<compile_context>
chip_gen: v6e
topology: v6e:2x2x1
jax: 0.10.0
libtpu: 0.0.40
codegen_flags: <defaults>
</compile_context>

<pallas_src>
import math
import functools

import jax
import jax.numpy as jnp
from jax.experimental import pallas as pl
from jax.experimental.pallas import tpu as pltpu

# ---------------- config (small, TPU-friendly) ----------------
VOCAB_SIZE = 100
ROUNDED_VOCAB = VOCAB_SIZE + (128 - VOCAB_SIZE % 128) % 128  # 128
HIDDEN = 128
N_HEADS = 2
HEAD_DIM = HIDDEN // N_HEADS          # 64
COND_DIM = 128
N_BLOCKS = 2
MLP_RATIO = 4
FREQ_EMB = 256
SEQ_LEN = 16
BATCH = 2
LN_EPS = 1e-5                         # F.layer_norm default (norm1/norm2/norm_final)
QK_EPS = 1e-6                         # q_norm / k_norm eps
LOGIT_BIAS = 0.0                      # registered buffer in the torch module (constant)


# ---------------- in-kernel helpers ----------------
def _ln(x, eps):
    mu = jnp.mean(x, axis=-1, keepdims=True)
    var = jnp.mean((x - mu) ** 2, axis=-1, keepdims=True)
    return (x - mu) * jax.lax.rsqrt(var + eps)


def _gelu_tanh(x):
    c = 0.7978845608028654  # sqrt(2/pi)
    return 0.5 * x * (1.0 + jnp.tanh(c * (x + 0.044715 * x * x * x)))


# ---------------- fused DIT kernel (all blocks + final layer) ----------------
def fused_dit_kernel(x_ref, c_ref, rope_ref,
                     wada_ref, bada_ref, n1w_ref, wqkv_ref, wqkP_ref, wout_ref,
                     n2w_ref, wm1_ref, bm1_ref, wm2_ref, bm2_ref,
                     fwada_ref, fbada_ref, fnw_ref, fwlin_ref, fblin_ref,
                     out_ref, *, B, S, D, H, hd, NB):
    x = x_ref[...]                                   # (B*S, D) f32
    c_bf = c_ref[...].astype(jnp.bfloat16)           # (B*S, C) per-row condition
    cos = rope_ref[0]                                # (S, hd)
    sin = rope_ref[1]                                # (S, hd)
    cs2 = rope_ref[2]                                # cos + sign*sin  (S, hd)
    inv_sqrt_d = 1.0 / math.sqrt(hd)

    def mm(a, w, bias=None):
        # bf16 MXU matmul with f32 accumulation (weights are already bf16).
        y = jnp.dot(a.astype(jnp.bfloat16), w, preferred_element_type=jnp.float32)
        return y if bias is None else y + bias

    def norm_rope(t, tp):
        # Fused q/k LayerNorm (head_dim, eps=1e-6, no affine) + rotary embedding.
        # tp = rotate_half permutation of the *pre-norm* head, produced by the
        # signed-permuted weight matmul (wqkP), so no in-kernel data movement.
        mu = jnp.mean(t, axis=-1, keepdims=True)
        var = jnp.mean((t - mu) ** 2, axis=-1, keepdims=True)
        s = jax.lax.rsqrt(var + QK_EPS)
        return s * (t * cos + tp * sin - mu * cs2)

    for blk in range(NB):                            # static unroll over DDiT blocks
        # adaLN modulation, already row-expanded via the (B*S, C) condition.
        mod = jnp.dot(c_bf, wada_ref[blk],
                      preferred_element_type=jnp.float32) + bada_ref[blk]   # (B*S, 6D)
        shift_msa = mod[:, 0 * D:1 * D]
        scale_msa = mod[:, 1 * D:2 * D]
        gate_msa = mod[:, 2 * D:3 * D]
        shift_mlp = mod[:, 3 * D:4 * D]
        scale_mlp = mod[:, 4 * D:5 * D]
        gate_mlp = mod[:, 5 * D:6 * D]

        # ----- attention branch -----
        xm = _ln(x, LN_EPS) * n1w_ref[blk]
        xm = xm * (1.0 + scale_msa) + shift_msa
        qkv = mm(xm, wqkv_ref[blk])                  # (B*S, 3D)
        qkp = mm(xm, wqkP_ref[blk])                  # (B*S, 2D) = rotate_half'd q|k

        batch_outs = []
        for b in range(B):                           # static: per-batch attention
            r0 = b * S
            head_outs = []
            for h in range(H):                       # static: per-head attention
                q = qkv[r0:r0 + S, h * hd:(h + 1) * hd]
                k = qkv[r0:r0 + S, D + h * hd:D + (h + 1) * hd]
                v = qkv[r0:r0 + S, 2 * D + h * hd:2 * D + (h + 1) * hd]
                qp = qkp[r0:r0 + S, h * hd:(h + 1) * hd]
                kp = qkp[r0:r0 + S, D + h * hd:D + (h + 1) * hd]
                qr = norm_rope(q, qp)
                kr = norm_rope(k, kp)
                s = jax.lax.dot_general(
                    qr.astype(jnp.bfloat16), kr.astype(jnp.bfloat16),
                    (((1,), (1,)), ((), ())),
                    preferred_element_type=jnp.float32) * inv_sqrt_d        # (S, S)
                s = s - jnp.max(s, axis=-1, keepdims=True)
                p = jnp.exp(s)
                p = p * pl.reciprocal(jnp.sum(p, axis=-1, keepdims=True), approx=True)
                head_outs.append(mm(p, v.astype(jnp.bfloat16)))             # (S, hd)
            batch_outs.append(jnp.concatenate(head_outs, axis=-1))          # (S, D)
        attn = jnp.concatenate(batch_outs, axis=0)                          # (B*S, D)

        # bias_dropout_add_scale (inference): residual + gate * attn_out
        x = x + gate_msa * mm(attn, wout_ref[blk])

        # ----- MLP branch -----
        xm2 = _ln(x, LN_EPS) * n2w_ref[blk]
        xm2 = xm2 * (1.0 + scale_mlp) + shift_mlp
        h1 = _gelu_tanh(mm(xm2, wm1_ref[blk], bm1_ref[blk]))
        x = x + gate_mlp * mm(h1, wm2_ref[blk], bm2_ref[blk])

    # ----- final layer -----
    fmod = jnp.dot(c_bf, fwada_ref[...],
                   preferred_element_type=jnp.float32) + fbada_ref[...]     # (B*S, 2D)
    xf = _ln(x, LN_EPS) * fnw_ref[...]
    xf = xf * (1.0 + fmod[:, D:]) + fmod[:, :D]
    logits = mm(xf, fwlin_ref[...], fblin_ref[...])                         # (B*S, V)
    # scatter_add of logit_bias at the token index is a no-op (constant 0.0 buffer),
    # so it is folded out here; see wrapper-level guard.
    out_ref[...] = jnp.tanh(logits * (1.0 / 30.0)) * 30.0


def _fspec(shape):
    n = len(shape)
    return pl.BlockSpec(shape, lambda i, _n=n: (0,) * _n)


def fused_forward(x, c, rope_tab, fp):
    B, S, D = x.shape
    C = c.shape[-1]
    V = fp["fwlin"].shape[-1]
    BS = B * S
    x2 = x.reshape(BS, D)
    # Expand condition to one row per token (free XLA broadcast) so the kernel's
    # adaLN matmuls are lane/sublane dense with no in-kernel row broadcasts.
    c_rows = jnp.broadcast_to(c[:, None, :], (B, S, C)).reshape(BS, C)

    kernel = functools.partial(fused_dit_kernel, B=B, S=S, D=D,
                               H=N_HEADS, hd=HEAD_DIM, NB=N_BLOCKS)
    args = (x2, c_rows, rope_tab,
            fp["wada"], fp["bada"], fp["n1w"], fp["wqkv"], fp["wqkP"], fp["wout"],
            fp["n2w"], fp["wm1"], fp["bm1"], fp["wm2"], fp["bm2"],
            fp["fwada"], fp["fbada"], fp["fnw"], fp["fwlin"], fp["fblin"])

    out2 = pl.pallas_call(
        kernel,
        out_shape=jax.ShapeDtypeStruct((BS, V), jnp.float32),
        grid=(1,),
        in_specs=[_fspec(a.shape) for a in args],
        out_specs=_fspec((BS, V)),
        compiler_params=pltpu.CompilerParams(dimension_semantics=("arbitrary",)),
    )(*args)
    return out2.reshape(B, S, V)


# ---------------- plain-JAX glue ----------------
def timestep_embedding(t, dim):
    half = dim // 2
    freqs = jnp.exp(-math.log(10000.0) * jnp.arange(half, dtype=jnp.float32) / half)
    args = t[:, None].astype(jnp.float32) * freqs[None, :]
    return jnp.concatenate([jnp.cos(args), jnp.sin(args)], axis=-1)


def rotary_tables(seq_len, dim):
    inv_freq = 1.0 / (10000.0 ** (jnp.arange(0, dim, 2, dtype=jnp.float32) / dim))
    t = jnp.arange(seq_len, dtype=jnp.float32)
    freqs = jnp.einsum("i,j->ij", t, inv_freq)
    emb = jnp.concatenate([freqs, freqs], axis=-1)      # (S, head_dim)
    cos = jnp.cos(emb)
    sin = jnp.sin(emb)
    # sign vector of rotate_half: -1 for first half, +1 for second half
    sign = jnp.where(jnp.arange(dim) < dim // 2, -1.0, 1.0)[None, :].astype(jnp.float32)
    cs2 = cos + sign * sin                              # used by the fused LN+RoPE formula
    return jnp.stack([cos, sin, cs2], axis=0)           # (3, S, head_dim)


def dit_forward(fp, indices, sigma):
    # logit_bias buffer is a constant 0.0 in the reference module; its scatter_add
    # is a no-op and has been folded out of the kernel.
    assert LOGIT_BIAS == 0.0
    x = fp["embedding"][indices]                        # (B, S, D)
    # sigma_map: sinusoidal -> Linear -> SiLU -> Linear, then outer SiLU
    t_freq = timestep_embedding(sigma, FREQ_EMB)
    h = jax.nn.silu(t_freq @ fp["t_w1"] + fp["t_b1"])
    t_emb = h @ fp["t_w2"] + fp["t_b2"]
    c = jax.nn.silu(t_emb)                              # (B, cond_dim)
    rope_tab = rotary_tables(indices.shape[1], HEAD_DIM)
    return fused_forward(x, c, rope_tab, fp)


# ---------------- parameter init & host-side packing ----------------
def init_params(key):
    ks = list(jax.random.split(key, 32))
    it = iter(ks)

    def nrm(shape, std=0.02):
        return std * jax.random.normal(next(it), shape, dtype=jnp.float32)

    params = {
        "embedding": nrm((ROUNDED_VOCAB, HIDDEN)),
        "t_w1": nrm((FREQ_EMB, COND_DIM)),
        "t_b1": jnp.zeros((COND_DIM,), jnp.float32),
        "t_w2": nrm((COND_DIM, COND_DIM)),
        "t_b2": jnp.zeros((COND_DIM,), jnp.float32),
    }
    blocks = []
    for _ in range(N_BLOCKS):
        blocks.append({
            "w_ada": nrm((COND_DIM, 6 * HIDDEN), std=0.01),
            "b_ada": jnp.zeros((1, 6 * HIDDEN), jnp.float32),
            "n1w": jnp.ones((1, HIDDEN), jnp.float32),
            "wqkv": nrm((HIDDEN, 3 * HIDDEN)),
            "wout": nrm((HIDDEN, HIDDEN)),
            "n2w": jnp.ones((1, HIDDEN), jnp.float32),
            "wm1": nrm((HIDDEN, MLP_RATIO * HIDDEN)),
            "bm1": jnp.zeros((1, MLP_RATIO * HIDDEN), jnp.float32),
            "wm2": nrm((MLP_RATIO * HIDDEN, HIDDEN)),
            "bm2": jnp.zeros((1, HIDDEN), jnp.float32),
        })
    params["blocks"] = blocks
    params["final"] = {
        "w_ada": nrm((COND_DIM, 2 * HIDDEN), std=0.01),
        "b_ada": jnp.zeros((1, 2 * HIDDEN), jnp.float32),
        "nfw": jnp.ones((1, HIDDEN), jnp.float32),
        "wlin": nrm((HIDDEN, ROUNDED_VOCAB), std=0.01),
        "blin": jnp.zeros((1, ROUNDED_VOCAB), jnp.float32),
    }
    return params


def build_rot_weights(wqkv):
    # Signed-permuted q/k weight columns such that  xm @ WqP = rotate_half(xm @ Wq)
    # (per head), letting RoPE be applied with pure elementwise math in-kernel.
    half = HEAD_DIM // 2
    qparts, kparts = [], []
    for h in range(N_HEADS):
        wq = wqkv[:, h * HEAD_DIM:(h + 1) * HEAD_DIM]
        wk = wqkv[:, HIDDEN + h * HEAD_DIM:HIDDEN + (h + 1) * HEAD_DIM]
        qparts.append(jnp.concatenate([-wq[:, half:], wq[:, :half]], axis=1))
        kparts.append(jnp.concatenate([-wk[:, half:], wk[:, :half]], axis=1))
    return jnp.concatenate(qparts + kparts, axis=1)     # (D, 2D)


def prepare_fused_params(params):
    blocks = params["blocks"]

    def stack(name):
        return jnp.stack([b[name] for b in blocks], axis=0)

    bf = jnp.bfloat16
    return {
        # stacked per-block weights (leading N_BLOCKS axis, resident in VMEM)
        "wada": stack("w_ada").astype(bf),
        "bada": stack("b_ada"),
        "n1w": stack("n1w"),
        "wqkv": stack("wqkv").astype(bf),
        "wqkP": jnp.stack([build_rot_weights(b["wqkv"]) for b in blocks], axis=0).astype(bf),
        "wout": stack("wout").astype(bf),
        "n2w": stack("n2w"),
        "wm1": stack("wm1").astype(bf),
        "bm1": stack("bm1"),
        "wm2": stack("wm2").astype(bf),
        "bm2": stack("bm2"),
        # final layer
        "fwada": params["final"]["w_ada"].astype(bf),
        "fbada": params["final"]["b_ada"],
        "fnw": params["final"]["nfw"],
        "fwlin": params["final"]["wlin"].astype(bf),
        "fblin": params["final"]["blin"],
        # glue (kept f32)
        "embedding": params["embedding"],
        "t_w1": params["t_w1"], "t_b1": params["t_b1"],
        "t_w2": params["t_w2"], "t_b2": params["t_b2"],
    }


if __name__ == "__main__":
    key = jax.random.PRNGKey(0)
    kp, ki, ks = jax.random.split(key, 3)
    params = init_params(kp)
    fp = prepare_fused_params(params)
    indices = jax.random.randint(ki, (BATCH, SEQ_LEN), 0, VOCAB_SIZE, dtype=jnp.int32)
    sigma = jax.random.uniform(ks, (BATCH,), dtype=jnp.float32)

    out = jax.jit(dit_forward)(fp, indices, sigma)
    out = jax.block_until_ready(out)

    assert out.shape == (BATCH, SEQ_LEN, ROUNDED_VOCAB), out.shape
    assert out.dtype == jnp.float32
    assert bool(jnp.all(jnp.isfinite(out)))
    assert bool(jnp.all(jnp.abs(out) <= 30.0))   # tanh(x/30)*30 clamp
    print("KERNEL_OK")
</pallas_src>

<mosaic_0001>
module attributes {stable_mosaic.version = 11 : i64} {
  func.func @fused_dit_kernel(%arg0: i32, %arg1: memref<32x128xf32, #tpu.memory_space<vmem>>, %arg2: memref<32x128xf32, #tpu.memory_space<vmem>>, %arg3: memref<3x16x64xf32, #tpu.memory_space<vmem>>, %arg4: memref<2x128x768xbf16, #tpu.memory_space<vmem>>, %arg5: memref<2x1x768xf32, #tpu.memory_space<vmem>>, %arg6: memref<2x1x128xf32, #tpu.memory_space<vmem>>, %arg7: memref<2x128x384xbf16, #tpu.memory_space<vmem>>, %arg8: memref<2x128x256xbf16, #tpu.memory_space<vmem>>, %arg9: memref<2x128x128xbf16, #tpu.memory_space<vmem>>, %arg10: memref<2x1x128xf32, #tpu.memory_space<vmem>>, %arg11: memref<2x128x512xbf16, #tpu.memory_space<vmem>>, %arg12: memref<2x1x512xf32, #tpu.memory_space<vmem>>, %arg13: memref<2x512x128xbf16, #tpu.memory_space<vmem>>, %arg14: memref<2x1x128xf32, #tpu.memory_space<vmem>>, %arg15: memref<128x256xbf16, #tpu.memory_space<vmem>>, %arg16: memref<1x256xf32, #tpu.memory_space<vmem>>, %arg17: memref<1x128xf32, #tpu.memory_space<vmem>>, %arg18: memref<128x128xbf16, #tpu.memory_space<vmem>>, %arg19: memref<1x128xf32, #tpu.memory_space<vmem>>, %arg20: memref<32x128xf32, #tpu.memory_space<vmem>>) attributes {dimension_semantics = [#tpu.dimension_semantics<arbitrary>], iteration_bounds = array<i64: 1>, scalar_prefetch = 0 : i64, scratch_operands = 0 : i64, tpu.core_type = #tpu.core_type<tc>, window_params = [{pipeline_mode = #tpu.pipeline_mode<synchronous>, transform_indices = @transform_0, window_bounds = array<i64: 32, 128>}, {pipeline_mode = #tpu.pipeline_mode<synchronous>, transform_indices = @transform_1, window_bounds = array<i64: 32, 128>}, {pipeline_mode = #tpu.pipeline_mode<synchronous>, transform_indices = @transform_2, window_bounds = array<i64: 3, 16, 64>}, {pipeline_mode = #tpu.pipeline_mode<synchronous>, transform_indices = @transform_3, window_bounds = array<i64: 2, 128, 768>}, {pipeline_mode = #tpu.pipeline_mode<synchronous>, transform_indices = @transform_4, window_bounds = array<i64: 2, 1, 768>}, {pipeline_mode = #tpu.pipeline_mode<synchronous>, transform_indices = @transform_5, window_bounds = array<i64: 2, 1, 128>}, {pipeline_mode = #tpu.pipeline_mode<synchronous>, transform_indices = @transform_6, window_bounds = array<i64: 2, 128, 384>}, {pipeline_mode = #tpu.pipeline_mode<synchronous>, transform_indices = @transform_7, window_bounds = array<i64: 2, 128, 256>}, {pipeline_mode = #tpu.pipeline_mode<synchronous>, transform_indices = @transform_8, window_bounds = array<i64: 2, 128, 128>}, {pipeline_mode = #tpu.pipeline_mode<synchronous>, transform_indices = @transform_9, window_bounds = array<i64: 2, 1, 128>}, {pipeline_mode = #tpu.pipeline_mode<synchronous>, transform_indices = @transform_10, window_bounds = array<i64: 2, 128, 512>}, {pipeline_mode = #tpu.pipeline_mode<synchronous>, transform_indices = @transform_11, window_bounds = array<i64: 2, 1, 512>}, {pipeline_mode = #tpu.pipeline_mode<synchronous>, transform_indices = @transform_12, window_bounds = array<i64: 2, 512, 128>}, {pipeline_mode = #tpu.pipeline_mode<synchronous>, transform_indices = @transform_13, window_bounds = array<i64: 2, 1, 128>}, {pipeline_mode = #tpu.pipeline_mode<synchronous>, transform_indices = @transform_14, window_bounds = array<i64: 128, 256>}, {pipeline_mode = #tpu.pipeline_mode<synchronous>, transform_indices = @transform_15, window_bounds = array<i64: 1, 256>}, {pipeline_mode = #tpu.pipeline_mode<synchronous>, transform_indices = @transform_16, window_bounds = array<i64: 1, 128>}, {pipeline_mode = #tpu.pipeline_mode<synchronous>, transform_indices = @transform_17, window_bounds = array<i64: 128, 128>}, {pipeline_mode = #tpu.pipeline_mode<synchronous>, transform_indices = @transform_18, window_bounds = array<i64: 1, 128>}, {pipeline_mode = #tpu.pipeline_mode<synchronous>, transform_indices = @transform_19, window_bounds = array<i64: 32, 128>}]} {
    %c0 = arith.constant 0 : index
    %c0_0 = arith.constant 0 : index
    %0 = vector.load %arg1[%c0, %c0_0] : memref<32x128xf32, #tpu.memory_space<vmem>>, vector<32x128xf32>
    %c0_1 = arith.constant 0 : index
    %c0_2 = arith.constant 0 : index
    %1 = vector.load %arg2[%c0_1, %c0_2] : memref<32x128xf32, #tpu.memory_space<vmem>>, vector<32x128xf32>
    %2 = arith.truncf %1 : vector<32x128xf32> to vector<32x128xbf16>
    %c0_3 = arith.constant 0 : index
    %c0_4 = arith.constant 0 : index
    %c0_5 = arith.constant 0 : index
    %3 = vector.load %arg3[%c0_3, %c0_4, %c0_5] : memref<3x16x64xf32, #tpu.memory_space<vmem>>, vector<1x16x64xf32>
    %4 = vector.shape_cast %3 : vector<1x16x64xf32> to vector<16x64xf32>
    %c1 = arith.constant 1 : index
    %c0_6 = arith.constant 0 : index
    %c0_7 = arith.constant 0 : index
    %5 = vector.load %arg3[%c1, %c0_6, %c0_7] : memref<3x16x64xf32, #tpu.memory_space<vmem>>, vector<1x16x64xf32>
    %6 = vector.shape_cast %5 : vector<1x16x64xf32> to vector<16x64xf32>
    %c2 = arith.constant 2 : index
    %c0_8 = arith.constant 0 : index
    %c0_9 = arith.constant 0 : index
    %7 = vector.load %arg3[%c2, %c0_8, %c0_9] : memref<3x16x64xf32, #tpu.memory_space<vmem>>, vector<1x16x64xf32>
    %8 = vector.shape_cast %7 : vector<1x16x64xf32> to vector<16x64xf32>
    %c0_10 = arith.constant 0 : index
    %c0_11 = arith.constant 0 : index
    %c0_12 = arith.constant 0 : index
    %9 = vector.load %arg4[%c0_10, %c0_11, %c0_12] : memref<2x128x768xbf16, #tpu.memory_space<vmem>>, vector<1x128x768xbf16>
    %10 = vector.shape_cast %9 : vector<1x128x768xbf16> to vector<128x768xbf16>
    %cst = arith.constant dense<0.000000e+00> : vector<32x768xf32>
    %11 = tpu.matmul %2, %10, %cst {dimension_numbers = #tpu.dot_dimension_numbers<[1], [0], [0], [1], [0, 0, 1, 1], [], []>} : vector<32x128xbf16>, vector<128x768xbf16>, vector<32x768xf32> -> vector<32x768xf32>
    %c0_13 = arith.constant 0 : index
    %c0_14 = arith.constant 0 : index
    %c0_15 = arith.constant 0 : index
    %12 = vector.load %arg5[%c0_13, %c0_14, %c0_15] : memref<2x1x768xf32, #tpu.memory_space<vmem>>, vector<1x1x768xf32>
    %13 = vector.shape_cast %12 : vector<1x1x768xf32> to vector<1x768xf32>
    %14 = vector.broadcast %13 : vector<1x768xf32> to vector<32x768xf32>
    %15 = arith.addf %11, %14 : vector<32x768xf32>
    %16 = vector.extract_strided_slice %15 {offsets = [0, 0], sizes = [32, 128], strides = [1, 1]} : vector<32x768xf32> to vector<32x128xf32>
    %17 = vector.extract_strided_slice %15 {offsets = [0, 128], sizes = [32, 128], strides = [1, 1]} : vector<32x768xf32> to vector<32x128xf32>
    %18 = vector.extract_strided_slice %15 {offsets = [0, 256], sizes = [32, 128], strides = [1, 1]} : vector<32x768xf32> to vector<32x128xf32>
    %19 = vector.extract_strided_slice %15 {offsets = [0, 384], sizes = [32, 128], strides = [1, 1]} : vector<32x768xf32> to vector<32x128xf32>
    %20 = vector.extract_strided_slice %15 {offsets = [0, 512], sizes = [32, 128], strides = [1, 1]} : vector<32x768xf32> to vector<32x128xf32>
    %21 = vector.extract_strided_slice %15 {offsets = [0, 640], sizes = [32, 128], strides = [1, 1]} : vector<32x768xf32> to vector<32x128xf32>
    %cst_16 = arith.constant dense<0.000000e+00> : vector<32xf32>
    %22 = vector.multi_reduction <add>, %0, %cst_16 [1] : vector<32x128xf32> to vector<32xf32>
    %23 = vector.shape_cast %22 : vector<32xf32> to vector<32x1xf32>
    %cst_17 = arith.constant 1.280000e+02 : f32
    %24 = vector.broadcast %cst_17 : f32 to vector<32x1xf32>
    %25 = arith.divf %23, %24 : vector<32x1xf32>
    %26 = vector.broadcast %25 : vector<32x1xf32> to vector<32x128xf32>
    %27 = arith.subf %0, %26 : vector<32x128xf32>
    %28 = arith.mulf %27, %27 : vector<32x128xf32>
    %cst_18 = arith.constant dense<0.000000e+00> : vector<32xf32>
    %29 = vector.multi_reduction <add>, %28, %cst_18 [1] : vector<32x128xf32> to vector<32xf32>
    %30 = vector.shape_cast %29 : vector<32xf32> to vector<32x1xf32>
    %cst_19 = arith.constant 1.280000e+02 : f32
    %31 = vector.broadcast %cst_19 : f32 to vector<32x1xf32>
    %32 = arith.divf %30, %31 : vector<32x1xf32>
    %33 = vector.broadcast %25 : vector<32x1xf32> to vector<32x128xf32>
    %34 = arith.subf %0, %33 : vector<32x128xf32>
    %cst_20 = arith.constant 9.99999974E-6 : f32
    %35 = vector.broadcast %cst_20 : f32 to vector<32x1xf32>
    %36 = arith.addf %32, %35 : vector<32x1xf32>
    %37 = math.rsqrt %36 : vector<32x1xf32>
    %38 = vector.broadcast %37 : vector<32x1xf32> to vector<32x128xf32>
    %39 = arith.mulf %34, %38 : vector<32x128xf32>
    %c0_21 = arith.constant 0 : index
    %c0_22 = arith.constant 0 : index
    %c0_23 = arith.constant 0 : index
    %40 = vector.load %arg6[%c0_21, %c0_22, %c0_23] : memref<2x1x128xf32, #tpu.memory_space<vmem>>, vector<1x1x128xf32>
    %41 = vector.shape_cast %40 : vector<1x1x128xf32> to vector<1x128xf32>
    %42 = vector.broadcast %41 : vector<1x128xf32> to vector<32x128xf32>
    %43 = arith.mulf %39, %42 : vector<32x128xf32>
    %cst_24 = arith.constant 1.000000e+00 : f32
    %44 = vector.broadcast %cst_24 : f32 to vector<32x128xf32>
    %45 = arith.addf %44, %17 : vector<32x128xf32>
    %46 = arith.mulf %43, %45 : vector<32x128xf32>
    %47 = arith.addf %46, %16 : vector<32x128xf32>
    %c0_25 = arith.constant 0 : index
    %c0_26 = arith.constant 0 : index
    %c0_27 = arith.constant 0 : index
    %48 = vector.load %arg7[%c0_25, %c0_26, %c0_27] : memref<2x128x384xbf16, #tpu.memory_space<vmem>>, vector<1x128x384xbf16>
    %49 = vector.shape_cast %48 : vector<1x128x384xbf16> to vector<128x384xbf16>
    %50 = arith.truncf %47 : vector<32x128xf32> to vector<32x128xbf16>
    %cst_28 = arith.constant dense<0.000000e+00> : vector<32x384xf32>
    %51 = tpu.matmul %50, %49, %cst_28 {dimension_numbers = #tpu.dot_dimension_numbers<[1], [0], [0], [1], [0, 0, 1, 1], [], []>} : vector<32x128xbf16>, vector<128x384xbf16>, vector<32x384xf32> -> vector<32x384xf32>
    %c0_29 = arith.constant 0 : index
    %c0_30 = arith.constant 0 : index
    %c0_31 = arith.constant 0 : index
    %52 = vector.load %arg8[%c0_29, %c0_30, %c0_31] : memref<2x128x256xbf16, #tpu.memory_space<vmem>>, vector<1x128x256xbf16>
    %53 = vector.shape_cast %52 : vector<1x128x256xbf16> to vector<128x256xbf16>
    %54 = arith.truncf %47 : vector<32x128xf32> to vector<32x128xbf16>
    %cst_32 = arith.constant dense<0.000000e+00> : vector<32x256xf32>
    %55 = tpu.matmul %54, %53, %cst_32 {dimension_numbers = #tpu.dot_dimension_numbers<[1], [0], [0], [1], [0, 0, 1, 1], [], []>} : vector<32x128xbf16>, vector<128x256xbf16>, vector<32x256xf32> -> vector<32x256xf32>
    %56 = vector.extract_strided_slice %51 {offsets = [0, 0], sizes = [16, 64], strides = [1, 1]} : vector<32x384xf32> to vector<16x64xf32>
    %57 = vector.extract_strided_slice %51 {offsets = [0, 128], sizes = [16, 64], strides = [1, 1]} : vector<32x384xf32> to vector<16x64xf32>
    %58 = vector.extract_strided_slice %51 {offsets = [0, 256], sizes = [16, 64], strides = [1, 1]} : vector<32x384xf32> to vector<16x64xf32>
    %59 = vector.extract_strided_slice %55 {offsets = [0, 0], sizes = [16, 64], strides = [1, 1]} : vector<32x256xf32> to vector<16x64xf32>
    %60 = vector.extract_strided_slice %55 {offsets = [0, 128], sizes = [16, 64], strides = [1, 1]} : vector<32x256xf32> to vector<16x64xf32>
    %cst_33 = arith.constant dense<0.000000e+00> : vector<16xf32>
    %61 = vector.multi_reduction <add>, %56, %cst_33 [1] : vector<16x64xf32> to vector<16xf32>
    %62 = vector.shape_cast %61 : vector<16xf32> to vector<16x1xf32>
    %cst_34 = arith.constant 6.400000e+01 : f32
    %63 = vector.broadcast %cst_34 : f32 to vector<16x1xf32>
    %64 = arith.divf %62, %63 : vector<16x1xf32>
    %65 = vector.broadcast %64 : vector<16x1xf32> to vector<16x64xf32>
    %66 = arith.subf %56, %65 : vector<16x64xf32>
    %67 = arith.mulf %66, %66 : vector<16x64xf32>
    %cst_35 = arith.constant dense<0.000000e+00> : vector<16xf32>
    %68 = vector.multi_reduction <add>, %67, %cst_35 [1] : vector<16x64xf32> to vector<16xf32>
    %69 = vector.shape_cast %68 : vector<16xf32> to vector<16x1xf32>
    %cst_36 = arith.constant 6.400000e+01 : f32
    %70 = vector.broadcast %cst_36 : f32 to vector<16x1xf32>
    %71 = arith.divf %69, %70 : vector<16x1xf32>
    %cst_37 = arith.constant 9.99999997E-7 : f32
    %72 = vector.broadcast %cst_37 : f32 to vector<16x1xf32>
    %73 = arith.addf %71, %72 : vector<16x1xf32>
    %74 = math.rsqrt %73 : vector<16x1xf32>
    %75 = arith.mulf %56, %4 : vector<16x64xf32>
    %76 = arith.mulf %59, %6 : vector<16x64xf32>
    %77 = arith.addf %75, %76 : vector<16x64xf32>
    %78 = vector.broadcast %64 : vector<16x1xf32> to vector<16x64xf32>
    %79 = arith.mulf %78, %8 : vector<16x64xf32>
    %80 = arith.subf %77, %79 : vector<16x64xf32>
    %81 = vector.broadcast %74 : vector<16x1xf32> to vector<16x64xf32>
    %82 = arith.mulf %81, %80 : vector<16x64xf32>
    %cst_38 = arith.constant dense<0.000000e+00> : vector<16xf32>
    %83 = vector.multi_reduction <add>, %57, %cst_38 [1] : vector<16x64xf32> to vector<16xf32>
    %84 = vector.shape_cast %83 : vector<16xf32> to vector<16x1xf32>
    %cst_39 = arith.constant 6.400000e+01 : f32
    %85 = vector.broadcast %cst_39 : f32 to vector<16x1xf32>
    %86 = arith.divf %84, %85 : vector<16x1xf32>
    %87 = vector.broadcast %86 : vector<16x1xf32> to vector<16x64xf32>
    %88 = arith.subf %57, %87 : vector<16x64xf32>
    %89 = arith.mulf %88, %88 : vector<16x64xf32>
    %cst_40 = arith.constant dense<0.000000e+00> : vector<16xf32>
    %90 = vector.multi_reduction <add>, %89, %cst_40 [1] : vector<16x64xf32> to vector<16xf32>
    %91 = vector.shape_cast %90 : vector<16xf32> to vector<16x1xf32>
    %cst_41 = arith.constant 6.400000e+01 : f32
    %92 = vector.broadcast %cst_41 : f32 to vector<16x1xf32>
    %93 = arith.divf %91, %92 : vector<16x1xf32>
    %cst_42 = arith.constant 9.99999997E-7 : f32
    %94 = vector.broadcast %cst_42 : f32 to vector<16x1xf32>
    %95 = arith.addf %93, %94 : vector<16x1xf32>
    %96 = math.rsqrt %95 : vector<16x1xf32>
    %97 = arith.mulf %57, %4 : vector<16x64xf32>
    %98 = arith.mulf %60, %6 : vector<16x64xf32>
    %99 = arith.addf %97, %98 : vector<16x64xf32>
    %100 = vector.broadcast %86 : vector<16x1xf32> to vector<16x64xf32>
    %101 = arith.mulf %100, %8 : vector<16x64xf32>
    %102 = arith.subf %99, %101 : vector<16x64xf32>
    %103 = vector.broadcast %96 : vector<16x1xf32> to vector<16x64xf32>
    %104 = arith.mulf %103, %102 : vector<16x64xf32>
    %105 = arith.truncf %82 : vector<16x64xf32> to vector<16x64xbf16>
    %106 = arith.truncf %104 : vector<16x64xf32> to vector<16x64xbf16>
    %cst_43 = arith.constant dense<0.000000e+00> : vector<16x16xf32>
    %107 = tpu.matmul %105, %106, %cst_43 {dimension_numbers = #tpu.dot_dimension_numbers<[1], [1], [0], [0], [0, 0, 1, 0], [], []>} : vector<16x64xbf16>, vector<16x64xbf16>, vector<16x16xf32> -> vector<16x16xf32>
    %cst_44 = arith.constant 1.250000e-01 : f32
    %108 = vector.broadcast %cst_44 : f32 to vector<16x16xf32>
    %109 = arith.mulf %107, %108 : vector<16x16xf32>
    %cst_45 = arith.constant dense<0xFF800000> : vector<16xf32>
    %110 = vector.multi_reduction <maximumf>, %109, %cst_45 [1] : vector<16x16xf32> to vector<16xf32>
    %111 = vector.shape_cast %110 : vector<16xf32> to vector<16x1xf32>
    %112 = vector.broadcast %111 : vector<16x1xf32> to vector<16x16xf32>
    %113 = arith.subf %109, %112 : vector<16x16xf32>
    %114 = math.exp %113 : vector<16x16xf32>
    %cst_46 = arith.constant dense<0.000000e+00> : vector<16xf32>
    %115 = vector.multi_reduction <add>, %114, %cst_46 [1] : vector<16x16xf32> to vector<16xf32>
    %116 = vector.shape_cast %115 : vector<16xf32> to vector<16x1xf32>
    %117 = tpu.reciprocal %116 {approx = true} : vector<16x1xf32> -> vector<16x1xf32>
    %118 = vector.broadcast %117 : vector<16x1xf32> to vector<16x16xf32>
    %119 = arith.mulf %114, %118 : vector<16x16xf32>
    %120 = arith.truncf %58 : vector<16x64xf32> to vector<16x64xbf16>
    %121 = arith.truncf %119 : vector<16x16xf32> to vector<16x16xbf16>
    %cst_47 = arith.constant dense<0.000000e+00> : vector<16x64xf32>
    %122 = tpu.matmul %121, %120, %cst_47 {dimension_numbers = #tpu.dot_dimension_numbers<[1], [0], [0], [1], [0, 0, 1, 1], [], []>} : vector<16x16xbf16>, vector<16x64xbf16>, vector<16x64xf32> -> vector<16x64xf32>
    %123 = vector.extract_strided_slice %51 {offsets = [0, 64], sizes = [16, 64], strides = [1, 1]} : vector<32x384xf32> to vector<16x64xf32>
    %124 = vector.extract_strided_slice %51 {offsets = [0, 192], sizes = [16, 64], strides = [1, 1]} : vector<32x384xf32> to vector<16x64xf32>
    %125 = vector.extract_strided_slice %51 {offsets = [0, 320], sizes = [16, 64], strides = [1, 1]} : vector<32x384xf32> to vector<16x64xf32>
    %126 = vector.extract_strided_slice %55 {offsets = [0, 64], sizes = [16, 64], strides = [1, 1]} : vector<32x256xf32> to vector<16x64xf32>
    %127 = vector.extract_strided_slice %55 {offsets = [0, 192], sizes = [16, 64], strides = [1, 1]} : vector<32x256xf32> to vector<16x64xf32>
    %cst_48 = arith.constant dense<0.000000e+00> : vector<16xf32>
    %128 = vector.multi_reduction <add>, %123, %cst_48 [1] : vector<16x64xf32> to vector<16xf32>
    %129 = vector.shape_cast %128 : vector<16xf32> to vector<16x1xf32>
    %cst_49 = arith.constant 6.400000e+01 : f32
    %130 = vector.broadcast %cst_49 : f32 to vector<16x1xf32>
    %131 = arith.divf %129, %130 : vector<16x1xf32>
    %132 = vector.broadcast %131 : vector<16x1xf32> to vector<16x64xf32>
    %133 = arith.subf %123, %132 : vector<16x64xf32>
    %134 = arith.mulf %133, %133 : vector<16x64xf32>
    %cst_50 = arith.constant dense<0.000000e+00> : vector<16xf32>
    %135 = vector.multi_reduction <add>, %134, %cst_50 [1] : vector<16x64xf32> to vector<16xf32>
    %136 = vector.shape_cast %135 : vector<16xf32> to vector<16x1xf32>
    %cst_51 = arith.constant 6.400000e+01 : f32
    %137 = vector.broadcast %cst_51 : f32 to vector<16x1xf32>
    %138 = arith.divf %136, %137 : vector<16x1xf32>
    %cst_52 = arith.constant 9.99999997E-7 : f32
    %139 = vector.broadcast %cst_52 : f32 to vector<16x1xf32>
    %140 = arith.addf %138, %139 : vector<16x1xf32>
    %141 = math.rsqrt %140 : vector<16x1xf32>
    %142 = arith.mulf %123, %4 : vector<16x64xf32>
    %143 = arith.mulf %126, %6 : vector<16x64xf32>
    %144 = arith.addf %142, %143 : vector<16x64xf32>
    %145 = vector.broadcast %131 : vector<16x1xf32> to vector<16x64xf32>
    %146 = arith.mulf %145, %8 : vector<16x64xf32>
    %147 = arith.subf %144, %146 : vector<16x64xf32>
    %148 = vector.broadcast %141 : vector<16x1xf32> to vector<16x64xf32>
    %149 = arith.mulf %148, %147 : vector<16x64xf32>
    %cst_53 = arith.constant dense<0.000000e+00> : vector<16xf32>
    %150 = vector.multi_reduction <add>, %124, %cst_53 [1] : vector<16x64xf32> to vector<16xf32>
    %151 = vector.shape_cast %150 : vector<16xf32> to vector<16x1xf32>
    %cst_54 = arith.constant 6.400000e+01 : f32
    %152 = vector.broadcast %cst_54 : f32 to vector<16x1xf32>
    %153 = arith.divf %151, %152 : vector<16x1xf32>
    %154 = vector.broadcast %153 : vector<16x1xf32> to vector<16x64xf32>
    %155 = arith.subf %124, %154 : vector<16x64xf32>
    %156 = arith.mulf %155, %155 : vector<16x64xf32>
    %cst_55 = arith.constant dense<0.000000e+00> : vector<16xf32>
    %157 = vector.multi_reduction <add>, %156, %cst_55 [1] : vector<16x64xf32> to vector<16xf32>
    %158 = vector.shape_cast %157 : vector<16xf32> to vector<16x1xf32>
    %cst_56 = arith.constant 6.400000e+01 : f32
    %159 = vector.broadcast %cst_56 : f32 to vector<16x1xf32>
    %160 = arith.divf %158, %159 : vector<16x1xf32>
    %cst_57 = arith.constant 9.99999997E-7 : f32
    %161 = vector.broadcast %cst_57 : f32 to vector<16x1xf32>
    %162 = arith.addf %160, %161 : vector<16x1xf32>
    %163 = math.rsqrt %162 : vector<16x1xf32>
    %164 = arith.mulf %124, %4 : vector<16x64xf32>
    %165 = arith.mulf %127, %6 : vector<16x64xf32>
    %166 = arith.addf %164, %165 : vector<16x64xf32>
    %167 = vector.broadcast %153 : vector<16x1xf32> to vector<16x64xf32>
    %168 = arith.mulf %167, %8 : vector<16x64xf32>
    %169 = arith.subf %166, %168 : vector<16x64xf32>
    %170 = vector.broadcast %163 : vector<16x1xf32> to vector<16x64xf32>
    %171 = arith.mulf %170, %169 : vector<16x64xf32>
    %172 = arith.truncf %149 : vector<16x64xf32> to vector<16x64xbf16>
    %173 = arith.truncf %171 : vector<16x64xf32> to vector<16x64xbf16>
    %cst_58 = arith.constant dense<0.000000e+00> : vector<16x16xf32>
    %174 = tpu.matmul %172, %173, %cst_58 {dimension_numbers = #tpu.dot_dimension_numbers<[1], [1], [0], [0], [0, 0, 1, 0], [], []>} : vector<16x64xbf16>, vector<16x64xbf16>, vector<16x16xf32> -> vector<16x16xf32>
    %cst_59 = arith.constant 1.250000e-01 : f32
    %175 = vector.broadcast %cst_59 : f32 to vector<16x16xf32>
    %176 = arith.mulf %174, %175 : vector<16x16xf32>
    %cst_60 = arith.constant dense<0xFF800000> : vector<16xf32>
    %177 = vector.multi_reduction <maximumf>, %176, %cst_60 [1] : vector<16x16xf32> to vector<16xf32>
    %178 = vector.shape_cast %177 : vector<16xf32> to vector<16x1xf32>
    %179 = vector.broadcast %178 : vector<16x1xf32> to vector<16x16xf32>
    %180 = arith.subf %176, %179 : vector<16x16xf32>
    %181 = math.exp %180 : vector<16x16xf32>
    %cst_61 = arith.constant dense<0.000000e+00> : vector<16xf32>
    %182 = vector.multi_reduction <add>, %181, %cst_61 [1] : vector<16x16xf32> to vector<16xf32>
    %183 = vector.shape_cast %182 : vector<16xf32> to vector<16x1xf32>
    %184 = tpu.reciprocal %183 {approx = true} : vector<16x1xf32> -> vector<16x1xf32>
    %185 = vector.broadcast %184 : vector<16x1xf32> to vector<16x16xf32>
    %186 = arith.mulf %181, %185 : vector<16x16xf32>
    %187 = arith.truncf %125 : vector<16x64xf32> to vector<16x64xbf16>
    %188 = arith.truncf %186 : vector<16x16xf32> to vector<16x16xbf16>
    %cst_62 = arith.constant dense<0.000000e+00> : vector<16x64xf32>
    %189 = tpu.matmul %188, %187, %cst_62 {dimension_numbers = #tpu.dot_dimension_numbers<[1], [0], [0], [1], [0, 0, 1, 1], [], []>} : vector<16x16xbf16>, vector<16x64xbf16>, vector<16x64xf32> -> vector<16x64xf32>
    %190 = tpu.concatenate %122, %189 in 1 : vector<16x64xf32>, vector<16x64xf32> -> vector<16x128xf32>
    %191 = vector.extract_strided_slice %51 {offsets = [16, 0], sizes = [16, 64], strides = [1, 1]} : vector<32x384xf32> to vector<16x64xf32>
    %192 = vector.extract_strided_slice %51 {offsets = [16, 128], sizes = [16, 64], strides = [1, 1]} : vector<32x384xf32> to vector<16x64xf32>
    %193 = vector.extract_strided_slice %51 {offsets = [16, 256], sizes = [16, 64], strides = [1, 1]} : vector<32x384xf32> to vector<16x64xf32>
    %194 = vector.extract_strided_slice %55 {offsets = [16, 0], sizes = [16, 64], strides = [1, 1]} : vector<32x256xf32> to vector<16x64xf32>
    %195 = vector.extract_strided_slice %55 {offsets = [16, 128], sizes = [16, 64], strides = [1, 1]} : vector<32x256xf32> to vector<16x64xf32>
    %cst_63 = arith.constant dense<0.000000e+00> : vector<16xf32>
    %196 = vector.multi_reduction <add>, %191, %cst_63 [1] : vector<16x64xf32> to vector<16xf32>
    %197 = vector.shape_cast %196 : vector<16xf32> to vector<16x1xf32>
    %cst_64 = arith.constant 6.400000e+01 : f32
    %198 = vector.broadcast %cst_64 : f32 to vector<16x1xf32>
    %199 = arith.divf %197, %198 : vector<16x1xf32>
    %200 = vector.broadcast %199 : vector<16x1xf32> to vector<16x64xf32>
    %201 = arith.subf %191, %200 : vector<16x64xf32>
    %202 = arith.mulf %201, %201 : vector<16x64xf32>
    %cst_65 = arith.constant dense<0.000000e+00> : vector<16xf32>
    %203 = vector.multi_reduction <add>, %202, %cst_65 [1] : vector<16x64xf32> to vector<16xf32>
    %204 = vector.shape_cast %203 : vector<16xf32> to vector<16x1xf32>
    %cst_66 = arith.constant 6.400000e+01 : f32
    %205 = vector.broadcast %cst_66 : f32 to vector<16x1xf32>
    %206 = arith.divf %204, %205 : vector<16x1xf32>
    %cst_67 = arith.constant 9.99999997E-7 : f32
    %207 = vector.broadcast %cst_67 : f32 to vector<16x1xf32>
    %208 = arith.addf %206, %207 : vector<16x1xf32>
    %209 = math.rsqrt %208 : vector<16x1xf32>
    %210 = arith.mulf %191, %4 : vector<16x64xf32>
    %211 = arith.mulf %194, %6 : vector<16x64xf32>
    %212 = arith.addf %210, %211 : vector<16x64xf32>
    %213 = vector.broadcast %199 : vector<16x1xf32> to vector<16x64xf32>
    %214 = arith.mulf %213, %8 : vector<16x64xf32>
    %215 = arith.subf %212, %214 : vector<16x64xf32>
    %216 = vector.broadcast %209 : vector<16x1xf32> to vector<16x64xf32>
    %217 = arith.mulf %216, %215 : vector<16x64xf32>
    %cst_68 = arith.constant dense<0.000000e+00> : vector<16xf32>
    %218 = vector.multi_reduction <add>, %192, %cst_68 [1] : vector<16x64xf32> to vector<16xf32>
    %219 = vector.shape_cast %218 : vector<16xf32> to vector<16x1xf32>
    %cst_69 = arith.constant 6.400000e+01 : f32
    %220 = vector.broadcast %cst_69 : f32 to vector<16x1xf32>
    %221 = arith.divf %219, %220 : vector<16x1xf32>
    %222 = vector.broadcast %221 : vector<16x1xf32> to vector<16x64xf32>
    %223 = arith.subf %192, %222 : vector<16x64xf32>
    %224 = arith.mulf %223, %223 : vector<16x64xf32>
    %cst_70 = arith.constant dense<0.000000e+00> : vector<16xf32>
    %225 = vector.multi_reduction <add>, %224, %cst_70 [1] : vector<16x64xf32> to vector<16xf32>
    %226 = vector.shape_cast %225 : vector<16xf32> to vector<16x1xf32>
    %cst_71 = arith.constant 6.400000e+01 : f32
    %227 = vector.broadcast %cst_71 : f32 to vector<16x1xf32>
    %228 = arith.divf %226, %227 : vector<16x1xf32>
    %cst_72 = arith.constant 9.99999997E-7 : f32
    %229 = vector.broadcast %cst_72 : f32 to vector<16x1xf32>
    %230 = arith.addf %228, %229 : vector<16x1xf32>
    %231 = math.rsqrt %230 : vector<16x1xf32>
    %232 = arith.mulf %192, %4 : vector<16x64xf32>
    %233 = arith.mulf %195, %6 : vector<16x64xf32>
    %234 = arith.addf %232, %233 : vector<16x64xf32>
    %235 = vector.broadcast %221 : vector<16x1xf32> to vector<16x64xf32>
    %236 = arith.mulf %235, %8 : vector<16x64xf32>
    %237 = arith.subf %234, %236 : vector<16x64xf32>
    %238 = vector.broadcast %231 : vector<16x1xf32> to vector<16x64xf32>
    %239 = arith.mulf %238, %237 : vector<16x64xf32>
    %240 = arith.truncf %217 : vector<16x64xf32> to vector<16x64xbf16>
    %241 = arith.truncf %239 : vector<16x64xf32> to vector<16x64xbf16>
    %cst_73 = arith.constant dense<0.000000e+00> : vector<16x16xf32>
    %242 = tpu.matmul %240, %241, %cst_73 {dimension_numbers = #tpu.dot_dimension_numbers<[1], [1], [0], [0], [0, 0, 1, 0], [], []>} : vector<16x64xbf16>, vector<16x64xbf16>, vector<16x16xf32> -> vector<16x16xf32>
    %cst_74 = arith.constant 1.250000e-01 : f32
    %243 = vector.broadcast %cst_74 : f32 to vector<16x16xf32>
    %244 = arith.mulf %242, %243 : vector<16x16xf32>
    %cst_75 = arith.constant dense<0xFF800000> : vector<16xf32>
    %245 = vector.multi_reduction <maximumf>, %244, %cst_75 [1] : vector<16x16xf32> to vector<16xf32>
    %246 = vector.shape_cast %245 : vector<16xf32> to vector<16x1xf32>
    %247 = vector.broadcast %246 : vector<16x1xf32> to vector<16x16xf32>
    %248 = arith.subf %244, %247 : vector<16x16xf32>
    %249 = math.exp %248 : vector<16x16xf32>
    %cst_76 = arith.constant dense<0.000000e+00> : vector<16xf32>
    %250 = vector.multi_reduction <add>, %249, %cst_76 [1] : vector<16x16xf32> to vector<16xf32>
    %251 = vector.shape_cast %250 : vector<16xf32> to vector<16x1xf32>
    %252 = tpu.reciprocal %251 {approx = true} : vector<16x1xf32> -> vector<16x1xf32>
    %253 = vector.broadcast %252 : vector<16x1xf32> to vector<16x16xf32>
    %254 = arith.mulf %249, %253 : vector<16x16xf32>
    %255 = arith.truncf %193 : vector<16x64xf32> to vector<16x64xbf16>
    %256 = arith.truncf %254 : vector<16x16xf32> to vector<16x16xbf16>
    %cst_77 = arith.constant dense<0.000000e+00> : vector<16x64xf32>
    %257 = tpu.matmul %256, %255, %cst_77 {dimension_numbers = #tpu.dot_dimension_numbers<[1], [0], [0], [1], [0, 0, 1, 1], [], []>} : vector<16x16xbf16>, vector<16x64xbf16>, vector<16x64xf32> -> vector<16x64xf32>
    %258 = vector.extract_strided_slice %51 {offsets = [16, 64], sizes = [16, 64], strides = [1, 1]} : vector<32x384xf32> to vector<16x64xf32>
    %259 = vector.extract_strided_slice %51 {offsets = [16, 192], sizes = [16, 64], strides = [1, 1]} : vector<32x384xf32> to vector<16x64xf32>
    %260 = vector.extract_strided_slice %51 {offsets = [16, 320], sizes = [16, 64], strides = [1, 1]} : vector<32x384xf32> to vector<16x64xf32>
    %261 = vector.extract_strided_slice %55 {offsets = [16, 64], sizes = [16, 64], strides = [1, 1]} : vector<32x256xf32> to vector<16x64xf32>
    %262 = vector.extract_strided_slice %55 {offsets = [16, 192], sizes = [16, 64], strides = [1, 1]} : vector<32x256xf32> to vector<16x64xf32>
    %cst_78 = arith.constant dense<0.000000e+00> : vector<16xf32>
    %263 = vector.multi_reduction <add>, %258, %cst_78 [1] : vector<16x64xf32> to vector<16xf32>
    %264 = vector.shape_cast %263 : vector<16xf32> to vector<16x1xf32>
    %cst_79 = arith.constant 6.400000e+01 : f32
    %265 = vector.broadcast %cst_79 : f32 to vector<16x1xf32>
    %266 = arith.divf %264, %265 : vector<16x1xf32>
    %267 = vector.broadcast %266 : vector<16x1xf32> to vector<16x64xf32>
    %268 = arith.subf %258, %267 : vector<16x64xf32>
    %269 = arith.mulf %268, %268 : vector<16x64xf32>
    %cst_80 = arith.constant dense<0.000000e+00> : vector<16xf32>
    %270 = vector.multi_reduction <add>, %269, %cst_80 [1] : vector<16x64xf32> to vector<16xf32>
    %271 = vector.shape_cast %270 : vector<16xf32> to vector<16x1xf32>
    %cst_81 = arith.constant 6.400000e+01 : f32
    %272 = vector.broadcast %cst_81 : f32 to vector<16x1xf32>
    %273 = arith.divf %271, %272 : vector<16x1xf32>
    %cst_82 = arith.constant 9.99999997E-7 : f32
    %274 = vector.broadcast %cst_82 : f32 to vector<16x1xf32>
    %275 = arith.addf %273, %274 : vector<16x1xf32>
    %276 = math.rsqrt %275 : vector<16x1xf32>
    %277 = arith.mulf %258, %4 : vector<16x64xf32>
    %278 = arith.mulf %261, %6 : vector<16x64xf32>
    %279 = arith.addf %277, %278 : vector<16x64xf32>
    %280 = vector.broadcast %266 : vector<16x1xf32> to vector<16x64xf32>
    %281 = arith.mulf %280, %8 : vector<16x64xf32>
    %282 = arith.subf %279, %281 : vector<16x64xf32>
    %283 = vector.broadcast %276 : vector<16x1xf32> to vector<16x64xf32>
    %284 = arith.mulf %283, %282 : vector<16x64xf32>
    %cst_83 = arith.constant dense<0.000000e+00> : vector<16xf32>
    %285 = vector.multi_reduction <add>, %259, %cst_83 [1] : vector<16x64xf32> to vector<16xf32>
    %286 = vector.shape_cast %285 : vector<16xf32> to vector<16x1xf32>
    %cst_84 = arith.constant 6.400000e+01 : f32
    %287 = vector.broadcast %cst_84 : f32 to vector<16x1xf32>
    %288 = arith.divf %286, %287 : vector<16x1xf32>
    %289 = vector.broadcast %288 : vector<16x1xf32> to vector<16x64xf32>
    %290 = arith.subf %259, %289 : vector<16x64xf32>
    %291 = arith.mulf %290, %290 : vector<16x64xf32>
    %cst_85 = arith.constant dense<0.000000e+00> : vector<16xf32>
    %292 = vector.multi_reduction <add>, %291, %cst_85 [1] : vector<16x64xf32> to vector<16xf32>
    %293 = vector.shape_cast %292 : vector<16xf32> to vector<16x1xf32>
    %cst_86 = arith.constant 6.400000e+01 : f32
    %294 = vector.broadcast %cst_86 : f32 to vector<16x1xf32>
    %295 = arith.divf %293, %294 : vector<16x1xf32>
    %cst_87 = arith.constant 9.99999997E-7 : f32
    %296 = vector.broadcast %cst_87 : f32 to vector<16x1xf32>
    %297 = arith.addf %295, %296 : vector<16x1xf32>
    %298 = math.rsqrt %297 : vector<16x1xf32>
    %299 = arith.mulf %259, %4 : vector<16x64xf32>
    %300 = arith.mulf %262, %6 : vector<16x64xf32>
    %301 = arith.addf %299, %300 : vector<16x64xf32>
    %302 = vector.broadcast %288 : vector<16x1xf32> to vector<16x64xf32>
    %303 = arith.mulf %302, %8 : vector<16x64xf32>
    %304 = arith.subf %301, %303 : vector<16x64xf32>
    %305 = vector.broadcast %298 : vector<16x1xf32> to vector<16x64xf32>
    %306 = arith.mulf %305, %304 : vector<16x64xf32>
    %307 = arith.truncf %284 : vector<16x64xf32> to vector<16x64xbf16>
    %308 = arith.truncf %306 : vector<16x64xf32> to vector<16x64xbf16>
    %cst_88 = arith.constant dense<0.000000e+00> : vector<16x16xf32>
    %309 = tpu.matmul %307, %308, %cst_88 {dimension_numbers = #tpu.dot_dimension_numbers<[1], [1], [0], [0], [0, 0, 1, 0], [], []>} : vector<16x64xbf16>, vector<16x64xbf16>, vector<16x16xf32> -> vector<16x16xf32>
    %cst_89 = arith.constant 1.250000e-01 : f32
    %310 = vector.broadcast %cst_89 : f32 to vector<16x16xf32>
    %311 = arith.mulf %309, %310 : vector<16x16xf32>
    %cst_90 = arith.constant dense<0xFF800000> : vector<16xf32>
    %312 = vector.multi_reduction <maximumf>, %311, %cst_90 [1] : vector<16x16xf32> to vector<16xf32>
    %313 = vector.shape_cast %312 : vector<16xf32> to vector<16x1xf32>
    %314 = vector.broadcast %313 : vector<16x1xf32> to vector<16x16xf32>
    %315 = arith.subf %311, %314 : vector<16x16xf32>
    %316 = math.exp %315 : vector<16x16xf32>
    %cst_91 = arith.constant dense<0.000000e+00> : vector<16xf32>
    %317 = vector.multi_reduction <add>, %316, %cst_91 [1] : vector<16x16xf32> to vector<16xf32>
    %318 = vector.shape_cast %317 : vector<16xf32> to vector<16x1xf32>
    %319 = tpu.reciprocal %318 {approx = true} : vector<16x1xf32> -> vector<16x1xf32>
    %320 = vector.broadcast %319 : vector<16x1xf32> to vector<16x16xf32>
    %321 = arith.mulf %316, %320 : vector<16x16xf32>
    %322 = arith.truncf %260 : vector<16x64xf32> to vector<16x64xbf16>
    %323 = arith.truncf %321 : vector<16x16xf32> to vector<16x16xbf16>
    %cst_92 = arith.constant dense<0.000000e+00> : vector<16x64xf32>
    %324 = tpu.matmul %323, %322, %cst_92 {dimension_numbers = #tpu.dot_dimension_numbers<[1], [0], [0], [1], [0, 0, 1, 1], [], []>} : vector<16x16xbf16>, vector<16x64xbf16>, vector<16x64xf32> -> vector<16x64xf32>
    %325 = tpu.concatenate %257, %324 in 1 : vector<16x64xf32>, vector<16x64xf32> -> vector<16x128xf32>
    %326 = tpu.concatenate %190, %325 in 0 : vector<16x128xf32>, vector<16x128xf32> -> vector<32x128xf32>
    %c0_93 = arith.constant 0 : index
    %c0_94 = arith.constant 0 : index
    %c0_95 = arith.constant 0 : index
    %327 = vector.load %arg9[%c0_93, %c0_94, %c0_95] : memref<2x128x128xbf16, #tpu.memory_space<vmem>>, vector<1x128x128xbf16>
    %328 = vector.shape_cast %327 : vector<1x128x128xbf16> to vector<128x128xbf16>
    %329 = arith.truncf %326 : vector<32x128xf32> to vector<32x128xbf16>
    %cst_96 = arith.constant dense<0.000000e+00> : vector<32x128xf32>
    %330 = tpu.matmul %329, %328, %cst_96 {dimension_numbers = #tpu.dot_dimension_numbers<[1], [0], [0], [1], [0, 0, 1, 1], [], []>} : vector<32x128xbf16>, vector<128x128xbf16>, vector<32x128xf32> -> vector<32x128xf32>
    %331 = arith.mulf %18, %330 : vector<32x128xf32>
    %332 = arith.addf %0, %331 : vector<32x128xf32>
    %cst_97 = arith.constant dense<0.000000e+00> : vector<32xf32>
    %333 = vector.multi_reduction <add>, %332, %cst_97 [1] : vector<32x128xf32> to vector<32xf32>
    %334 = vector.shape_cast %333 : vector<32xf32> to vector<32x1xf32>
    %cst_98 = arith.constant 1.280000e+02 : f32
    %335 = vector.broadcast %cst_98 : f32 to vector<32x1xf32>
    %336 = arith.divf %334, %335 : vector<32x1xf32>
    %337 = vector.broadcast %336 : vector<32x1xf32> to vector<32x128xf32>
    %338 = arith.subf %332, %337 : vector<32x128xf32>
    %339 = arith.mulf %338, %338 : vector<32x128xf32>
    %cst_99 = arith.constant dense<0.000000e+00> : vector<32xf32>
    %340 = vector.multi_reduction <add>, %339, %cst_99 [1] : vector<32x128xf32> to vector<32xf32>
    %341 = vector.shape_cast %340 : vector<32xf32> to vector<32x1xf32>
    %cst_100 = arith.constant 1.280000e+02 : f32
    %342 = vector.broadcast %cst_100 : f32 to vector<32x1xf32>
    %343 = arith.divf %341, %342 : vector<32x1xf32>
    %344 = vector.broadcast %336 : vector<32x1xf32> to vector<32x128xf32>
    %345 = arith.subf %332, %344 : vector<32x128xf32>
    %cst_101 = arith.constant 9.99999974E-6 : f32
    %346 = vector.broadcast %cst_101 : f32 to vector<32x1xf32>
    %347 = arith.addf %343, %346 : vector<32x1xf32>
    %348 = math.rsqrt %347 : vector<32x1xf32>
    %349 = vector.broadcast %348 : vector<32x1xf32> to vector<32x128xf32>
    %350 = arith.mulf %345, %349 : vector<32x128xf32>
    %c0_102 = arith.constant 0 : index
    %c0_103 = arith.constant 0 : index
    %c0_104 = arith.constant 0 : index
    %351 = vector.load %arg10[%c0_102, %c0_103, %c0_104] : memref<2x1x128xf32, #tpu.memory_space<vmem>>, vector<1x1x128xf32>
    %352 = vector.shape_cast %351 : vector<1x1x128xf32> to vector<1x128xf32>
    %353 = vector.broadcast %352 : vector<1x128xf32> to vector<32x128xf32>
    %354 = arith.mulf %350, %353 : vector<32x128xf32>
    %cst_105 = arith.constant 1.000000e+00 : f32
    %355 = vector.broadcast %cst_105 : f32 to vector<32x128xf32>
    %356 = arith.addf %355, %20 : vector<32x128xf32>
    %357 = arith.mulf %354, %356 : vector<32x128xf32>
    %358 = arith.addf %357, %19 : vector<32x128xf32>
    %c0_106 = arith.constant 0 : index
    %c0_107 = arith.constant 0 : index
    %c0_108 = arith.constant 0 : index
    %359 = vector.load %arg11[%c0_106, %c0_107, %c0_108] : memref<2x128x512xbf16, #tpu.memory_space<vmem>>, vector<1x128x512xbf16>
    %360 = vector.shape_cast %359 : vector<1x128x512xbf16> to vector<128x512xbf16>
    %c0_109 = arith.constant 0 : index
    %c0_110 = arith.constant 0 : index
    %c0_111 = arith.constant 0 : index
    %361 = vector.load %arg12[%c0_109, %c0_110, %c0_111] : memref<2x1x512xf32, #tpu.memory_space<vmem>>, vector<1x1x512xf32>
    %362 = vector.shape_cast %361 : vector<1x1x512xf32> to vector<1x512xf32>
    %363 = arith.truncf %358 : vector<32x128xf32> to vector<32x128xbf16>
    %cst_112 = arith.constant dense<0.000000e+00> : vector<32x512xf32>
    %364 = tpu.matmul %363, %360, %cst_112 {dimension_numbers = #tpu.dot_dimension_numbers<[1], [0], [0], [1], [0, 0, 1, 1], [], []>} : vector<32x128xbf16>, vector<128x512xbf16>, vector<32x512xf32> -> vector<32x512xf32>
    %365 = vector.broadcast %362 : vector<1x512xf32> to vector<32x512xf32>
    %366 = arith.addf %364, %365 : vector<32x512xf32>
    %cst_113 = arith.constant 5.000000e-01 : f32
    %367 = vector.broadcast %cst_113 : f32 to vector<32x512xf32>
    %368 = arith.mulf %367, %366 : vector<32x512xf32>
    %cst_114 = arith.constant 4.471500e-02 : f32
    %369 = vector.broadcast %cst_114 : f32 to vector<32x512xf32>
    %370 = arith.mulf %369, %366 : vector<32x512xf32>
    %371 = arith.mulf %370, %366 : vector<32x512xf32>
    %372 = arith.mulf %371, %366 : vector<32x512xf32>
    %373 = arith.addf %366, %372 : vector<32x512xf32>
    %cst_115 = arith.constant 0.797884583 : f32
    %374 = vector.broadcast %cst_115 : f32 to vector<32x512xf32>
    %375 = arith.mulf %374, %373 : vector<32x512xf32>
    %376 = math.tanh %375 : vector<32x512xf32>
    %cst_116 = arith.constant 1.000000e+00 : f32
    %377 = vector.broadcast %cst_116 : f32 to vector<32x512xf32>
    %378 = arith.addf %377, %376 : vector<32x512xf32>
    %379 = arith.mulf %368, %378 : vector<32x512xf32>
    %c0_117 = arith.constant 0 : index
    %c0_118 = arith.constant 0 : index
    %c0_119 = arith.constant 0 : index
    %380 = vector.load %arg13[%c0_117, %c0_118, %c0_119] : memref<2x512x128xbf16, #tpu.memory_space<vmem>>, vector<1x512x128xbf16>
    %381 = vector.shape_cast %380 : vector<1x512x128xbf16> to vector<512x128xbf16>
    %c0_120 = arith.constant 0 : index
    %c0_121 = arith.constant 0 : index
    %c0_122 = arith.constant 0 : index
    %382 = vector.load %arg14[%c0_120, %c0_121, %c0_122] : memref<2x1x128xf32, #tpu.memory_space<vmem>>, vector<1x1x128xf32>
    %383 = vector.shape_cast %382 : vector<1x1x128xf32> to vector<1x128xf32>
    %384 = arith.truncf %379 : vector<32x512xf32> to vector<32x512xbf16>
    %cst_123 = arith.constant dense<0.000000e+00> : vector<32x128xf32>
    %385 = tpu.matmul %384, %381, %cst_123 {dimension_numbers = #tpu.dot_dimension_numbers<[1], [0], [0], [1], [0, 0, 1, 1], [], []>} : vector<32x512xbf16>, vector<512x128xbf16>, vector<32x128xf32> -> vector<32x128xf32>
    %386 = vector.broadcast %383 : vector<1x128xf32> to vector<32x128xf32>
    %387 = arith.addf %385, %386 : vector<32x128xf32>
    %388 = arith.mulf %21, %387 : vector<32x128xf32>
    %389 = arith.addf %332, %388 : vector<32x128xf32>
    %c1_124 = arith.constant 1 : index
    %c0_125 = arith.constant 0 : index
    %c0_126 = arith.constant 0 : index
    %390 = vector.load %arg4[%c1_124, %c0_125, %c0_126] : memref<2x128x768xbf16, #tpu.memory_space<vmem>>, vector<1x128x768xbf16>
    %391 = vector.shape_cast %390 : vector<1x128x768xbf16> to vector<128x768xbf16>
    %cst_127 = arith.constant dense<0.000000e+00> : vector<32x768xf32>
    %392 = tpu.matmul %2, %391, %cst_127 {dimension_numbers = #tpu.dot_dimension_numbers<[1], [0], [0], [1], [0, 0, 1, 1], [], []>} : vector<32x128xbf16>, vector<128x768xbf16>, vector<32x768xf32> -> vector<32x768xf32>
    %c1_128 = arith.constant 1 : index
    %c0_129 = arith.constant 0 : index
    %c0_130 = arith.constant 0 : index
    %393 = vector.load %arg5[%c1_128, %c0_129, %c0_130] : memref<2x1x768xf32, #tpu.memory_space<vmem>>, vector<1x1x768xf32>
    %394 = vector.shape_cast %393 : vector<1x1x768xf32> to vector<1x768xf32>
    %395 = vector.broadcast %394 : vector<1x768xf32> to vector<32x768xf32>
    %396 = arith.addf %392, %395 : vector<32x768xf32>
    %397 = vector.extract_strided_slice %396 {offsets = [0, 0], sizes = [32, 128], strides = [1, 1]} : vector<32x768xf32> to vector<32x128xf32>
    %398 = vector.extract_strided_slice %396 {offsets = [0, 128], sizes = [32, 128], strides = [1, 1]} : vector<32x768xf32> to vector<32x128xf32>
    %399 = vector.extract_strided_slice %396 {offsets = [0, 256], sizes = [32, 128], strides = [1, 1]} : vector<32x768xf32> to vector<32x128xf32>
    %400 = vector.extract_strided_slice %396 {offsets = [0, 384], sizes = [32, 128], strides = [1, 1]} : vector<32x768xf32> to vector<32x128xf32>
    %401 = vector.extract_strided_slice %396 {offsets = [0, 512], sizes = [32, 128], strides = [1, 1]} : vector<32x768xf32> to vector<32x128xf32>
    %402 = vector.extract_strided_slice %396 {offsets = [0, 640], sizes = [32, 128], strides = [1, 1]} : vector<32x768xf32> to vector<32x128xf32>
    %cst_131 = arith.constant dense<0.000000e+00> : vector<32xf32>
    %403 = vector.multi_reduction <add>, %389, %cst_131 [1] : vector<32x128xf32> to vector<32xf32>
    %404 = vector.shape_cast %403 : vector<32xf32> to vector<32x1xf32>
    %cst_132 = arith.constant 1.280000e+02 : f32
    %405 = vector.broadcast %cst_132 : f32 to vector<32x1xf32>
    %406 = arith.divf %404, %405 : vector<32x1xf32>
    %407 = vector.broadcast %406 : vector<32x1xf32> to vector<32x128xf32>
    %408 = arith.subf %389, %407 : vector<32x128xf32>
    %409 = arith.mulf %408, %408 : vector<32x128xf32>
    %cst_133 = arith.constant dense<0.000000e+00> : vector<32xf32>
    %410 = vector.multi_reduction <add>, %409, %cst_133 [1] : vector<32x128xf32> to vector<32xf32>
    %411 = vector.shape_cast %410 : vector<32xf32> to vector<32x1xf32>
    %cst_134 = arith.constant 1.280000e+02 : f32
    %412 = vector.broadcast %cst_134 : f32 to vector<32x1xf32>
    %413 = arith.divf %411, %412 : vector<32x1xf32>
    %414 = vector.broadcast %406 : vector<32x1xf32> to vector<32x128xf32>
    %415 = arith.subf %389, %414 : vector<32x128xf32>
    %cst_135 = arith.constant 9.99999974E-6 : f32
    %416 = vector.broadcast %cst_135 : f32 to vector<32x1xf32>
    %417 = arith.addf %413, %416 : vector<32x1xf32>
    %418 = math.rsqrt %417 : vector<32x1xf32>
    %419 = vector.broadcast %418 : vector<32x1xf32> to vector<32x128xf32>
    %420 = arith.mulf %415, %419 : vector<32x128xf32>
    %c1_136 = arith.constant 1 : index
    %c0_137 = arith.constant 0 : index
    %c0_138 = arith.constant 0 : index
    %421 = vector.load %arg6[%c1_136, %c0_137, %c0_138] : memref<2x1x128xf32, #tpu.memory_space<vmem>>, vector<1x1x128xf32>
    %422 = vector.shape_cast %421 : vector<1x1x128xf32> to vector<1x128xf32>
    %423 = vector.broadcast %422 : vector<1x128xf32> to vector<32x128xf32>
    %424 = arith.mulf %420, %423 : vector<32x128xf32>
    %cst_139 = arith.constant 1.000000e+00 : f32
    %425 = vector.broadcast %cst_139 : f32 to vector<32x128xf32>
    %426 = arith.addf %425, %398 : vector<32x128xf32>
    %427 = arith.mulf %424, %426 : vector<32x128xf32>
    %428 = arith.addf %427, %397 : vector<32x128xf32>
    %c1_140 = arith.constant 1 : index
    %c0_141 = arith.constant 0 : index
    %c0_142 = arith.constant 0 : index
    %429 = vector.load %arg7[%c1_140, %c0_141, %c0_142] : memref<2x128x384xbf16, #tpu.memory_space<vmem>>, vector<1x128x384xbf16>
    %430 = vector.shape_cast %429 : vector<1x128x384xbf16> to vector<128x384xbf16>
    %431 = arith.truncf %428 : vector<32x128xf32> to vector<32x128xbf16>
    %cst_143 = arith.constant dense<0.000000e+00> : vector<32x384xf32>
    %432 = tpu.matmul %431, %430, %cst_143 {dimension_numbers = #tpu.dot_dimension_numbers<[1], [0], [0], [1], [0, 0, 1, 1], [], []>} : vector<32x128xbf16>, vector<128x384xbf16>, vector<32x384xf32> -> vector<32x384xf32>
    %c1_144 = arith.constant 1 : index
    %c0_145 = arith.constant 0 : index
    %c0_146 = arith.constant 0 : index
    %433 = vector.load %arg8[%c1_144, %c0_145, %c0_146] : memref<2x128x256xbf16, #tpu.memory_space<vmem>>, vector<1x128x256xbf16>
    %434 = vector.shape_cast %433 : vector<1x128x256xbf16> to vector<128x256xbf16>
    %435 = arith.truncf %428 : vector<32x128xf32> to vector<32x128xbf16>
    %cst_147 = arith.constant dense<0.000000e+00> : vector<32x256xf32>
    %436 = tpu.matmul %435, %434, %cst_147 {dimension_numbers = #tpu.dot_dimension_numbers<[1], [0], [0], [1], [0, 0, 1, 1], [], []>} : vector<32x128xbf16>, vector<128x256xbf16>, vector<32x256xf32> -> vector<32x256xf32>
    %437 = vector.extract_strided_slice %432 {offsets = [0, 0], sizes = [16, 64], strides = [1, 1]} : vector<32x384xf32> to vector<16x64xf32>
    %438 = vector.extract_strided_slice %432 {offsets = [0, 128], sizes = [16, 64], strides = [1, 1]} : vector<32x384xf32> to vector<16x64xf32>
    %439 = vector.extract_strided_slice %432 {offsets = [0, 256], sizes = [16, 64], strides = [1, 1]} : vector<32x384xf32> to vector<16x64xf32>
    %440 = vector.extract_strided_slice %436 {offsets = [0, 0], sizes = [16, 64], strides = [1, 1]} : vector<32x256xf32> to vector<16x64xf32>
    %441 = vector.extract_strided_slice %436 {offsets = [0, 128], sizes = [16, 64], strides = [1, 1]} : vector<32x256xf32> to vector<16x64xf32>
    %cst_148 = arith.constant dense<0.000000e+00> : vector<16xf32>
    %442 = vector.multi_reduction <add>, %437, %cst_148 [1] : vector<16x64xf32> to vector<16xf32>
    %443 = vector.shape_cast %442 : vector<16xf32> to vector<16x1xf32>
    %cst_149 = arith.constant 6.400000e+01 : f32
    %444 = vector.broadcast %cst_149 : f32 to vector<16x1xf32>
    %445 = arith.divf %443, %444 : vector<16x1xf32>
    %446 = vector.broadcast %445 : vector<16x1xf32> to vector<16x64xf32>
    %447 = arith.subf %437, %446 : vector<16x64xf32>
    %448 = arith.mulf %447, %447 : vector<16x64xf32>
    %cst_150 = arith.constant dense<0.000000e+00> : vector<16xf32>
    %449 = vector.multi_reduction <add>, %448, %cst_150 [1] : vector<16x64xf32> to vector<16xf32>
    %450 = vector.shape_cast %449 : vector<16xf32> to vector<16x1xf32>
    %cst_151 = arith.constant 6.400000e+01 : f32
    %451 = vector.broadcast %cst_151 : f32 to vector<16x1xf32>
    %452 = arith.divf %450, %451 : vector<16x1xf32>
    %cst_152 = arith.constant 9.99999997E-7 : f32
    %453 = vector.broadcast %cst_152 : f32 to vector<16x1xf32>
    %454 = arith.addf %452, %453 : vector<16x1xf32>
    %455 = math.rsqrt %454 : vector<16x1xf32>
    %456 = arith.mulf %437, %4 : vector<16x64xf32>
    %457 = arith.mulf %440, %6 : vector<16x64xf32>
    %458 = arith.addf %456, %457 : vector<16x64xf32>
    %459 = vector.broadcast %445 : vector<16x1xf32> to vector<16x64xf32>
    %460 = arith.mulf %459, %8 : vector<16x64xf32>
    %461 = arith.subf %458, %460 : vector<16x64xf32>
    %462 = vector.broadcast %455 : vector<16x1xf32> to vector<16x64xf32>
    %463 = arith.mulf %462, %461 : vector<16x64xf32>
    %cst_153 = arith.constant dense<0.000000e+00> : vector<16xf32>
    %464 = vector.multi_reduction <add>, %438, %cst_153 [1] : vector<16x64xf32> to vector<16xf32>
    %465 = vector.shape_cast %464 : vector<16xf32> to vector<16x1xf32>
    %cst_154 = arith.constant 6.400000e+01 : f32
    %466 = vector.broadcast %cst_154 : f32 to vector<16x1xf32>
    %467 = arith.divf %465, %466 : vector<16x1xf32>
    %468 = vector.broadcast %467 : vector<16x1xf32> to vector<16x64xf32>
    %469 = arith.subf %438, %468 : vector<16x64xf32>
    %470 = arith.mulf %469, %469 : vector<16x64xf32>
    %cst_155 = arith.constant dense<0.000000e+00> : vector<16xf32>
    %471 = vector.multi_reduction <add>, %470, %cst_155 [1] : vector<16x64xf32> to vector<16xf32>
    %472 = vector.shape_cast %471 : vector<16xf32> to vector<16x1xf32>
    %cst_156 = arith.constant 6.400000e+01 : f32
    %473 = vector.broadcast %cst_156 : f32 to vector<16x1xf32>
    %474 = arith.divf %472, %473 : vector<16x1xf32>
    %cst_157 = arith.constant 9.99999997E-7 : f32
    %475 = vector.broadcast %cst_157 : f32 to vector<16x1xf32>
    %476 = arith.addf %474, %475 : vector<16x1xf32>
    %477 = math.rsqrt %476 : vector<16x1xf32>
    %478 = arith.mulf %438, %4 : vector<16x64xf32>
    %479 = arith.mulf %441, %6 : vector<16x64xf32>
    %480 = arith.addf %478, %479 : vector<16x64xf32>
    %481 = vector.broadcast %467 : vector<16x1xf32> to vector<16x64xf32>
    %482 = arith.mulf %481, %8 : vector<16x64xf32>
    %483 = arith.subf %480, %482 : vector<16x64xf32>
    %484 = vector.broadcast %477 : vector<16x1xf32> to vector<16x64xf32>
    %485 = arith.mulf %484, %483 : vector<16x64xf32>
    %486 = arith.truncf %463 : vector<16x64xf32> to vector<16x64xbf16>
    %487 = arith.truncf %485 : vector<16x64xf32> to vector<16x64xbf16>
    %cst_158 = arith.constant dense<0.000000e+00> : vector<16x16xf32>
    %488 = tpu.matmul %486, %487, %cst_158 {dimension_numbers = #tpu.dot_dimension_numbers<[1], [1], [0], [0], [0, 0, 1, 0], [], []>} : vector<16x64xbf16>, vector<16x64xbf16>, vector<16x16xf32> -> vector<16x16xf32>
    %cst_159 = arith.constant 1.250000e-01 : f32
    %489 = vector.broadcast %cst_159 : f32 to vector<16x16xf32>
    %490 = arith.mulf %488, %489 : vector<16x16xf32>
    %cst_160 = arith.constant dense<0xFF800000> : vector<16xf32>
    %491 = vector.multi_reduction <maximumf>, %490, %cst_160 [1] : vector<16x16xf32> to vector<16xf32>
    %492 = vector.shape_cast %491 : vector<16xf32> to vector<16x1xf32>
    %493 = vector.broadcast %492 : vector<16x1xf32> to vector<16x16xf32>
    %494 = arith.subf %490, %493 : vector<16x16xf32>
    %495 = math.exp %494 : vector<16x16xf32>
    %cst_161 = arith.constant dense<0.000000e+00> : vector<16xf32>
    %496 = vector.multi_reduction <add>, %495, %cst_161 [1] : vector<16x16xf32> to vector<16xf32>
    %497 = vector.shape_cast %496 : vector<16xf32> to vector<16x1xf32>
    %498 = tpu.reciprocal %497 {approx = true} : vector<16x1xf32> -> vector<16x1xf32>
    %499 = vector.broadcast %498 : vector<16x1xf32> to vector<16x16xf32>
    %500 = arith.mulf %495, %499 : vector<16x16xf32>
    %501 = arith.truncf %439 : vector<16x64xf32> to vector<16x64xbf16>
    %502 = arith.truncf %500 : vector<16x16xf32> to vector<16x16xbf16>
    %cst_162 = arith.constant dense<0.000000e+00> : vector<16x64xf32>
    %503 = tpu.matmul %502, %501, %cst_162 {dimension_numbers = #tpu.dot_dimension_numbers<[1], [0], [0], [1], [0, 0, 1, 1], [], []>} : vector<16x16xbf16>, vector<16x64xbf16>, vector<16x64xf32> -> vector<16x64xf32>
    %504 = vector.extract_strided_slice %432 {offsets = [0, 64], sizes = [16, 64], strides = [1, 1]} : vector<32x384xf32> to vector<16x64xf32>
    %505 = vector.extract_strided_slice %432 {offsets = [0, 192], sizes = [16, 64], strides = [1, 1]} : vector<32x384xf32> to vector<16x64xf32>
    %506 = vector.extract_strided_slice %432 {offsets = [0, 320], sizes = [16, 64], strides = [1, 1]} : vector<32x384xf32> to vector<16x64xf32>
    %507 = vector.extract_strided_slice %436 {offsets = [0, 64], sizes = [16, 64], strides = [1, 1]} : vector<32x256xf32> to vector<16x64xf32>
    %508 = vector.extract_strided_slice %436 {offsets = [0, 192], sizes = [16, 64], strides = [1, 1]} : vector<32x256xf32> to vector<16x64xf32>
    %cst_163 = arith.constant dense<0.000000e+00> : vector<16xf32>
    %509 = vector.multi_reduction <add>, %504, %cst_163 [1] : vector<16x64xf32> to vector<16xf32>
    %510 = vector.shape_cast %509 : vector<16xf32> to vector<16x1xf32>
    %cst_164 = arith.constant 6.400000e+01 : f32
    %511 = vector.broadcast %cst_164 : f32 to vector<16x1xf32>
    %512 = arith.divf %510, %511 : vector<16x1xf32>
    %513 = vector.broadcast %512 : vector<16x1xf32> to vector<16x64xf32>
    %514 = arith.subf %504, %513 : vector<16x64xf32>
    %515 = arith.mulf %514, %514 : vector<16x64xf32>
    %cst_165 = arith.constant dense<0.000000e+00> : vector<16xf32>
    %516 = vector.multi_reduction <add>, %515, %cst_165 [1] : vector<16x64xf32> to vector<16xf32>
    %517 = vector.shape_cast %516 : vector<16xf32> to vector<16x1xf32>
    %cst_166 = arith.constant 6.400000e+01 : f32
    %518 = vector.broadcast %cst_166 : f32 to vector<16x1xf32>
    %519 = arith.divf %517, %518 : vector<16x1xf32>
    %cst_167 = arith.constant 9.99999997E-7 : f32
    %520 = vector.broadcast %cst_167 : f32 to vector<16x1xf32>
    %521 = arith.addf %519, %520 : vector<16x1xf32>
    %522 = math.rsqrt %521 : vector<16x1xf32>
    %523 = arith.mulf %504, %4 : vector<16x64xf32>
    %524 = arith.mulf %507, %6 : vector<16x64xf32>
    %525 = arith.addf %523, %524 : vector<16x64xf32>
    %526 = vector.broadcast %512 : vector<16x1xf32> to vector<16x64xf32>
    %527 = arith.mulf %526, %8 : vector<16x64xf32>
    %528 = arith.subf %525, %527 : vector<16x64xf32>
    %529 = vector.broadcast %522 : vector<16x1xf32> to vector<16x64xf32>
    %530 = arith.mulf %529, %528 : vector<16x64xf32>
    %cst_168 = arith.constant dense<0.000000e+00> : vector<16xf32>
    %531 = vector.multi_reduction <add>, %505, %cst_168 [1] : vector<16x64xf32> to vector<16xf32>
    %532 = vector.shape_cast %531 : vector<16xf32> to vector<16x1xf32>
    %cst_169 = arith.constant 6.400000e+01 : f32
    %533 = vector.broadcast %cst_169 : f32 to vector<16x1xf32>
    %534 = arith.divf %532, %533 : vector<16x1xf32>
    %535 = vector.broadcast %534 : vector<16x1xf32> to vector<16x64xf32>
    %536 = arith.subf %505, %535 : vector<16x64xf32>
    %537 = arith.mulf %536, %536 : vector<16x64xf32>
    %cst_170 = arith.constant dense<0.000000e+00> : vector<16xf32>
    %538 = vector.multi_reduction <add>, %537, %cst_170 [1] : vector<16x64xf32> to vector<16xf32>
    %539 = vector.shape_cast %538 : vector<16xf32> to vector<16x1xf32>
    %cst_171 = arith.constant 6.400000e+01 : f32
    %540 = vector.broadcast %cst_171 : f32 to vector<16x1xf32>
    %541 = arith.divf %539, %540 : vector<16x1xf32>
    %cst_172 = arith.constant 9.99999997E-7 : f32
    %542 = vector.broadcast %cst_172 : f32 to vector<16x1xf32>
    %543 = arith.addf %541, %542 : vector<16x1xf32>
    %544 = math.rsqrt %543 : vector<16x1xf32>
    %545 = arith.mulf %505, %4 : vector<16x64xf32>
    %546 = arith.mulf %508, %6 : vector<16x64xf32>
    %547 = arith.addf %545, %546 : vector<16x64xf32>
    %548 = vector.broadcast %534 : vector<16x1xf32> to vector<16x64xf32>
    %549 = arith.mulf %548, %8 : vector<16x64xf32>
    %550 = arith.subf %547, %549 : vector<16x64xf32>
    %551 = vector.broadcast %544 : vector<16x1xf32> to vector<16x64xf32>
    %552 = arith.mulf %551, %550 : vector<16x64xf32>
    %553 = arith.truncf %530 : vector<16x64xf32> to vector<16x64xbf16>
    %554 = arith.truncf %552 : vector<16x64xf32> to vector<16x64xbf16>
    %cst_173 = arith.constant dense<0.000000e+00> : vector<16x16xf32>
    %555 = tpu.matmul %553, %554, %cst_173 {dimension_numbers = #tpu.dot_dimension_numbers<[1], [1], [0], [0], [0, 0, 1, 0], [], []>} : vector<16x64xbf16>, vector<16x64xbf16>, vector<16x16xf32> -> vector<16x16xf32>
    %cst_174 = arith.constant 1.250000e-01 : f32
    %556 = vector.broadcast %cst_174 : f32 to vector<16x16xf32>
    %557 = arith.mulf %555, %556 : vector<16x16xf32>
    %cst_175 = arith.constant dense<0xFF800000> : vector<16xf32>
    %558 = vector.multi_reduction <maximumf>, %557, %cst_175 [1] : vector<16x16xf32> to vector<16xf32>
    %559 = vector.shape_cast %558 : vector<16xf32> to vector<16x1xf32>
    %560 = vector.broadcast %559 : vector<16x1xf32> to vector<16x16xf32>
    %561 = arith.subf %557, %560 : vector<16x16xf32>
    %562 = math.exp %561 : vector<16x16xf32>
    %cst_176 = arith.constant dense<0.000000e+00> : vector<16xf32>
    %563 = vector.multi_reduction <add>, %562, %cst_176 [1] : vector<16x16xf32> to vector<16xf32>
    %564 = vector.shape_cast %563 : vector<16xf32> to vector<16x1xf32>
    %565 = tpu.reciprocal %564 {approx = true} : vector<16x1xf32> -> vector<16x1xf32>
    %566 = vector.broadcast %565 : vector<16x1xf32> to vector<16x16xf32>
    %567 = arith.mulf %562, %566 : vector<16x16xf32>
    %568 = arith.truncf %506 : vector<16x64xf32> to vector<16x64xbf16>
    %569 = arith.truncf %567 : vector<16x16xf32> to vector<16x16xbf16>
    %cst_177 = arith.constant dense<0.000000e+00> : vector<16x64xf32>
    %570 = tpu.matmul %569, %568, %cst_177 {dimension_numbers = #tpu.dot_dimension_numbers<[1], [0], [0], [1], [0, 0, 1, 1], [], []>} : vector<16x16xbf16>, vector<16x64xbf16>, vector<16x64xf32> -> vector<16x64xf32>
    %571 = tpu.concatenate %503, %570 in 1 : vector<16x64xf32>, vector<16x64xf32> -> vector<16x128xf32>
    %572 = vector.extract_strided_slice %432 {offsets = [16, 0], sizes = [16, 64], strides = [1, 1]} : vector<32x384xf32> to vector<16x64xf32>
    %573 = vector.extract_strided_slice %432 {offsets = [16, 128], sizes = [16, 64], strides = [1, 1]} : vector<32x384xf32> to vector<16x64xf32>
    %574 = vector.extract_strided_slice %432 {offsets = [16, 256], sizes = [16, 64], strides = [1, 1]} : vector<32x384xf32> to vector<16x64xf32>
    %575 = vector.extract_strided_slice %436 {offsets = [16, 0], sizes = [16, 64], strides = [1, 1]} : vector<32x256xf32> to vector<16x64xf32>
    %576 = vector.extract_strided_slice %436 {offsets = [16, 128], sizes = [16, 64], strides = [1, 1]} : vector<32x256xf32> to vector<16x64xf32>
    %cst_178 = arith.constant dense<0.000000e+00> : vector<16xf32>
    %577 = vector.multi_reduction <add>, %572, %cst_178 [1] : vector<16x64xf32> to vector<16xf32>
    %578 = vector.shape_cast %577 : vector<16xf32> to vector<16x1xf32>
    %cst_179 = arith.constant 6.400000e+01 : f32
    %579 = vector.broadcast %cst_179 : f32 to vector<16x1xf32>
    %580 = arith.divf %578, %579 : vector<16x1xf32>
    %581 = vector.broadcast %580 : vector<16x1xf32> to vector<16x64xf32>
    %582 = arith.subf %572, %581 : vector<16x64xf32>
    %583 = arith.mulf %582, %582 : vector<16x64xf32>
    %cst_180 = arith.constant dense<0.000000e+00> : vector<16xf32>
    %584 = vector.multi_reduction <add>, %583, %cst_180 [1] : vector<16x64xf32> to vector<16xf32>
    %585 = vector.shape_cast %584 : vector<16xf32> to vector<16x1xf32>
    %cst_181 = arith.constant 6.400000e+01 : f32
    %586 = vector.broadcast %cst_181 : f32 to vector<16x1xf32>
    %587 = arith.divf %585, %586 : vector<16x1xf32>
    %cst_182 = arith.constant 9.99999997E-7 : f32
    %588 = vector.broadcast %cst_182 : f32 to vector<16x1xf32>
    %589 = arith.addf %587, %588 : vector<16x1xf32>
    %590 = math.rsqrt %589 : vector<16x1xf32>
    %591 = arith.mulf %572, %4 : vector<16x64xf32>
    %592 = arith.mulf %575, %6 : vector<16x64xf32>
    %593 = arith.addf %591, %592 : vector<16x64xf32>
    %594 = vector.broadcast %580 : vector<16x1xf32> to vector<16x64xf32>
    %595 = arith.mulf %594, %8 : vector<16x64xf32>
    %596 = arith.subf %593, %595 : vector<16x64xf32>
    %597 = vector.broadcast %590 : vector<16x1xf32> to vector<16x64xf32>
    %598 = arith.mulf %597, %596 : vector<16x64xf32>
    %cst_183 = arith.constant dense<0.000000e+00> : vector<16xf32>
    %599 = vector.multi_reduction <add>, %573, %cst_183 [1] : vector<16x64xf32> to vector<16xf32>
    %600 = vector.shape_cast %599 : vector<16xf32> to vector<16x1xf32>
    %cst_184 = arith.constant 6.400000e+01 : f32
    %601 = vector.broadcast %cst_184 : f32 to vector<16x1xf32>
    %602 = arith.divf %600, %601 : vector<16x1xf32>
    %603 = vector.broadcast %602 : vector<16x1xf32> to vector<16x64xf32>
    %604 = arith.subf %573, %603 : vector<16x64xf32>
    %605 = arith.mulf %604, %604 : vector<16x64xf32>
    %cst_185 = arith.constant dense<0.000000e+00> : vector<16xf32>
    %606 = vector.multi_reduction <add>, %605, %cst_185 [1] : vector<16x64xf32> to vector<16xf32>
    %607 = vector.shape_cast %606 : vector<16xf32> to vector<16x1xf32>
    %cst_186 = arith.constant 6.400000e+01 : f32
    %608 = vector.broadcast %cst_186 : f32 to vector<16x1xf32>
    %609 = arith.divf %607, %608 : vector<16x1xf32>
    %cst_187 = arith.constant 9.99999997E-7 : f32
    %610 = vector.broadcast %cst_187 : f32 to vector<16x1xf32>
    %611 = arith.addf %609, %610 : vector<16x1xf32>
    %612 = math.rsqrt %611 : vector<16x1xf32>
    %613 = arith.mulf %573, %4 : vector<16x64xf32>
    %614 = arith.mulf %576, %6 : vector<16x64xf32>
    %615 = arith.addf %613, %614 : vector<16x64xf32>
    %616 = vector.broadcast %602 : vector<16x1xf32> to vector<16x64xf32>
    %617 = arith.mulf %616, %8 : vector<16x64xf32>
    %618 = arith.subf %615, %617 : vector<16x64xf32>
    %619 = vector.broadcast %612 : vector<16x1xf32> to vector<16x64xf32>
    %620 = arith.mulf %619, %618 : vector<16x64xf32>
    %621 = arith.truncf %598 : vector<16x64xf32> to vector<16x64xbf16>
    %622 = arith.truncf %620 : vector<16x64xf32> to vector<16x64xbf16>
    %cst_188 = arith.constant dense<0.000000e+00> : vector<16x16xf32>
    %623 = tpu.matmul %621, %622, %cst_188 {dimension_numbers = #tpu.dot_dimension_numbers<[1], [1], [0], [0], [0, 0, 1, 0], [], []>} : vector<16x64xbf16>, vector<16x64xbf16>, vector<16x16xf32> -> vector<16x16xf32>
    %cst_189 = arith.constant 1.250000e-01 : f32
    %624 = vector.broadcast %cst_189 : f32 to vector<16x16xf32>
    %625 = arith.mulf %623, %624 : vector<16x16xf32>
    %cst_190 = arith.constant dense<0xFF800000> : vector<16xf32>
    %626 = vector.multi_reduction <maximumf>, %625, %cst_190 [1] : vector<16x16xf32> to vector<16xf32>
    %627 = vector.shape_cast %626 : vector<16xf32> to vector<16x1xf32>
    %628 = vector.broadcast %627 : vector<16x1xf32> to vector<16x16xf32>
    %629 = arith.subf %625, %628 : vector<16x16xf32>
    %630 = math.exp %629 : vector<16x16xf32>
    %cst_191 = arith.constant dense<0.000000e+00> : vector<16xf32>
    %631 = vector.multi_reduction <add>, %630, %cst_191 [1] : vector<16x16xf32> to vector<16xf32>
    %632 = vector.shape_cast %631 : vector<16xf32> to vector<16x1xf32>
    %633 = tpu.reciprocal %632 {approx = true} : vector<16x1xf32> -> vector<16x1xf32>
    %634 = vector.broadcast %633 : vector<16x1xf32> to vector<16x16xf32>
    %635 = arith.mulf %630, %634 : vector<16x16xf32>
    %636 = arith.truncf %574 : vector<16x64xf32> to vector<16x64xbf16>
    %637 = arith.truncf %635 : vector<16x16xf32> to vector<16x16xbf16>
    %cst_192 = arith.constant dense<0.000000e+00> : vector<16x64xf32>
    %638 = tpu.matmul %637, %636, %cst_192 {dimension_numbers = #tpu.dot_dimension_numbers<[1], [0], [0], [1], [0, 0, 1, 1], [], []>} : vector<16x16xbf16>, vector<16x64xbf16>, vector<16x64xf32> -> vector<16x64xf32>
    %639 = vector.extract_strided_slice %432 {offsets = [16, 64], sizes = [16, 64], strides = [1, 1]} : vector<32x384xf32> to vector<16x64xf32>
    %640 = vector.extract_strided_slice %432 {offsets = [16, 192], sizes = [16, 64], strides = [1, 1]} : vector<32x384xf32> to vector<16x64xf32>
    %641 = vector.extract_strided_slice %432 {offsets = [16, 320], sizes = [16, 64], strides = [1, 1]} : vector<32x384xf32> to vector<16x64xf32>
    %642 = vector.extract_strided_slice %436 {offsets = [16, 64], sizes = [16, 64], strides = [1, 1]} : vector<32x256xf32> to vector<16x64xf32>
    %643 = vector.extract_strided_slice %436 {offsets = [16, 192], sizes = [16, 64], strides = [1, 1]} : vector<32x256xf32> to vector<16x64xf32>
    %cst_193 = arith.constant dense<0.000000e+00> : vector<16xf32>
    %644 = vector.multi_reduction <add>, %639, %cst_193 [1] : vector<16x64xf32> to vector<16xf32>
    %645 = vector.shape_cast %644 : vector<16xf32> to vector<16x1xf32>
    %cst_194 = arith.constant 6.400000e+01 : f32
    %646 = vector.broadcast %cst_194 : f32 to vector<16x1xf32>
    %647 = arith.divf %645, %646 : vector<16x1xf32>
    %648 = vector.broadcast %647 : vector<16x1xf32> to vector<16x64xf32>
    %649 = arith.subf %639, %648 : vector<16x64xf32>
    %650 = arith.mulf %649, %649 : vector<16x64xf32>
    %cst_195 = arith.constant dense<0.000000e+00> : vector<16xf32>
    %651 = vector.multi_reduction <add>, %650, %cst_195 [1] : vector<16x64xf32> to vector<16xf32>
    %652 = vector.shape_cast %651 : vector<16xf32> to vector<16x1xf32>
    %cst_196 = arith.constant 6.400000e+01 : f32
    %653 = vector.broadcast %cst_196 : f32 to vector<16x1xf32>
    %654 = arith.divf %652, %653 : vector<16x1xf32>
    %cst_197 = arith.constant 9.99999997E-7 : f32
    %655 = vector.broadcast %cst_197 : f32 to vector<16x1xf32>
    %656 = arith.addf %654, %655 : vector<16x1xf32>
    %657 = math.rsqrt %656 : vector<16x1xf32>
    %658 = arith.mulf %639, %4 : vector<16x64xf32>
    %659 = arith.mulf %642, %6 : vector<16x64xf32>
    %660 = arith.addf %658, %659 : vector<16x64xf32>
    %661 = vector.broadcast %647 : vector<16x1xf32> to vector<16x64xf32>
    %662 = arith.mulf %661, %8 : vector<16x64xf32>
    %663 = arith.subf %660, %662 : vector<16x64xf32>
    %664 = vector.broadcast %657 : vector<16x1xf32> to vector<16x64xf32>
    %665 = arith.mulf %664, %663 : vector<16x64xf32>
    %cst_198 = arith.constant dense<0.000000e+00> : vector<16xf32>
    %666 = vector.multi_reduction <add>, %640, %cst_198 [1] : vector<16x64xf32> to vector<16xf32>
    %667 = vector.shape_cast %666 : vector<16xf32> to vector<16x1xf32>
    %cst_199 = arith.constant 6.400000e+01 : f32
    %668 = vector.broadcast %cst_199 : f32 to vector<16x1xf32>
    %669 = arith.divf %667, %668 : vector<16x1xf32>
    %670 = vector.broadcast %669 : vector<16x1xf32> to vector<16x64xf32>
    %671 = arith.subf %640, %670 : vector<16x64xf32>
    %672 = arith.mulf %671, %671 : vector<16x64xf32>
    %cst_200 = arith.constant dense<0.000000e+00> : vector<16xf32>
    %673 = vector.multi_reduction <add>, %672, %cst_200 [1] : vector<16x64xf32> to vector<16xf32>
    %674 = vector.shape_cast %673 : vector<16xf32> to vector<16x1xf32>
    %cst_201 = arith.constant 6.400000e+01 : f32
    %675 = vector.broadcast %cst_201 : f32 to vector<16x1xf32>
    %676 = arith.divf %674, %675 : vector<16x1xf32>
    %cst_202 = arith.constant 9.99999997E-7 : f32
    %677 = vector.broadcast %cst_202 : f32 to vector<16x1xf32>
    %678 = arith.addf %676, %677 : vector<16x1xf32>
    %679 = math.rsqrt %678 : vector<16x1xf32>
    %680 = arith.mulf %640, %4 : vector<16x64xf32>
    %681 = arith.mulf %643, %6 : vector<16x64xf32>
    %682 = arith.addf %680, %681 : vector<16x64xf32>
    %683 = vector.broadcast %669 : vector<16x1xf32> to vector<16x64xf32>
    %684 = arith.mulf %683, %8 : vector<16x64xf32>
    %685 = arith.subf %682, %684 : vector<16x64xf32>
    %686 = vector.broadcast %679 : vector<16x1xf32> to vector<16x64xf32>
    %687 = arith.mulf %686, %685 : vector<16x64xf32>
    %688 = arith.truncf %665 : vector<16x64xf32> to vector<16x64xbf16>
    %689 = arith.truncf %687 : vector<16x64xf32> to vector<16x64xbf16>
    %cst_203 = arith.constant dense<0.000000e+00> : vector<16x16xf32>
    %690 = tpu.matmul %688, %689, %cst_203 {dimension_numbers = #tpu.dot_dimension_numbers<[1], [1], [0], [0], [0, 0, 1, 0], [], []>} : vector<16x64xbf16>, vector<16x64xbf16>, vector<16x16xf32> -> vector<16x16xf32>
    %cst_204 = arith.constant 1.250000e-01 : f32
    %691 = vector.broadcast %cst_204 : f32 to vector<16x16xf32>
    %692 = arith.mulf %690, %691 : vector<16x16xf32>
    %cst_205 = arith.constant dense<0xFF800000> : vector<16xf32>
    %693 = vector.multi_reduction <maximumf>, %692, %cst_205 [1] : vector<16x16xf32> to vector<16xf32>
    %694 = vector.shape_cast %693 : vector<16xf32> to vector<16x1xf32>
    %695 = vector.broadcast %694 : vector<16x1xf32> to vector<16x16xf32>
    %696 = arith.subf %692, %695 : vector<16x16xf32>
    %697 = math.exp %696 : vector<16x16xf32>
    %cst_206 = arith.constant dense<0.000000e+00> : vector<16xf32>
    %698 = vector.multi_reduction <add>, %697, %cst_206 [1] : vector<16x16xf32> to vector<16xf32>
    %699 = vector.shape_cast %698 : vector<16xf32> to vector<16x1xf32>
    %700 = tpu.reciprocal %699 {approx = true} : vector<16x1xf32> -> vector<16x1xf32>
    %701 = vector.broadcast %700 : vector<16x1xf32> to vector<16x16xf32>
    %702 = arith.mulf %697, %701 : vector<16x16xf32>
    %703 = arith.truncf %641 : vector<16x64xf32> to vector<16x64xbf16>
    %704 = arith.truncf %702 : vector<16x16xf32> to vector<16x16xbf16>
    %cst_207 = arith.constant dense<0.000000e+00> : vector<16x64xf32>
    %705 = tpu.matmul %704, %703, %cst_207 {dimension_numbers = #tpu.dot_dimension_numbers<[1], [0], [0], [1], [0, 0, 1, 1], [], []>} : vector<16x16xbf16>, vector<16x64xbf16>, vector<16x64xf32> -> vector<16x64xf32>
    %706 = tpu.concatenate %638, %705 in 1 : vector<16x64xf32>, vector<16x64xf32> -> vector<16x128xf32>
    %707 = tpu.concatenate %571, %706 in 0 : vector<16x128xf32>, vector<16x128xf32> -> vector<32x128xf32>
    %c1_208 = arith.constant 1 : index
    %c0_209 = arith.constant 0 : index
    %c0_210 = arith.constant 0 : index
    %708 = vector.load %arg9[%c1_208, %c0_209, %c0_210] : memref<2x128x128xbf16, #tpu.memory_space<vmem>>, vector<1x128x128xbf16>
    %709 = vector.shape_cast %708 : vector<1x128x128xbf16> to vector<128x128xbf16>
    %710 = arith.truncf %707 : vector<32x128xf32> to vector<32x128xbf16>
    %cst_211 = arith.constant dense<0.000000e+00> : vector<32x128xf32>
    %711 = tpu.matmul %710, %709, %cst_211 {dimension_numbers = #tpu.dot_dimension_numbers<[1], [0], [0], [1], [0, 0, 1, 1], [], []>} : vector<32x128xbf16>, vector<128x128xbf16>, vector<32x128xf32> -> vector<32x128xf32>
    %712 = arith.mulf %399, %711 : vector<32x128xf32>
    %713 = arith.addf %389, %712 : vector<32x128xf32>
    %cst_212 = arith.constant dense<0.000000e+00> : vector<32xf32>
    %714 = vector.multi_reduction <add>, %713, %cst_212 [1] : vector<32x128xf32> to vector<32xf32>
    %715 = vector.shape_cast %714 : vector<32xf32> to vector<32x1xf32>
    %cst_213 = arith.constant 1.280000e+02 : f32
    %716 = vector.broadcast %cst_213 : f32 to vector<32x1xf32>
    %717 = arith.divf %715, %716 : vector<32x1xf32>
    %718 = vector.broadcast %717 : vector<32x1xf32> to vector<32x128xf32>
    %719 = arith.subf %713, %718 : vector<32x128xf32>
    %720 = arith.mulf %719, %719 : vector<32x128xf32>
    %cst_214 = arith.constant dense<0.000000e+00> : vector<32xf32>
    %721 = vector.multi_reduction <add>, %720, %cst_214 [1] : vector<32x128xf32> to vector<32xf32>
    %722 = vector.shape_cast %721 : vector<32xf32> to vector<32x1xf32>
    %cst_215 = arith.constant 1.280000e+02 : f32
    %723 = vector.broadcast %cst_215 : f32 to vector<32x1xf32>
    %724 = arith.divf %722, %723 : vector<32x1xf32>
    %725 = vector.broadcast %717 : vector<32x1xf32> to vector<32x128xf32>
    %726 = arith.subf %713, %725 : vector<32x128xf32>
    %cst_216 = arith.constant 9.99999974E-6 : f32
    %727 = vector.broadcast %cst_216 : f32 to vector<32x1xf32>
    %728 = arith.addf %724, %727 : vector<32x1xf32>
    %729 = math.rsqrt %728 : vector<32x1xf32>
    %730 = vector.broadcast %729 : vector<32x1xf32> to vector<32x128xf32>
    %731 = arith.mulf %726, %730 : vector<32x128xf32>
    %c1_217 = arith.constant 1 : index
    %c0_218 = arith.constant 0 : index
    %c0_219 = arith.constant 0 : index
    %732 = vector.load %arg10[%c1_217, %c0_218, %c0_219] : memref<2x1x128xf32, #tpu.memory_space<vmem>>, vector<1x1x128xf32>
    %733 = vector.shape_cast %732 : vector<1x1x128xf32> to vector<1x128xf32>
    %734 = vector.broadcast %733 : vector<1x128xf32> to vector<32x128xf32>
    %735 = arith.mulf %731, %734 : vector<32x128xf32>
    %cst_220 = arith.constant 1.000000e+00 : f32
    %736 = vector.broadcast %cst_220 : f32 to vector<32x128xf32>
    %737 = arith.addf %736, %401 : vector<32x128xf32>
    %738 = arith.mulf %735, %737 : vector<32x128xf32>
    %739 = arith.addf %738, %400 : vector<32x128xf32>
    %c1_221 = arith.constant 1 : index
    %c0_222 = arith.constant 0 : index
    %c0_223 = arith.constant 0 : index
    %740 = vector.load %arg11[%c1_221, %c0_222, %c0_223] : memref<2x128x512xbf16, #tpu.memory_space<vmem>>, vector<1x128x512xbf16>
    %741 = vector.shape_cast %740 : vector<1x128x512xbf16> to vector<128x512xbf16>
    %c1_224 = arith.constant 1 : index
    %c0_225 = arith.constant 0 : index
    %c0_226 = arith.constant 0 : index
    %742 = vector.load %arg12[%c1_224, %c0_225, %c0_226] : memref<2x1x512xf32, #tpu.memory_space<vmem>>, vector<1x1x512xf32>
    %743 = vector.shape_cast %742 : vector<1x1x512xf32> to vector<1x512xf32>
    %744 = arith.truncf %739 : vector<32x128xf32> to vector<32x128xbf16>
    %cst_227 = arith.constant dense<0.000000e+00> : vector<32x512xf32>
    %745 = tpu.matmul %744, %741, %cst_227 {dimension_numbers = #tpu.dot_dimension_numbers<[1], [0], [0], [1], [0, 0, 1, 1], [], []>} : vector<32x128xbf16>, vector<128x512xbf16>, vector<32x512xf32> -> vector<32x512xf32>
    %746 = vector.broadcast %743 : vector<1x512xf32> to vector<32x512xf32>
    %747 = arith.addf %745, %746 : vector<32x512xf32>
    %cst_228 = arith.constant 5.000000e-01 : f32
    %748 = vector.broadcast %cst_228 : f32 to vector<32x512xf32>
    %749 = arith.mulf %748, %747 : vector<32x512xf32>
    %cst_229 = arith.constant 4.471500e-02 : f32
    %750 = vector.broadcast %cst_229 : f32 to vector<32x512xf32>
    %751 = arith.mulf %750, %747 : vector<32x512xf32>
    %752 = arith.mulf %751, %747 : vector<32x512xf32>
    %753 = arith.mulf %752, %747 : vector<32x512xf32>
    %754 = arith.addf %747, %753 : vector<32x512xf32>
    %cst_230 = arith.constant 0.797884583 : f32
    %755 = vector.broadcast %cst_230 : f32 to vector<32x512xf32>
    %756 = arith.mulf %755, %754 : vector<32x512xf32>
    %757 = math.tanh %756 : vector<32x512xf32>
    %cst_231 = arith.constant 1.000000e+00 : f32
    %758 = vector.broadcast %cst_231 : f32 to vector<32x512xf32>
    %759 = arith.addf %758, %757 : vector<32x512xf32>
    %760 = arith.mulf %749, %759 : vector<32x512xf32>
    %c1_232 = arith.constant 1 : index
    %c0_233 = arith.constant 0 : index
    %c0_234 = arith.constant 0 : index
    %761 = vector.load %arg13[%c1_232, %c0_233, %c0_234] : memref<2x512x128xbf16, #tpu.memory_space<vmem>>, vector<1x512x128xbf16>
    %762 = vector.shape_cast %761 : vector<1x512x128xbf16> to vector<512x128xbf16>
    %c1_235 = arith.constant 1 : index
    %c0_236 = arith.constant 0 : index
    %c0_237 = arith.constant 0 : index
    %763 = vector.load %arg14[%c1_235, %c0_236, %c0_237] : memref<2x1x128xf32, #tpu.memory_space<vmem>>, vector<1x1x128xf32>
    %764 = vector.shape_cast %763 : vector<1x1x128xf32> to vector<1x128xf32>
    %765 = arith.truncf %760 : vector<32x512xf32> to vector<32x512xbf16>
    %cst_238 = arith.constant dense<0.000000e+00> : vector<32x128xf32>
    %766 = tpu.matmul %765, %762, %cst_238 {dimension_numbers = #tpu.dot_dimension_numbers<[1], [0], [0], [1], [0, 0, 1, 1], [], []>} : vector<32x512xbf16>, vector<512x128xbf16>, vector<32x128xf32> -> vector<32x128xf32>
    %767 = vector.broadcast %764 : vector<1x128xf32> to vector<32x128xf32>
    %768 = arith.addf %766, %767 : vector<32x128xf32>
    %769 = arith.mulf %402, %768 : vector<32x128xf32>
    %770 = arith.addf %713, %769 : vector<32x128xf32>
    %c0_239 = arith.constant 0 : index
    %c0_240 = arith.constant 0 : index
    %771 = vector.load %arg15[%c0_239, %c0_240] : memref<128x256xbf16, #tpu.memory_space<vmem>>, vector<128x256xbf16>
    %cst_241 = arith.constant dense<0.000000e+00> : vector<32x256xf32>
    %772 = tpu.matmul %2, %771, %cst_241 {dimension_numbers = #tpu.dot_dimension_numbers<[1], [0], [0], [1], [0, 0, 1, 1], [], []>} : vector<32x128xbf16>, vector<128x256xbf16>, vector<32x256xf32> -> vector<32x256xf32>
    %c0_242 = arith.constant 0 : index
    %c0_243 = arith.constant 0 : index
    %773 = vector.load %arg16[%c0_242, %c0_243] : memref<1x256xf32, #tpu.memory_space<vmem>>, vector<1x256xf32>
    %774 = vector.broadcast %773 : vector<1x256xf32> to vector<32x256xf32>
    %775 = arith.addf %772, %774 : vector<32x256xf32>
    %cst_244 = arith.constant dense<0.000000e+00> : vector<32xf32>
    %776 = vector.multi_reduction <add>, %770, %cst_244 [1] : vector<32x128xf32> to vector<32xf32>
    %777 = vector.shape_cast %776 : vector<32xf32> to vector<32x1xf32>
    %cst_245 = arith.constant 1.280000e+02 : f32
    %778 = vector.broadcast %cst_245 : f32 to vector<32x1xf32>
    %779 = arith.divf %777, %778 : vector<32x1xf32>
    %780 = vector.broadcast %779 : vector<32x1xf32> to vector<32x128xf32>
    %781 = arith.subf %770, %780 : vector<32x128xf32>
    %782 = arith.mulf %781, %781 : vector<32x128xf32>
    %cst_246 = arith.constant dense<0.000000e+00> : vector<32xf32>
    %783 = vector.multi_reduction <add>, %782, %cst_246 [1] : vector<32x128xf32> to vector<32xf32>
    %784 = vector.shape_cast %783 : vector<32xf32> to vector<32x1xf32>
    %cst_247 = arith.constant 1.280000e+02 : f32
    %785 = vector.broadcast %cst_247 : f32 to vector<32x1xf32>
    %786 = arith.divf %784, %785 : vector<32x1xf32>
    %787 = vector.broadcast %779 : vector<32x1xf32> to vector<32x128xf32>
    %788 = arith.subf %770, %787 : vector<32x128xf32>
    %cst_248 = arith.constant 9.99999974E-6 : f32
    %789 = vector.broadcast %cst_248 : f32 to vector<32x1xf32>
    %790 = arith.addf %786, %789 : vector<32x1xf32>
    %791 = math.rsqrt %790 : vector<32x1xf32>
    %792 = vector.broadcast %791 : vector<32x1xf32> to vector<32x128xf32>
    %793 = arith.mulf %788, %792 : vector<32x128xf32>
    %c0_249 = arith.constant 0 : index
    %c0_250 = arith.constant 0 : index
    %794 = vector.load %arg17[%c0_249, %c0_250] : memref<1x128xf32, #tpu.memory_space<vmem>>, vector<1x128xf32>
    %795 = vector.broadcast %794 : vector<1x128xf32> to vector<32x128xf32>
    %796 = arith.mulf %793, %795 : vector<32x128xf32>
    %797 = vector.extract_strided_slice %775 {offsets = [0, 128], sizes = [32, 128], strides = [1, 1]} : vector<32x256xf32> to vector<32x128xf32>
    %cst_251 = arith.constant 1.000000e+00 : f32
    %798 = vector.broadcast %cst_251 : f32 to vector<32x128xf32>
    %799 = arith.addf %798, %797 : vector<32x128xf32>
    %800 = arith.mulf %796, %799 : vector<32x128xf32>
    %801 = vector.extract_strided_slice %775 {offsets = [0, 0], sizes = [32, 128], strides = [1, 1]} : vector<32x256xf32> to vector<32x128xf32>
    %802 = arith.addf %800, %801 : vector<32x128xf32>
    %c0_252 = arith.constant 0 : index
    %c0_253 = arith.constant 0 : index
    %803 = vector.load %arg18[%c0_252, %c0_253] : memref<128x128xbf16, #tpu.memory_space<vmem>>, vector<128x128xbf16>
    %c0_254 = arith.constant 0 : index
    %c0_255 = arith.constant 0 : index
    %804 = vector.load %arg19[%c0_254, %c0_255] : memref<1x128xf32, #tpu.memory_space<vmem>>, vector<1x128xf32>
    %805 = arith.truncf %802 : vector<32x128xf32> to vector<32x128xbf16>
    %cst_256 = arith.constant dense<0.000000e+00> : vector<32x128xf32>
    %806 = tpu.matmul %805, %803, %cst_256 {dimension_numbers = #tpu.dot_dimension_numbers<[1], [0], [0], [1], [0, 0, 1, 1], [], []>} : vector<32x128xbf16>, vector<128x128xbf16>, vector<32x128xf32> -> vector<32x128xf32>
    %807 = vector.broadcast %804 : vector<1x128xf32> to vector<32x128xf32>
    %808 = arith.addf %806, %807 : vector<32x128xf32>
    %cst_257 = arith.constant 0.0333333351 : f32
    %809 = vector.broadcast %cst_257 : f32 to vector<32x128xf32>
    %810 = arith.mulf %808, %809 : vector<32x128xf32>
    %811 = math.tanh %810 : vector<32x128xf32>
    %cst_258 = arith.constant 3.000000e+01 : f32
    %812 = vector.broadcast %cst_258 : f32 to vector<32x128xf32>
    %813 = arith.mulf %811, %812 : vector<32x128xf32>
    %c0_259 = arith.constant 0 : index
    %c0_260 = arith.constant 0 : index
    %814 = vector.load %arg20[%c0_259, %c0_260] : memref<32x128xf32, #tpu.memory_space<vmem>>, vector<32x128xf32>
    tpu.vector_store %arg20[%c0_259, %c0_260], %813 {strides = array<i32>} : memref<32x128xf32, #tpu.memory_space<vmem>>, vector<32x128xf32>,
    return
  }
  func.func @transform_0(%arg0: i32) -> (i32, i32) {
    %c0_i32 = arith.constant 0 : i32
    %c0_i32_0 = arith.constant 0 : i32
    %c0_i32_1 = arith.constant 0 : i32
    return %c0_i32, %c0_i32_0 : i32, i32
  }
  func.func @transform_1(%arg0: i32) -> (i32, i32) {
    %c0_i32 = arith.constant 0 : i32
    %c0_i32_0 = arith.constant 0 : i32
    %c0_i32_1 = arith.constant 0 : i32
    return %c0_i32, %c0_i32_0 : i32, i32
  }
  func.func @transform_2(%arg0: i32) -> (i32, i32, i32) {
    %c0_i32 = arith.constant 0 : i32
    %c0_i32_0 = arith.constant 0 : i32
    %c0_i32_1 = arith.constant 0 : i32
    %c0_i32_2 = arith.constant 0 : i32
    return %c0_i32, %c0_i32_0, %c0_i32_1 : i32, i32, i32
  }
  func.func @transform_3(%arg0: i32) -> (i32, i32, i32) {
    %c0_i32 = arith.constant 0 : i32
    %c0_i32_0 = arith.constant 0 : i32
    %c0_i32_1 = arith.constant 0 : i32
    %c0_i32_2 = arith.constant 0 : i32
    return %c0_i32, %c0_i32_0, %c0_i32_1 : i32, i32, i32
  }
  func.func @transform_4(%arg0: i32) -> (i32, i32, i32) {
    %c0_i32 = arith.constant 0 : i32
    %c0_i32_0 = arith.constant 0 : i32
    %c0_i32_1 = arith.constant 0 : i32
    %c0_i32_2 = arith.constant 0 : i32
    return %c0_i32, %c0_i32_0, %c0_i32_1 : i32, i32, i32
  }
  func.func @transform_5(%arg0: i32) -> (i32, i32, i32) {
    %c0_i32 = arith.constant 0 : i32
    %c0_i32_0 = arith.constant 0 : i32
    %c0_i32_1 = arith.constant 0 : i32
    %c0_i32_2 = arith.constant 0 : i32
    return %c0_i32, %c0_i32_0, %c0_i32_1 : i32, i32, i32
  }
  func.func @transform_6(%arg0: i32) -> (i32, i32, i32) {
    %c0_i32 = arith.constant 0 : i32
    %c0_i32_0 = arith.constant 0 : i32
    %c0_i32_1 = arith.constant 0 : i32
    %c0_i32_2 = arith.constant 0 : i32
    return %c0_i32, %c0_i32_0, %c0_i32_1 : i32, i32, i32
  }
  func.func @transform_7(%arg0: i32) -> (i32, i32, i32) {
    %c0_i32 = arith.constant 0 : i32
    %c0_i32_0 = arith.constant 0 : i32
    %c0_i32_1 = arith.constant 0 : i32
    %c0_i32_2 = arith.constant 0 : i32
    return %c0_i32, %c0_i32_0, %c0_i32_1 : i32, i32, i32
  }
  func.func @transform_8(%arg0: i32) -> (i32, i32, i32) {
    %c0_i32 = arith.constant 0 : i32
    %c0_i32_0 = arith.constant 0 : i32
    %c0_i32_1 = arith.constant 0 : i32
    %c0_i32_2 = arith.constant 0 : i32
    return %c0_i32, %c0_i32_0, %c0_i32_1 : i32, i32, i32
  }
  func.func @transform_9(%arg0: i32) -> (i32, i32, i32) {
    %c0_i32 = arith.constant 0 : i32
    %c0_i32_0 = arith.constant 0 : i32
    %c0_i32_1 = arith.constant 0 : i32
    %c0_i32_2 = arith.constant 0 : i32
    return %c0_i32, %c0_i32_0, %c0_i32_1 : i32, i32, i32
  }
  func.func @transform_10(%arg0: i32) -> (i32, i32, i32) {
    %c0_i32 = arith.constant 0 : i32
    %c0_i32_0 = arith.constant 0 : i32
    %c0_i32_1 = arith.constant 0 : i32
    %c0_i32_2 = arith.constant 0 : i32
    return %c0_i32, %c0_i32_0, %c0_i32_1 : i32, i32, i32
  }
  func.func @transform_11(%arg0: i32) -> (i32, i32, i32) {
    %c0_i32 = arith.constant 0 : i32
    %c0_i32_0 = arith.constant 0 : i32
    %c0_i32_1 = arith.constant 0 : i32
    %c0_i32_2 = arith.constant 0 : i32
    return %c0_i32, %c0_i32_0, %c0_i32_1 : i32, i32, i32
  }
  func.func @transform_12(%arg0: i32) -> (i32, i32, i32) {
    %c0_i32 = arith.constant 0 : i32
    %c0_i32_0 = arith.constant 0 : i32
    %c0_i32_1 = arith.constant 0 : i32
    %c0_i32_2 = arith.constant 0 : i32
    return %c0_i32, %c0_i32_0, %c0_i32_1 : i32, i32, i32
  }
  func.func @transform_13(%arg0: i32) -> (i32, i32, i32) {
    %c0_i32 = arith.constant 0 : i32
    %c0_i32_0 = arith.constant 0 : i32
    %c0_i32_1 = arith.constant 0 : i32
    %c0_i32_2 = arith.constant 0 : i32
    return %c0_i32, %c0_i32_0, %c0_i32_1 : i32, i32, i32
  }
  func.func @transform_14(%arg0: i32) -> (i32, i32) {
    %c0_i32 = arith.constant 0 : i32
    %c0_i32_0 = arith.constant 0 : i32
    %c0_i32_1 = arith.constant 0 : i32
    return %c0_i32, %c0_i32_0 : i32, i32
  }
  func.func @transform_15(%arg0: i32) -> (i32, i32) {
    %c0_i32 = arith.constant 0 : i32
    %c0_i32_0 = arith.constant 0 : i32
    %c0_i32_1 = arith.constant 0 : i32
    return %c0_i32, %c0_i32_0 : i32, i32
  }
  func.func @transform_16(%arg0: i32) -> (i32, i32) {
    %c0_i32 = arith.constant 0 : i32
    %c0_i32_0 = arith.constant 0 : i32
    %c0_i32_1 = arith.constant 0 : i32
    return %c0_i32, %c0_i32_0 : i32, i32
  }
  func.func @transform_17(%arg0: i32) -> (i32, i32) {
    %c0_i32 = arith.constant 0 : i32
    %c0_i32_0 = arith.constant 0 : i32
    %c0_i32_1 = arith.constant 0 : i32
    return %c0_i32, %c0_i32_0 : i32, i32
  }
  func.func @transform_18(%arg0: i32) -> (i32, i32) {
    %c0_i32 = arith.constant 0 : i32
    %c0_i32_0 = arith.constant 0 : i32
    %c0_i32_1 = arith.constant 0 : i32
    return %c0_i32, %c0_i32_0 : i32, i32
  }
  func.func @transform_19(%arg0: i32) -> (i32, i32) {
    %c0_i32 = arith.constant 0 : i32
    %c0_i32_0 = arith.constant 0 : i32
    %c0_i32_1 = arith.constant 0 : i32
    return %c0_i32, %c0_i32_0 : i32, i32
  }
}

</mosaic_0001>

<llo_original>
// kernel: dit_forward.1
$region0: #{dit_forward.1}
  #allocation0 [shape = 'u32[]', space=smem, size = 0x4, offset = 0x4, fixed_abs, tag = 'smem constant byte address 0x4 - core index']
  #allocation1 [shape = 'u32[144,128]{1,0:T(1,128)}', space=vmem, size = 0x12000, scoped, tag = 'internal scratch']
  %s0 = inlined_call_operand.vmem [shape: f32[32,128], index: 0, kind: input, shape index: {}]
  %s1 = inlined_call_operand.vmem [shape: f32[32,128], index: 1, kind: input, shape index: {}]
  %s2 = inlined_call_operand.vmem [shape: f32[3,16,64], index: 2, kind: input, shape index: {}]
  %s3 = inlined_call_operand.vmem [shape: bf16[2,128,768], index: 3, kind: input, shape index: {}]
  %s4 = inlined_call_operand.vmem [shape: f32[2,1,768], index: 4, kind: input, shape index: {}]
  %s5 = inlined_call_operand.vmem [shape: f32[2,1,128], index: 5, kind: input, shape index: {}]
  %s6 = inlined_call_operand.hbm [shape: bf16[2,128,384], index: 6, kind: input, shape index: {}]
  %s7 = inlined_call_operand.hbm [shape: bf16[2,128,256], index: 7, kind: input, shape index: {}]
  %s8 = inlined_call_operand.hbm [shape: bf16[2,128,128], index: 8, kind: input, shape index: {}]
  %s9 = inlined_call_operand.vmem [shape: f32[2,1,128], index: 9, kind: input, shape index: {}]
  %s10 = inlined_call_operand.hbm [shape: bf16[2,128,512], index: 10, kind: input, shape index: {}]
  %s11 = inlined_call_operand.vmem [shape: f32[2,1,512], index: 11, kind: input, shape index: {}]
  %s12 = inlined_call_operand.hbm [shape: bf16[2,512,128], index: 12, kind: input, shape index: {}]
  %s13 = inlined_call_operand.vmem [shape: f32[2,1,128], index: 13, kind: input, shape index: {}]
  %s14 = inlined_call_operand.hbm [shape: bf16[128,256], index: 14, kind: input, shape index: {}]
  %s15 = inlined_call_operand.vmem [shape: f32[1,256], index: 15, kind: input, shape index: {}]
  %s16 = inlined_call_operand.vmem [shape: f32[1,128], index: 16, kind: input, shape index: {}]
  %s17 = inlined_call_operand.hbm [shape: bf16[128,128], index: 17, kind: input, shape index: {}]
  %s18 = inlined_call_operand.vmem [shape: f32[1,128], index: 18, kind: input, shape index: {}]
  %s19 = inlined_call_operand.hbm [shape: f32[32,128], index: 19, kind: output, shape index: {}]
  %s20 = sld [smem:[#allocation0]]
  $region114: #{dit_forward.1} parent=0
    _
  %s22 = ssub.s32 1, %s20
  %s23 = scalar_select 0, %s22, %s20
  $region1: #{dit_forward.1} parent=0
    #allocation2 [shape = 'u8[196608]{0}', space=vmem, size = 0x30000, scoped, tag = 'input window, operand 6, single buffered']
    #allocation3 [shape = 's32[1]{0}', space=sflag, size = 0x4, scoped, tag = 'scoped memory for dit_forward.1']
    #allocation4 [shape = 's32[1]{0}', space=sflag, size = 0x4, scoped, tag = 'scoped memory for dit_forward.1']
    #allocation5 [shape = 'u8[131072]{0}', space=vmem, size = 0x20000, scoped, tag = 'input window, operand 7, single buffered']
    #allocation6 [shape = 's32[1]{0}', space=sflag, size = 0x4, scoped, tag = 'scoped memory for dit_forward.1']
    #allocation7 [shape = 'u8[65536]{0}', space=vmem, size = 0x10000, scoped, tag = 'input window, operand 8, single buffered']
    #allocation8 [shape = 'u8[262144]{0}', space=vmem, size = 0x40000, scoped, tag = 'input window, operand 10, single buffered']
    #allocation9 [shape = 's32[1]{0}', space=sflag, size = 0x4, scoped, tag = 'scoped memory for dit_forward.1']
    #allocation10 [shape = 'u8[262144]{0}', space=vmem, size = 0x40000, scoped, tag = 'input window, operand 12, single buffered']
    #allocation11 [shape = 'u8[65536]{0}', space=vmem, size = 0x10000, scoped, tag = 'input window, operand 14, single buffered']
    #allocation12 [shape = 's32[1]{0}', space=sflag, size = 0x4, scoped, tag = 'scoped memory for dit_forward.1']
    #allocation13 [shape = 'u8[32768]{0}', space=vmem, size = 0x8000, scoped, tag = 'input window, operand 17, single buffered']
    #allocation14 [shape = 'u8[16384]{0}', space=vmem, size = 0x4000, scoped, tag = 'output window, operand 0, single buffered']
    %24 = vsyncpa [#allocation3], 0
    %25 = vsyncpa [#allocation6], 0
    %26 = vsyncpa [#allocation9], 0
    %27 = vsyncpa [#allocation12], 0
    %28 = vsyncpa [#allocation4], 0
    // Predicated region
    $region2: #{dit_forward.1} parent=1 // pred_check
      _
    $region3: #{dit_forward.1} parent=1 // pred_check_branch
      %30 = sbr.rel (0) target = $region5
    $region4: #{dit_forward.1} parent=1 // pred_region
      _
    $region5: #{dit_forward.1} parent=1 // pred_fallthru
      _
    // Predicated region
    $region6: #{dit_forward.1} parent=1 // pred_check
      _
    $region7: #{dit_forward.1} parent=1 // pred_check_branch
      %32 = sbr.rel (0) target = $region9
    $region8: #{dit_forward.1} parent=1 // pred_region
      _
    $region9: #{dit_forward.1} parent=1 // pred_fallthru
      _
    // Predicated region
    $region10: #{dit_forward.1} parent=1 // pred_check
      _
    $region11: #{dit_forward.1} parent=1 // pred_check_branch
      %34 = sbr.rel (0) target = $region13
    $region12: #{dit_forward.1} parent=1 // pred_region
      _
    $region13: #{dit_forward.1} parent=1 // pred_fallthru
      _
    // Predicated region
    $region14: #{dit_forward.1} parent=1 // pred_check
      _
    $region15: #{dit_forward.1} parent=1 // pred_check_branch
      %36 = sbr.rel (0) target = $region17
    $region16: #{dit_forward.1} parent=1 // pred_region
      _
    $region17: #{dit_forward.1} parent=1 // pred_fallthru
      _
    // Predicated region
    $region18: #{dit_forward.1} parent=1 // pred_check
      _
    $region19: #{dit_forward.1} parent=1 // pred_check_branch
      %38 = sbr.rel (0) target = $region21
    $region20: #{dit_forward.1} parent=1 // pred_region
      _
    $region21: #{dit_forward.1} parent=1 // pred_fallthru
      _
    // Predicated region
    $region22: #{dit_forward.1} parent=1 // pred_check
      _
    $region23: #{dit_forward.1} parent=1 // pred_check_branch
      %40 = sbr.rel (0) target = $region25
    $region24: #{dit_forward.1} parent=1 // pred_region
      _
    $region25: #{dit_forward.1} parent=1 // pred_fallthru
      _
    // Predicated region
    $region26: #{dit_forward.1} parent=1 // pred_check
      _
    $region27: #{dit_forward.1} parent=1 // pred_check_branch
      %42 = sbr.rel (0) target = $region29
    $region28: #{dit_forward.1} parent=1 // pred_region
      %s44 = ssub.s32 6144, 6144
      %45 = vsyncadd [#allocation3], %s44
      %s46 = sshll.u32 [#allocation2], 4
      %s47 = int_to_ptr.vmem [resolvable:$true] %s46
      %52 = dma.hbm_to_vmem [thread:$0]  %s6, 6144, %s47, [#allocation3], 192, 192, 12
    $region29: #{dit_forward.1} parent=1 // pred_fallthru
      _
    // Predicated region
    $region30: #{dit_forward.1} parent=1 // pred_check
      _
    $region31: #{dit_forward.1} parent=1 // pred_check_branch
      %54 = sbr.rel (0) target = $region33
    $region32: #{dit_forward.1} parent=1 // pred_region
      %s56 = ssub.s32 4096, 4096
      %57 = vsyncadd [#allocation6], %s56
      %s58 = sshll.u32 [#allocation5], 4
      %s59 = int_to_ptr.vmem [resolvable:$true] %s58
      %64 = dma.hbm_to_vmem [thread:$0]  %s7, 4096, %s59, [#allocation6], 128, 128, 8
    $region33: #{dit_forward.1} parent=1 // pred_fallthru
      _
    // Predicated region
    $region34: #{dit_forward.1} parent=1 // pred_check
      _
    $region35: #{dit_forward.1} parent=1 // pred_check_branch
      %66 = sbr.rel (0) target = $region37
    $region36: #{dit_forward.1} parent=1 // pred_region
      %s68 = ssub.s32 2048, 2048
      %69 = vsyncadd [#allocation6], %s68
      %s70 = sshll.u32 [#allocation7], 4
      %s71 = int_to_ptr.vmem [resolvable:$true] %s70
      %76 = dma.hbm_to_vmem [thread:$0]  %s8, 2048, %s71, [#allocation6], 64, 64, 4
    $region37: #{dit_forward.1} parent=1 // pred_fallthru
      _
    // Predicated region
    $region38: #{dit_forward.1} parent=1 // pred_check
      _
    $region39: #{dit_forward.1} parent=1 // pred_check_branch
      %78 = sbr.rel (0) target = $region41
    $region40: #{dit_forward.1} parent=1 // pred_region
      _
    $region41: #{dit_forward.1} parent=1 // pred_fallthru
      _
    // Predicated region
    $region42: #{dit_forward.1} parent=1 // pred_check
      _
    $region43: #{dit_forward.1} parent=1 // pred_check_branch
      %80 = sbr.rel (0) target = $region45
    $region44: #{dit_forward.1} parent=1 // pred_region
      %s82 = ssub.s32 8192, 8192
      %83 = vsyncadd [#allocation9], %s82
      %s84 = sshll.u32 [#allocation8], 4
      %s85 = int_to_ptr.vmem [resolvable:$true] %s84
      %90 = dma.hbm_to_vmem [thread:$0]  %s10, 8192, %s85, [#allocation9], 256, 256, 16
    $region45: #{dit_forward.1} parent=1 // pred_fallthru
      _
    // Predicated region
    $region46: #{dit_forward.1} parent=1 // pred_check
      _
    $region47: #{dit_forward.1} parent=1 // pred_check_branch
      %92 = sbr.rel (0) target = $region49
    $region48: #{dit_forward.1} parent=1 // pred_region
      _
    $region49: #{dit_forward.1} parent=1 // pred_fallthru
      _
    // Predicated region
    $region50: #{dit_forward.1} parent=1 // pred_check
      _
    $region51: #{dit_forward.1} parent=1 // pred_check_branch
      %94 = sbr.rel (0) target = $region53
    $region52: #{dit_forward.1} parent=1 // pred_region
      %s96 = ssub.s32 8192, 8192
      %97 = vsyncadd [#allocation9], %s96
      %s98 = sshll.u32 [#allocation10], 4
      %s99 = int_to_ptr.vmem [resolvable:$true] %s98
      %104 = dma.hbm_to_vmem [thread:$0]  %s12, 8192, %s99, [#allocation9], 64, 64, 4
    $region53: #{dit_forward.1} parent=1 // pred_fallthru
      _
    // Predicated region
    $region54: #{dit_forward.1} parent=1 // pred_check
      _
    $region55: #{dit_forward.1} parent=1 // pred_check_branch
      %106 = sbr.rel (0) target = $region57
    $region56: #{dit_forward.1} parent=1 // pred_region
      _
    $region57: #{dit_forward.1} parent=1 // pred_fallthru
      _
    // Predicated region
    $region58: #{dit_forward.1} parent=1 // pred_check
      _
    $region59: #{dit_forward.1} parent=1 // pred_check_branch
      %108 = sbr.rel (0) target = $region61
    $region60: #{dit_forward.1} parent=1 // pred_region
      %s110 = ssub.s32 2048, 2048
      %111 = vsyncadd [#allocation12], %s110
      %s112 = sshll.u32 [#allocation11], 4
      %s113 = int_to_ptr.vmem [resolvable:$true] %s112
      %118 = dma.hbm_to_vmem [thread:$0]  %s14, 2048, %s113, [#allocation12], 128, 128, 8
    $region61: #{dit_forward.1} parent=1 // pred_fallthru
      _
    // Predicated region
    $region62: #{dit_forward.1} parent=1 // pred_check
      _
    $region63: #{dit_forward.1} parent=1 // pred_check_branch
      %120 = sbr.rel (0) target = $region65
    $region64: #{dit_forward.1} parent=1 // pred_region
      _
    $region65: #{dit_forward.1} parent=1 // pred_fallthru
      _
    // Predicated region
    $region66: #{dit_forward.1} parent=1 // pred_check
      _
    $region67: #{dit_forward.1} parent=1 // pred_check_branch
      %122 = sbr.rel (0) target = $region69
    $region68: #{dit_forward.1} parent=1 // pred_region
      _
    $region69: #{dit_forward.1} parent=1 // pred_fallthru
      _
    // Predicated region
    $region70: #{dit_forward.1} parent=1 // pred_check
      _
    $region71: #{dit_forward.1} parent=1 // pred_check_branch
      %124 = sbr.rel (0) target = $region73
    $region72: #{dit_forward.1} parent=1 // pred_region
      %s126 = ssub.s32 1024, 1024
      %127 = vsyncadd [#allocation12], %s126
      %s128 = sshll.u32 [#allocation13], 4
      %s129 = int_to_ptr.vmem [resolvable:$true] %s128
      %134 = dma.hbm_to_vmem [thread:$0]  %s17, 1024, %s129, [#allocation12], 64, 64, 4
    $region73: #{dit_forward.1} parent=1 // pred_fallthru
      _
    // Predicated region
    $region74: #{dit_forward.1} parent=1 // pred_check
      _
    $region75: #{dit_forward.1} parent=1 // pred_check_branch
      %136 = sbr.rel (0) target = $region77
    $region76: #{dit_forward.1} parent=1 // pred_region
      _
    $region77: #{dit_forward.1} parent=1 // pred_fallthru
      _
    // Predicated region
    $region78: #{dit_forward.1} parent=1 // pred_check
      _
    $region79: #{dit_forward.1} parent=1 // pred_check_branch
      %138 = sbr.rel (0) target = $region81
    $region80: #{dit_forward.1} parent=1 // pred_region
      %139 = dma.done [#allocation3], 6144
    $region81: #{dit_forward.1} parent=1 // pred_fallthru
      _
    // Predicated region
    $region82: #{dit_forward.1} parent=1 // pred_check
      _
    $region83: #{dit_forward.1} parent=1 // pred_check_branch
      %141 = sbr.rel (0) target = $region85
    $region84: #{dit_forward.1} parent=1 // pred_region
      %142 = dma.done [#allocation6], 4096
    $region85: #{dit_forward.1} parent=1 // pred_fallthru
      _
    // Predicated region
    $region86: #{dit_forward.1} parent=1 // pred_check
      _
    $region87: #{dit_forward.1} parent=1 // pred_check_branch
      %144 = sbr.rel (0) target = $region89
    $region88: #{dit_forward.1} parent=1 // pred_region
      %145 = dma.done [#allocation6], 2048
    $region89: #{dit_forward.1} parent=1 // pred_fallthru
      _
    // Predicated region
    $region90: #{dit_forward.1} parent=1 // pred_check
      _
    $region91: #{dit_forward.1} parent=1 // pred_check_branch
      %147 = sbr.rel (0) target = $region93
    $region92: #{dit_forward.1} parent=1 // pred_region
      %148 = dma.done [#allocation9], 8192
    $region93: #{dit_forward.1} parent=1 // pred_fallthru
      _
    // Predicated region
    $region94: #{dit_forward.1} parent=1 // pred_check
      _
    $region95: #{dit_forward.1} parent=1 // pred_check_branch
      %150 = sbr.rel (0) target = $region97
    $region96: #{dit_forward.1} parent=1 // pred_region
      %151 = dma.done [#allocation9], 8192
    $region97: #{dit_forward.1} parent=1 // pred_fallthru
      _
    // Predicated region
    $region98: #{dit_forward.1} parent=1 // pred_check
      _
    $region99: #{dit_forward.1} parent=1 // pred_check_branch
      %153 = sbr.rel (0) target = $region101
    $region100: #{dit_forward.1} parent=1 // pred_region
      %154 = dma.done [#allocation12], 2048
    $region101: #{dit_forward.1} parent=1 // pred_fallthru
      _
    // Predicated region
    $region102: #{dit_forward.1} parent=1 // pred_check
      _
    $region103: #{dit_forward.1} parent=1 // pred_check_branch
      %156 = sbr.rel (0) target = $region105
    $region104: #{dit_forward.1} parent=1 // pred_region
      %157 = dma.done [#allocation12], 1024
    $region105: #{dit_forward.1} parent=1 // pred_fallthru
      _
    %v159 = vld [vmem:[%s0] sm:$0xff]
    %v160 = vld [vmem:[%s0 + $0x8] sm:$0xff]
    %v161 = vld [vmem:[%s0 + $0x10] sm:$0xff]
    %v162 = vld [vmem:[%s0 + $0x18] sm:$0xff]
    %v163 = vld [vmem:[%s1] sm:$0xff]
    %v164 = vld [vmem:[%s1 + $0x8] sm:$0xff]
    %v165 = vld [vmem:[%s1 + $0x10] sm:$0xff]
    %v166 = vld [vmem:[%s1 + $0x18] sm:$0xff]
    %v167 = vpack.c.bf16 %v164, %v163
    %v168 = vpack.c.bf16 %v166, %v165
    %v169 = vld [vmem:[%s2] sm:$0xff]
    %v170 = vld [vmem:[%s2 + $0x8] sm:$0xff]
    %s171 = scalar_lea.vmem %s2, 16
    %v172 = vld [vmem:[%s171] sm:$0xff]
    %v173 = vld [vmem:[%s171 + $0x8] sm:$0xff]
    %s174 = scalar_lea.vmem %s2, 32
    %v175 = vld [vmem:[%s174] sm:$0xff]
    %v176 = vld [vmem:[%s174 + $0x8] sm:$0xff]
    %v177 = vld [vmem:[%s3] sm:$0xff]
    %v178 = vld [vmem:[%s3 + $0x8] sm:$0xff]
    %v179 = vld [vmem:[%s3 + $0x10] sm:$0xff]
    %v180 = vld [vmem:[%s3 + $0x18] sm:$0xff]
    %v181 = vld [vmem:[%s3 + $0x20] sm:$0xff]
    %v182 = vld [vmem:[%s3 + $0x28] sm:$0xff]
    %v183 = vld [vmem:[%s3 + $0x30] sm:$0xff]
    %v184 = vld [vmem:[%s3 + $0x38] sm:$0xff]
    %v185 = vld [vmem:[%s3 + $0x40] sm:$0xff]
    %v186 = vld [vmem:[%s3 + $0x48] sm:$0xff]
    %v187 = vld [vmem:[%s3 + $0x50] sm:$0xff]
    %v188 = vld [vmem:[%s3 + $0x58] sm:$0xff]
    %v189 = vld [vmem:[%s3 + $0x60] sm:$0xff]
    %v190 = vld [vmem:[%s3 + $0x68] sm:$0xff]
    %v191 = vld [vmem:[%s3 + $0x70] sm:$0xff]
    %v192 = vld [vmem:[%s3 + $0x78] sm:$0xff]
    %v193 = vld [vmem:[%s3 + $0x80] sm:$0xff]
    %v194 = vld [vmem:[%s3 + $0x88] sm:$0xff]
    %v195 = vld [vmem:[%s3 + $0x90] sm:$0xff]
    %v196 = vld [vmem:[%s3 + $0x98] sm:$0xff]
    %v197 = vld [vmem:[%s3 + $0xa0] sm:$0xff]
    %v198 = vld [vmem:[%s3 + $0xa8] sm:$0xff]
    %v199 = vld [vmem:[%s3 + $0xb0] sm:$0xff]
    %v200 = vld [vmem:[%s3 + $0xb8] sm:$0xff]
    %v201 = vld [vmem:[%s3 + $0xc0] sm:$0xff]
    %v202 = vld [vmem:[%s3 + $0xc8] sm:$0xff]
    %v203 = vld [vmem:[%s3 + $0xd0] sm:$0xff]
    %v204 = vld [vmem:[%s3 + $0xd8] sm:$0xff]
    %v205 = vld [vmem:[%s3 + $0xe0] sm:$0xff]
    %v206 = vld [vmem:[%s3 + $0xe8] sm:$0xff]
    %v207 = vld [vmem:[%s3 + $0xf0] sm:$0xff]
    %v208 = vld [vmem:[%s3 + $0xf8] sm:$0xff]
    %v209 = vld [vmem:[%s3 + $0x100] sm:$0xff]
    %v210 = vld [vmem:[%s3 + $0x108] sm:$0xff]
    %v211 = vld [vmem:[%s3 + $0x110] sm:$0xff]
    %v212 = vld [vmem:[%s3 + $0x118] sm:$0xff]
    %v213 = vld [vmem:[%s3 + $0x120] sm:$0xff]
    %v214 = vld [vmem:[%s3 + $0x128] sm:$0xff]
    %v215 = vld [vmem:[%s3 + $0x130] sm:$0xff]
    %v216 = vld [vmem:[%s3 + $0x138] sm:$0xff]
    %v217 = vld [vmem:[%s3 + $0x140] sm:$0xff]
    %v218 = vld [vmem:[%s3 + $0x148] sm:$0xff]
    %v219 = vld [vmem:[%s3 + $0x150] sm:$0xff]
    %v220 = vld [vmem:[%s3 + $0x158] sm:$0xff]
    %v221 = vld [vmem:[%s3 + $0x160] sm:$0xff]
    %v222 = vld [vmem:[%s3 + $0x168] sm:$0xff]
    %v223 = vld [vmem:[%s3 + $0x170] sm:$0xff]
    %v224 = vld [vmem:[%s3 + $0x178] sm:$0xff]
    %v225 = vld [vmem:[%s4] sm:$0x3f]
    %v227 = vlaneseq
    %v228 = vshrl.u32 %v227, 7
    %v229 = vsub.s32 0, %v228
    %v230 = vrot.slane %v225, %v229
    %v231 = vlaneseq
    %v232 = vshrl.u32 %v231, 7
    %v233 = vsub.s32 1, %v232
    %v234 = vrot.slane %v225, %v233
    %v235 = vlaneseq
    %v236 = vshrl.u32 %v235, 7
    %v237 = vsub.s32 2, %v236
    %v238 = vrot.slane %v225, %v237
    %v239 = vlaneseq
    %v240 = vshrl.u32 %v239, 7
    %v241 = vsub.s32 3, %v240
    %v242 = vrot.slane %v225, %v241
    %v243 = vlaneseq
    %v244 = vshrl.u32 %v243, 7
    %v245 = vsub.s32 4, %v244
    %v246 = vrot.slane %v225, %v245
    %v247 = vlaneseq
    %v248 = vshrl.u32 %v247, 7
    %v249 = vsub.s32 5, %v248
    %v250 = vrot.slane %v225, %v249
    %v305 = vunpack.c.l.b16 %v177
    %v306 = vunpack.c.h.b16 %v177
    %v307 = vunpack.c.l.b16 %v178
    %v308 = vunpack.c.h.b16 %v178
    %v309 = vunpack.c.l.b16 %v179
    %v310 = vunpack.c.h.b16 %v179
    %v311 = vunpack.c.l.b16 %v180
    %v312 = vunpack.c.h.b16 %v180
    %v313 = vunpack.c.l.b16 %v181
    %v314 = vunpack.c.h.b16 %v181
    %v315 = vunpack.c.l.b16 %v182
    %v316 = vunpack.c.h.b16 %v182
    %v317 = vunpack.c.l.b16 %v183
    %v318 = vunpack.c.h.b16 %v183
    %v319 = vunpack.c.l.b16 %v184
    %v320 = vunpack.c.h.b16 %v184
    %v321 = vunpack.c.l.b16 %v185
    %v322 = vunpack.c.h.b16 %v185
    %v323 = vunpack.c.l.b16 %v186
    %v324 = vunpack.c.h.b16 %v186
    %v325 = vunpack.c.l.b16 %v187
    %v326 = vunpack.c.h.b16 %v187
    %v327 = vunpack.c.l.b16 %v188
    %v328 = vunpack.c.h.b16 %v188
    %v329 = vunpack.c.l.b16 %v189
    %v330 = vunpack.c.h.b16 %v189
    %v331 = vunpack.c.l.b16 %v190
    %v332 = vunpack.c.h.b16 %v190
    %v333 = vunpack.c.l.b16 %v191
    %v334 = vunpack.c.h.b16 %v191
    %v335 = vunpack.c.l.b16 %v192
    %v336 = vunpack.c.h.b16 %v192
    %v337 = vunpack.c.l.b16 %v193
    %v338 = vunpack.c.h.b16 %v193
    %v339 = vunpack.c.l.b16 %v194
    %v340 = vunpack.c.h.b16 %v194
    %v341 = vunpack.c.l.b16 %v195
    %v342 = vunpack.c.h.b16 %v195
    %v343 = vunpack.c.l.b16 %v196
    %v344 = vunpack.c.h.b16 %v196
    %v345 = vunpack.c.l.b16 %v197
    %v346 = vunpack.c.h.b16 %v197
    %v347 = vunpack.c.l.b16 %v198
    %v348 = vunpack.c.h.b16 %v198
    %v349 = vunpack.c.l.b16 %v199
    %v350 = vunpack.c.h.b16 %v199
    %v351 = vunpack.c.l.b16 %v200
    %v352 = vunpack.c.h.b16 %v200
    %v353 = vunpack.c.l.b16 %v201
    %v354 = vunpack.c.h.b16 %v201
    %v355 = vunpack.c.l.b16 %v202
    %v356 = vunpack.c.h.b16 %v202
    %v357 = vunpack.c.l.b16 %v203
    %v358 = vunpack.c.h.b16 %v203
    %v359 = vunpack.c.l.b16 %v204
    %v360 = vunpack.c.h.b16 %v204
    %v361 = vunpack.c.l.b16 %v205
    %v362 = vunpack.c.h.b16 %v205
    %v363 = vunpack.c.l.b16 %v206
    %v364 = vunpack.c.h.b16 %v206
    %v365 = vunpack.c.l.b16 %v207
    %v366 = vunpack.c.h.b16 %v207
    %v367 = vunpack.c.l.b16 %v208
    %v368 = vunpack.c.h.b16 %v208
    %v369 = vunpack.c.l.b16 %v209
    %v370 = vunpack.c.h.b16 %v209
    %v371 = vunpack.c.l.b16 %v210
    %v372 = vunpack.c.h.b16 %v210
    %v373 = vunpack.c.l.b16 %v211
    %v374 = vunpack.c.h.b16 %v211
    %v375 = vunpack.c.l.b16 %v212
    %v376 = vunpack.c.h.b16 %v212
    %v377 = vunpack.c.l.b16 %v213
    %v378 = vunpack.c.h.b16 %v213
    %v379 = vunpack.c.l.b16 %v214
    %v380 = vunpack.c.h.b16 %v214
    %v381 = vunpack.c.l.b16 %v215
    %v382 = vunpack.c.h.b16 %v215
    %v383 = vunpack.c.l.b16 %v216
    %v384 = vunpack.c.h.b16 %v216
    %v385 = vunpack.c.l.b16 %v217
    %v386 = vunpack.c.h.b16 %v217
    %v387 = vunpack.c.l.b16 %v218
    %v388 = vunpack.c.h.b16 %v218
    %v389 = vunpack.c.l.b16 %v219
    %v390 = vunpack.c.h.b16 %v219
    %v391 = vunpack.c.l.b16 %v220
    %v392 = vunpack.c.h.b16 %v220
    %v393 = vunpack.c.l.b16 %v221
    %v394 = vunpack.c.h.b16 %v221
    %v395 = vunpack.c.l.b16 %v222
    %v396 = vunpack.c.h.b16 %v222
    %v397 = vunpack.c.l.b16 %v223
    %v398 = vunpack.c.h.b16 %v223
    %v399 = vunpack.c.l.b16 %v224
    %v400 = vunpack.c.h.b16 %v224
    %v401 = vpack.c.b16 %v311, %v305
    %v402 = vpack.c.b16 %v312, %v306
    %v403 = vpack.c.b16 %v313, %v307
    %v404 = vpack.c.b16 %v314, %v308
    %v405 = vpack.c.b16 %v315, %v309
    %v406 = vpack.c.b16 %v316, %v310
    %v407 = vpack.c.b16 %v323, %v317
    %v408 = vpack.c.b16 %v324, %v318
    %v409 = vpack.c.b16 %v325, %v319
    %v410 = vpack.c.b16 %v326, %v320
    %v411 = vpack.c.b16 %v327, %v321
    %v412 = vpack.c.b16 %v328, %v322
    %v413 = vpack.c.b16 %v335, %v329
    %v414 = vpack.c.b16 %v336, %v330
    %v415 = vpack.c.b16 %v337, %v331
    %v416 = vpack.c.b16 %v338, %v332
    %v417 = vpack.c.b16 %v339, %v333
    %v418 = vpack.c.b16 %v340, %v334
    %v419 = vpack.c.b16 %v347, %v341
    %v420 = vpack.c.b16 %v348, %v342
    %v421 = vpack.c.b16 %v349, %v343
    %v422 = vpack.c.b16 %v350, %v344
    %v423 = vpack.c.b16 %v351, %v345
    %v424 = vpack.c.b16 %v352, %v346
    %v425 = vpack.c.b16 %v359, %v353
    %v426 = vpack.c.b16 %v360, %v354
    %v427 = vpack.c.b16 %v361, %v355
    %v428 = vpack.c.b16 %v362, %v356
    %v429 = vpack.c.b16 %v363, %v357
    %v430 = vpack.c.b16 %v364, %v358
    %v431 = vpack.c.b16 %v371, %v365
    %v432 = vpack.c.b16 %v372, %v366
    %v433 = vpack.c.b16 %v373, %v367
    %v434 = vpack.c.b16 %v374, %v368
    %v435 = vpack.c.b16 %v375, %v369
    %v436 = vpack.c.b16 %v376, %v370
    %v437 = vpack.c.b16 %v383, %v377
    %v438 = vpack.c.b16 %v384, %v378
    %v439 = vpack.c.b16 %v385, %v379
    %v440 = vpack.c.b16 %v386, %v380
    %v441 = vpack.c.b16 %v387, %v381
    %v442 = vpack.c.b16 %v388, %v382
    %v443 = vpack.c.b16 %v395, %v389
    %v444 = vpack.c.b16 %v396, %v390
    %v445 = vpack.c.b16 %v397, %v391
    %v446 = vpack.c.b16 %v398, %v392
    %v447 = vpack.c.b16 %v399, %v393
    %v448 = vpack.c.b16 %v400, %v394
    %497 = vmatprep.subr.bf16.mxu0 %v444
    %498 = vmatpush1.bf16.msra.mxu0 %v443
    %499 = vmatprep.subr.bf16.mxu0 %v438
    %500 = vmatpush1.bf16.msra.mxu0 %v437
    %501 = vmatprep.subr.bf16.mxu0 %v432
    %502 = vmatpush1.bf16.msra.mxu0 %v431
    %503 = vmatprep.subr.bf16.mxu0 %v426
    %504 = vmatpush1.bf16.msra.mxu0 %v425
    %505 = vmatprep.subr.bf16.mxu0 %v420
    %506 = vmatpush1.bf16.msra.mxu0 %v419
    %507 = vmatprep.subr.bf16.mxu0 %v414
    %508 = vmatpush1.bf16.msra.mxu0 %v413
    %509 = vmatprep.subr.bf16.mxu0 %v408
    %510 = vmatpush1.bf16.msra.mxu0 %v407
    %511 = vmatprep.subr.bf16.mxu0 %v402
    %512 = vmatpush1.bf16.msra.mxu0 %v401
    %513 = vmatprep.subr.bf16.mxu0 0
    %514 = vmatpush2.bf16.msra.mxu0 0
    %515 = vmatprep.subr.bf16.mxu0 0
    %516 = vmatpush2.bf16.msra.mxu0 0
    %517 = vmatprep.subr.bf16.mxu0 0
    %518 = vmatpush2.bf16.msra.mxu0 0
    %519 = vmatprep.subr.bf16.mxu0 0
    %520 = vmatpush2.bf16.msra.mxu0 0
    %521 = vmatprep.subr.bf16.mxu0 0
    %522 = vmatpush2.bf16.msra.mxu0 0
    %523 = vmatprep.subr.bf16.mxu0 0
    %524 = vmatpush2.bf16.msra.mxu0 0
    %525 = vmatprep.subr.bf16.mxu0 0
    %526 = vmatpush2.bf16.msra.mxu0 0
    %527 = vmatprep.subr.bf16.mxu0 0
    %528 = vmatpush2.bf16.msra.mxu0 0
    %529 = vmatprep.mubr.bf16.mxu0 0
    %530 = vmatmul.mubr.bf16.gmra.mxu0 %v167
    %v531 = vpop.f32.mrf.mxu0
    %v532 = vadd.f32 %v230, %v531
    %v533 = vpop.f32.mrf.mxu0
    %v534 = vadd.f32 %v234, %v533
    %v535 = vpop.f32.mrf.mxu0
    %v536 = vadd.f32 %v230, %v535
    %v537 = vpop.f32.mrf.mxu0
    %v538 = vadd.f32 %v234, %v537
    %539 = vmatprep.mubr.bf16.mxu0 0
    %540 = vmatmul.mubr.bf16.gmra.mxu0 %v168
    %v541 = vpop.f32.mrf.mxu0
    %v542 = vadd.f32 %v230, %v541
    %v543 = vpop.f32.mrf.mxu0
    %v544 = vadd.f32 %v234, %v543
    %v545 = vpop.f32.mrf.mxu0
    %v546 = vadd.f32 %v230, %v545
    %v547 = vpop.f32.mrf.mxu0
    %v548 = vadd.f32 %v234, %v547
    %549 = vdwg.mxu0
    %550 = vmatprep.subr.bf16.mxu0 %v446
    %551 = vmatpush1.bf16.msra.mxu0 %v445
    %552 = vmatprep.subr.bf16.mxu0 %v440
    %553 = vmatpush1.bf16.msra.mxu0 %v439
    %554 = vmatprep.subr.bf16.mxu0 %v434
    %555 = vmatpush1.bf16.msra.mxu0 %v433
    %556 = vmatprep.subr.bf16.mxu0 %v428
    %557 = vmatpush1.bf16.msra.mxu0 %v427
    %558 = vmatprep.subr.bf16.mxu0 %v422
    %559 = vmatpush1.bf16.msra.mxu0 %v421
    %560 = vmatprep.subr.bf16.mxu0 %v416
    %561 = vmatpush1.bf16.msra.mxu0 %v415
    %562 = vmatprep.subr.bf16.mxu0 %v410
    %563 = vmatpush1.bf16.msra.mxu0 %v409
    %564 = vmatprep.subr.bf16.mxu0 %v404
    %565 = vmatpush1.bf16.msra.mxu0 %v403
    %566 = vmatprep.subr.bf16.mxu0 0
    %567 = vmatpush2.bf16.msra.mxu0 0
    %568 = vmatprep.subr.bf16.mxu0 0
    %569 = vmatpush2.bf16.msra.mxu0 0
    %570 = vmatprep.subr.bf16.mxu0 0
    %571 = vmatpush2.bf16.msra.mxu0 0
    %572 = vmatprep.subr.bf16.mxu0 0
    %573 = vmatpush2.bf16.msra.mxu0 0
    %574 = vmatprep.subr.bf16.mxu0 0
    %575 = vmatpush2.bf16.msra.mxu0 0
    %576 = vmatprep.subr.bf16.mxu0 0
    %577 = vmatpush2.bf16.msra.mxu0 0
    %578 = vmatprep.subr.bf16.mxu0 0
    %579 = vmatpush2.bf16.msra.mxu0 0
    %580 = vmatprep.subr.bf16.mxu0 0
    %581 = vmatpush2.bf16.msra.mxu0 0
    %582 = vmatprep.mubr.bf16.mxu0 0
    %583 = vmatmul.mubr.bf16.gmra.mxu0 %v167
    %v584 = vpop.f32.mrf.mxu0
    %v585 = vadd.f32 %v238, %v584
    %v586 = vpop.f32.mrf.mxu0
    %v587 = vadd.f32 %v242, %v586
    %v588 = vpop.f32.mrf.mxu0
    %v589 = vadd.f32 %v238, %v588
    %v590 = vpop.f32.mrf.mxu0
    %v591 = vadd.f32 %v242, %v590
    %592 = vmatprep.mubr.bf16.mxu0 0
    %593 = vmatmul.mubr.bf16.gmra.mxu0 %v168
    %v594 = vpop.f32.mrf.mxu0
    %v595 = vadd.f32 %v238, %v594
    %v596 = vpop.f32.mrf.mxu0
    %v597 = vadd.f32 %v242, %v596
    %v598 = vpop.f32.mrf.mxu0
    %v599 = vadd.f32 %v238, %v598
    %v600 = vpop.f32.mrf.mxu0
    %v601 = vadd.f32 %v242, %v600
    %602 = vdwg.mxu0
    %603 = vmatprep.subr.bf16.mxu0 %v448
    %604 = vmatpush1.bf16.msra.mxu0 %v447
    %605 = vmatprep.subr.bf16.mxu0 %v442
    %606 = vmatpush1.bf16.msra.mxu0 %v441
    %607 = vmatprep.subr.bf16.mxu0 %v436
    %608 = vmatpush1.bf16.msra.mxu0 %v435
    %609 = vmatprep.subr.bf16.mxu0 %v430
    %610 = vmatpush1.bf16.msra.mxu0 %v429
    %611 = vmatprep.subr.bf16.mxu0 %v424
    %612 = vmatpush1.bf16.msra.mxu0 %v423
    %613 = vmatprep.subr.bf16.mxu0 %v418
    %614 = vmatpush1.bf16.msra.mxu0 %v417
    %615 = vmatprep.subr.bf16.mxu0 %v412
    %616 = vmatpush1.bf16.msra.mxu0 %v411
    %617 = vmatprep.subr.bf16.mxu0 %v406
    %618 = vmatpush1.bf16.msra.mxu0 %v405
    %619 = vmatprep.subr.bf16.mxu0 0
    %620 = vmatpush2.bf16.msra.mxu0 0
    %621 = vmatprep.subr.bf16.mxu0 0
    %622 = vmatpush2.bf16.msra.mxu0 0
    %623 = vmatprep.subr.bf16.mxu0 0
    %624 = vmatpush2.bf16.msra.mxu0 0
    %625 = vmatprep.subr.bf16.mxu0 0
    %626 = vmatpush2.bf16.msra.mxu0 0
    %627 = vmatprep.subr.bf16.mxu0 0
    %628 = vmatpush2.bf16.msra.mxu0 0
    %629 = vmatprep.subr.bf16.mxu0 0
    %630 = vmatpush2.bf16.msra.mxu0 0
    %631 = vmatprep.subr.bf16.mxu0 0
    %632 = vmatpush2.bf16.msra.mxu0 0
    %633 = vmatprep.subr.bf16.mxu0 0
    %634 = vmatpush2.bf16.msra.mxu0 0
    %635 = vmatprep.mubr.bf16.mxu0 0
    %636 = vmatmul.mubr.bf16.gmra.mxu0 %v167
    %v637 = vpop.f32.mrf.mxu0
    %v638 = vadd.f32 %v246, %v637
    %v639 = vpop.f32.mrf.mxu0
    %v640 = vadd.f32 %v250, %v639
    %v641 = vpop.f32.mrf.mxu0
    %v642 = vadd.f32 %v246, %v641
    %v643 = vpop.f32.mrf.mxu0
    %v644 = vadd.f32 %v250, %v643
    %645 = vmatprep.mubr.bf16.mxu0 0
    %646 = vmatmul.mubr.bf16.gmra.mxu0 %v168
    %v647 = vpop.f32.mrf.mxu0
    %v648 = vadd.f32 %v246, %v647
    %v649 = vpop.f32.mrf.mxu0
    %v650 = vadd.f32 %v250, %v649
    %v651 = vpop.f32.mrf.mxu0
    %v652 = vadd.f32 %v246, %v651
    %v653 = vpop.f32.mrf.mxu0
    %v654 = vadd.f32 %v250, %v653
    %655 = vdwg.mxu0
    %656 = vadd.xlane.f32.xlu0 %v159
    %v657 = vpop.xlane.xlu0 %656
    %658 = vadd.xlane.f32.xlu0 %v160
    %v659 = vpop.xlane.xlu0 %658
    %660 = vadd.xlane.f32.xlu0 %v161
    %v661 = vpop.xlane.xlu0 %660
    %662 = vadd.xlane.f32.xlu0 %v162
    %v663 = vpop.xlane.xlu0 %662
    %v664 = vrcp.pop 128.0
    %v665 = vmul.f32 %v657, %v664
    %v666 = vmul.f32 %v659, %v664
    %v667 = vmul.f32 %v661, %v664
    %v668 = vmul.f32 %v663, %v664
    %v669 = vsub.f32 %v159, %v665
    %v670 = vsub.f32 %v160, %v666
    %v671 = vsub.f32 %v161, %v667
    %v672 = vsub.f32 %v162, %v668
    %v673 = vmul.f32 %v669, %v669
    %v674 = vmul.f32 %v670, %v670
    %v675 = vmul.f32 %v671, %v671
    %v676 = vmul.f32 %v672, %v672
    %677 = vadd.xlane.f32.xlu0 %v673
    %v678 = vpop.xlane.xlu0 %677
    %679 = vadd.xlane.f32.xlu0 %v674
    %v680 = vpop.xlane.xlu0 %679
    %681 = vadd.xlane.f32.xlu0 %v675
    %v682 = vpop.xlane.xlu0 %681
    %683 = vadd.xlane.f32.xlu0 %v676
    %v684 = vpop.xlane.xlu0 %683
    %v685 = vmul.f32 %v678, %v664
    %v686 = vmul.f32 %v680, %v664
    %v687 = vmul.f32 %v682, %v664
    %v688 = vmul.f32 %v684, %v664
    %v689 = vadd.f32 %v685, 1e-05
    %v690 = vadd.f32 %v686, 1e-05
    %v691 = vadd.f32 %v687, 1e-05
    %v692 = vadd.f32 %v688, 1e-05
    %v693 = vrsqrt.pop %v689
    %v694 = vrsqrt.pop %v690
    %v695 = vrsqrt.pop %v691
    %v696 = vrsqrt.pop %v692
    %v697 = vmul.f32 %v669, %v693
    %v698 = vmul.f32 %v670, %v694
    %v699 = vmul.f32 %v671, %v695
    %v700 = vmul.f32 %v672, %v696
    %v701 = vld [vmem:[%s5] sm:$0x1]
    %v703 = vlaneseq
    %v704 = vshrl.u32 %v703, 7
    %v705 = vsub.s32 0, %v704
    %v706 = vrot.slane %v701, %v705
    %v708 = vmul.f32 %v697, %v706
    %v709 = vmul.f32 %v698, %v706
    %v710 = vmul.f32 %v699, %v706
    %v711 = vmul.f32 %v700, %v706
    %v712 = vadd.f32 %v534, 1.0
    %v713 = vadd.f32 %v538, 1.0
    %v714 = vadd.f32 %v544, 1.0
    %v715 = vadd.f32 %v548, 1.0
    %v716 = vmul.f32 %v708, %v712
    %v717 = vmul.f32 %v709, %v713
    %v718 = vmul.f32 %v710, %v714
    %v719 = vmul.f32 %v711, %v715
    %v720 = vadd.f32 %v716, %v532
    %v721 = vadd.f32 %v717, %v536
    %v722 = vadd.f32 %v718, %v542
    %v723 = vadd.f32 %v719, %v546
    %v724 = vld [vmem:[#allocation2] sm:$0xff]
    %v725 = vld [vmem:[#allocation2 + $0x8] sm:$0xf]
    %v726 = vld [vmem:[#allocation2 + $0xc] sm:$0xff]
    %v727 = vld [vmem:[#allocation2 + $0x14] sm:$0xf]
    %v728 = vld [vmem:[#allocation2 + $0x18] sm:$0xff]
    %v729 = vld [vmem:[#allocation2 + $0x20] sm:$0xf]
    %v730 = vld [vmem:[#allocation2 + $0x24] sm:$0xff]
    %v731 = vld [vmem:[#allocation2 + $0x2c] sm:$0xf]
    %v732 = vld [vmem:[#allocation2 + $0x30] sm:$0xff]
    %v733 = vld [vmem:[#allocation2 + $0x38] sm:$0xf]
    %v734 = vld [vmem:[#allocation2 + $0x3c] sm:$0xff]
    %v735 = vld [vmem:[#allocation2 + $0x44] sm:$0xf]
    %v736 = vld [vmem:[#allocation2 + $0x48] sm:$0xff]
    %v737 = vld [vmem:[#allocation2 + $0x50] sm:$0xf]
    %v738 = vld [vmem:[#allocation2 + $0x54] sm:$0xff]
    %v739 = vld [vmem:[#allocation2 + $0x5c] sm:$0xf]
    %v740 = vld [vmem:[#allocation2 + $0x60] sm:$0xff]
    %v741 = vld [vmem:[#allocation2 + $0x68] sm:$0xf]
    %v742 = vld [vmem:[#allocation2 + $0x6c] sm:$0xff]
    %v743 = vld [vmem:[#allocation2 + $0x74] sm:$0xf]
    %v744 = vld [vmem:[#allocation2 + $0x78] sm:$0xff]
    %v745 = vld [vmem:[#allocation2 + $0x80] sm:$0xf]
    %v746 = vld [vmem:[#allocation2 + $0x84] sm:$0xff]
    %v747 = vld [vmem:[#allocation2 + $0x8c] sm:$0xf]
    %v748 = vld [vmem:[#allocation2 + $0x90] sm:$0xff]
    %v749 = vld [vmem:[#allocation2 + $0x98] sm:$0xf]
    %v750 = vld [vmem:[#allocation2 + $0x9c] sm:$0xff]
    %v751 = vld [vmem:[#allocation2 + $0xa4] sm:$0xf]
    %v752 = vld [vmem:[#allocation2 + $0xa8] sm:$0xff]
    %v753 = vld [vmem:[#allocation2 + $0xb0] sm:$0xf]
    %v754 = vld [vmem:[#allocation2 + $0xb4] sm:$0xff]
    %v755 = vld [vmem:[#allocation2 + $0xbc] sm:$0xf]
    %v756 = vpack.c.bf16 %v721, %v720
    %v757 = vpack.c.bf16 %v723, %v722
    %v790 = vunpack.c.l.b16 %v724
    %v791 = vunpack.c.h.b16 %v724
    %v792 = vunpack.c.l.b16 %v725
    %v793 = vunpack.c.l.b16 %v726
    %v794 = vunpack.c.h.b16 %v726
    %v795 = vunpack.c.l.b16 %v727
    %v796 = vunpack.c.l.b16 %v728
    %v797 = vunpack.c.h.b16 %v728
    %v798 = vunpack.c.l.b16 %v729
    %v799 = vunpack.c.l.b16 %v730
    %v800 = vunpack.c.h.b16 %v730
    %v801 = vunpack.c.l.b16 %v731
    %v802 = vunpack.c.l.b16 %v732
    %v803 = vunpack.c.h.b16 %v732
    %v804 = vunpack.c.l.b16 %v733
    %v805 = vunpack.c.l.b16 %v734
    %v806 = vunpack.c.h.b16 %v734
    %v807 = vunpack.c.l.b16 %v735
    %v808 = vunpack.c.l.b16 %v736
    %v809 = vunpack.c.h.b16 %v736
    %v810 = vunpack.c.l.b16 %v737
    %v811 = vunpack.c.l.b16 %v738
    %v812 = vunpack.c.h.b16 %v738
    %v813 = vunpack.c.l.b16 %v739
    %v814 = vunpack.c.l.b16 %v740
    %v815 = vunpack.c.h.b16 %v740
    %v816 = vunpack.c.l.b16 %v741
    %v817 = vunpack.c.l.b16 %v742
    %v818 = vunpack.c.h.b16 %v742
    %v819 = vunpack.c.l.b16 %v743
    %v820 = vunpack.c.l.b16 %v744
    %v821 = vunpack.c.h.b16 %v744
    %v822 = vunpack.c.l.b16 %v745
    %v823 = vunpack.c.l.b16 %v746
    %v824 = vunpack.c.h.b16 %v746
    %v825 = vunpack.c.l.b16 %v747
    %v826 = vunpack.c.l.b16 %v748
    %v827 = vunpack.c.h.b16 %v748
    %v828 = vunpack.c.l.b16 %v749
    %v829 = vunpack.c.l.b16 %v750
    %v830 = vunpack.c.h.b16 %v750
    %v831 = vunpack.c.l.b16 %v751
    %v832 = vunpack.c.l.b16 %v752
    %v833 = vunpack.c.h.b16 %v752
    %v834 = vunpack.c.l.b16 %v753
    %v835 = vunpack.c.l.b16 %v754
    %v836 = vunpack.c.h.b16 %v754
    %v837 = vunpack.c.l.b16 %v755
    %v838 = vpack.c.b16 %v793, %v790
    %v839 = vpack.c.b16 %v794, %v791
    %v840 = vpack.c.b16 %v795, %v792
    %v841 = vpack.c.b16 %v799, %v796
    %v842 = vpack.c.b16 %v800, %v797
    %v843 = vpack.c.b16 %v801, %v798
    %v844 = vpack.c.b16 %v805, %v802
    %v845 = vpack.c.b16 %v806, %v803
    %v846 = vpack.c.b16 %v807, %v804
    %v847 = vpack.c.b16 %v811, %v808
    %v848 = vpack.c.b16 %v812, %v809
    %v849 = vpack.c.b16 %v813, %v810
    %v850 = vpack.c.b16 %v817, %v814
    %v851 = vpack.c.b16 %v818, %v815
    %v852 = vpack.c.b16 %v819, %v816
    %v853 = vpack.c.b16 %v823, %v820
    %v854 = vpack.c.b16 %v824, %v821
    %v855 = vpack.c.b16 %v825, %v822
    %v856 = vpack.c.b16 %v829, %v826
    %v857 = vpack.c.b16 %v830, %v827
    %v858 = vpack.c.b16 %v831, %v828
    %v859 = vpack.c.b16 %v835, %v832
    %v860 = vpack.c.b16 %v836, %v833
    %v861 = vpack.c.b16 %v837, %v834
    %886 = vmatprep.subr.bf16.mxu0 %v860
    %887 = vmatpush1.bf16.msra.mxu0 %v859
    %888 = vmatprep.subr.bf16.mxu0 %v857
    %889 = vmatpush1.bf16.msra.mxu0 %v856
    %890 = vmatprep.subr.bf16.mxu0 %v854
    %891 = vmatpush1.bf16.msra.mxu0 %v853
    %892 = vmatprep.subr.bf16.mxu0 %v851
    %893 = vmatpush1.bf16.msra.mxu0 %v850
    %894 = vmatprep.subr.bf16.mxu0 %v848
    %895 = vmatpush1.bf16.msra.mxu0 %v847
    %896 = vmatprep.subr.bf16.mxu0 %v845
    %897 = vmatpush1.bf16.msra.mxu0 %v844
    %898 = vmatprep.subr.bf16.mxu0 %v842
    %899 = vmatpush1.bf16.msra.mxu0 %v841
    %900 = vmatprep.subr.bf16.mxu0 %v839
    %901 = vmatpush1.bf16.msra.mxu0 %v838
    %902 = vmatprep.subr.bf16.mxu0 0
    %903 = vmatpush2.bf16.msra.mxu0 0
    %904 = vmatprep.subr.bf16.mxu0 0
    %905 = vmatpush2.bf16.msra.mxu0 0
    %906 = vmatprep.subr.bf16.mxu0 0
    %907 = vmatpush2.bf16.msra.mxu0 0
    %908 = vmatprep.subr.bf16.mxu0 0
    %909 = vmatpush2.bf16.msra.mxu0 0
    %910 = vmatprep.subr.bf16.mxu0 0
    %911 = vmatpush2.bf16.msra.mxu0 0
    %912 = vmatprep.subr.bf16.mxu0 0
    %913 = vmatpush2.bf16.msra.mxu0 0
    %914 = vmatprep.subr.bf16.mxu0 0
    %915 = vmatpush2.bf16.msra.mxu0 0
    %916 = vmatprep.subr.bf16.mxu0 0
    %917 = vmatpush2.bf16.msra.mxu0 0
    %918 = vmatprep.mubr.bf16.mxu0 0
    %919 = vmatmul.mubr.bf16.gmra.mxu0 %v756
    %v920 = vpop.f32.mrf.mxu0
    %v921 = vadd.f32 0.0, %v920
    %v922 = vpop.f32.mrf.mxu0
    %v923 = vadd.f32 0.0, %v922
    %v924 = vpop.f32.mrf.mxu0
    %v925 = vadd.f32 0.0, %v924
    %v926 = vpop.f32.mrf.mxu0
    %v927 = vadd.f32 0.0, %v926
    %928 = vmatprep.mubr.bf16.mxu0 0
    %929 = vmatmul.mubr.bf16.gmra.mxu0 %v757
    %v930 = vpop.f32.mrf.mxu0
    %v931 = vadd.f32 0.0, %v930
    %v932 = vpop.f32.mrf.mxu0
    %v933 = vadd.f32 0.0, %v932
    %v934 = vpop.f32.mrf.mxu0
    %v935 = vadd.f32 0.0, %v934
    %v936 = vpop.f32.mrf.mxu0
    %v937 = vadd.f32 0.0, %v936
    %938 = vdwg.mxu0
    %939 = vmatprep.subr.bf16.mxu0 0
    %940 = vmatpush1.bf16.msra.mxu0 %v861
    %941 = vmatprep.subr.bf16.mxu0 0
    %942 = vmatpush1.bf16.msra.mxu0 %v858
    %943 = vmatprep.subr.bf16.mxu0 0
    %944 = vmatpush1.bf16.msra.mxu0 %v855
    %945 = vmatprep.subr.bf16.mxu0 0
    %946 = vmatpush1.bf16.msra.mxu0 %v852
    %947 = vmatprep.subr.bf16.mxu0 0
    %948 = vmatpush1.bf16.msra.mxu0 %v849
    %949 = vmatprep.subr.bf16.mxu0 0
    %950 = vmatpush1.bf16.msra.mxu0 %v846
    %951 = vmatprep.subr.bf16.mxu0 0
    %952 = vmatpush1.bf16.msra.mxu0 %v843
    %953 = vmatprep.subr.bf16.mxu0 0
    %954 = vmatpush1.bf16.msra.mxu0 %v840
    %955 = vmatprep.subr.bf16.mxu0 0
    %956 = vmatpush2.bf16.msra.mxu0 0
    %957 = vmatprep.subr.bf16.mxu0 0
    %958 = vmatpush2.bf16.msra.mxu0 0
    %959 = vmatprep.subr.bf16.mxu0 0
    %960 = vmatpush2.bf16.msra.mxu0 0
    %961 = vmatprep.subr.bf16.mxu0 0
    %962 = vmatpush2.bf16.msra.mxu0 0
    %963 = vmatprep.subr.bf16.mxu0 0
    %964 = vmatpush2.bf16.msra.mxu0 0
    %965 = vmatprep.subr.bf16.mxu0 0
    %966 = vmatpush2.bf16.msra.mxu0 0
    %967 = vmatprep.subr.bf16.mxu0 0
    %968 = vmatpush2.bf16.msra.mxu0 0
    %969 = vmatprep.subr.bf16.mxu0 0
    %970 = vmatpush2.bf16.msra.mxu0 0
    %971 = vmatprep.mubr.bf16.mxu0 0
    %972 = vmatmul.mubr.bf16.gmra.mxu0 %v756
    %v973 = vpop.f32.mrf.mxu0
    %v974 = vadd.f32 0.0, %v973
    %v975 = vpop.f32.mrf.mxu0
    %v976 = vpop.f32.mrf.mxu0
    %v977 = vadd.f32 0.0, %v976
    %v978 = vpop.f32.mrf.mxu0
    %979 = vmatprep.mubr.bf16.mxu0 0
    %980 = vmatmul.mubr.bf16.gmra.mxu0 %v757
    %v981 = vpop.f32.mrf.mxu0
    %v982 = vadd.f32 0.0, %v981
    %v983 = vpop.f32.mrf.mxu0
    %v984 = vpop.f32.mrf.mxu0
    %v985 = vadd.f32 0.0, %v984
    %v986 = vpop.f32.mrf.mxu0
    %987 = vdwg.mxu0
    %v988 = vld [vmem:[#allocation5] sm:$0xff]
    %v989 = vld [vmem:[#allocation5 + $0x8] sm:$0xff]
    %v990 = vld [vmem:[#allocation5 + $0x10] sm:$0xff]
    %v991 = vld [vmem:[#allocation5 + $0x18] sm:$0xff]
    %v992 = vld [vmem:[#allocation5 + $0x20] sm:$0xff]
    %v993 = vld [vmem:[#allocation5 + $0x28] sm:$0xff]
    %v994 = vld [vmem:[#allocation5 + $0x30] sm:$0xff]
    %v995 = vld [vmem:[#allocation5 + $0x38] sm:$0xff]
    %v996 = vld [vmem:[#allocation5 + $0x40] sm:$0xff]
    %v997 = vld [vmem:[#allocation5 + $0x48] sm:$0xff]
    %v998 = vld [vmem:[#allocation5 + $0x50] sm:$0xff]
    %v999 = vld [vmem:[#allocation5 + $0x58] sm:$0xff]
    %v1000 = vld [vmem:[#allocation5 + $0x60] sm:$0xff]
    %v1001 = vld [vmem:[#allocation5 + $0x68] sm:$0xff]
    %v1002 = vld [vmem:[#allocation5 + $0x70] sm:$0xff]
    %v1003 = vld [vmem:[#allocation5 + $0x78] sm:$0xff]
    %v1020 = vunpack.c.l.b16 %v988
    %v1021 = vunpack.c.h.b16 %v988
    %v1022 = vunpack.c.l.b16 %v989
    %v1023 = vunpack.c.h.b16 %v989
    %v1024 = vunpack.c.l.b16 %v990
    %v1025 = vunpack.c.h.b16 %v990
    %v1026 = vunpack.c.l.b16 %v991
    %v1027 = vunpack.c.h.b16 %v991
    %v1028 = vunpack.c.l.b16 %v992
    %v1029 = vunpack.c.h.b16 %v992
    %v1030 = vunpack.c.l.b16 %v993
    %v1031 = vunpack.c.h.b16 %v993
    %v1032 = vunpack.c.l.b16 %v994
    %v1033 = vunpack.c.h.b16 %v994
    %v1034 = vunpack.c.l.b16 %v995
    %v1035 = vunpack.c.h.b16 %v995
    %v1036 = vunpack.c.l.b16 %v996
    %v1037 = vunpack.c.h.b16 %v996
    %v1038 = vunpack.c.l.b16 %v997
    %v1039 = vunpack.c.h.b16 %v997
    %v1040 = vunpack.c.l.b16 %v998
    %v1041 = vunpack.c.h.b16 %v998
    %v1042 = vunpack.c.l.b16 %v999
    %v1043 = vunpack.c.h.b16 %v999
    %v1044 = vunpack.c.l.b16 %v1000
    %v1045 = vunpack.c.h.b16 %v1000
    %v1046 = vunpack.c.l.b16 %v1001
    %v1047 = vunpack.c.h.b16 %v1001
    %v1048 = vunpack.c.l.b16 %v1002
    %v1049 = vunpack.c.h.b16 %v1002
    %v1050 = vunpack.c.l.b16 %v1003
    %v1051 = vunpack.c.h.b16 %v1003
    %v1052 = vpack.c.b16 %v1022, %v1020
    %v1053 = vpack.c.b16 %v1023, %v1021
    %v1054 = vpack.c.b16 %v1026, %v1024
    %v1055 = vpack.c.b16 %v1027, %v1025
    %v1056 = vpack.c.b16 %v1030, %v1028
    %v1057 = vpack.c.b16 %v1031, %v1029
    %v1058 = vpack.c.b16 %v1034, %v1032
    %v1059 = vpack.c.b16 %v1035, %v1033
    %v1060 = vpack.c.b16 %v1038, %v1036
    %v1061 = vpack.c.b16 %v1039, %v1037
    %v1062 = vpack.c.b16 %v1042, %v1040
    %v1063 = vpack.c.b16 %v1043, %v1041
    %v1064 = vpack.c.b16 %v1046, %v1044
    %v1065 = vpack.c.b16 %v1047, %v1045
    %v1066 = vpack.c.b16 %v1050, %v1048
    %v1067 = vpack.c.b16 %v1051, %v1049
    %1084 = vmatprep.subr.bf16.mxu0 %v1067
    %1085 = vmatpush1.bf16.msra.mxu0 %v1066
    %1086 = vmatprep.subr.bf16.mxu0 %v1065
    %1087 = vmatpush1.bf16.msra.mxu0 %v1064
    %1088 = vmatprep.subr.bf16.mxu0 %v1063
    %1089 = vmatpush1.bf16.msra.mxu0 %v1062
    %1090 = vmatprep.subr.bf16.mxu0 %v1061
    %1091 = vmatpush1.bf16.msra.mxu0 %v1060
    %1092 = vmatprep.subr.bf16.mxu0 %v1059
    %1093 = vmatpush1.bf16.msra.mxu0 %v1058
    %1094 = vmatprep.subr.bf16.mxu0 %v1057
    %1095 = vmatpush1.bf16.msra.mxu0 %v1056
    %1096 = vmatprep.subr.bf16.mxu0 %v1055
    %1097 = vmatpush1.bf16.msra.mxu0 %v1054
    %1098 = vmatprep.subr.bf16.mxu0 %v1053
    %1099 = vmatpush1.bf16.msra.mxu0 %v1052
    %1100 = vmatprep.subr.bf16.mxu0 0
    %1101 = vmatpush2.bf16.msra.mxu0 0
    %1102 = vmatprep.subr.bf16.mxu0 0
    %1103 = vmatpush2.bf16.msra.mxu0 0
    %1104 = vmatprep.subr.bf16.mxu0 0
    %1105 = vmatpush2.bf16.msra.mxu0 0
    %1106 = vmatprep.subr.bf16.mxu0 0
    %1107 = vmatpush2.bf16.msra.mxu0 0
    %1108 = vmatprep.subr.bf16.mxu0 0
    %1109 = vmatpush2.bf16.msra.mxu0 0
    %1110 = vmatprep.subr.bf16.mxu0 0
    %1111 = vmatpush2.bf16.msra.mxu0 0
    %1112 = vmatprep.subr.bf16.mxu0 0
    %1113 = vmatpush2.bf16.msra.mxu0 0
    %1114 = vmatprep.subr.bf16.mxu0 0
    %1115 = vmatpush2.bf16.msra.mxu0 0
    %1116 = vmatprep.mubr.bf16.mxu0 0
    %1117 = vmatmul.mubr.bf16.gmra.mxu0 %v756
    %v1118 = vpop.f32.mrf.mxu0
    %v1119 = vadd.f32 0.0, %v1118
    %v1120 = vpop.f32.mrf.mxu0
    %v1121 = vadd.f32 0.0, %v1120
    %v1122 = vpop.f32.mrf.mxu0
    %v1123 = vadd.f32 0.0, %v1122
    %v1124 = vpop.f32.mrf.mxu0
    %v1125 = vadd.f32 0.0, %v1124
    %1126 = vmatprep.mubr.bf16.mxu0 0
    %1127 = vmatmul.mubr.bf16.gmra.mxu0 %v757
    %v1128 = vpop.f32.mrf.mxu0
    %v1129 = vadd.f32 0.0, %v1128
    %v1130 = vpop.f32.mrf.mxu0
    %v1131 = vadd.f32 0.0, %v1130
    %v1132 = vpop.f32.mrf.mxu0
    %v1133 = vadd.f32 0.0, %v1132
    %v1134 = vpop.f32.mrf.mxu0
    %v1135 = vadd.f32 0.0, %v1134
    %1136 = vdwg.mxu0
    %vm1137 = vcmask 523264
    %v1138 = vsel %vm1137, %v921, 0.0
    %1139 = vadd.xlane.f32.xlu0 %v1138
    %v1140 = vpop.xlane.xlu0 %1139
    %v1141 = vsel %vm1137, %v925, 0.0
    %1142 = vadd.xlane.f32.xlu0 %v1141
    %v1143 = vpop.xlane.xlu0 %1142
    %v1144 = vrcp.pop 64.0
    %v1145 = vmul.f32 %v1140, %v1144
    %v1146 = vmul.f32 %v1143, %v1144
    %v1147 = vsub.f32 %v921, %v1145
    %v1148 = vsub.f32 %v925, %v1146
    %v1149 = vmul.f32 %v1147, %v1147
    %v1150 = vmul.f32 %v1148, %v1148
    %v1151 = vsel %vm1137, %v1149, 0.0
    %1152 = vadd.xlane.f32.xlu0 %v1151
    %v1153 = vpop.xlane.xlu0 %1152
    %v1154 = vsel %vm1137, %v1150, 0.0
    %1155 = vadd.xlane.f32.xlu0 %v1154
    %v1156 = vpop.xlane.xlu0 %1155
    %v1157 = vmul.f32 %v1153, %v1144
    %v1158 = vmul.f32 %v1156, %v1144
    %v1159 = vadd.f32 %v1157, 1e-06
    %v1160 = vadd.f32 %v1158, 1e-06
    %v1161 = vrsqrt.pop %v1159
    %v1162 = vrsqrt.pop %v1160
    %v1163 = vmul.f32 %v921, %v169
    %v1164 = vmul.f32 %v925, %v170
    %v1165 = vmul.f32 %v1119, %v172
    %v1166 = vmul.f32 %v1123, %v173
    %v1167 = vadd.f32 %v1163, %v1165
    %v1168 = vadd.f32 %v1164, %v1166
    %v1169 = vmul.f32 %v1145, %v175
    %v1170 = vmul.f32 %v1146, %v176
    %v1171 = vsub.f32 %v1167, %v1169
    %v1172 = vsub.f32 %v1168, %v1170
    %v1173 = vmul.f32 %v1161, %v1171
    %v1174 = vmul.f32 %v1162, %v1172
    %v1175 = vsel %vm1137, %v923, 0.0
    %1176 = vadd.xlane.f32.xlu0 %v1175
    %v1177 = vpop.xlane.xlu0 %1176
    %v1178 = vsel %vm1137, %v927, 0.0
    %1179 = vadd.xlane.f32.xlu0 %v1178
    %v1180 = vpop.xlane.xlu0 %1179
    %v1181 = vmul.f32 %v1177, %v1144
    %v1182 = vmul.f32 %v1180, %v1144
    %v1183 = vsub.f32 %v923, %v1181
    %v1184 = vsub.f32 %v927, %v1182
    %v1185 = vmul.f32 %v1183, %v1183
    %v1186 = vmul.f32 %v1184, %v1184
    %v1187 = vsel %vm1137, %v1185, 0.0
    %1188 = vadd.xlane.f32.xlu0 %v1187
    %v1189 = vpop.xlane.xlu0 %1188
    %v1190 = vsel %vm1137, %v1186, 0.0
    %1191 = vadd.xlane.f32.xlu0 %v1190
    %v1192 = vpop.xlane.xlu0 %1191
    %v1193 = vmul.f32 %v1189, %v1144
    %v1194 = vmul.f32 %v1192, %v1144
    %v1195 = vadd.f32 %v1193, 1e-06
    %v1196 = vadd.f32 %v1194, 1e-06
    %v1197 = vrsqrt.pop %v1195
    %v1198 = vrsqrt.pop %v1196
    %v1199 = vmul.f32 %v923, %v169
    %v1200 = vmul.f32 %v927, %v170
    %v1201 = vmul.f32 %v1121, %v172
    %v1202 = vmul.f32 %v1125, %v173
    %v1203 = vadd.f32 %v1199, %v1201
    %v1204 = vadd.f32 %v1200, %v1202
    %v1205 = vmul.f32 %v1181, %v175
    %v1206 = vmul.f32 %v1182, %v176
    %v1207 = vsub.f32 %v1203, %v1205
    %v1208 = vsub.f32 %v1204, %v1206
    %v1209 = vmul.f32 %v1197, %v1207
    %v1210 = vmul.f32 %v1198, %v1208
    %v1211 = vpack.c.bf16 %v1174, %v1173
    %v1212 = vpack.c.bf16 %v1210, %v1209
    %v1214 = vsel %vm1137, %v1211, 0
    %v1217 = vsel %vm1137, %v1212, 0
    %1219 = vmatprep.subr.bf16.mxu0 0
    %1220 = vmatpush1.bf16.xpose.msra.mxu0 0
    %1221 = vmatprep.subr.bf16.mxu0 0
    %1222 = vmatpush1.bf16.xpose.msra.mxu0 0
    %1223 = vmatprep.subr.bf16.mxu0 0
    %1224 = vmatpush1.bf16.xpose.msra.mxu0 0
    %1225 = vmatprep.subr.bf16.mxu0 0
    %1226 = vmatpush1.bf16.xpose.msra.mxu0 0
    %1227 = vmatprep.subr.bf16.mxu0 0
    %1228 = vmatpush1.bf16.xpose.msra.mxu0 0
    %1229 = vmatprep.subr.bf16.mxu0 0
    %1230 = vmatpush1.bf16.xpose.msra.mxu0 0
    %1231 = vmatprep.subr.bf16.mxu0 0
    %1232 = vmatpush1.bf16.xpose.msra.mxu0 0
    %1233 = vmatprep.subr.bf16.mxu0 0
    %1234 = vmatpush1.bf16.xpose.msra.mxu0 %v1217
    %1235 = vmatprep.subr.bf16.mxu0 0
    %1236 = vmatpush2.bf16.xpose.msra.mxu0 0
    %1237 = vmatprep.subr.bf16.mxu0 0
    %1238 = vmatpush2.bf16.xpose.msra.mxu0 0
    %1239 = vmatprep.subr.bf16.mxu0 0
    %1240 = vmatpush2.bf16.xpose.msra.mxu0 0
    %1241 = vmatprep.subr.bf16.mxu0 0
    %1242 = vmatpush2.bf16.xpose.msra.mxu0 0
    %1243 = vmatprep.subr.bf16.mxu0 0
    %1244 = vmatpush2.bf16.xpose.msra.mxu0 0
    %1245 = vmatprep.subr.bf16.mxu0 0
    %1246 = vmatpush2.bf16.xpose.msra.mxu0 0
    %1247 = vmatprep.subr.bf16.mxu0 0
    %1248 = vmatpush2.bf16.xpose.msra.mxu0 0
    %1249 = vmatprep.subr.bf16.mxu0 0
    %1250 = vmatpush2.bf16.xpose.msra.mxu0 0
    %1251 = vmatprep.mubr.bf16.mxu0 0
    %1252 = vmatmul.mubr.bf16.gmra.mxu0 %v1214
    %v1253 = vpop.f32.mrf.mxu0
    %v1254 = vadd.f32 0.0, %v1253
    %v1255 = vpop.f32.mrf.mxu0
    %v1256 = vpop.f32.mrf.mxu0
    %v1257 = vadd.f32 0.0, %v1256
    %v1258 = vpop.f32.mrf.mxu0
    %1259 = vdwg.mxu0
    %v1260 = vmul.f32 %v1254, 0.125
    %v1261 = vmul.f32 %v1257, 0.125
    %vm1262 = vcmask 130048
    %v1263 = vsel %vm1262, %v1260, -inf
    %1264 = vmax.xlane.f32.xlu0 %v1263
    %v1265 = vpop.xlane.xlu0 %1264
    %v1266 = vsel %vm1262, %v1261, -inf
    %1267 = vmax.xlane.f32.xlu0 %v1266
    %v1268 = vpop.xlane.xlu0 %1267
    %v1269 = vsub.f32 %v1260, %v1265
    %v1270 = vsub.f32 %v1261, %v1268
    %v1271 = vmul.f32 %v1269, 1.442695
    %v1272 = vpow.pop %v1271
    %v1273 = vmul.f32 %v1270, 1.442695
    %v1274 = vpow.pop %v1273
    %v1275 = vsel %vm1262, %v1272, 0.0
    %1276 = vadd.xlane.f32.xlu0 %v1275
    %v1277 = vpop.xlane.xlu0 %1276
    %v1278 = vsel %vm1262, %v1274, 0.0
    %1279 = vadd.xlane.f32.xlu0 %v1278
    %v1280 = vpop.xlane.xlu0 %1279
    %v1281 = vrcp.pop %v1277
    %v1282 = vrcp.pop %v1280
    %v1283 = vmul.f32 %v1272, %v1281
    %v1284 = vmul.f32 %v1274, %v1282
    %v1285 = vpack.c.bf16 %v977, %v974
    %v1286 = vpack.c.bf16 %v1284, %v1283
    %v1288 = vsel %vm1262, %v1286, 0
    %1290 = vmatprep.subr.bf16.mxu0 0
    %1291 = vmatpush1.bf16.msra.mxu0 0
    %1292 = vmatprep.subr.bf16.mxu0 0
    %1293 = vmatpush1.bf16.msra.mxu0 0
    %1294 = vmatprep.subr.bf16.mxu0 0
    %1295 = vmatpush1.bf16.msra.mxu0 0
    %1296 = vmatprep.subr.bf16.mxu0 0
    %1297 = vmatpush1.bf16.msra.mxu0 0
    %1298 = vmatprep.subr.bf16.mxu0 0
    %1299 = vmatpush1.bf16.msra.mxu0 0
    %1300 = vmatprep.subr.bf16.mxu0 0
    %1301 = vmatpush1.bf16.msra.mxu0 0
    %1302 = vmatprep.subr.bf16.mxu0 0
    %1303 = vmatpush1.bf16.msra.mxu0 0
    %1304 = vmatprep.subr.bf16.mxu0 0
    %1305 = vmatpush1.bf16.msra.mxu0 %v1285
    %1306 = vmatprep.subr.bf16.mxu0 0
    %1307 = vmatpush2.bf16.msra.mxu0 0
    %1308 = vmatprep.subr.bf16.mxu0 0
    %1309 = vmatpush2.bf16.msra.mxu0 0
    %1310 = vmatprep.subr.bf16.mxu0 0
    %1311 = vmatpush2.bf16.msra.mxu0 0
    %1312 = vmatprep.subr.bf16.mxu0 0
    %1313 = vmatpush2.bf16.msra.mxu0 0
    %1314 = vmatprep.subr.bf16.mxu0 0
    %1315 = vmatpush2.bf16.msra.mxu0 0
    %1316 = vmatprep.subr.bf16.mxu0 0
    %1317 = vmatpush2.bf16.msra.mxu0 0
    %1318 = vmatprep.subr.bf16.mxu0 0
    %1319 = vmatpush2.bf16.msra.mxu0 0
    %1320 = vmatprep.subr.bf16.mxu0 0
    %1321 = vmatpush2.bf16.msra.mxu0 0
    %1322 = vmatprep.mubr.bf16.mxu0 0
    %1323 = vmatmul.mubr.bf16.gmra.mxu0 %v1288
    %v1324 = vpop.f32.mrf.mxu0
    %v1325 = vadd.f32 0.0, %v1324
    %v1326 = vpop.f32.mrf.mxu0
    %v1327 = vpop.f32.mrf.mxu0
    %v1328 = vadd.f32 0.0, %v1327
    %v1329 = vpop.f32.mrf.mxu0
    %1330 = vdwg.mxu0
    %1333 = vrot.lane.b32.xlu0 %v921, 64
    %v1334 = vpop.permute.xlu0 %1333
    %1335 = vrot.lane.b32.xlu0 %v925, 64
    %v1336 = vpop.permute.xlu0 %1335
    %v1339 = vsel %vm1137, %v1334, 0.0
    %1340 = vadd.xlane.f32.xlu0 %v1339
    %v1341 = vpop.xlane.xlu0 %1340
    %v1342 = vsel %vm1137, %v1336, 0.0
    %1343 = vadd.xlane.f32.xlu0 %v1342
    %v1344 = vpop.xlane.xlu0 %1343
    %v1345 = vmul.f32 %v1341, %v1144
    %v1346 = vmul.f32 %v1344, %v1144
    %v1347 = vsub.f32 %v921, %v1345
    %v1348 = vsub.f32 %v925, %v1346
    %v1349 = vmul.f32 %v1347, %v1347
    %v1350 = vmul.f32 %v1348, %v1348
    %1353 = vrot.lane.b32.xlu0 %v1349, 64
    %v1354 = vpop.permute.xlu0 %1353
    %1355 = vrot.lane.b32.xlu0 %v1350, 64
    %v1356 = vpop.permute.xlu0 %1355
    %v1359 = vsel %vm1137, %v1354, 0.0
    %1360 = vadd.xlane.f32.xlu0 %v1359
    %v1361 = vpop.xlane.xlu0 %1360
    %v1362 = vsel %vm1137, %v1356, 0.0
    %1363 = vadd.xlane.f32.xlu0 %v1362
    %v1364 = vpop.xlane.xlu0 %1363
    %v1365 = vmul.f32 %v1361, %v1144
    %v1366 = vmul.f32 %v1364, %v1144
    %v1367 = vadd.f32 %v1365, 1e-06
    %v1368 = vadd.f32 %v1366, 1e-06
    %v1369 = vrsqrt.pop %v1367
    %v1370 = vrsqrt.pop %v1368
    %1373 = vrot.lane.b32.xlu0 %v169, 64
    %v1374 = vpop.permute.xlu0 %1373
    %1375 = vrot.lane.b32.xlu0 %v170, 64
    %v1376 = vpop.permute.xlu0 %1375
    %v1379 = vmul.f32 %v921, %v1374
    %v1380 = vmul.f32 %v925, %v1376
    %1383 = vrot.lane.b32.xlu0 %v172, 64
    %v1384 = vpop.permute.xlu0 %1383
    %1385 = vrot.lane.b32.xlu0 %v173, 64
    %v1386 = vpop.permute.xlu0 %1385
    %v1389 = vmul.f32 %v1119, %v1384
    %v1390 = vmul.f32 %v1123, %v1386
    %v1391 = vadd.f32 %v1379, %v1389
    %v1392 = vadd.f32 %v1380, %v1390
    %v1393 = vmul.f32 %v1345, %v175
    %v1394 = vmul.f32 %v1346, %v176
    %1397 = vrot.lane.b32.xlu0 %v1393, 64
    %v1398 = vpop.permute.xlu0 %1397
    %1399 = vrot.lane.b32.xlu0 %v1394, 64
    %v1400 = vpop.permute.xlu0 %1399
    %v1403 = vsub.f32 %v1391, %v1398
    %v1404 = vsub.f32 %v1392, %v1400
    %v1405 = vmul.f32 %v1369, %v1403
    %v1406 = vmul.f32 %v1370, %v1404
    %1409 = vrot.lane.b32.xlu0 %v923, 64
    %v1410 = vpop.permute.xlu0 %1409
    %1411 = vrot.lane.b32.xlu0 %v927, 64
    %v1412 = vpop.permute.xlu0 %1411
    %v1415 = vsel %vm1137, %v1410, 0.0
    %1416 = vadd.xlane.f32.xlu0 %v1415
    %v1417 = vpop.xlane.xlu0 %1416
    %v1418 = vsel %vm1137, %v1412, 0.0
    %1419 = vadd.xlane.f32.xlu0 %v1418
    %v1420 = vpop.xlane.xlu0 %1419
    %v1421 = vmul.f32 %v1417, %v1144
    %v1422 = vmul.f32 %v1420, %v1144
    %v1423 = vsub.f32 %v923, %v1421
    %v1424 = vsub.f32 %v927, %v1422
    %v1425 = vmul.f32 %v1423, %v1423
    %v1426 = vmul.f32 %v1424, %v1424
    %1429 = vrot.lane.b32.xlu0 %v1425, 64
    %v1430 = vpop.permute.xlu0 %1429
    %1431 = vrot.lane.b32.xlu0 %v1426, 64
    %v1432 = vpop.permute.xlu0 %1431
    %v1435 = vsel %vm1137, %v1430, 0.0
    %1436 = vadd.xlane.f32.xlu0 %v1435
    %v1437 = vpop.xlane.xlu0 %1436
    %v1438 = vsel %vm1137, %v1432, 0.0
    %1439 = vadd.xlane.f32.xlu0 %v1438
    %v1440 = vpop.xlane.xlu0 %1439
    %v1441 = vmul.f32 %v1437, %v1144
    %v1442 = vmul.f32 %v1440, %v1144
    %v1443 = vadd.f32 %v1441, 1e-06
    %v1444 = vadd.f32 %v1442, 1e-06
    %v1445 = vrsqrt.pop %v1443
    %v1446 = vrsqrt.pop %v1444
    %v1447 = vmul.f32 %v923, %v1374
    %v1448 = vmul.f32 %v927, %v1376
    %v1449 = vmul.f32 %v1121, %v1384
    %v1450 = vmul.f32 %v1125, %v1386
    %v1451 = vadd.f32 %v1447, %v1449
    %v1452 = vadd.f32 %v1448, %v1450
    %v1453 = vmul.f32 %v1421, %v175
    %v1454 = vmul.f32 %v1422, %v176
    %1457 = vrot.lane.b32.xlu0 %v1453, 64
    %v1458 = vpop.permute.xlu0 %1457
    %1459 = vrot.lane.b32.xlu0 %v1454, 64
    %v1460 = vpop.permute.xlu0 %1459
    %v1463 = vsub.f32 %v1451, %v1458
    %v1464 = vsub.f32 %v1452, %v1460
    %v1465 = vmul.f32 %v1445, %v1463
    %v1466 = vmul.f32 %v1446, %v1464
    %v1467 = vpack.c.bf16 %v1406, %v1405
    %v1468 = vpack.c.bf16 %v1466, %v1465
    %1470 = vrot.lane.b32.xlu0 %v1467, 64
    %v1471 = vpop.permute.xlu0 %1470
    %1473 = vrot.lane.b32.xlu0 %v1468, 64
    %v1474 = vpop.permute.xlu0 %1473
    %v1476 = vsel %vm1137, %v1471, 0
    %v1479 = vsel %vm1137, %v1474, 0
    %1481 = vmatprep.subr.bf16.mxu0 0
    %1482 = vmatpush1.bf16.xpose.msra.mxu0 0
    %1483 = vmatprep.subr.bf16.mxu0 0
    %1484 = vmatpush1.bf16.xpose.msra.mxu0 0
    %1485 = vmatprep.subr.bf16.mxu0 0
    %1486 = vmatpush1.bf16.xpose.msra.mxu0 0
    %1487 = vmatprep.subr.bf16.mxu0 0
    %1488 = vmatpush1.bf16.xpose.msra.mxu0 0
    %1489 = vmatprep.subr.bf16.mxu0 0
    %1490 = vmatpush1.bf16.xpose.msra.mxu0 0
    %1491 = vmatprep.subr.bf16.mxu0 0
    %1492 = vmatpush1.bf16.xpose.msra.mxu0 0
    %1493 = vmatprep.subr.bf16.mxu0 0
    %1494 = vmatpush1.bf16.xpose.msra.mxu0 0
    %1495 = vmatprep.subr.bf16.mxu0 0
    %1496 = vmatpush1.bf16.xpose.msra.mxu0 %v1479
    %1497 = vmatprep.subr.bf16.mxu0 0
    %1498 = vmatpush2.bf16.xpose.msra.mxu0 0
    %1499 = vmatprep.subr.bf16.mxu0 0
    %1500 = vmatpush2.bf16.xpose.msra.mxu0 0
    %1501 = vmatprep.subr.bf16.mxu0 0
    %1502 = vmatpush2.bf16.xpose.msra.mxu0 0
    %1503 = vmatprep.subr.bf16.mxu0 0
    %1504 = vmatpush2.bf16.xpose.msra.mxu0 0
    %1505 = vmatprep.subr.bf16.mxu0 0
    %1506 = vmatpush2.bf16.xpose.msra.mxu0 0
    %1507 = vmatprep.subr.bf16.mxu0 0
    %1508 = vmatpush2.bf16.xpose.msra.mxu0 0
    %1509 = vmatprep.subr.bf16.mxu0 0
    %1510 = vmatpush2.bf16.xpose.msra.mxu0 0
    %1511 = vmatprep.subr.bf16.mxu0 0
    %1512 = vmatpush2.bf16.xpose.msra.mxu0 0
    %1513 = vmatprep.mubr.bf16.mxu0 0
    %1514 = vmatmul.mubr.bf16.gmra.mxu0 %v1476
    %v1515 = vpop.f32.mrf.mxu0
    %v1516 = vadd.f32 0.0, %v1515
    %v1517 = vpop.f32.mrf.mxu0
    %v1518 = vpop.f32.mrf.mxu0
    %v1519 = vadd.f32 0.0, %v1518
    %v1520 = vpop.f32.mrf.mxu0
    %1521 = vdwg.mxu0
    %v1522 = vmul.f32 %v1516, 0.125
    %v1523 = vmul.f32 %v1519, 0.125
    %v1524 = vsel %vm1262, %v1522, -inf
    %1525 = vmax.xlane.f32.xlu0 %v1524
    %v1526 = vpop.xlane.xlu0 %1525
    %v1527 = vsel %vm1262, %v1523, -inf
    %1528 = vmax.xlane.f32.xlu0 %v1527
    %v1529 = vpop.xlane.xlu0 %1528
    %v1530 = vsub.f32 %v1522, %v1526
    %v1531 = vsub.f32 %v1523, %v1529
    %v1532 = vmul.f32 %v1530, 1.442695
    %v1533 = vpow.pop %v1532
    %v1534 = vmul.f32 %v1531, 1.442695
    %v1535 = vpow.pop %v1534
    %v1536 = vsel %vm1262, %v1533, 0.0
    %1537 = vadd.xlane.f32.xlu0 %v1536
    %v1538 = vpop.xlane.xlu0 %1537
    %v1539 = vsel %vm1262, %v1535, 0.0
    %1540 = vadd.xlane.f32.xlu0 %v1539
    %v1541 = vpop.xlane.xlu0 %1540
    %v1542 = vrcp.pop %v1538
    %v1543 = vrcp.pop %v1541
    %v1544 = vmul.f32 %v1533, %v1542
    %v1545 = vmul.f32 %v1535, %v1543
    %v1546 = vpack.c.bf16 %v1545, %v1544
    %1548 = vrot.lane.b32.xlu0 %v1285, 64
    %v1549 = vpop.permute.xlu0 %1548
    %v1552 = vsel %vm1262, %v1546, 0
    %1554 = vmatprep.subr.bf16.mxu0 0
    %1555 = vmatpush1.bf16.msra.mxu0 0
    %1556 = vmatprep.subr.bf16.mxu0 0
    %1557 = vmatpush1.bf16.msra.mxu0 0
    %1558 = vmatprep.subr.bf16.mxu0 0
    %1559 = vmatpush1.bf16.msra.mxu0 0
    %1560 = vmatprep.subr.bf16.mxu0 0
    %1561 = vmatpush1.bf16.msra.mxu0 0
    %1562 = vmatprep.subr.bf16.mxu0 0
    %1563 = vmatpush1.bf16.msra.mxu0 0
    %1564 = vmatprep.subr.bf16.mxu0 0
    %1565 = vmatpush1.bf16.msra.mxu0 0
    %1566 = vmatprep.subr.bf16.mxu0 0
    %1567 = vmatpush1.bf16.msra.mxu0 0
    %1568 = vmatprep.subr.bf16.mxu0 0
    %1569 = vmatpush1.bf16.msra.mxu0 %v1549
    %1570 = vmatprep.subr.bf16.mxu0 0
    %1571 = vmatpush2.bf16.msra.mxu0 0
    %1572 = vmatprep.subr.bf16.mxu0 0
    %1573 = vmatpush2.bf16.msra.mxu0 0
    %1574 = vmatprep.subr.bf16.mxu0 0
    %1575 = vmatpush2.bf16.msra.mxu0 0
    %1576 = vmatprep.subr.bf16.mxu0 0
    %1577 = vmatpush2.bf16.msra.mxu0 0
    %1578 = vmatprep.subr.bf16.mxu0 0
    %1579 = vmatpush2.bf16.msra.mxu0 0
    %1580 = vmatprep.subr.bf16.mxu0 0
    %1581 = vmatpush2.bf16.msra.mxu0 0
    %1582 = vmatprep.subr.bf16.mxu0 0
    %1583 = vmatpush2.bf16.msra.mxu0 0
    %1584 = vmatprep.subr.bf16.mxu0 0
    %1585 = vmatpush2.bf16.msra.mxu0 0
    %1586 = vmatprep.mubr.bf16.mxu0 0
    %1587 = vmatmul.mubr.bf16.gmra.mxu0 %v1552
    %v1588 = vpop.f32.mrf.mxu0
    %v1589 = vadd.f32 0.0, %v1588
    %v1590 = vpop.f32.mrf.mxu0
    %v1591 = vpop.f32.mrf.mxu0
    %v1592 = vadd.f32 0.0, %v1591
    %v1593 = vpop.f32.mrf.mxu0
    %1594 = vdwg.mxu0
    %1597 = vrot.lane.b32.xlu0 %v1589, 64
    %v1598 = vpop.permute.xlu0 %1597
    %1599 = vrot.lane.b32.xlu0 %v1592, 64
    %v1600 = vpop.permute.xlu0 %1599
    %v1603 = vsel %vm1137, %v1325, %v1598
    %v1604 = vsel %vm1137, %v1328, %v1600
    %v1605 = vsel %vm1137, %v931, 0.0
    %1606 = vadd.xlane.f32.xlu0 %v1605
    %v1607 = vpop.xlane.xlu0 %1606
    %v1608 = vsel %vm1137, %v935, 0.0
    %1609 = vadd.xlane.f32.xlu0 %v1608
    %v1610 = vpop.xlane.xlu0 %1609
    %v1611 = vmul.f32 %v1607, %v1144
    %v1612 = vmul.f32 %v1610, %v1144
    %v1613 = vsub.f32 %v931, %v1611
    %v1614 = vsub.f32 %v935, %v1612
    %v1615 = vmul.f32 %v1613, %v1613
    %v1616 = vmul.f32 %v1614, %v1614
    %v1617 = vsel %vm1137, %v1615, 0.0
    %1618 = vadd.xlane.f32.xlu0 %v1617
    %v1619 = vpop.xlane.xlu0 %1618
    %v1620 = vsel %vm1137, %v1616, 0.0
    %1621 = vadd.xlane.f32.xlu0 %v1620
    %v1622 = vpop.xlane.xlu0 %1621
    %v1623 = vmul.f32 %v1619, %v1144
    %v1624 = vmul.f32 %v1622, %v1144
    %v1625 = vadd.f32 %v1623, 1e-06
    %v1626 = vadd.f32 %v1624, 1e-06
    %v1627 = vrsqrt.pop %v1625
    %v1628 = vrsqrt.pop %v1626
    %v1629 = vmul.f32 %v931, %v169
    %v1630 = vmul.f32 %v935, %v170
    %v1631 = vmul.f32 %v1129, %v172
    %v1632 = vmul.f32 %v1133, %v173
    %v1633 = vadd.f32 %v1629, %v1631
    %v1634 = vadd.f32 %v1630, %v1632
    %v1635 = vmul.f32 %v1611, %v175
    %v1636 = vmul.f32 %v1612, %v176
    %v1637 = vsub.f32 %v1633, %v1635
    %v1638 = vsub.f32 %v1634, %v1636
    %v1639 = vmul.f32 %v1627, %v1637
    %v1640 = vmul.f32 %v1628, %v1638
    %v1641 = vsel %vm1137, %v933, 0.0
    %1642 = vadd.xlane.f32.xlu0 %v1641
    %v1643 = vpop.xlane.xlu0 %1642
    %v1644 = vsel %vm1137, %v937, 0.0
    %1645 = vadd.xlane.f32.xlu0 %v1644
    %v1646 = vpop.xlane.xlu0 %1645
    %v1647 = vmul.f32 %v1643, %v1144
    %v1648 = vmul.f32 %v1646, %v1144
    %v1649 = vsub.f32 %v933, %v1647
    %v1650 = vsub.f32 %v937, %v1648
    %v1651 = vmul.f32 %v1649, %v1649
    %v1652 = vmul.f32 %v1650, %v1650
    %v1653 = vsel %vm1137, %v1651, 0.0
    %1654 = vadd.xlane.f32.xlu0 %v1653
    %v1655 = vpop.xlane.xlu0 %1654
    %v1656 = vsel %vm1137, %v1652, 0.0
    %1657 = vadd.xlane.f32.xlu0 %v1656
    %v1658 = vpop.xlane.xlu0 %1657
    %v1659 = vmul.f32 %v1655, %v1144
    %v1660 = vmul.f32 %v1658, %v1144
    %v1661 = vadd.f32 %v1659, 1e-06
    %v1662 = vadd.f32 %v1660, 1e-06
    %v1663 = vrsqrt.pop %v1661
    %v1664 = vrsqrt.pop %v1662
    %v1665 = vmul.f32 %v933, %v169
    %v1666 = vmul.f32 %v937, %v170
    %v1667 = vmul.f32 %v1131, %v172
    %v1668 = vmul.f32 %v1135, %v173
    %v1669 = vadd.f32 %v1665, %v1667
    %v1670 = vadd.f32 %v1666, %v1668
    %v1671 = vmul.f32 %v1647, %v175
    %v1672 = vmul.f32 %v1648, %v176
    %v1673 = vsub.f32 %v1669, %v1671
    %v1674 = vsub.f32 %v1670, %v1672
    %v1675 = vmul.f32 %v1663, %v1673
    %v1676 = vmul.f32 %v1664, %v1674
    %v1677 = vpack.c.bf16 %v1640, %v1639
    %v1678 = vpack.c.bf16 %v1676, %v1675
    %v1680 = vsel %vm1137, %v1677, 0
    %v1683 = vsel %vm1137, %v1678, 0
    %1685 = vmatprep.subr.bf16.mxu0 0
    %1686 = vmatpush1.bf16.xpose.msra.mxu0 0
    %1687 = vmatprep.subr.bf16.mxu0 0
    %1688 = vmatpush1.bf16.xpose.msra.mxu0 0
    %1689 = vmatprep.subr.bf16.mxu0 0
    %1690 = vmatpush1.bf16.xpose.msra.mxu0 0
    %1691 = vmatprep.subr.bf16.mxu0 0
    %1692 = vmatpush1.bf16.xpose.msra.mxu0 0
    %1693 = vmatprep.subr.bf16.mxu0 0
    %1694 = vmatpush1.bf16.xpose.msra.mxu0 0
    %1695 = vmatprep.subr.bf16.mxu0 0
    %1696 = vmatpush1.bf16.xpose.msra.mxu0 0
    %1697 = vmatprep.subr.bf16.mxu0 0
    %1698 = vmatpush1.bf16.xpose.msra.mxu0 0
    %1699 = vmatprep.subr.bf16.mxu0 0
    %1700 = vmatpush1.bf16.xpose.msra.mxu0 %v1683
    %1701 = vmatprep.subr.bf16.mxu0 0
    %1702 = vmatpush2.bf16.xpose.msra.mxu0 0
    %1703 = vmatprep.subr.bf16.mxu0 0
    %1704 = vmatpush2.bf16.xpose.msra.mxu0 0
    %1705 = vmatprep.subr.bf16.mxu0 0
    %1706 = vmatpush2.bf16.xpose.msra.mxu0 0
    %1707 = vmatprep.subr.bf16.mxu0 0
    %1708 = vmatpush2.bf16.xpose.msra.mxu0 0
    %1709 = vmatprep.subr.bf16.mxu0 0
    %1710 = vmatpush2.bf16.xpose.msra.mxu0 0
    %1711 = vmatprep.subr.bf16.mxu0 0
    %1712 = vmatpush2.bf16.xpose.msra.mxu0 0
    %1713 = vmatprep.subr.bf16.mxu0 0
    %1714 = vmatpush2.bf16.xpose.msra.mxu0 0
    %1715 = vmatprep.subr.bf16.mxu0 0
    %1716 = vmatpush2.bf16.xpose.msra.mxu0 0
    %1717 = vmatprep.mubr.bf16.mxu0 0
    %1718 = vmatmul.mubr.bf16.gmra.mxu0 %v1680
    %v1719 = vpop.f32.mrf.mxu0
    %v1720 = vadd.f32 0.0, %v1719
    %v1721 = vpop.f32.mrf.mxu0
    %v1722 = vpop.f32.mrf.mxu0
    %v1723 = vadd.f32 0.0, %v1722
    %v1724 = vpop.f32.mrf.mxu0
    %1725 = vdwg.mxu0
    %v1726 = vmul.f32 %v1720, 0.125
    %v1727 = vmul.f32 %v1723, 0.125
    %v1728 = vsel %vm1262, %v1726, -inf
    %1729 = vmax.xlane.f32.xlu0 %v1728
    %v1730 = vpop.xlane.xlu0 %1729
    %v1731 = vsel %vm1262, %v1727, -inf
    %1732 = vmax.xlane.f32.xlu0 %v1731
    %v1733 = vpop.xlane.xlu0 %1732
    %v1734 = vsub.f32 %v1726, %v1730
    %v1735 = vsub.f32 %v1727, %v1733
    %v1736 = vmul.f32 %v1734, 1.442695
    %v1737 = vpow.pop %v1736
    %v1738 = vmul.f32 %v1735, 1.442695
    %v1739 = vpow.pop %v1738
    %v1740 = vsel %vm1262, %v1737, 0.0
    %1741 = vadd.xlane.f32.xlu0 %v1740
    %v1742 = vpop.xlane.xlu0 %1741
    %v1743 = vsel %vm1262, %v1739, 0.0
    %1744 = vadd.xlane.f32.xlu0 %v1743
    %v1745 = vpop.xlane.xlu0 %1744
    %v1746 = vrcp.pop %v1742
    %v1747 = vrcp.pop %v1745
    %v1748 = vmul.f32 %v1737, %v1746
    %v1749 = vmul.f32 %v1739, %v1747
    %v1750 = vpack.c.bf16 %v985, %v982
    %v1751 = vpack.c.bf16 %v1749, %v1748
    %v1753 = vsel %vm1262, %v1751, 0
    %1755 = vmatprep.subr.bf16.mxu0 0
    %1756 = vmatpush1.bf16.msra.mxu0 0
    %1757 = vmatprep.subr.bf16.mxu0 0
    %1758 = vmatpush1.bf16.msra.mxu0 0
    %1759 = vmatprep.subr.bf16.mxu0 0
    %1760 = vmatpush1.bf16.msra.mxu0 0
    %1761 = vmatprep.subr.bf16.mxu0 0
    %1762 = vmatpush1.bf16.msra.mxu0 0
    %1763 = vmatprep.subr.bf16.mxu0 0
    %1764 = vmatpush1.bf16.msra.mxu0 0
    %1765 = vmatprep.subr.bf16.mxu0 0
    %1766 = vmatpush1.bf16.msra.mxu0 0
    %1767 = vmatprep.subr.bf16.mxu0 0
    %1768 = vmatpush1.bf16.msra.mxu0 0
    %1769 = vmatprep.subr.bf16.mxu0 0
    %1770 = vmatpush1.bf16.msra.mxu0 %v1750
    %1771 = vmatprep.subr.bf16.mxu0 0
    %1772 = vmatpush2.bf16.msra.mxu0 0
    %1773 = vmatprep.subr.bf16.mxu0 0
    %1774 = vmatpush2.bf16.msra.mxu0 0
    %1775 = vmatprep.subr.bf16.mxu0 0
    %1776 = vmatpush2.bf16.msra.mxu0 0
    %1777 = vmatprep.subr.bf16.mxu0 0
    %1778 = vmatpush2.bf16.msra.mxu0 0
    %1779 = vmatprep.subr.bf16.mxu0 0
    %1780 = vmatpush2.bf16.msra.mxu0 0
    %1781 = vmatprep.subr.bf16.mxu0 0
    %1782 = vmatpush2.bf16.msra.mxu0 0
    %1783 = vmatprep.subr.bf16.mxu0 0
    %1784 = vmatpush2.bf16.msra.mxu0 0
    %1785 = vmatprep.subr.bf16.mxu0 0
    %1786 = vmatpush2.bf16.msra.mxu0 0
    %1787 = vmatprep.mubr.bf16.mxu0 0
    %1788 = vmatmul.mubr.bf16.gmra.mxu0 %v1753
    %v1789 = vpop.f32.mrf.mxu0
    %v1790 = vadd.f32 0.0, %v1789
    %v1791 = vpop.f32.mrf.mxu0
    %v1792 = vpop.f32.mrf.mxu0
    %v1793 = vadd.f32 0.0, %v1792
    %v1794 = vpop.f32.mrf.mxu0
    %1795 = vdwg.mxu0
    %1798 = vrot.lane.b32.xlu0 %v931, 64
    %v1799 = vpop.permute.xlu0 %1798
    %1800 = vrot.lane.b32.xlu0 %v935, 64
    %v1801 = vpop.permute.xlu0 %1800
    %v1804 = vsel %vm1137, %v1799, 0.0
    %1805 = vadd.xlane.f32.xlu0 %v1804
    %v1806 = vpop.xlane.xlu0 %1805
    %v1807 = vsel %vm1137, %v1801, 0.0
    %1808 = vadd.xlane.f32.xlu0 %v1807
    %v1809 = vpop.xlane.xlu0 %1808
    %v1810 = vmul.f32 %v1806, %v1144
    %v1811 = vmul.f32 %v1809, %v1144
    %v1812 = vsub.f32 %v931, %v1810
    %v1813 = vsub.f32 %v935, %v1811
    %v1814 = vmul.f32 %v1812, %v1812
    %v1815 = vmul.f32 %v1813, %v1813
    %1818 = vrot.lane.b32.xlu0 %v1814, 64
    %v1819 = vpop.permute.xlu0 %1818
    %1820 = vrot.lane.b32.xlu0 %v1815, 64
    %v1821 = vpop.permute.xlu0 %1820
    %v1824 = vsel %vm1137, %v1819, 0.0
    %1825 = vadd.xlane.f32.xlu0 %v1824
    %v1826 = vpop.xlane.xlu0 %1825
    %v1827 = vsel %vm1137, %v1821, 0.0
    %1828 = vadd.xlane.f32.xlu0 %v1827
    %v1829 = vpop.xlane.xlu0 %1828
    %v1830 = vmul.f32 %v1826, %v1144
    %v1831 = vmul.f32 %v1829, %v1144
    %v1832 = vadd.f32 %v1830, 1e-06
    %v1833 = vadd.f32 %v1831, 1e-06
    %v1834 = vrsqrt.pop %v1832
    %v1835 = vrsqrt.pop %v1833
    %v1836 = vmul.f32 %v931, %v1374
    %v1837 = vmul.f32 %v935, %v1376
    %v1838 = vmul.f32 %v1129, %v1384
    %v1839 = vmul.f32 %v1133, %v1386
    %v1840 = vadd.f32 %v1836, %v1838
    %v1841 = vadd.f32 %v1837, %v1839
    %v1842 = vmul.f32 %v1810, %v175
    %v1843 = vmul.f32 %v1811, %v176
    %1846 = vrot.lane.b32.xlu0 %v1842, 64
    %v1847 = vpop.permute.xlu0 %1846
    %1848 = vrot.lane.b32.xlu0 %v1843, 64
    %v1849 = vpop.permute.xlu0 %1848
    %v1852 = vsub.f32 %v1840, %v1847
    %v1853 = vsub.f32 %v1841, %v1849
    %v1854 = vmul.f32 %v1834, %v1852
    %v1855 = vmul.f32 %v1835, %v1853
    %1858 = vrot.lane.b32.xlu0 %v933, 64
    %v1859 = vpop.permute.xlu0 %1858
    %1860 = vrot.lane.b32.xlu0 %v937, 64
    %v1861 = vpop.permute.xlu0 %1860
    %v1864 = vsel %vm1137, %v1859, 0.0
    %1865 = vadd.xlane.f32.xlu0 %v1864
    %v1866 = vpop.xlane.xlu0 %1865
    %v1867 = vsel %vm1137, %v1861, 0.0
    %1868 = vadd.xlane.f32.xlu0 %v1867
    %v1869 = vpop.xlane.xlu0 %1868
    %v1870 = vmul.f32 %v1866, %v1144
    %v1871 = vmul.f32 %v1869, %v1144
    %v1872 = vsub.f32 %v933, %v1870
    %v1873 = vsub.f32 %v937, %v1871
    %v1874 = vmul.f32 %v1872, %v1872
    %v1875 = vmul.f32 %v1873, %v1873
    %1878 = vrot.lane.b32.xlu0 %v1874, 64
    %v1879 = vpop.permute.xlu0 %1878
    %1880 = vrot.lane.b32.xlu0 %v1875, 64
    %v1881 = vpop.permute.xlu0 %1880
    %v1884 = vsel %vm1137, %v1879, 0.0
    %1885 = vadd.xlane.f32.xlu0 %v1884
    %v1886 = vpop.xlane.xlu0 %1885
    %v1887 = vsel %vm1137, %v1881, 0.0
    %1888 = vadd.xlane.f32.xlu0 %v1887
    %v1889 = vpop.xlane.xlu0 %1888
    %v1890 = vmul.f32 %v1886, %v1144
    %v1891 = vmul.f32 %v1889, %v1144
    %v1892 = vadd.f32 %v1890, 1e-06
    %v1893 = vadd.f32 %v1891, 1e-06
    %v1894 = vrsqrt.pop %v1892
    %v1895 = vrsqrt.pop %v1893
    %v1896 = vmul.f32 %v933, %v1374
    %v1897 = vmul.f32 %v937, %v1376
    %v1898 = vmul.f32 %v1131, %v1384
    %v1899 = vmul.f32 %v1135, %v1386
    %v1900 = vadd.f32 %v1896, %v1898
    %v1901 = vadd.f32 %v1897, %v1899
    %v1902 = vmul.f32 %v1870, %v175
    %v1903 = vmul.f32 %v1871, %v176
    %1906 = vrot.lane.b32.xlu0 %v1902, 64
    %v1907 = vpop.permute.xlu0 %1906
    %1908 = vrot.lane.b32.xlu0 %v1903, 64
    %v1909 = vpop.permute.xlu0 %1908
    %v1912 = vsub.f32 %v1900, %v1907
    %v1913 = vsub.f32 %v1901, %v1909
    %v1914 = vmul.f32 %v1894, %v1912
    %v1915 = vmul.f32 %v1895, %v1913
    %v1916 = vpack.c.bf16 %v1855, %v1854
    %v1917 = vpack.c.bf16 %v1915, %v1914
    %1919 = vrot.lane.b32.xlu0 %v1916, 64
    %v1920 = vpop.permute.xlu0 %1919
    %1922 = vrot.lane.b32.xlu0 %v1917, 64
    %v1923 = vpop.permute.xlu0 %1922
    %v1925 = vsel %vm1137, %v1920, 0
    %v1928 = vsel %vm1137, %v1923, 0
    %1930 = vmatprep.subr.bf16.mxu0 0
    %1931 = vmatpush1.bf16.xpose.msra.mxu0 0
    %1932 = vmatprep.subr.bf16.mxu0 0
    %1933 = vmatpush1.bf16.xpose.msra.mxu0 0
    %1934 = vmatprep.subr.bf16.mxu0 0
    %1935 = vmatpush1.bf16.xpose.msra.mxu0 0
    %1936 = vmatprep.subr.bf16.mxu0 0
    %1937 = vmatpush1.bf16.xpose.msra.mxu0 0
    %1938 = vmatprep.subr.bf16.mxu0 0
    %1939 = vmatpush1.bf16.xpose.msra.mxu0 0
    %1940 = vmatprep.subr.bf16.mxu0 0
    %1941 = vmatpush1.bf16.xpose.msra.mxu0 0
    %1942 = vmatprep.subr.bf16.mxu0 0
    %1943 = vmatpush1.bf16.xpose.msra.mxu0 0
    %1944 = vmatprep.subr.bf16.mxu0 0
    %1945 = vmatpush1.bf16.xpose.msra.mxu0 %v1928
    %1946 = vmatprep.subr.bf16.mxu0 0
    %1947 = vmatpush2.bf16.xpose.msra.mxu0 0
    %1948 = vmatprep.subr.bf16.mxu0 0
    %1949 = vmatpush2.bf16.xpose.msra.mxu0 0
    %1950 = vmatprep.subr.bf16.mxu0 0
    %1951 = vmatpush2.bf16.xpose.msra.mxu0 0
    %1952 = vmatprep.subr.bf16.mxu0 0
    %1953 = vmatpush2.bf16.xpose.msra.mxu0 0
    %1954 = vmatprep.subr.bf16.mxu0 0
    %1955 = vmatpush2.bf16.xpose.msra.mxu0 0
    %1956 = vmatprep.subr.bf16.mxu0 0
    %1957 = vmatpush2.bf16.xpose.msra.mxu0 0
    %1958 = vmatprep.subr.bf16.mxu0 0
    %1959 = vmatpush2.bf16.xpose.msra.mxu0 0
    %1960 = vmatprep.subr.bf16.mxu0 0
    %1961 = vmatpush2.bf16.xpose.msra.mxu0 0
    %1962 = vmatprep.mubr.bf16.mxu0 0
    %1963 = vmatmul.mubr.bf16.gmra.mxu0 %v1925
    %v1964 = vpop.f32.mrf.mxu0
    %v1965 = vadd.f32 0.0, %v1964
    %v1966 = vpop.f32.mrf.mxu0
    %v1967 = vpop.f32.mrf.mxu0
    %v1968 = vadd.f32 0.0, %v1967
    %v1969 = vpop.f32.mrf.mxu0
    %1970 = vdwg.mxu0
    %v1971 = vmul.f32 %v1965, 0.125
    %v1972 = vmul.f32 %v1968, 0.125
    %v1973 = vsel %vm1262, %v1971, -inf
    %1974 = vmax.xlane.f32.xlu0 %v1973
    %v1975 = vpop.xlane.xlu0 %1974
    %v1976 = vsel %vm1262, %v1972, -inf
    %1977 = vmax.xlane.f32.xlu0 %v1976
    %v1978 = vpop.xlane.xlu0 %1977
    %v1979 = vsub.f32 %v1971, %v1975
    %v1980 = vsub.f32 %v1972, %v1978
    %v1981 = vmul.f32 %v1979, 1.442695
    %v1982 = vpow.pop %v1981
    %v1983 = vmul.f32 %v1980, 1.442695
    %v1984 = vpow.pop %v1983
    %v1985 = vsel %vm1262, %v1982, 0.0
    %1986 = vadd.xlane.f32.xlu0 %v1985
    %v1987 = vpop.xlane.xlu0 %1986
    %v1988 = vsel %vm1262, %v1984, 0.0
    %1989 = vadd.xlane.f32.xlu0 %v1988
    %v1990 = vpop.xlane.xlu0 %1989
    %v1991 = vrcp.pop %v1987
    %v1992 = vrcp.pop %v1990
    %v1993 = vmul.f32 %v1982, %v1991
    %v1994 = vmul.f32 %v1984, %v1992
    %v1995 = vpack.c.bf16 %v1994, %v1993
    %1997 = vrot.lane.b32.xlu0 %v1750, 64
    %v1998 = vpop.permute.xlu0 %1997
    %v2001 = vsel %vm1262, %v1995, 0
    %2003 = vmatprep.subr.bf16.mxu0 0
    %2004 = vmatpush1.bf16.msra.mxu0 0
    %2005 = vmatprep.subr.bf16.mxu0 0
    %2006 = vmatpush1.bf16.msra.mxu0 0
    %2007 = vmatprep.subr.bf16.mxu0 0
    %2008 = vmatpush1.bf16.msra.mxu0 0
    %2009 = vmatprep.subr.bf16.mxu0 0
    %2010 = vmatpush1.bf16.msra.mxu0 0
    %2011 = vmatprep.subr.bf16.mxu0 0
    %2012 = vmatpush1.bf16.msra.mxu0 0
    %2013 = vmatprep.subr.bf16.mxu0 0
    %2014 = vmatpush1.bf16.msra.mxu0 0
    %2015 = vmatprep.subr.bf16.mxu0 0
    %2016 = vmatpush1.bf16.msra.mxu0 0
    %2017 = vmatprep.subr.bf16.mxu0 0
    %2018 = vmatpush1.bf16.msra.mxu0 %v1998
    %2019 = vmatprep.subr.bf16.mxu0 0
    %2020 = vmatpush2.bf16.msra.mxu0 0
    %2021 = vmatprep.subr.bf16.mxu0 0
    %2022 = vmatpush2.bf16.msra.mxu0 0
    %2023 = vmatprep.subr.bf16.mxu0 0
    %2024 = vmatpush2.bf16.msra.mxu0 0
    %2025 = vmatprep.subr.bf16.mxu0 0
    %2026 = vmatpush2.bf16.msra.mxu0 0
    %2027 = vmatprep.subr.bf16.mxu0 0
    %2028 = vmatpush2.bf16.msra.mxu0 0
    %2029 = vmatprep.subr.bf16.mxu0 0
    %2030 = vmatpush2.bf16.msra.mxu0 0
    %2031 = vmatprep.subr.bf16.mxu0 0
    %2032 = vmatpush2.bf16.msra.mxu0 0
    %2033 = vmatprep.subr.bf16.mxu0 0
    %2034 = vmatpush2.bf16.msra.mxu0 0
    %2035 = vmatprep.mubr.bf16.mxu0 0
    %2036 = vmatmul.mubr.bf16.gmra.mxu0 %v2001
    %v2037 = vpop.f32.mrf.mxu0
    %v2038 = vadd.f32 0.0, %v2037
    %v2039 = vpop.f32.mrf.mxu0
    %v2040 = vpop.f32.mrf.mxu0
    %v2041 = vadd.f32 0.0, %v2040
    %v2042 = vpop.f32.mrf.mxu0
    %2043 = vdwg.mxu0
    %2046 = vrot.lane.b32.xlu0 %v2038, 64
    %v2047 = vpop.permute.xlu0 %2046
    %2048 = vrot.lane.b32.xlu0 %v2041, 64
    %v2049 = vpop.permute.xlu0 %2048
    %v2052 = vsel %vm1137, %v1790, %v2047
    %v2053 = vsel %vm1137, %v1793, %v2049
    %v2054 = vld [vmem:[#allocation7] sm:$0xf]
    %v2055 = vld [vmem:[#allocation7 + $0x4] sm:$0xf]
    %v2056 = vld [vmem:[#allocation7 + $0x8] sm:$0xf]
    %v2057 = vld [vmem:[#allocation7 + $0xc] sm:$0xf]
    %v2058 = vld [vmem:[#allocation7 + $0x10] sm:$0xf]
    %v2059 = vld [vmem:[#allocation7 + $0x14] sm:$0xf]
    %v2060 = vld [vmem:[#allocation7 + $0x18] sm:$0xf]
    %v2061 = vld [vmem:[#allocation7 + $0x1c] sm:$0xf]
    %v2062 = vld [vmem:[#allocation7 + $0x20] sm:$0xf]
    %v2063 = vld [vmem:[#allocation7 + $0x24] sm:$0xf]
    %v2064 = vld [vmem:[#allocation7 + $0x28] sm:$0xf]
    %v2065 = vld [vmem:[#allocation7 + $0x2c] sm:$0xf]
    %v2066 = vld [vmem:[#allocation7 + $0x30] sm:$0xf]
    %v2067 = vld [vmem:[#allocation7 + $0x34] sm:$0xf]
    %v2068 = vld [vmem:[#allocation7 + $0x38] sm:$0xf]
    %v2069 = vld [vmem:[#allocation7 + $0x3c] sm:$0xf]
    %v2070 = vpack.c.bf16 %v1604, %v1603
    %v2071 = vpack.c.bf16 %v2053, %v2052
    %v2088 = vunpack.c.l.b16 %v2054
    %v2089 = vunpack.c.l.b16 %v2055
    %v2090 = vunpack.c.l.b16 %v2056
    %v2091 = vunpack.c.l.b16 %v2057
    %v2092 = vunpack.c.l.b16 %v2058
    %v2093 = vunpack.c.l.b16 %v2059
    %v2094 = vunpack.c.l.b16 %v2060
    %v2095 = vunpack.c.l.b16 %v2061
    %v2096 = vunpack.c.l.b16 %v2062
    %v2097 = vunpack.c.l.b16 %v2063
    %v2098 = vunpack.c.l.b16 %v2064
    %v2099 = vunpack.c.l.b16 %v2065
    %v2100 = vunpack.c.l.b16 %v2066
    %v2101 = vunpack.c.l.b16 %v2067
    %v2102 = vunpack.c.l.b16 %v2068
    %v2103 = vunpack.c.l.b16 %v2069
    %v2104 = vpack.c.b16 %v2089, %v2088
    %v2105 = vpack.c.b16 %v2091, %v2090
    %v2106 = vpack.c.b16 %v2093, %v2092
    %v2107 = vpack.c.b16 %v2095, %v2094
    %v2108 = vpack.c.b16 %v2097, %v2096
    %v2109 = vpack.c.b16 %v2099, %v2098
    %v2110 = vpack.c.b16 %v2101, %v2100
    %v2111 = vpack.c.b16 %v2103, %v2102
    %2120 = vmatprep.subr.bf16.mxu0 0
    %2121 = vmatpush1.bf16.msra.mxu0 %v2111
    %2122 = vmatprep.subr.bf16.mxu0 0
    %2123 = vmatpush1.bf16.msra.mxu0 %v2110
    %2124 = vmatprep.subr.bf16.mxu0 0
    %2125 = vmatpush1.bf16.msra.mxu0 %v2109
    %2126 = vmatprep.subr.bf16.mxu0 0
    %2127 = vmatpush1.bf16.msra.mxu0 %v2108
    %2128 = vmatprep.subr.bf16.mxu0 0
    %2129 = vmatpush1.bf16.msra.mxu0 %v2107
    %2130 = vmatprep.subr.bf16.mxu0 0
    %2131 = vmatpush1.bf16.msra.mxu0 %v2106
    %2132 = vmatprep.subr.bf16.mxu0 0
    %2133 = vmatpush1.bf16.msra.mxu0 %v2105
    %2134 = vmatprep.subr.bf16.mxu0 0
    %2135 = vmatpush1.bf16.msra.mxu0 %v2104
    %2136 = vmatprep.subr.bf16.mxu0 0
    %2137 = vmatpush2.bf16.msra.mxu0 0
    %2138 = vmatprep.subr.bf16.mxu0 0
    %2139 = vmatpush2.bf16.msra.mxu0 0
    %2140 = vmatprep.subr.bf16.mxu0 0
    %2141 = vmatpush2.bf16.msra.mxu0 0
    %2142 = vmatprep.subr.bf16.mxu0 0
    %2143 = vmatpush2.bf16.msra.mxu0 0
    %2144 = vmatprep.subr.bf16.mxu0 0
    %2145 = vmatpush2.bf16.msra.mxu0 0
    %2146 = vmatprep.subr.bf16.mxu0 0
    %2147 = vmatpush2.bf16.msra.mxu0 0
    %2148 = vmatprep.subr.bf16.mxu0 0
    %2149 = vmatpush2.bf16.msra.mxu0 0
    %2150 = vmatprep.subr.bf16.mxu0 0
    %2151 = vmatpush2.bf16.msra.mxu0 0
    %2152 = vmatprep.mubr.bf16.mxu0 0
    %2153 = vmatmul.mubr.bf16.gmra.mxu0 %v2070
    %v2154 = vpop.f32.mrf.mxu0
    %v2155 = vadd.f32 0.0, %v2154
    %v2156 = vpop.f32.mrf.mxu0
    %v2157 = vpop.f32.mrf.mxu0
    %v2158 = vadd.f32 0.0, %v2157
    %v2159 = vpop.f32.mrf.mxu0
    %2160 = vmatprep.mubr.bf16.mxu0 0
    %2161 = vmatmul.mubr.bf16.gmra.mxu0 %v2071
    %v2162 = vpop.f32.mrf.mxu0
    %v2163 = vadd.f32 0.0, %v2162
    %v2164 = vpop.f32.mrf.mxu0
    %v2165 = vpop.f32.mrf.mxu0
    %v2166 = vadd.f32 0.0, %v2165
    %v2167 = vpop.f32.mrf.mxu0
    %2168 = vdwg.mxu0
    %v2169 = vmul.f32 %v585, %v2155
    %v2170 = vmul.f32 %v589, %v2158
    %v2171 = vmul.f32 %v595, %v2163
    %v2172 = vmul.f32 %v599, %v2166
    %v2173 = vadd.f32 %v159, %v2169
    %v2174 = vadd.f32 %v160, %v2170
    %v2175 = vadd.f32 %v161, %v2171
    %v2176 = vadd.f32 %v162, %v2172
    %2177 = vadd.xlane.f32.xlu0 %v2173
    %v2178 = vpop.xlane.xlu0 %2177
    %2179 = vadd.xlane.f32.xlu0 %v2174
    %v2180 = vpop.xlane.xlu0 %2179
    %2181 = vadd.xlane.f32.xlu0 %v2175
    %v2182 = vpop.xlane.xlu0 %2181
    %2183 = vadd.xlane.f32.xlu0 %v2176
    %v2184 = vpop.xlane.xlu0 %2183
    %v2185 = vmul.f32 %v2178, %v664
    %v2186 = vmul.f32 %v2180, %v664
    %v2187 = vmul.f32 %v2182, %v664
    %v2188 = vmul.f32 %v2184, %v664
    %v2189 = vsub.f32 %v2173, %v2185
    %v2190 = vsub.f32 %v2174, %v2186
    %v2191 = vsub.f32 %v2175, %v2187
    %v2192 = vsub.f32 %v2176, %v2188
    %v2193 = vmul.f32 %v2189, %v2189
    %v2194 = vmul.f32 %v2190, %v2190
    %v2195 = vmul.f32 %v2191, %v2191
    %v2196 = vmul.f32 %v2192, %v2192
    %2197 = vadd.xlane.f32.xlu0 %v2193
    %v2198 = vpop.xlane.xlu0 %2197
    %2199 = vadd.xlane.f32.xlu0 %v2194
    %v2200 = vpop.xlane.xlu0 %2199
    %2201 = vadd.xlane.f32.xlu0 %v2195
    %v2202 = vpop.xlane.xlu0 %2201
    %2203 = vadd.xlane.f32.xlu0 %v2196
    %v2204 = vpop.xlane.xlu0 %2203
    %v2205 = vmul.f32 %v2198, %v664
    %v2206 = vmul.f32 %v2200, %v664
    %v2207 = vmul.f32 %v2202, %v664
    %v2208 = vmul.f32 %v2204, %v664
    %v2209 = vadd.f32 %v2205, 1e-05
    %v2210 = vadd.f32 %v2206, 1e-05
    %v2211 = vadd.f32 %v2207, 1e-05
    %v2212 = vadd.f32 %v2208, 1e-05
    %v2213 = vrsqrt.pop %v2209
    %v2214 = vrsqrt.pop %v2210
    %v2215 = vrsqrt.pop %v2211
    %v2216 = vrsqrt.pop %v2212
    %v2217 = vmul.f32 %v2189, %v2213
    %v2218 = vmul.f32 %v2190, %v2214
    %v2219 = vmul.f32 %v2191, %v2215
    %v2220 = vmul.f32 %v2192, %v2216
    %v2221 = vld [vmem:[%s9] sm:$0x1]
    %v2223 = vlaneseq
    %v2224 = vshrl.u32 %v2223, 7
    %v2225 = vsub.s32 0, %v2224
    %v2226 = vrot.slane %v2221, %v2225
    %v2228 = vmul.f32 %v2217, %v2226
    %v2229 = vmul.f32 %v2218, %v2226
    %v2230 = vmul.f32 %v2219, %v2226
    %v2231 = vmul.f32 %v2220, %v2226
    %v2232 = vadd.f32 %v638, 1.0
    %v2233 = vadd.f32 %v642, 1.0
    %v2234 = vadd.f32 %v648, 1.0
    %v2235 = vadd.f32 %v652, 1.0
    %v2236 = vmul.f32 %v2228, %v2232
    %v2237 = vmul.f32 %v2229, %v2233
    %v2238 = vmul.f32 %v2230, %v2234
    %v2239 = vmul.f32 %v2231, %v2235
    %v2240 = vadd.f32 %v2236, %v587
    %v2241 = vadd.f32 %v2237, %v591
    %v2242 = vadd.f32 %v2238, %v597
    %v2243 = vadd.f32 %v2239, %v601
    %v2244 = vld [vmem:[#allocation8] sm:$0xff]
    %v2245 = vld [vmem:[#allocation8 + $0x8] sm:$0xff]
    %v2246 = vld [vmem:[#allocation8 + $0x10] sm:$0xff]
    %v2247 = vld [vmem:[#allocation8 + $0x18] sm:$0xff]
    %v2248 = vld [vmem:[#allocation8 + $0x20] sm:$0xff]
    %v2249 = vld [vmem:[#allocation8 + $0x28] sm:$0xff]
    %v2250 = vld [vmem:[#allocation8 + $0x30] sm:$0xff]
    %v2251 = vld [vmem:[#allocation8 + $0x38] sm:$0xff]
    %v2252 = vld [vmem:[#allocation8 + $0x40] sm:$0xff]
    %v2253 = vld [vmem:[#allocation8 + $0x48] sm:$0xff]
    %v2254 = vld [vmem:[#allocation8 + $0x50] sm:$0xff]
    %v2255 = vld [vmem:[#allocation8 + $0x58] sm:$0xff]
    %v2256 = vld [vmem:[#allocation8 + $0x60] sm:$0xff]
    %v2257 = vld [vmem:[#allocation8 + $0x68] sm:$0xff]
    %v2258 = vld [vmem:[#allocation8 + $0x70] sm:$0xff]
    %v2259 = vld [vmem:[#allocation8 + $0x78] sm:$0xff]
    %v2260 = vld [vmem:[#allocation8 + $0x80] sm:$0xff]
    %v2261 = vld [vmem:[#allocation8 + $0x88] sm:$0xff]
    %v2262 = vld [vmem:[#allocation8 + $0x90] sm:$0xff]
    %v2263 = vld [vmem:[#allocation8 + $0x98] sm:$0xff]
    %v2264 = vld [vmem:[#allocation8 + $0xa0] sm:$0xff]
    %v2265 = vld [vmem:[#allocation8 + $0xa8] sm:$0xff]
    %v2266 = vld [vmem:[#allocation8 + $0xb0] sm:$0xff]
    %v2267 = vld [vmem:[#allocation8 + $0xb8] sm:$0xff]
    %v2268 = vld [vmem:[#allocation8 + $0xc0] sm:$0xff]
    %v2269 = vld [vmem:[#allocation8 + $0xc8] sm:$0xff]
    %v2270 = vld [vmem:[#allocation8 + $0xd0] sm:$0xff]
    %v2271 = vld [vmem:[#allocation8 + $0xd8] sm:$0xff]
    %v2272 = vld [vmem:[#allocation8 + $0xe0] sm:$0xff]
    %v2273 = vld [vmem:[#allocation8 + $0xe8] sm:$0xff]
    %v2274 = vld [vmem:[#allocation8 + $0xf0] sm:$0xff]
    %v2275 = vld [vmem:[#allocation8 + $0xf8] sm:$0xff]
    %v2276 = vld [vmem:[%s11] sm:$0xf]
    %v2277 = vpack.c.bf16 %v2241, %v2240
    %v2278 = vpack.c.bf16 %v2243, %v2242
    %v2280 = vlaneseq
    %v2281 = vshrl.u32 %v2280, 7
    %v2282 = vsub.s32 0, %v2281
    %v2283 = vrot.slane %v2276, %v2282
    %v2284 = vlaneseq
    %v2285 = vshrl.u32 %v2284, 7
    %v2286 = vsub.s32 1, %v2285
    %v2287 = vrot.slane %v2276, %v2286
    %v2288 = vlaneseq
    %v2289 = vshrl.u32 %v2288, 7
    %v2290 = vsub.s32 2, %v2289
    %v2291 = vrot.slane %v2276, %v2290
    %v2292 = vlaneseq
    %v2293 = vshrl.u32 %v2292, 7
    %v2294 = vsub.s32 3, %v2293
    %v2295 = vrot.slane %v2276, %v2294
    %v2332 = vunpack.c.l.b16 %v2244
    %v2333 = vunpack.c.h.b16 %v2244
    %v2334 = vunpack.c.l.b16 %v2245
    %v2335 = vunpack.c.h.b16 %v2245
    %v2336 = vunpack.c.l.b16 %v2246
    %v2337 = vunpack.c.h.b16 %v2246
    %v2338 = vunpack.c.l.b16 %v2247
    %v2339 = vunpack.c.h.b16 %v2247
    %v2340 = vunpack.c.l.b16 %v2248
    %v2341 = vunpack.c.h.b16 %v2248
    %v2342 = vunpack.c.l.b16 %v2249
    %v2343 = vunpack.c.h.b16 %v2249
    %v2344 = vunpack.c.l.b16 %v2250
    %v2345 = vunpack.c.h.b16 %v2250
    %v2346 = vunpack.c.l.b16 %v2251
    %v2347 = vunpack.c.h.b16 %v2251
    %v2348 = vunpack.c.l.b16 %v2252
    %v2349 = vunpack.c.h.b16 %v2252
    %v2350 = vunpack.c.l.b16 %v2253
    %v2351 = vunpack.c.h.b16 %v2253
    %v2352 = vunpack.c.l.b16 %v2254
    %v2353 = vunpack.c.h.b16 %v2254
    %v2354 = vunpack.c.l.b16 %v2255
    %v2355 = vunpack.c.h.b16 %v2255
    %v2356 = vunpack.c.l.b16 %v2256
    %v2357 = vunpack.c.h.b16 %v2256
    %v2358 = vunpack.c.l.b16 %v2257
    %v2359 = vunpack.c.h.b16 %v2257
    %v2360 = vunpack.c.l.b16 %v2258
    %v2361 = vunpack.c.h.b16 %v2258
    %v2362 = vunpack.c.l.b16 %v2259
    %v2363 = vunpack.c.h.b16 %v2259
    %v2364 = vunpack.c.l.b16 %v2260
    %v2365 = vunpack.c.h.b16 %v2260
    %v2366 = vunpack.c.l.b16 %v2261
    %v2367 = vunpack.c.h.b16 %v2261
    %v2368 = vunpack.c.l.b16 %v2262
    %v2369 = vunpack.c.h.b16 %v2262
    %v2370 = vunpack.c.l.b16 %v2263
    %v2371 = vunpack.c.h.b16 %v2263
    %v2372 = vunpack.c.l.b16 %v2264
    %v2373 = vunpack.c.h.b16 %v2264
    %v2374 = vunpack.c.l.b16 %v2265
    %v2375 = vunpack.c.h.b16 %v2265
    %v2376 = vunpack.c.l.b16 %v2266
    %v2377 = vunpack.c.h.b16 %v2266
    %v2378 = vunpack.c.l.b16 %v2267
    %v2379 = vunpack.c.h.b16 %v2267
    %v2380 = vunpack.c.l.b16 %v2268
    %v2381 = vunpack.c.h.b16 %v2268
    %v2382 = vunpack.c.l.b16 %v2269
    %v2383 = vunpack.c.h.b16 %v2269
    %v2384 = vunpack.c.l.b16 %v2270
    %v2385 = vunpack.c.h.b16 %v2270
    %v2386 = vunpack.c.l.b16 %v2271
    %v2387 = vunpack.c.h.b16 %v2271
    %v2388 = vunpack.c.l.b16 %v2272
    %v2389 = vunpack.c.h.b16 %v2272
    %v2390 = vunpack.c.l.b16 %v2273
    %v2391 = vunpack.c.h.b16 %v2273
    %v2392 = vunpack.c.l.b16 %v2274
    %v2393 = vunpack.c.h.b16 %v2274
    %v2394 = vunpack.c.l.b16 %v2275
    %v2395 = vunpack.c.h.b16 %v2275
    %v2396 = vpack.c.b16 %v2336, %v2332
    %v2397 = vpack.c.b16 %v2337, %v2333
    %v2398 = vpack.c.b16 %v2338, %v2334
    %v2399 = vpack.c.b16 %v2339, %v2335
    %v2400 = vpack.c.b16 %v2344, %v2340
    %v2401 = vpack.c.b16 %v2345, %v2341
    %v2402 = vpack.c.b16 %v2346, %v2342
    %v2403 = vpack.c.b16 %v2347, %v2343
    %v2404 = vpack.c.b16 %v2352, %v2348
    %v2405 = vpack.c.b16 %v2353, %v2349
    %v2406 = vpack.c.b16 %v2354, %v2350
    %v2407 = vpack.c.b16 %v2355, %v2351
    %v2408 = vpack.c.b16 %v2360, %v2356
    %v2409 = vpack.c.b16 %v2361, %v2357
    %v2410 = vpack.c.b16 %v2362, %v2358
    %v2411 = vpack.c.b16 %v2363, %v2359
    %v2412 = vpack.c.b16 %v2368, %v2364
    %v2413 = vpack.c.b16 %v2369, %v2365
    %v2414 = vpack.c.b16 %v2370, %v2366
    %v2415 = vpack.c.b16 %v2371, %v2367
    %v2416 = vpack.c.b16 %v2376, %v2372
    %v2417 = vpack.c.b16 %v2377, %v2373
    %v2418 = vpack.c.b16 %v2378, %v2374
    %v2419 = vpack.c.b16 %v2379, %v2375
    %v2420 = vpack.c.b16 %v2384, %v2380
    %v2421 = vpack.c.b16 %v2385, %v2381
    %v2422 = vpack.c.b16 %v2386, %v2382
    %v2423 = vpack.c.b16 %v2387, %v2383
    %v2424 = vpack.c.b16 %v2392, %v2388
    %v2425 = vpack.c.b16 %v2393, %v2389
    %v2426 = vpack.c.b16 %v2394, %v2390
    %v2427 = vpack.c.b16 %v2395, %v2391
    %2460 = vmatprep.subr.bf16.mxu0 %v2425
    %2461 = vmatpush1.bf16.msra.mxu0 %v2424
    %2462 = vmatprep.subr.bf16.mxu0 %v2421
    %2463 = vmatpush1.bf16.msra.mxu0 %v2420
    %2464 = vmatprep.subr.bf16.mxu0 %v2417
    %2465 = vmatpush1.bf16.msra.mxu0 %v2416
    %2466 = vmatprep.subr.bf16.mxu0 %v2413
    %2467 = vmatpush1.bf16.msra.mxu0 %v2412
    %2468 = vmatprep.subr.bf16.mxu0 %v2409
    %2469 = vmatpush1.bf16.msra.mxu0 %v2408
    %2470 = vmatprep.subr.bf16.mxu0 %v2405
    %2471 = vmatpush1.bf16.msra.mxu0 %v2404
    %2472 = vmatprep.subr.bf16.mxu0 %v2401
    %2473 = vmatpush1.bf16.msra.mxu0 %v2400
    %2474 = vmatprep.subr.bf16.mxu0 %v2397
    %2475 = vmatpush1.bf16.msra.mxu0 %v2396
    %2476 = vmatprep.subr.bf16.mxu0 0
    %2477 = vmatpush2.bf16.msra.mxu0 0
    %2478 = vmatprep.subr.bf16.mxu0 0
    %2479 = vmatpush2.bf16.msra.mxu0 0
    %2480 = vmatprep.subr.bf16.mxu0 0
    %2481 = vmatpush2.bf16.msra.mxu0 0
    %2482 = vmatprep.subr.bf16.mxu0 0
    %2483 = vmatpush2.bf16.msra.mxu0 0
    %2484 = vmatprep.subr.bf16.mxu0 0
    %2485 = vmatpush2.bf16.msra.mxu0 0
    %2486 = vmatprep.subr.bf16.mxu0 0
    %2487 = vmatpush2.bf16.msra.mxu0 0
    %2488 = vmatprep.subr.bf16.mxu0 0
    %2489 = vmatpush2.bf16.msra.mxu0 0
    %2490 = vmatprep.subr.bf16.mxu0 0
    %2491 = vmatpush2.bf16.msra.mxu0 0
    %2492 = vmatprep.mubr.bf16.mxu0 0
    %2493 = vmatmul.mubr.bf16.gmra.mxu0 %v2277
    %v2494 = vpop.f32.mrf.mxu0
    %v2495 = vadd.f32 %v2283, %v2494
    %v2496 = vpop.f32.mrf.mxu0
    %v2497 = vadd.f32 %v2287, %v2496
    %v2498 = vpop.f32.mrf.mxu0
    %v2499 = vadd.f32 %v2283, %v2498
    %v2500 = vpop.f32.mrf.mxu0
    %v2501 = vadd.f32 %v2287, %v2500
    %2502 = vmatprep.mubr.bf16.mxu0 0
    %2503 = vmatmul.mubr.bf16.gmra.mxu0 %v2278
    %v2504 = vpop.f32.mrf.mxu0
    %v2505 = vadd.f32 %v2283, %v2504
    %v2506 = vpop.f32.mrf.mxu0
    %v2507 = vadd.f32 %v2287, %v2506
    %v2508 = vpop.f32.mrf.mxu0
    %v2509 = vadd.f32 %v2283, %v2508
    %v2510 = vpop.f32.mrf.mxu0
    %v2511 = vadd.f32 %v2287, %v2510
    %2512 = vdwg.mxu0
    %2513 = vmatprep.subr.bf16.mxu0 %v2427
    %2514 = vmatpush1.bf16.msra.mxu0 %v2426
    %2515 = vmatprep.subr.bf16.mxu0 %v2423
    %2516 = vmatpush1.bf16.msra.mxu0 %v2422
    %2517 = vmatprep.subr.bf16.mxu0 %v2419
    %2518 = vmatpush1.bf16.msra.mxu0 %v2418
    %2519 = vmatprep.subr.bf16.mxu0 %v2415
    %2520 = vmatpush1.bf16.msra.mxu0 %v2414
    %2521 = vmatprep.subr.bf16.mxu0 %v2411
    %2522 = vmatpush1.bf16.msra.mxu0 %v2410
    %2523 = vmatprep.subr.bf16.mxu0 %v2407
    %2524 = vmatpush1.bf16.msra.mxu0 %v2406
    %2525 = vmatprep.subr.bf16.mxu0 %v2403
    %2526 = vmatpush1.bf16.msra.mxu0 %v2402
    %2527 = vmatprep.subr.bf16.mxu0 %v2399
    %2528 = vmatpush1.bf16.msra.mxu0 %v2398
    %2529 = vmatprep.subr.bf16.mxu0 0
    %2530 = vmatpush2.bf16.msra.mxu0 0
    %2531 = vmatprep.subr.bf16.mxu0 0
    %2532 = vmatpush2.bf16.msra.mxu0 0
    %2533 = vmatprep.subr.bf16.mxu0 0
    %2534 = vmatpush2.bf16.msra.mxu0 0
    %2535 = vmatprep.subr.bf16.mxu0 0
    %2536 = vmatpush2.bf16.msra.mxu0 0
    %2537 = vmatprep.subr.bf16.mxu0 0
    %2538 = vmatpush2.bf16.msra.mxu0 0
    %2539 = vmatprep.subr.bf16.mxu0 0
    %2540 = vmatpush2.bf16.msra.mxu0 0
    %2541 = vmatprep.subr.bf16.mxu0 0
    %2542 = vmatpush2.bf16.msra.mxu0 0
    %2543 = vmatprep.subr.bf16.mxu0 0
    %2544 = vmatpush2.bf16.msra.mxu0 0
    %2545 = vmatprep.mubr.bf16.mxu0 0
    %2546 = vmatmul.mubr.bf16.gmra.mxu0 %v2277
    %v2547 = vpop.f32.mrf.mxu0
    %v2548 = vadd.f32 %v2291, %v2547
    %v2549 = vpop.f32.mrf.mxu0
    %v2550 = vadd.f32 %v2295, %v2549
    %v2551 = vpop.f32.mrf.mxu0
    %v2552 = vadd.f32 %v2291, %v2551
    %v2553 = vpop.f32.mrf.mxu0
    %v2554 = vadd.f32 %v2295, %v2553
    %2555 = vmatprep.mubr.bf16.mxu0 0
    %2556 = vmatmul.mubr.bf16.gmra.mxu0 %v2278
    %v2557 = vpop.f32.mrf.mxu0
    %v2558 = vadd.f32 %v2291, %v2557
    %v2559 = vpop.f32.mrf.mxu0
    %v2560 = vadd.f32 %v2295, %v2559
    %v2561 = vpop.f32.mrf.mxu0
    %v2562 = vadd.f32 %v2291, %v2561
    %v2563 = vpop.f32.mrf.mxu0
    %v2564 = vadd.f32 %v2295, %v2563
    %2565 = vdwg.mxu0
    %v2566 = vmul.f32 %v2495, 0.5
    %v2567 = vmul.f32 %v2497, 0.5
    %v2568 = vmul.f32 %v2548, 0.5
    %v2569 = vmul.f32 %v2550, 0.5
    %v2570 = vmul.f32 %v2499, 0.5
    %v2571 = vmul.f32 %v2501, 0.5
    %v2572 = vmul.f32 %v2552, 0.5
    %v2573 = vmul.f32 %v2554, 0.5
    %v2574 = vmul.f32 %v2505, 0.5
    %v2575 = vmul.f32 %v2507, 0.5
    %v2576 = vmul.f32 %v2558, 0.5
    %v2577 = vmul.f32 %v2560, 0.5
    %v2578 = vmul.f32 %v2509, 0.5
    %v2579 = vmul.f32 %v2511, 0.5
    %v2580 = vmul.f32 %v2562, 0.5
    %v2581 = vmul.f32 %v2564, 0.5
    %v2582 = vmul.f32 %v2495, 0.044715
    %v2583 = vmul.f32 %v2497, 0.044715
    %v2584 = vmul.f32 %v2548, 0.044715
    %v2585 = vmul.f32 %v2550, 0.044715
    %v2586 = vmul.f32 %v2499, 0.044715
    %v2587 = vmul.f32 %v2501, 0.044715
    %v2588 = vmul.f32 %v2552, 0.044715
    %v2589 = vmul.f32 %v2554, 0.044715
    %v2590 = vmul.f32 %v2505, 0.044715
    %v2591 = vmul.f32 %v2507, 0.044715
    %v2592 = vmul.f32 %v2558, 0.044715
    %v2593 = vmul.f32 %v2560, 0.044715
    %v2594 = vmul.f32 %v2509, 0.044715
    %v2595 = vmul.f32 %v2511, 0.044715
    %v2596 = vmul.f32 %v2562, 0.044715
    %v2597 = vmul.f32 %v2564, 0.044715
    %v2598 = vmul.f32 %v2582, %v2495
    %v2599 = vmul.f32 %v2583, %v2497
    %v2600 = vmul.f32 %v2584, %v2548
    %v2601 = vmul.f32 %v2585, %v2550
    %v2602 = vmul.f32 %v2586, %v2499
    %v2603 = vmul.f32 %v2587, %v2501
    %v2604 = vmul.f32 %v2588, %v2552
    %v2605 = vmul.f32 %v2589, %v2554
    %v2606 = vmul.f32 %v2590, %v2505
    %v2607 = vmul.f32 %v2591, %v2507
    %v2608 = vmul.f32 %v2592, %v2558
    %v2609 = vmul.f32 %v2593, %v2560
    %v2610 = vmul.f32 %v2594, %v2509
    %v2611 = vmul.f32 %v2595, %v2511
    %v2612 = vmul.f32 %v2596, %v2562
    %v2613 = vmul.f32 %v2597, %v2564
    %v2614 = vmul.f32 %v2598, %v2495
    %v2615 = vmul.f32 %v2599, %v2497
    %v2616 = vmul.f32 %v2600, %v2548
    %v2617 = vmul.f32 %v2601, %v2550
    %v2618 = vmul.f32 %v2602, %v2499
    %v2619 = vmul.f32 %v2603, %v2501
    %v2620 = vmul.f32 %v2604, %v2552
    %v2621 = vmul.f32 %v2605, %v2554
    %v2622 = vmul.f32 %v2606, %v2505
    %v2623 = vmul.f32 %v2607, %v2507
    %v2624 = vmul.f32 %v2608, %v2558
    %v2625 = vmul.f32 %v2609, %v2560
    %v2626 = vmul.f32 %v2610, %v2509
    %v2627 = vmul.f32 %v2611, %v2511
    %v2628 = vmul.f32 %v2612, %v2562
    %v2629 = vmul.f32 %v2613, %v2564
    %v2630 = vadd.f32 %v2495, %v2614
    %v2631 = vadd.f32 %v2497, %v2615
    %v2632 = vadd.f32 %v2548, %v2616
    %v2633 = vadd.f32 %v2550, %v2617
    %v2634 = vadd.f32 %v2499, %v2618
    %v2635 = vadd.f32 %v2501, %v2619
    %v2636 = vadd.f32 %v2552, %v2620
    %v2637 = vadd.f32 %v2554, %v2621
    %v2638 = vadd.f32 %v2505, %v2622
    %v2639 = vadd.f32 %v2507, %v2623
    %v2640 = vadd.f32 %v2558, %v2624
    %v2641 = vadd.f32 %v2560, %v2625
    %v2642 = vadd.f32 %v2509, %v2626
    %v2643 = vadd.f32 %v2511, %v2627
    %v2644 = vadd.f32 %v2562, %v2628
    %v2645 = vadd.f32 %v2564, %v2629
    %v2646 = vmul.f32 %v2630, 0.7978846
    %v2647 = vmul.f32 %v2631, 0.7978846
    %v2648 = vmul.f32 %v2632, 0.7978846
    %v2649 = vmul.f32 %v2633, 0.7978846
    %v2650 = vmul.f32 %v2634, 0.7978846
    %v2651 = vmul.f32 %v2635, 0.7978846
    %v2652 = vmul.f32 %v2636, 0.7978846
    %v2653 = vmul.f32 %v2637, 0.7978846
    %v2654 = vmul.f32 %v2638, 0.7978846
    %v2655 = vmul.f32 %v2639, 0.7978846
    %v2656 = vmul.f32 %v2640, 0.7978846
    %v2657 = vmul.f32 %v2641, 0.7978846
    %v2658 = vmul.f32 %v2642, 0.7978846
    %v2659 = vmul.f32 %v2643, 0.7978846
    %v2660 = vmul.f32 %v2644, 0.7978846
    %v2661 = vmul.f32 %v2645, 0.7978846
    %v2662 = vtanh.pop %v2646
    %v2663 = vtanh.pop %v2647
    %v2664 = vtanh.pop %v2648
    %v2665 = vtanh.pop %v2649
    %v2666 = vtanh.pop %v2650
    %v2667 = vtanh.pop %v2651
    %v2668 = vtanh.pop %v2652
    %v2669 = vtanh.pop %v2653
    %v2670 = vtanh.pop %v2654
    %v2671 = vtanh.pop %v2655
    %v2672 = vtanh.pop %v2656
    %v2673 = vtanh.pop %v2657
    %v2674 = vtanh.pop %v2658
    %v2675 = vtanh.pop %v2659
    %v2676 = vtanh.pop %v2660
    %v2677 = vtanh.pop %v2661
    %v2678 = vadd.f32 %v2662, 1.0
    %v2679 = vadd.f32 %v2663, 1.0
    %v2680 = vadd.f32 %v2664, 1.0
    %v2681 = vadd.f32 %v2665, 1.0
    %v2682 = vadd.f32 %v2666, 1.0
    %v2683 = vadd.f32 %v2667, 1.0
    %v2684 = vadd.f32 %v2668, 1.0
    %v2685 = vadd.f32 %v2669, 1.0
    %v2686 = vadd.f32 %v2670, 1.0
    %v2687 = vadd.f32 %v2671, 1.0
    %v2688 = vadd.f32 %v2672, 1.0
    %v2689 = vadd.f32 %v2673, 1.0
    %v2690 = vadd.f32 %v2674, 1.0
    %v2691 = vadd.f32 %v2675, 1.0
    %v2692 = vadd.f32 %v2676, 1.0
    %v2693 = vadd.f32 %v2677, 1.0
    %v2694 = vmul.f32 %v2566, %v2678
    %v2695 = vmul.f32 %v2567, %v2679
    %v2696 = vmul.f32 %v2568, %v2680
    %v2697 = vmul.f32 %v2569, %v2681
    %v2698 = vmul.f32 %v2570, %v2682
    %v2699 = vmul.f32 %v2571, %v2683
    %v2700 = vmul.f32 %v2572, %v2684
    %v2701 = vmul.f32 %v2573, %v2685
    %v2702 = vmul.f32 %v2574, %v2686
    %v2703 = vmul.f32 %v2575, %v2687
    %v2704 = vmul.f32 %v2576, %v2688
    %v2705 = vmul.f32 %v2577, %v2689
    %v2706 = vmul.f32 %v2578, %v2690
    %v2707 = vmul.f32 %v2579, %v2691
    %v2708 = vmul.f32 %v2580, %v2692
    %v2709 = vmul.f32 %v2581, %v2693
    %v2710 = vld [vmem:[#allocation10] sm:$0xf]
    %v2711 = vld [vmem:[#allocation10 + $0x4] sm:$0xf]
    %v2712 = vld [vmem:[#allocation10 + $0x8] sm:$0xf]
    %v2713 = vld [vmem:[#allocation10 + $0xc] sm:$0xf]
    %v2714 = vld [vmem:[#allocation10 + $0x10] sm:$0xf]
    %v2715 = vld [vmem:[#allocation10 + $0x14] sm:$0xf]
    %v2716 = vld [vmem:[#allocation10 + $0x18] sm:$0xf]
    %v2717 = vld [vmem:[#allocation10 + $0x1c] sm:$0xf]
    %v2718 = vld [vmem:[#allocation10 + $0x20] sm:$0xf]
    %v2719 = vld [vmem:[#allocation10 + $0x24] sm:$0xf]
    %v2720 = vld [vmem:[#allocation10 + $0x28] sm:$0xf]
    %v2721 = vld [vmem:[#allocation10 + $0x2c] sm:$0xf]
    %v2722 = vld [vmem:[#allocation10 + $0x30] sm:$0xf]
    %v2723 = vld [vmem:[#allocation10 + $0x34] sm:$0xf]
    %v2724 = vld [vmem:[#allocation10 + $0x38] sm:$0xf]
    %v2725 = vld [vmem:[#allocation10 + $0x3c] sm:$0xf]
    %v2726 = vld [vmem:[#allocation10 + $0x40] sm:$0xf]
    %v2727 = vld [vmem:[#allocation10 + $0x44] sm:$0xf]
    %v2728 = vld [vmem:[#allocation10 + $0x48] sm:$0xf]
    %v2729 = vld [vmem:[#allocation10 + $0x4c] sm:$0xf]
    %v2730 = vld [vmem:[#allocation10 + $0x50] sm:$0xf]
    %v2731 = vld [vmem:[#allocation10 + $0x54] sm:$0xf]
    %v2732 = vld [vmem:[#allocation10 + $0x58] sm:$0xf]
    %v2733 = vld [vmem:[#allocation10 + $0x5c] sm:$0xf]
    %v2734 = vld [vmem:[#allocation10 + $0x60] sm:$0xf]
    %v2735 = vld [vmem:[#allocation10 + $0x64] sm:$0xf]
    %v2736 = vld [vmem:[#allocation10 + $0x68] sm:$0xf]
    %v2737 = vld [vmem:[#allocation10 + $0x6c] sm:$0xf]
    %v2738 = vld [vmem:[#allocation10 + $0x70] sm:$0xf]
    %v2739 = vld [vmem:[#allocation10 + $0x74] sm:$0xf]
    %v2740 = vld [vmem:[#allocation10 + $0x78] sm:$0xf]
    %v2741 = vld [vmem:[#allocation10 + $0x7c] sm:$0xf]
    %v2742 = vld [vmem:[#allocation10 + $0x80] sm:$0xf]
    %v2743 = vld [vmem:[#allocation10 + $0x84] sm:$0xf]
    %v2744 = vld [vmem:[#allocation10 + $0x88] sm:$0xf]
    %v2745 = vld [vmem:[#allocation10 + $0x8c] sm:$0xf]
    %v2746 = vld [vmem:[#allocation10 + $0x90] sm:$0xf]
    %v2747 = vld [vmem:[#allocation10 + $0x94] sm:$0xf]
    %v2748 = vld [vmem:[#allocation10 + $0x98] sm:$0xf]
    %v2749 = vld [vmem:[#allocation10 + $0x9c] sm:$0xf]
    %v2750 = vld [vmem:[#allocation10 + $0xa0] sm:$0xf]
    %v2751 = vld [vmem:[#allocation10 + $0xa4] sm:$0xf]
    %v2752 = vld [vmem:[#allocation10 + $0xa8] sm:$0xf]
    %v2753 = vld [vmem:[#allocation10 + $0xac] sm:$0xf]
    %v2754 = vld [vmem:[#allocation10 + $0xb0] sm:$0xf]
    %v2755 = vld [vmem:[#allocation10 + $0xb4] sm:$0xf]
    %v2756 = vld [vmem:[#allocation10 + $0xb8] sm:$0xf]
    %v2757 = vld [vmem:[#allocation10 + $0xbc] sm:$0xf]
    %v2758 = vld [vmem:[#allocation10 + $0xc0] sm:$0xf]
    %v2759 = vld [vmem:[#allocation10 + $0xc4] sm:$0xf]
    %v2760 = vld [vmem:[#allocation10 + $0xc8] sm:$0xf]
    %v2761 = vld [vmem:[#allocation10 + $0xcc] sm:$0xf]
    %v2762 = vld [vmem:[#allocation10 + $0xd0] sm:$0xf]
    %v2763 = vld [vmem:[#allocation10 + $0xd4] sm:$0xf]
    %v2764 = vld [vmem:[#allocation10 + $0xd8] sm:$0xf]
    %v2765 = vld [vmem:[#allocation10 + $0xdc] sm:$0xf]
    %v2766 = vld [vmem:[#allocation10 + $0xe0] sm:$0xf]
    %v2767 = vld [vmem:[#allocation10 + $0xe4] sm:$0xf]
    %v2768 = vld [vmem:[#allocation10 + $0xe8] sm:$0xf]
    %v2769 = vld [vmem:[#allocation10 + $0xec] sm:$0xf]
    %v2770 = vld [vmem:[#allocation10 + $0xf0] sm:$0xf]
    %v2771 = vld [vmem:[#allocation10 + $0xf4] sm:$0xf]
    %v2772 = vld [vmem:[#allocation10 + $0xf8] sm:$0xf]
    %v2773 = vld [vmem:[#allocation10 + $0xfc] sm:$0xf]
    %v2774 = vld [vmem:[%s13] sm:$0x1]
    %v2775 = vpack.c.bf16 %v2698, %v2694
    %v2776 = vpack.c.bf16 %v2699, %v2695
    %v2777 = vpack.c.bf16 %v2700, %v2696
    %v2778 = vpack.c.bf16 %v2701, %v2697
    %v2779 = vpack.c.bf16 %v2706, %v2702
    %v2780 = vpack.c.bf16 %v2707, %v2703
    %v2781 = vpack.c.bf16 %v2708, %v2704
    %v2782 = vpack.c.bf16 %v2709, %v2705
    %v2784 = vlaneseq
    %v2785 = vshrl.u32 %v2784, 7
    %v2786 = vsub.s32 0, %v2785
    %v2787 = vrot.slane %v2774, %v2786
    %v2853 = vunpack.c.l.b16 %v2710
    %v2854 = vunpack.c.l.b16 %v2711
    %v2855 = vunpack.c.l.b16 %v2712
    %v2856 = vunpack.c.l.b16 %v2713
    %v2857 = vunpack.c.l.b16 %v2714
    %v2858 = vunpack.c.l.b16 %v2715
    %v2859 = vunpack.c.l.b16 %v2716
    %v2860 = vunpack.c.l.b16 %v2717
    %v2861 = vunpack.c.l.b16 %v2718
    %v2862 = vunpack.c.l.b16 %v2719
    %v2863 = vunpack.c.l.b16 %v2720
    %v2864 = vunpack.c.l.b16 %v2721
    %v2865 = vunpack.c.l.b16 %v2722
    %v2866 = vunpack.c.l.b16 %v2723
    %v2867 = vunpack.c.l.b16 %v2724
    %v2868 = vunpack.c.l.b16 %v2725
    %v2869 = vunpack.c.l.b16 %v2726
    %v2870 = vunpack.c.l.b16 %v2727
    %v2871 = vunpack.c.l.b16 %v2728
    %v2872 = vunpack.c.l.b16 %v2729
    %v2873 = vunpack.c.l.b16 %v2730
    %v2874 = vunpack.c.l.b16 %v2731
    %v2875 = vunpack.c.l.b16 %v2732
    %v2876 = vunpack.c.l.b16 %v2733
    %v2877 = vunpack.c.l.b16 %v2734
    %v2878 = vunpack.c.l.b16 %v2735
    %v2879 = vunpack.c.l.b16 %v2736
    %v2880 = vunpack.c.l.b16 %v2737
    %v2881 = vunpack.c.l.b16 %v2738
    %v2882 = vunpack.c.l.b16 %v2739
    %v2883 = vunpack.c.l.b16 %v2740
    %v2884 = vunpack.c.l.b16 %v2741
    %v2885 = vunpack.c.l.b16 %v2742
    %v2886 = vunpack.c.l.b16 %v2743
    %v2887 = vunpack.c.l.b16 %v2744
    %v2888 = vunpack.c.l.b16 %v2745
    %v2889 = vunpack.c.l.b16 %v2746
    %v2890 = vunpack.c.l.b16 %v2747
    %v2891 = vunpack.c.l.b16 %v2748
    %v2892 = vunpack.c.l.b16 %v2749
    %v2893 = vunpack.c.l.b16 %v2750
    %v2894 = vunpack.c.l.b16 %v2751
    %v2895 = vunpack.c.l.b16 %v2752
    %v2896 = vunpack.c.l.b16 %v2753
    %v2897 = vunpack.c.l.b16 %v2754
    %v2898 = vunpack.c.l.b16 %v2755
    %v2899 = vunpack.c.l.b16 %v2756
    %v2900 = vunpack.c.l.b16 %v2757
    %v2901 = vunpack.c.l.b16 %v2758
    %v2902 = vunpack.c.l.b16 %v2759
    %v2903 = vunpack.c.l.b16 %v2760
    %v2904 = vunpack.c.l.b16 %v2761
    %v2905 = vunpack.c.l.b16 %v2762
    %v2906 = vunpack.c.l.b16 %v2763
    %v2907 = vunpack.c.l.b16 %v2764
    %v2908 = vunpack.c.l.b16 %v2765
    %v2909 = vunpack.c.l.b16 %v2766
    %v2910 = vunpack.c.l.b16 %v2767
    %v2911 = vunpack.c.l.b16 %v2768
    %v2912 = vunpack.c.l.b16 %v2769
    %v2913 = vunpack.c.l.b16 %v2770
    %v2914 = vunpack.c.l.b16 %v2771
    %v2915 = vunpack.c.l.b16 %v2772
    %v2916 = vunpack.c.l.b16 %v2773
    %v2917 = vpack.c.b16 %v2854, %v2853
    %v2918 = vpack.c.b16 %v2856, %v2855
    %v2919 = vpack.c.b16 %v2858, %v2857
    %v2920 = vpack.c.b16 %v2860, %v2859
    %v2921 = vpack.c.b16 %v2862, %v2861
    %v2922 = vpack.c.b16 %v2864, %v2863
    %v2923 = vpack.c.b16 %v2866, %v2865
    %v2924 = vpack.c.b16 %v2868, %v2867
    %v2925 = vpack.c.b16 %v2870, %v2869
    %v2926 = vpack.c.b16 %v2872, %v2871
    %v2927 = vpack.c.b16 %v2874, %v2873
    %v2928 = vpack.c.b16 %v2876, %v2875
    %v2929 = vpack.c.b16 %v2878, %v2877
    %v2930 = vpack.c.b16 %v2880, %v2879
    %v2931 = vpack.c.b16 %v2882, %v2881
    %v2932 = vpack.c.b16 %v2884, %v2883
    %v2933 = vpack.c.b16 %v2886, %v2885
    %v2934 = vpack.c.b16 %v2888, %v2887
    %v2935 = vpack.c.b16 %v2890, %v2889
    %v2936 = vpack.c.b16 %v2892, %v2891
    %v2937 = vpack.c.b16 %v2894, %v2893
    %v2938 = vpack.c.b16 %v2896, %v2895
    %v2939 = vpack.c.b16 %v2898, %v2897
    %v2940 = vpack.c.b16 %v2900, %v2899
    %v2941 = vpack.c.b16 %v2902, %v2901
    %v2942 = vpack.c.b16 %v2904, %v2903
    %v2943 = vpack.c.b16 %v2906, %v2905
    %v2944 = vpack.c.b16 %v2908, %v2907
    %v2945 = vpack.c.b16 %v2910, %v2909
    %v2946 = vpack.c.b16 %v2912, %v2911
    %v2947 = vpack.c.b16 %v2914, %v2913
    %v2948 = vpack.c.b16 %v2916, %v2915
    %2981 = vmatprep.subr.bf16.mxu0 0
    %2982 = vmatpush1.bf16.msra.mxu0 %v2924
    %2983 = vmatprep.subr.bf16.mxu0 0
    %2984 = vmatpush1.bf16.msra.mxu0 %v2923
    %2985 = vmatprep.subr.bf16.mxu0 0
    %2986 = vmatpush1.bf16.msra.mxu0 %v2922
    %2987 = vmatprep.subr.bf16.mxu0 0
    %2988 = vmatpush1.bf16.msra.mxu0 %v2921
    %2989 = vmatprep.subr.bf16.mxu0 0
    %2990 = vmatpush1.bf16.msra.mxu0 %v2920
    %2991 = vmatprep.subr.bf16.mxu0 0
    %2992 = vmatpush1.bf16.msra.mxu0 %v2919
    %2993 = vmatprep.subr.bf16.mxu0 0
    %2994 = vmatpush1.bf16.msra.mxu0 %v2918
    %2995 = vmatprep.subr.bf16.mxu0 0
    %2996 = vmatpush1.bf16.msra.mxu0 %v2917
    %2997 = vmatprep.subr.bf16.mxu0 0
    %2998 = vmatpush2.bf16.msra.mxu0 %v2932
    %2999 = vmatprep.subr.bf16.mxu0 0
    %3000 = vmatpush2.bf16.msra.mxu0 %v2931
    %3001 = vmatprep.subr.bf16.mxu0 0
    %3002 = vmatpush2.bf16.msra.mxu0 %v2930
    %3003 = vmatprep.subr.bf16.mxu0 0
    %3004 = vmatpush2.bf16.msra.mxu0 %v2929
    %3005 = vmatprep.subr.bf16.mxu0 0
    %3006 = vmatpush2.bf16.msra.mxu0 %v2928
    %3007 = vmatprep.subr.bf16.mxu0 0
    %3008 = vmatpush2.bf16.msra.mxu0 %v2927
    %3009 = vmatprep.subr.bf16.mxu0 0
    %3010 = vmatpush2.bf16.msra.mxu0 %v2926
    %3011 = vmatprep.subr.bf16.mxu0 0
    %3012 = vmatpush2.bf16.msra.mxu0 %v2925
    %3013 = vmatprep.mubr.bf16.mxu0 %v2776
    %3014 = vmatmul.mubr.bf16.gmra.mxu0 %v2775
    %v3015 = vpop.f32.mrf.mxu0
    %v3016 = vadd.f32 %v2787, %v3015
    %v3017 = vpop.f32.mrf.mxu0
    %v3018 = vpop.f32.mrf.mxu0
    %v3019 = vadd.f32 %v2787, %v3018
    %v3020 = vpop.f32.mrf.mxu0
    %3021 = vmatprep.mubr.bf16.mxu0 %v2780
    %3022 = vmatmul.mubr.bf16.gmra.mxu0 %v2779
    %v3023 = vpop.f32.mrf.mxu0
    %v3024 = vadd.f32 %v2787, %v3023
    %v3025 = vpop.f32.mrf.mxu0
    %v3026 = vpop.f32.mrf.mxu0
    %v3027 = vadd.f32 %v2787, %v3026
    %v3028 = vpop.f32.mrf.mxu0
    %3029 = vdwg.mxu0
    %3030 = vmatprep.subr.bf16.mxu0 0
    %3031 = vmatpush1.bf16.msra.mxu0 %v2940
    %3032 = vmatprep.subr.bf16.mxu0 0
    %3033 = vmatpush1.bf16.msra.mxu0 %v2939
    %3034 = vmatprep.subr.bf16.mxu0 0
    %3035 = vmatpush1.bf16.msra.mxu0 %v2938
    %3036 = vmatprep.subr.bf16.mxu0 0
    %3037 = vmatpush1.bf16.msra.mxu0 %v2937
    %3038 = vmatprep.subr.bf16.mxu0 0
    %3039 = vmatpush1.bf16.msra.mxu0 %v2936
    %3040 = vmatprep.subr.bf16.mxu0 0
    %3041 = vmatpush1.bf16.msra.mxu0 %v2935
    %3042 = vmatprep.subr.bf16.mxu0 0
    %3043 = vmatpush1.bf16.msra.mxu0 %v2934
    %3044 = vmatprep.subr.bf16.mxu0 0
    %3045 = vmatpush1.bf16.msra.mxu0 %v2933
    %3046 = vmatprep.subr.bf16.mxu0 0
    %3047 = vmatpush2.bf16.msra.mxu0 %v2948
    %3048 = vmatprep.subr.bf16.mxu0 0
    %3049 = vmatpush2.bf16.msra.mxu0 %v2947
    %3050 = vmatprep.subr.bf16.mxu0 0
    %3051 = vmatpush2.bf16.msra.mxu0 %v2946
    %3052 = vmatprep.subr.bf16.mxu0 0
    %3053 = vmatpush2.bf16.msra.mxu0 %v2945
    %3054 = vmatprep.subr.bf16.mxu0 0
    %3055 = vmatpush2.bf16.msra.mxu0 %v2944
    %3056 = vmatprep.subr.bf16.mxu0 0
    %3057 = vmatpush2.bf16.msra.mxu0 %v2943
    %3058 = vmatprep.subr.bf16.mxu0 0
    %3059 = vmatpush2.bf16.msra.mxu0 %v2942
    %3060 = vmatprep.subr.bf16.mxu0 0
    %3061 = vmatpush2.bf16.msra.mxu0 %v2941
    %3062 = vmatprep.mubr.bf16.mxu0 %v2778
    %3063 = vmatmul.mubr.bf16.gmra.mxu0 %v2777
    %v3064 = vpop.f32.mrf.mxu0
    %v3065 = vadd.f32 %v3016, %v3064
    %v3066 = vpop.f32.mrf.mxu0
    %v3067 = vpop.f32.mrf.mxu0
    %v3068 = vadd.f32 %v3019, %v3067
    %v3069 = vpop.f32.mrf.mxu0
    %3070 = vmatprep.mubr.bf16.mxu0 %v2782
    %3071 = vmatmul.mubr.bf16.gmra.mxu0 %v2781
    %v3072 = vpop.f32.mrf.mxu0
    %v3073 = vadd.f32 %v3024, %v3072
    %v3074 = vpop.f32.mrf.mxu0
    %v3075 = vpop.f32.mrf.mxu0
    %v3076 = vadd.f32 %v3027, %v3075
    %v3077 = vpop.f32.mrf.mxu0
    %3078 = vdwg.mxu0
    %v3079 = vmul.f32 %v640, %v3065
    %v3080 = vmul.f32 %v644, %v3068
    %v3081 = vmul.f32 %v650, %v3073
    %v3082 = vmul.f32 %v654, %v3076
    %v3083 = vadd.f32 %v2173, %v3079
    %v3084 = vadd.f32 %v2174, %v3080
    %v3085 = vadd.f32 %v2175, %v3081
    %v3086 = vadd.f32 %v2176, %v3082
    %s3087 = scalar_lea.vmem %s3, 384
    %v3088 = vld [vmem:[%s3087] sm:$0xff]
    %v3089 = vld [vmem:[%s3087 + $0x8] sm:$0xff]
    %v3090 = vld [vmem:[%s3087 + $0x10] sm:$0xff]
    %v3091 = vld [vmem:[%s3087 + $0x18] sm:$0xff]
    %v3092 = vld [vmem:[%s3087 + $0x20] sm:$0xff]
    %v3093 = vld [vmem:[%s3087 + $0x28] sm:$0xff]
    %v3094 = vld [vmem:[%s3087 + $0x30] sm:$0xff]
    %v3095 = vld [vmem:[%s3087 + $0x38] sm:$0xff]
    %v3096 = vld [vmem:[%s3087 + $0x40] sm:$0xff]
    %v3097 = vld [vmem:[%s3087 + $0x48] sm:$0xff]
    %v3098 = vld [vmem:[%s3087 + $0x50] sm:$0xff]
    %v3099 = vld [vmem:[%s3087 + $0x58] sm:$0xff]
    %v3100 = vld [vmem:[%s3087 + $0x60] sm:$0xff]
    %v3101 = vld [vmem:[%s3087 + $0x68] sm:$0xff]
    %v3102 = vld [vmem:[%s3087 + $0x70] sm:$0xff]
    %v3103 = vld [vmem:[%s3087 + $0x78] sm:$0xff]
    %v3104 = vld [vmem:[%s3087 + $0x80] sm:$0xff]
    %v3105 = vld [vmem:[%s3087 + $0x88] sm:$0xff]
    %v3106 = vld [vmem:[%s3087 + $0x90] sm:$0xff]
    %v3107 = vld [vmem:[%s3087 + $0x98] sm:$0xff]
    %v3108 = vld [vmem:[%s3087 + $0xa0] sm:$0xff]
    %v3109 = vld [vmem:[%s3087 + $0xa8] sm:$0xff]
    %v3110 = vld [vmem:[%s3087 + $0xb0] sm:$0xff]
    %v3111 = vld [vmem:[%s3087 + $0xb8] sm:$0xff]
    %v3112 = vld [vmem:[%s3087 + $0xc0] sm:$0xff]
    %v3113 = vld [vmem:[%s3087 + $0xc8] sm:$0xff]
    %v3114 = vld [vmem:[%s3087 + $0xd0] sm:$0xff]
    %v3115 = vld [vmem:[%s3087 + $0xd8] sm:$0xff]
    %v3116 = vld [vmem:[%s3087 + $0xe0] sm:$0xff]
    %v3117 = vld [vmem:[%s3087 + $0xe8] sm:$0xff]
    %v3118 = vld [vmem:[%s3087 + $0xf0] sm:$0xff]
    %v3119 = vld [vmem:[%s3087 + $0xf8] sm:$0xff]
    %v3120 = vld [vmem:[%s3087 + $0x100] sm:$0xff]
    %v3121 = vld [vmem:[%s3087 + $0x108] sm:$0xff]
    %v3122 = vld [vmem:[%s3087 + $0x110] sm:$0xff]
    %v3123 = vld [vmem:[%s3087 + $0x118] sm:$0xff]
    %v3124 = vld [vmem:[%s3087 + $0x120] sm:$0xff]
    %v3125 = vld [vmem:[%s3087 + $0x128] sm:$0xff]
    %v3126 = vld [vmem:[%s3087 + $0x130] sm:$0xff]
    %v3127 = vld [vmem:[%s3087 + $0x138] sm:$0xff]
    %v3128 = vld [vmem:[%s3087 + $0x140] sm:$0xff]
    %v3129 = vld [vmem:[%s3087 + $0x148] sm:$0xff]
    %v3130 = vld [vmem:[%s3087 + $0x150] sm:$0xff]
    %v3131 = vld [vmem:[%s3087 + $0x158] sm:$0xff]
    %v3132 = vld [vmem:[%s3087 + $0x160] sm:$0xff]
    %v3133 = vld [vmem:[%s3087 + $0x168] sm:$0xff]
    %v3134 = vld [vmem:[%s3087 + $0x170] sm:$0xff]
    %v3135 = vld [vmem:[%s3087 + $0x178] sm:$0xff]
    %s3136 = scalar_lea.vmem %s4, 6
    %v3137 = vld [vmem:[%s3136] sm:$0x3f]
    %v3139 = vlaneseq
    %v3140 = vshrl.u32 %v3139, 7
    %v3141 = vsub.s32 0, %v3140
    %v3142 = vrot.slane %v3137, %v3141
    %v3143 = vlaneseq
    %v3144 = vshrl.u32 %v3143, 7
    %v3145 = vsub.s32 1, %v3144
    %v3146 = vrot.slane %v3137, %v3145
    %v3147 = vlaneseq
    %v3148 = vshrl.u32 %v3147, 7
    %v3149 = vsub.s32 2, %v3148
    %v3150 = vrot.slane %v3137, %v3149
    %v3151 = vlaneseq
    %v3152 = vshrl.u32 %v3151, 7
    %v3153 = vsub.s32 3, %v3152
    %v3154 = vrot.slane %v3137, %v3153
    %v3155 = vlaneseq
    %v3156 = vshrl.u32 %v3155, 7
    %v3157 = vsub.s32 4, %v3156
    %v3158 = vrot.slane %v3137, %v3157
    %v3159 = vlaneseq
    %v3160 = vshrl.u32 %v3159, 7
    %v3161 = vsub.s32 5, %v3160
    %v3162 = vrot.slane %v3137, %v3161
    %v3217 = vunpack.c.l.b16 %v3088
    %v3218 = vunpack.c.h.b16 %v3088
    %v3219 = vunpack.c.l.b16 %v3089
    %v3220 = vunpack.c.h.b16 %v3089
    %v3221 = vunpack.c.l.b16 %v3090
    %v3222 = vunpack.c.h.b16 %v3090
    %v3223 = vunpack.c.l.b16 %v3091
    %v3224 = vunpack.c.h.b16 %v3091
    %v3225 = vunpack.c.l.b16 %v3092
    %v3226 = vunpack.c.h.b16 %v3092
    %v3227 = vunpack.c.l.b16 %v3093
    %v3228 = vunpack.c.h.b16 %v3093
    %v3229 = vunpack.c.l.b16 %v3094
    %v3230 = vunpack.c.h.b16 %v3094
    %v3231 = vunpack.c.l.b16 %v3095
    %v3232 = vunpack.c.h.b16 %v3095
    %v3233 = vunpack.c.l.b16 %v3096
    %v3234 = vunpack.c.h.b16 %v3096
    %v3235 = vunpack.c.l.b16 %v3097
    %v3236 = vunpack.c.h.b16 %v3097
    %v3237 = vunpack.c.l.b16 %v3098
    %v3238 = vunpack.c.h.b16 %v3098
    %v3239 = vunpack.c.l.b16 %v3099
    %v3240 = vunpack.c.h.b16 %v3099
    %v3241 = vunpack.c.l.b16 %v3100
    %v3242 = vunpack.c.h.b16 %v3100
    %v3243 = vunpack.c.l.b16 %v3101
    %v3244 = vunpack.c.h.b16 %v3101
    %v3245 = vunpack.c.l.b16 %v3102
    %v3246 = vunpack.c.h.b16 %v3102
    %v3247 = vunpack.c.l.b16 %v3103
    %v3248 = vunpack.c.h.b16 %v3103
    %v3249 = vunpack.c.l.b16 %v3104
    %v3250 = vunpack.c.h.b16 %v3104
    %v3251 = vunpack.c.l.b16 %v3105
    %v3252 = vunpack.c.h.b16 %v3105
    %v3253 = vunpack.c.l.b16 %v3106
    %v3254 = vunpack.c.h.b16 %v3106
    %v3255 = vunpack.c.l.b16 %v3107
    %v3256 = vunpack.c.h.b16 %v3107
    %v3257 = vunpack.c.l.b16 %v3108
    %v3258 = vunpack.c.h.b16 %v3108
    %v3259 = vunpack.c.l.b16 %v3109
    %v3260 = vunpack.c.h.b16 %v3109
    %v3261 = vunpack.c.l.b16 %v3110
    %v3262 = vunpack.c.h.b16 %v3110
    %v3263 = vunpack.c.l.b16 %v3111
    %v3264 = vunpack.c.h.b16 %v3111
    %v3265 = vunpack.c.l.b16 %v3112
    %v3266 = vunpack.c.h.b16 %v3112
    %v3267 = vunpack.c.l.b16 %v3113
    %v3268 = vunpack.c.h.b16 %v3113
    %v3269 = vunpack.c.l.b16 %v3114
    %v3270 = vunpack.c.h.b16 %v3114
    %v3271 = vunpack.c.l.b16 %v3115
    %v3272 = vunpack.c.h.b16 %v3115
    %v3273 = vunpack.c.l.b16 %v3116
    %v3274 = vunpack.c.h.b16 %v3116
    %v3275 = vunpack.c.l.b16 %v3117
    %v3276 = vunpack.c.h.b16 %v3117
    %v3277 = vunpack.c.l.b16 %v3118
    %v3278 = vunpack.c.h.b16 %v3118
    %v3279 = vunpack.c.l.b16 %v3119
    %v3280 = vunpack.c.h.b16 %v3119
    %v3281 = vunpack.c.l.b16 %v3120
    %v3282 = vunpack.c.h.b16 %v3120
    %v3283 = vunpack.c.l.b16 %v3121
    %v3284 = vunpack.c.h.b16 %v3121
    %v3285 = vunpack.c.l.b16 %v3122
    %v3286 = vunpack.c.h.b16 %v3122
    %v3287 = vunpack.c.l.b16 %v3123
    %v3288 = vunpack.c.h.b16 %v3123
    %v3289 = vunpack.c.l.b16 %v3124
    %v3290 = vunpack.c.h.b16 %v3124
    %v3291 = vunpack.c.l.b16 %v3125
    %v3292 = vunpack.c.h.b16 %v3125
    %v3293 = vunpack.c.l.b16 %v3126
    %v3294 = vunpack.c.h.b16 %v3126
    %v3295 = vunpack.c.l.b16 %v3127
    %v3296 = vunpack.c.h.b16 %v3127
    %v3297 = vunpack.c.l.b16 %v3128
    %v3298 = vunpack.c.h.b16 %v3128
    %v3299 = vunpack.c.l.b16 %v3129
    %v3300 = vunpack.c.h.b16 %v3129
    %v3301 = vunpack.c.l.b16 %v3130
    %v3302 = vunpack.c.h.b16 %v3130
    %v3303 = vunpack.c.l.b16 %v3131
    %v3304 = vunpack.c.h.b16 %v3131
    %v3305 = vunpack.c.l.b16 %v3132
    %v3306 = vunpack.c.h.b16 %v3132
    %v3307 = vunpack.c.l.b16 %v3133
    %v3308 = vunpack.c.h.b16 %v3133
    %v3309 = vunpack.c.l.b16 %v3134
    %v3310 = vunpack.c.h.b16 %v3134
    %v3311 = vunpack.c.l.b16 %v3135
    %v3312 = vunpack.c.h.b16 %v3135
    %v3313 = vpack.c.b16 %v3223, %v3217
    %v3314 = vpack.c.b16 %v3224, %v3218
    %v3315 = vpack.c.b16 %v3225, %v3219
    %v3316 = vpack.c.b16 %v3226, %v3220
    %v3317 = vpack.c.b16 %v3227, %v3221
    %v3318 = vpack.c.b16 %v3228, %v3222
    %v3319 = vpack.c.b16 %v3235, %v3229
    %v3320 = vpack.c.b16 %v3236, %v3230
    %v3321 = vpack.c.b16 %v3237, %v3231
    %v3322 = vpack.c.b16 %v3238, %v3232
    %v3323 = vpack.c.b16 %v3239, %v3233
    %v3324 = vpack.c.b16 %v3240, %v3234
    %v3325 = vpack.c.b16 %v3247, %v3241
    %v3326 = vpack.c.b16 %v3248, %v3242
    %v3327 = vpack.c.b16 %v3249, %v3243
    %v3328 = vpack.c.b16 %v3250, %v3244
    %v3329 = vpack.c.b16 %v3251, %v3245
    %v3330 = vpack.c.b16 %v3252, %v3246
    %v3331 = vpack.c.b16 %v3259, %v3253
    %v3332 = vpack.c.b16 %v3260, %v3254
    %v3333 = vpack.c.b16 %v3261, %v3255
    %v3334 = vpack.c.b16 %v3262, %v3256
    %v3335 = vpack.c.b16 %v3263, %v3257
    %v3336 = vpack.c.b16 %v3264, %v3258
    %v3337 = vpack.c.b16 %v3271, %v3265
    %v3338 = vpack.c.b16 %v3272, %v3266
    %v3339 = vpack.c.b16 %v3273, %v3267
    %v3340 = vpack.c.b16 %v3274, %v3268
    %v3341 = vpack.c.b16 %v3275, %v3269
    %v3342 = vpack.c.b16 %v3276, %v3270
    %v3343 = vpack.c.b16 %v3283, %v3277
    %v3344 = vpack.c.b16 %v3284, %v3278
    %v3345 = vpack.c.b16 %v3285, %v3279
    %v3346 = vpack.c.b16 %v3286, %v3280
    %v3347 = vpack.c.b16 %v3287, %v3281
    %v3348 = vpack.c.b16 %v3288, %v3282
    %v3349 = vpack.c.b16 %v3295, %v3289
    %v3350 = vpack.c.b16 %v3296, %v3290
    %v3351 = vpack.c.b16 %v3297, %v3291
    %v3352 = vpack.c.b16 %v3298, %v3292
    %v3353 = vpack.c.b16 %v3299, %v3293
    %v3354 = vpack.c.b16 %v3300, %v3294
    %v3355 = vpack.c.b16 %v3307, %v3301
    %v3356 = vpack.c.b16 %v3308, %v3302
    %v3357 = vpack.c.b16 %v3309, %v3303
    %v3358 = vpack.c.b16 %v3310, %v3304
    %v3359 = vpack.c.b16 %v3311, %v3305
    %v3360 = vpack.c.b16 %v3312, %v3306
    %3409 = vmatprep.subr.bf16.mxu0 %v3356
    %3410 = vmatpush1.bf16.msra.mxu0 %v3355
    %3411 = vmatprep.subr.bf16.mxu0 %v3350
    %3412 = vmatpush1.bf16.msra.mxu0 %v3349
    %3413 = vmatprep.subr.bf16.mxu0 %v3344
    %3414 = vmatpush1.bf16.msra.mxu0 %v3343
    %3415 = vmatprep.subr.bf16.mxu0 %v3338
    %3416 = vmatpush1.bf16.msra.mxu0 %v3337
    %3417 = vmatprep.subr.bf16.mxu0 %v3332
    %3418 = vmatpush1.bf16.msra.mxu0 %v3331
    %3419 = vmatprep.subr.bf16.mxu0 %v3326
    %3420 = vmatpush1.bf16.msra.mxu0 %v3325
    %3421 = vmatprep.subr.bf16.mxu0 %v3320
    %3422 = vmatpush1.bf16.msra.mxu0 %v3319
    %3423 = vmatprep.subr.bf16.mxu0 %v3314
    %3424 = vmatpush1.bf16.msra.mxu0 %v3313
    %3425 = vmatprep.subr.bf16.mxu0 0
    %3426 = vmatpush2.bf16.msra.mxu0 0
    %3427 = vmatprep.subr.bf16.mxu0 0
    %3428 = vmatpush2.bf16.msra.mxu0 0
    %3429 = vmatprep.subr.bf16.mxu0 0
    %3430 = vmatpush2.bf16.msra.mxu0 0
    %3431 = vmatprep.subr.bf16.mxu0 0
    %3432 = vmatpush2.bf16.msra.mxu0 0
    %3433 = vmatprep.subr.bf16.mxu0 0
    %3434 = vmatpush2.bf16.msra.mxu0 0
    %3435 = vmatprep.subr.bf16.mxu0 0
    %3436 = vmatpush2.bf16.msra.mxu0 0
    %3437 = vmatprep.subr.bf16.mxu0 0
    %3438 = vmatpush2.bf16.msra.mxu0 0
    %3439 = vmatprep.subr.bf16.mxu0 0
    %3440 = vmatpush2.bf16.msra.mxu0 0
    %3441 = vmatprep.mubr.bf16.mxu0 0
    %3442 = vmatmul.mubr.bf16.gmra.mxu0 %v167
    %v3443 = vpop.f32.mrf.mxu0
    %v3444 = vadd.f32 %v3142, %v3443
    %v3445 = vpop.f32.mrf.mxu0
    %v3446 = vadd.f32 %v3146, %v3445
    %v3447 = vpop.f32.mrf.mxu0
    %v3448 = vadd.f32 %v3142, %v3447
    %v3449 = vpop.f32.mrf.mxu0
    %v3450 = vadd.f32 %v3146, %v3449
    %3451 = vmatprep.mubr.bf16.mxu0 0
    %3452 = vmatmul.mubr.bf16.gmra.mxu0 %v168
    %v3453 = vpop.f32.mrf.mxu0
    %v3454 = vadd.f32 %v3142, %v3453
    %v3455 = vpop.f32.mrf.mxu0
    %v3456 = vadd.f32 %v3146, %v3455
    %v3457 = vpop.f32.mrf.mxu0
    %v3458 = vadd.f32 %v3142, %v3457
    %v3459 = vpop.f32.mrf.mxu0
    %v3460 = vadd.f32 %v3146, %v3459
    %3461 = vdwg.mxu0
    %3462 = vmatprep.subr.bf16.mxu0 %v3358
    %3463 = vmatpush1.bf16.msra.mxu0 %v3357
    %3464 = vmatprep.subr.bf16.mxu0 %v3352
    %3465 = vmatpush1.bf16.msra.mxu0 %v3351
    %3466 = vmatprep.subr.bf16.mxu0 %v3346
    %3467 = vmatpush1.bf16.msra.mxu0 %v3345
    %3468 = vmatprep.subr.bf16.mxu0 %v3340
    %3469 = vmatpush1.bf16.msra.mxu0 %v3339
    %3470 = vmatprep.subr.bf16.mxu0 %v3334
    %3471 = vmatpush1.bf16.msra.mxu0 %v3333
    %3472 = vmatprep.subr.bf16.mxu0 %v3328
    %3473 = vmatpush1.bf16.msra.mxu0 %v3327
    %3474 = vmatprep.subr.bf16.mxu0 %v3322
    %3475 = vmatpush1.bf16.msra.mxu0 %v3321
    %3476 = vmatprep.subr.bf16.mxu0 %v3316
    %3477 = vmatpush1.bf16.msra.mxu0 %v3315
    %3478 = vmatprep.subr.bf16.mxu0 0
    %3479 = vmatpush2.bf16.msra.mxu0 0
    %3480 = vmatprep.subr.bf16.mxu0 0
    %3481 = vmatpush2.bf16.msra.mxu0 0
    %3482 = vmatprep.subr.bf16.mxu0 0
    %3483 = vmatpush2.bf16.msra.mxu0 0
    %3484 = vmatprep.subr.bf16.mxu0 0
    %3485 = vmatpush2.bf16.msra.mxu0 0
    %3486 = vmatprep.subr.bf16.mxu0 0
    %3487 = vmatpush2.bf16.msra.mxu0 0
    %3488 = vmatprep.subr.bf16.mxu0 0
    %3489 = vmatpush2.bf16.msra.mxu0 0
    %3490 = vmatprep.subr.bf16.mxu0 0
    %3491 = vmatpush2.bf16.msra.mxu0 0
    %3492 = vmatprep.subr.bf16.mxu0 0
    %3493 = vmatpush2.bf16.msra.mxu0 0
    %3494 = vmatprep.mubr.bf16.mxu0 0
    %3495 = vmatmul.mubr.bf16.gmra.mxu0 %v167
    %v3496 = vpop.f32.mrf.mxu0
    %v3497 = vadd.f32 %v3150, %v3496
    %v3498 = vpop.f32.mrf.mxu0
    %v3499 = vadd.f32 %v3154, %v3498
    %v3500 = vpop.f32.mrf.mxu0
    %v3501 = vadd.f32 %v3150, %v3500
    %v3502 = vpop.f32.mrf.mxu0
    %v3503 = vadd.f32 %v3154, %v3502
    %3504 = vmatprep.mubr.bf16.mxu0 0
    %3505 = vmatmul.mubr.bf16.gmra.mxu0 %v168
    %v3506 = vpop.f32.mrf.mxu0
    %v3507 = vadd.f32 %v3150, %v3506
    %v3508 = vpop.f32.mrf.mxu0
    %v3509 = vadd.f32 %v3154, %v3508
    %v3510 = vpop.f32.mrf.mxu0
    %v3511 = vadd.f32 %v3150, %v3510
    %v3512 = vpop.f32.mrf.mxu0
    %v3513 = vadd.f32 %v3154, %v3512
    %3514 = vdwg.mxu0
    %3515 = vmatprep.subr.bf16.mxu0 %v3360
    %3516 = vmatpush1.bf16.msra.mxu0 %v3359
    %3517 = vmatprep.subr.bf16.mxu0 %v3354
    %3518 = vmatpush1.bf16.msra.mxu0 %v3353
    %3519 = vmatprep.subr.bf16.mxu0 %v3348
    %3520 = vmatpush1.bf16.msra.mxu0 %v3347
    %3521 = vmatprep.subr.bf16.mxu0 %v3342
    %3522 = vmatpush1.bf16.msra.mxu0 %v3341
    %3523 = vmatprep.subr.bf16.mxu0 %v3336
    %3524 = vmatpush1.bf16.msra.mxu0 %v3335
    %3525 = vmatprep.subr.bf16.mxu0 %v3330
    %3526 = vmatpush1.bf16.msra.mxu0 %v3329
    %3527 = vmatprep.subr.bf16.mxu0 %v3324
    %3528 = vmatpush1.bf16.msra.mxu0 %v3323
    %3529 = vmatprep.subr.bf16.mxu0 %v3318
    %3530 = vmatpush1.bf16.msra.mxu0 %v3317
    %3531 = vmatprep.subr.bf16.mxu0 0
    %3532 = vmatpush2.bf16.msra.mxu0 0
    %3533 = vmatprep.subr.bf16.mxu0 0
    %3534 = vmatpush2.bf16.msra.mxu0 0
    %3535 = vmatprep.subr.bf16.mxu0 0
    %3536 = vmatpush2.bf16.msra.mxu0 0
    %3537 = vmatprep.subr.bf16.mxu0 0
    %3538 = vmatpush2.bf16.msra.mxu0 0
    %3539 = vmatprep.subr.bf16.mxu0 0
    %3540 = vmatpush2.bf16.msra.mxu0 0
    %3541 = vmatprep.subr.bf16.mxu0 0
    %3542 = vmatpush2.bf16.msra.mxu0 0
    %3543 = vmatprep.subr.bf16.mxu0 0
    %3544 = vmatpush2.bf16.msra.mxu0 0
    %3545 = vmatprep.subr.bf16.mxu0 0
    %3546 = vmatpush2.bf16.msra.mxu0 0
    %3547 = vmatprep.mubr.bf16.mxu0 0
    %3548 = vmatmul.mubr.bf16.gmra.mxu0 %v167
    %v3549 = vpop.f32.mrf.mxu0
    %v3550 = vadd.f32 %v3158, %v3549
    %v3551 = vpop.f32.mrf.mxu0
    %v3552 = vadd.f32 %v3162, %v3551
    %v3553 = vpop.f32.mrf.mxu0
    %v3554 = vadd.f32 %v3158, %v3553
    %v3555 = vpop.f32.mrf.mxu0
    %v3556 = vadd.f32 %v3162, %v3555
    %3557 = vmatprep.mubr.bf16.mxu0 0
    %3558 = vmatmul.mubr.bf16.gmra.mxu0 %v168
    %v3559 = vpop.f32.mrf.mxu0
    %v3560 = vadd.f32 %v3158, %v3559
    %v3561 = vpop.f32.mrf.mxu0
    %v3562 = vadd.f32 %v3162, %v3561
    %v3563 = vpop.f32.mrf.mxu0
    %v3564 = vadd.f32 %v3158, %v3563
    %v3565 = vpop.f32.mrf.mxu0
    %v3566 = vadd.f32 %v3162, %v3565
    %3567 = vdwg.mxu0
    %3568 = vadd.xlane.f32.xlu0 %v3083
    %v3569 = vpop.xlane.xlu0 %3568
    %3570 = vadd.xlane.f32.xlu0 %v3084
    %v3571 = vpop.xlane.xlu0 %3570
    %3572 = vadd.xlane.f32.xlu0 %v3085
    %v3573 = vpop.xlane.xlu0 %3572
    %3574 = vadd.xlane.f32.xlu0 %v3086
    %v3575 = vpop.xlane.xlu0 %3574
    %v3576 = vmul.f32 %v3569, %v664
    %v3577 = vmul.f32 %v3571, %v664
    %v3578 = vmul.f32 %v3573, %v664
    %v3579 = vmul.f32 %v3575, %v664
    %v3580 = vsub.f32 %v3083, %v3576
    %v3581 = vsub.f32 %v3084, %v3577
    %v3582 = vsub.f32 %v3085, %v3578
    %v3583 = vsub.f32 %v3086, %v3579
    %v3584 = vmul.f32 %v3580, %v3580
    %v3585 = vmul.f32 %v3581, %v3581
    %v3586 = vmul.f32 %v3582, %v3582
    %v3587 = vmul.f32 %v3583, %v3583
    %3588 = vadd.xlane.f32.xlu0 %v3584
    %v3589 = vpop.xlane.xlu0 %3588
    %3590 = vadd.xlane.f32.xlu0 %v3585
    %v3591 = vpop.xlane.xlu0 %3590
    %3592 = vadd.xlane.f32.xlu0 %v3586
    %v3593 = vpop.xlane.xlu0 %3592
    %3594 = vadd.xlane.f32.xlu0 %v3587
    %v3595 = vpop.xlane.xlu0 %3594
    %v3596 = vmul.f32 %v3589, %v664
    %v3597 = vmul.f32 %v3591, %v664
    %v3598 = vmul.f32 %v3593, %v664
    %v3599 = vmul.f32 %v3595, %v664
    %v3600 = vadd.f32 %v3596, 1e-05
    %v3601 = vadd.f32 %v3597, 1e-05
    %v3602 = vadd.f32 %v3598, 1e-05
    %v3603 = vadd.f32 %v3599, 1e-05
    %v3604 = vrsqrt.pop %v3600
    %v3605 = vrsqrt.pop %v3601
    %v3606 = vrsqrt.pop %v3602
    %v3607 = vrsqrt.pop %v3603
    %v3608 = vmul.f32 %v3580, %v3604
    %v3609 = vmul.f32 %v3581, %v3605
    %v3610 = vmul.f32 %v3582, %v3606
    %v3611 = vmul.f32 %v3583, %v3607
    %s3612 = scalar_lea.vmem %s5, 1
    %v3613 = vld [vmem:[%s3612] sm:$0x1]
    %v3615 = vlaneseq
    %v3616 = vshrl.u32 %v3615, 7
    %v3617 = vsub.s32 0, %v3616
    %v3618 = vrot.slane %v3613, %v3617
    %v3620 = vmul.f32 %v3608, %v3618
    %v3621 = vmul.f32 %v3609, %v3618
    %v3622 = vmul.f32 %v3610, %v3618
    %v3623 = vmul.f32 %v3611, %v3618
    %v3624 = vadd.f32 %v3446, 1.0
    %v3625 = vadd.f32 %v3450, 1.0
    %v3626 = vadd.f32 %v3456, 1.0
    %v3627 = vadd.f32 %v3460, 1.0
    %v3628 = vmul.f32 %v3620, %v3624
    %v3629 = vmul.f32 %v3621, %v3625
    %v3630 = vmul.f32 %v3622, %v3626
    %v3631 = vmul.f32 %v3623, %v3627
    %v3632 = vadd.f32 %v3628, %v3444
    %v3633 = vadd.f32 %v3629, %v3448
    %v3634 = vadd.f32 %v3630, %v3454
    %v3635 = vadd.f32 %v3631, %v3458
    %s3636 = scalar_lea.vmem [#allocation2], 192
    %v3637 = vld [vmem:[%s3636] sm:$0xff]
    %v3638 = vld [vmem:[%s3636 + $0x8] sm:$0xf]
    %v3639 = vld [vmem:[%s3636 + $0xc] sm:$0xff]
    %v3640 = vld [vmem:[%s3636 + $0x14] sm:$0xf]
    %v3641 = vld [vmem:[%s3636 + $0x18] sm:$0xff]
    %v3642 = vld [vmem:[%s3636 + $0x20] sm:$0xf]
    %v3643 = vld [vmem:[%s3636 + $0x24] sm:$0xff]
    %v3644 = vld [vmem:[%s3636 + $0x2c] sm:$0xf]
    %v3645 = vld [vmem:[%s3636 + $0x30] sm:$0xff]
    %v3646 = vld [vmem:[%s3636 + $0x38] sm:$0xf]
    %v3647 = vld [vmem:[%s3636 + $0x3c] sm:$0xff]
    %v3648 = vld [vmem:[%s3636 + $0x44] sm:$0xf]
    %v3649 = vld [vmem:[%s3636 + $0x48] sm:$0xff]
    %v3650 = vld [vmem:[%s3636 + $0x50] sm:$0xf]
    %v3651 = vld [vmem:[%s3636 + $0x54] sm:$0xff]
    %v3652 = vld [vmem:[%s3636 + $0x5c] sm:$0xf]
    %v3653 = vld [vmem:[%s3636 + $0x60] sm:$0xff]
    %v3654 = vld [vmem:[%s3636 + $0x68] sm:$0xf]
    %v3655 = vld [vmem:[%s3636 + $0x6c] sm:$0xff]
    %v3656 = vld [vmem:[%s3636 + $0x74] sm:$0xf]
    %v3657 = vld [vmem:[%s3636 + $0x78] sm:$0xff]
    %v3658 = vld [vmem:[%s3636 + $0x80] sm:$0xf]
    %v3659 = vld [vmem:[%s3636 + $0x84] sm:$0xff]
    %v3660 = vld [vmem:[%s3636 + $0x8c] sm:$0xf]
    %v3661 = vld [vmem:[%s3636 + $0x90] sm:$0xff]
    %v3662 = vld [vmem:[%s3636 + $0x98] sm:$0xf]
    %v3663 = vld [vmem:[%s3636 + $0x9c] sm:$0xff]
    %v3664 = vld [vmem:[%s3636 + $0xa4] sm:$0xf]
    %v3665 = vld [vmem:[%s3636 + $0xa8] sm:$0xff]
    %v3666 = vld [vmem:[%s3636 + $0xb0] sm:$0xf]
    %v3667 = vld [vmem:[%s3636 + $0xb4] sm:$0xff]
    %v3668 = vld [vmem:[%s3636 + $0xbc] sm:$0xf]
    %v3669 = vpack.c.bf16 %v3633, %v3632
    %v3670 = vpack.c.bf16 %v3635, %v3634
    %v3703 = vunpack.c.l.b16 %v3637
    %v3704 = vunpack.c.h.b16 %v3637
    %v3705 = vunpack.c.l.b16 %v3638
    %v3706 = vunpack.c.l.b16 %v3639
    %v3707 = vunpack.c.h.b16 %v3639
    %v3708 = vunpack.c.l.b16 %v3640
    %v3709 = vunpack.c.l.b16 %v3641
    %v3710 = vunpack.c.h.b16 %v3641
    %v3711 = vunpack.c.l.b16 %v3642
    %v3712 = vunpack.c.l.b16 %v3643
    %v3713 = vunpack.c.h.b16 %v3643
    %v3714 = vunpack.c.l.b16 %v3644
    %v3715 = vunpack.c.l.b16 %v3645
    %v3716 = vunpack.c.h.b16 %v3645
    %v3717 = vunpack.c.l.b16 %v3646
    %v3718 = vunpack.c.l.b16 %v3647
    %v3719 = vunpack.c.h.b16 %v3647
    %v3720 = vunpack.c.l.b16 %v3648
    %v3721 = vunpack.c.l.b16 %v3649
    %v3722 = vunpack.c.h.b16 %v3649
    %v3723 = vunpack.c.l.b16 %v3650
    %v3724 = vunpack.c.l.b16 %v3651
    %v3725 = vunpack.c.h.b16 %v3651
    %v3726 = vunpack.c.l.b16 %v3652
    %v3727 = vunpack.c.l.b16 %v3653
    %v3728 = vunpack.c.h.b16 %v3653
    %v3729 = vunpack.c.l.b16 %v3654
    %v3730 = vunpack.c.l.b16 %v3655
    %v3731 = vunpack.c.h.b16 %v3655
    %v3732 = vunpack.c.l.b16 %v3656
    %v3733 = vunpack.c.l.b16 %v3657
    %v3734 = vunpack.c.h.b16 %v3657
    %v3735 = vunpack.c.l.b16 %v3658
    %v3736 = vunpack.c.l.b16 %v3659
    %v3737 = vunpack.c.h.b16 %v3659
    %v3738 = vunpack.c.l.b16 %v3660
    %v3739 = vunpack.c.l.b16 %v3661
    %v3740 = vunpack.c.h.b16 %v3661
    %v3741 = vunpack.c.l.b16 %v3662
    %v3742 = vunpack.c.l.b16 %v3663
    %v3743 = vunpack.c.h.b16 %v3663
    %v3744 = vunpack.c.l.b16 %v3664
    %v3745 = vunpack.c.l.b16 %v3665
    %v3746 = vunpack.c.h.b16 %v3665
    %v3747 = vunpack.c.l.b16 %v3666
    %v3748 = vunpack.c.l.b16 %v3667
    %v3749 = vunpack.c.h.b16 %v3667
    %v3750 = vunpack.c.l.b16 %v3668
    %v3751 = vpack.c.b16 %v3706, %v3703
    %v3752 = vpack.c.b16 %v3707, %v3704
    %v3753 = vpack.c.b16 %v3708, %v3705
    %v3754 = vpack.c.b16 %v3712, %v3709
    %v3755 = vpack.c.b16 %v3713, %v3710
    %v3756 = vpack.c.b16 %v3714, %v3711
    %v3757 = vpack.c.b16 %v3718, %v3715
    %v3758 = vpack.c.b16 %v3719, %v3716
    %v3759 = vpack.c.b16 %v3720, %v3717
    %v3760 = vpack.c.b16 %v3724, %v3721
    %v3761 = vpack.c.b16 %v3725, %v3722
    %v3762 = vpack.c.b16 %v3726, %v3723
    %v3763 = vpack.c.b16 %v3730, %v3727
    %v3764 = vpack.c.b16 %v3731, %v3728
    %v3765 = vpack.c.b16 %v3732, %v3729
    %v3766 = vpack.c.b16 %v3736, %v3733
    %v3767 = vpack.c.b16 %v3737, %v3734
    %v3768 = vpack.c.b16 %v3738, %v3735
    %v3769 = vpack.c.b16 %v3742, %v3739
    %v3770 = vpack.c.b16 %v3743, %v3740
    %v3771 = vpack.c.b16 %v3744, %v3741
    %v3772 = vpack.c.b16 %v3748, %v3745
    %v3773 = vpack.c.b16 %v3749, %v3746
    %v3774 = vpack.c.b16 %v3750, %v3747
    %3799 = vmatprep.subr.bf16.mxu0 %v3773
    %3800 = vmatpush1.bf16.msra.mxu0 %v3772
    %3801 = vmatprep.subr.bf16.mxu0 %v3770
    %3802 = vmatpush1.bf16.msra.mxu0 %v3769
    %3803 = vmatprep.subr.bf16.mxu0 %v3767
    %3804 = vmatpush1.bf16.msra.mxu0 %v3766
    %3805 = vmatprep.subr.bf16.mxu0 %v3764
    %3806 = vmatpush1.bf16.msra.mxu0 %v3763
    %3807 = vmatprep.subr.bf16.mxu0 %v3761
    %3808 = vmatpush1.bf16.msra.mxu0 %v3760
    %3809 = vmatprep.subr.bf16.mxu0 %v3758
    %3810 = vmatpush1.bf16.msra.mxu0 %v3757
    %3811 = vmatprep.subr.bf16.mxu0 %v3755
    %3812 = vmatpush1.bf16.msra.mxu0 %v3754
    %3813 = vmatprep.subr.bf16.mxu0 %v3752
    %3814 = vmatpush1.bf16.msra.mxu0 %v3751
    %3815 = vmatprep.subr.bf16.mxu0 0
    %3816 = vmatpush2.bf16.msra.mxu0 0
    %3817 = vmatprep.subr.bf16.mxu0 0
    %3818 = vmatpush2.bf16.msra.mxu0 0
    %3819 = vmatprep.subr.bf16.mxu0 0
    %3820 = vmatpush2.bf16.msra.mxu0 0
    %3821 = vmatprep.subr.bf16.mxu0 0
    %3822 = vmatpush2.bf16.msra.mxu0 0
    %3823 = vmatprep.subr.bf16.mxu0 0
    %3824 = vmatpush2.bf16.msra.mxu0 0
    %3825 = vmatprep.subr.bf16.mxu0 0
    %3826 = vmatpush2.bf16.msra.mxu0 0
    %3827 = vmatprep.subr.bf16.mxu0 0
    %3828 = vmatpush2.bf16.msra.mxu0 0
    %3829 = vmatprep.subr.bf16.mxu0 0
    %3830 = vmatpush2.bf16.msra.mxu0 0
    %3831 = vmatprep.mubr.bf16.mxu0 0
    %3832 = vmatmul.mubr.bf16.gmra.mxu0 %v3669
    %v3833 = vpop.f32.mrf.mxu0
    %v3834 = vadd.f32 0.0, %v3833
    %v3835 = vpop.f32.mrf.mxu0
    %v3836 = vadd.f32 0.0, %v3835
    %v3837 = vpop.f32.mrf.mxu0
    %v3838 = vadd.f32 0.0, %v3837
    %v3839 = vpop.f32.mrf.mxu0
    %v3840 = vadd.f32 0.0, %v3839
    %3841 = vmatprep.mubr.bf16.mxu0 0
    %3842 = vmatmul.mubr.bf16.gmra.mxu0 %v3670
    %v3843 = vpop.f32.mrf.mxu0
    %v3844 = vadd.f32 0.0, %v3843
    %v3845 = vpop.f32.mrf.mxu0
    %v3846 = vadd.f32 0.0, %v3845
    %v3847 = vpop.f32.mrf.mxu0
    %v3848 = vadd.f32 0.0, %v3847
    %v3849 = vpop.f32.mrf.mxu0
    %v3850 = vadd.f32 0.0, %v3849
    %3851 = vdwg.mxu0
    %3852 = vmatprep.subr.bf16.mxu0 0
    %3853 = vmatpush1.bf16.msra.mxu0 %v3774
    %3854 = vmatprep.subr.bf16.mxu0 0
    %3855 = vmatpush1.bf16.msra.mxu0 %v3771
    %3856 = vmatprep.subr.bf16.mxu0 0
    %3857 = vmatpush1.bf16.msra.mxu0 %v3768
    %3858 = vmatprep.subr.bf16.mxu0 0
    %3859 = vmatpush1.bf16.msra.mxu0 %v3765
    %3860 = vmatprep.subr.bf16.mxu0 0
    %3861 = vmatpush1.bf16.msra.mxu0 %v3762
    %3862 = vmatprep.subr.bf16.mxu0 0
    %3863 = vmatpush1.bf16.msra.mxu0 %v3759
    %3864 = vmatprep.subr.bf16.mxu0 0
    %3865 = vmatpush1.bf16.msra.mxu0 %v3756
    %3866 = vmatprep.subr.bf16.mxu0 0
    %3867 = vmatpush1.bf16.msra.mxu0 %v3753
    %3868 = vmatprep.subr.bf16.mxu0 0
    %3869 = vmatpush2.bf16.msra.mxu0 0
    %3870 = vmatprep.subr.bf16.mxu0 0
    %3871 = vmatpush2.bf16.msra.mxu0 0
    %3872 = vmatprep.subr.bf16.mxu0 0
    %3873 = vmatpush2.bf16.msra.mxu0 0
    %3874 = vmatprep.subr.bf16.mxu0 0
    %3875 = vmatpush2.bf16.msra.mxu0 0
    %3876 = vmatprep.subr.bf16.mxu0 0
    %3877 = vmatpush2.bf16.msra.mxu0 0
    %3878 = vmatprep.subr.bf16.mxu0 0
    %3879 = vmatpush2.bf16.msra.mxu0 0
    %3880 = vmatprep.subr.bf16.mxu0 0
    %3881 = vmatpush2.bf16.msra.mxu0 0
    %3882 = vmatprep.subr.bf16.mxu0 0
    %3883 = vmatpush2.bf16.msra.mxu0 0
    %3884 = vmatprep.mubr.bf16.mxu0 0
    %3885 = vmatmul.mubr.bf16.gmra.mxu0 %v3669
    %v3886 = vpop.f32.mrf.mxu0
    %v3887 = vadd.f32 0.0, %v3886
    %v3888 = vpop.f32.mrf.mxu0
    %v3889 = vpop.f32.mrf.mxu0
    %v3890 = vadd.f32 0.0, %v3889
    %v3891 = vpop.f32.mrf.mxu0
    %3892 = vmatprep.mubr.bf16.mxu0 0
    %3893 = vmatmul.mubr.bf16.gmra.mxu0 %v3670
    %v3894 = vpop.f32.mrf.mxu0
    %v3895 = vadd.f32 0.0, %v3894
    %v3896 = vpop.f32.mrf.mxu0
    %v3897 = vpop.f32.mrf.mxu0
    %v3898 = vadd.f32 0.0, %v3897
    %v3899 = vpop.f32.mrf.mxu0
    %3900 = vdwg.mxu0
    %s3901 = scalar_lea.vmem [#allocation5], 128
    %v3902 = vld [vmem:[%s3901] sm:$0xff]
    %v3903 = vld [vmem:[%s3901 + $0x8] sm:$0xff]
    %v3904 = vld [vmem:[%s3901 + $0x10] sm:$0xff]
    %v3905 = vld [vmem:[%s3901 + $0x18] sm:$0xff]
    %v3906 = vld [vmem:[%s3901 + $0x20] sm:$0xff]
    %v3907 = vld [vmem:[%s3901 + $0x28] sm:$0xff]
    %v3908 = vld [vmem:[%s3901 + $0x30] sm:$0xff]
    %v3909 = vld [vmem:[%s3901 + $0x38] sm:$0xff]
    %v3910 = vld [vmem:[%s3901 + $0x40] sm:$0xff]
    %v3911 = vld [vmem:[%s3901 + $0x48] sm:$0xff]
    %v3912 = vld [vmem:[%s3901 + $0x50] sm:$0xff]
    %v3913 = vld [vmem:[%s3901 + $0x58] sm:$0xff]
    %v3914 = vld [vmem:[%s3901 + $0x60] sm:$0xff]
    %v3915 = vld [vmem:[%s3901 + $0x68] sm:$0xff]
    %v3916 = vld [vmem:[%s3901 + $0x70] sm:$0xff]
    %v3917 = vld [vmem:[%s3901 + $0x78] sm:$0xff]
    %v3934 = vunpack.c.l.b16 %v3902
    %v3935 = vunpack.c.h.b16 %v3902
    %v3936 = vunpack.c.l.b16 %v3903
    %v3937 = vunpack.c.h.b16 %v3903
    %v3938 = vunpack.c.l.b16 %v3904
    %v3939 = vunpack.c.h.b16 %v3904
    %v3940 = vunpack.c.l.b16 %v3905
    %v3941 = vunpack.c.h.b16 %v3905
    %v3942 = vunpack.c.l.b16 %v3906
    %v3943 = vunpack.c.h.b16 %v3906
    %v3944 = vunpack.c.l.b16 %v3907
    %v3945 = vunpack.c.h.b16 %v3907
    %v3946 = vunpack.c.l.b16 %v3908
    %v3947 = vunpack.c.h.b16 %v3908
    %v3948 = vunpack.c.l.b16 %v3909
    %v3949 = vunpack.c.h.b16 %v3909
    %v3950 = vunpack.c.l.b16 %v3910
    %v3951 = vunpack.c.h.b16 %v3910
    %v3952 = vunpack.c.l.b16 %v3911
    %v3953 = vunpack.c.h.b16 %v3911
    %v3954 = vunpack.c.l.b16 %v3912
    %v3955 = vunpack.c.h.b16 %v3912
    %v3956 = vunpack.c.l.b16 %v3913
    %v3957 = vunpack.c.h.b16 %v3913
    %v3958 = vunpack.c.l.b16 %v3914
    %v3959 = vunpack.c.h.b16 %v3914
    %v3960 = vunpack.c.l.b16 %v3915
    %v3961 = vunpack.c.h.b16 %v3915
    %v3962 = vunpack.c.l.b16 %v3916
    %v3963 = vunpack.c.h.b16 %v3916
    %v3964 = vunpack.c.l.b16 %v3917
    %v3965 = vunpack.c.h.b16 %v3917
    %v3966 = vpack.c.b16 %v3936, %v3934
    %v3967 = vpack.c.b16 %v3937, %v3935
    %v3968 = vpack.c.b16 %v3940, %v3938
    %v3969 = vpack.c.b16 %v3941, %v3939
    %v3970 = vpack.c.b16 %v3944, %v3942
    %v3971 = vpack.c.b16 %v3945, %v3943
    %v3972 = vpack.c.b16 %v3948, %v3946
    %v3973 = vpack.c.b16 %v3949, %v3947
    %v3974 = vpack.c.b16 %v3952, %v3950
    %v3975 = vpack.c.b16 %v3953, %v3951
    %v3976 = vpack.c.b16 %v3956, %v3954
    %v3977 = vpack.c.b16 %v3957, %v3955
    %v3978 = vpack.c.b16 %v3960, %v3958
    %v3979 = vpack.c.b16 %v3961, %v3959
    %v3980 = vpack.c.b16 %v3964, %v3962
    %v3981 = vpack.c.b16 %v3965, %v3963
    %3998 = vmatprep.subr.bf16.mxu0 %v3981
    %3999 = vmatpush1.bf16.msra.mxu0 %v3980
    %4000 = vmatprep.subr.bf16.mxu0 %v3979
    %4001 = vmatpush1.bf16.msra.mxu0 %v3978
    %4002 = vmatprep.subr.bf16.mxu0 %v3977
    %4003 = vmatpush1.bf16.msra.mxu0 %v3976
    %4004 = vmatprep.subr.bf16.mxu0 %v3975
    %4005 = vmatpush1.bf16.msra.mxu0 %v3974
    %4006 = vmatprep.subr.bf16.mxu0 %v3973
    %4007 = vmatpush1.bf16.msra.mxu0 %v3972
    %4008 = vmatprep.subr.bf16.mxu0 %v3971
    %4009 = vmatpush1.bf16.msra.mxu0 %v3970
    %4010 = vmatprep.subr.bf16.mxu0 %v3969
    %4011 = vmatpush1.bf16.msra.mxu0 %v3968
    %4012 = vmatprep.subr.bf16.mxu0 %v3967
    %4013 = vmatpush1.bf16.msra.mxu0 %v3966
    %4014 = vmatprep.subr.bf16.mxu0 0
    %4015 = vmatpush2.bf16.msra.mxu0 0
    %4016 = vmatprep.subr.bf16.mxu0 0
    %4017 = vmatpush2.bf16.msra.mxu0 0
    %4018 = vmatprep.subr.bf16.mxu0 0
    %4019 = vmatpush2.bf16.msra.mxu0 0
    %4020 = vmatprep.subr.bf16.mxu0 0
    %4021 = vmatpush2.bf16.msra.mxu0 0
    %4022 = vmatprep.subr.bf16.mxu0 0
    %4023 = vmatpush2.bf16.msra.mxu0 0
    %4024 = vmatprep.subr.bf16.mxu0 0
    %4025 = vmatpush2.bf16.msra.mxu0 0
    %4026 = vmatprep.subr.bf16.mxu0 0
    %4027 = vmatpush2.bf16.msra.mxu0 0
    %4028 = vmatprep.subr.bf16.mxu0 0
    %4029 = vmatpush2.bf16.msra.mxu0 0
    %4030 = vmatprep.mubr.bf16.mxu0 0
    %4031 = vmatmul.mubr.bf16.gmra.mxu0 %v3669
    %v4032 = vpop.f32.mrf.mxu0
    %v4033 = vadd.f32 0.0, %v4032
    %v4034 = vpop.f32.mrf.mxu0
    %v4035 = vadd.f32 0.0, %v4034
    %v4036 = vpop.f32.mrf.mxu0
    %v4037 = vadd.f32 0.0, %v4036
    %v4038 = vpop.f32.mrf.mxu0
    %v4039 = vadd.f32 0.0, %v4038
    %4040 = vmatprep.mubr.bf16.mxu0 0
    %4041 = vmatmul.mubr.bf16.gmra.mxu0 %v3670
    %v4042 = vpop.f32.mrf.mxu0
    %v4043 = vadd.f32 0.0, %v4042
    %v4044 = vpop.f32.mrf.mxu0
    %v4045 = vadd.f32 0.0, %v4044
    %v4046 = vpop.f32.mrf.mxu0
    %v4047 = vadd.f32 0.0, %v4046
    %v4048 = vpop.f32.mrf.mxu0
    %v4049 = vadd.f32 0.0, %v4048
    %4050 = vdwg.mxu0
    %v4051 = vsel %vm1137, %v3834, 0.0
    %4052 = vadd.xlane.f32.xlu0 %v4051
    %v4053 = vpop.xlane.xlu0 %4052
    %v4054 = vsel %vm1137, %v3838, 0.0
    %4055 = vadd.xlane.f32.xlu0 %v4054
    %v4056 = vpop.xlane.xlu0 %4055
    %v4057 = vmul.f32 %v4053, %v1144
    %v4058 = vmul.f32 %v4056, %v1144
    %v4059 = vsub.f32 %v3834, %v4057
    %v4060 = vsub.f32 %v3838, %v4058
    %v4061 = vmul.f32 %v4059, %v4059
    %v4062 = vmul.f32 %v4060, %v4060
    %v4063 = vsel %vm1137, %v4061, 0.0
    %4064 = vadd.xlane.f32.xlu0 %v4063
    %v4065 = vpop.xlane.xlu0 %4064
    %v4066 = vsel %vm1137, %v4062, 0.0
    %4067 = vadd.xlane.f32.xlu0 %v4066
    %v4068 = vpop.xlane.xlu0 %4067
    %v4069 = vmul.f32 %v4065, %v1144
    %v4070 = vmul.f32 %v4068, %v1144
    %v4071 = vadd.f32 %v4069, 1e-06
    %v4072 = vadd.f32 %v4070, 1e-06
    %v4073 = vrsqrt.pop %v4071
    %v4074 = vrsqrt.pop %v4072
    %v4075 = vmul.f32 %v3834, %v169
    %v4076 = vmul.f32 %v3838, %v170
    %v4077 = vmul.f32 %v4033, %v172
    %v4078 = vmul.f32 %v4037, %v173
    %v4079 = vadd.f32 %v4075, %v4077
    %v4080 = vadd.f32 %v4076, %v4078
    %v4081 = vmul.f32 %v4057, %v175
    %v4082 = vmul.f32 %v4058, %v176
    %v4083 = vsub.f32 %v4079, %v4081
    %v4084 = vsub.f32 %v4080, %v4082
    %v4085 = vmul.f32 %v4073, %v4083
    %v4086 = vmul.f32 %v4074, %v4084
    %v4087 = vsel %vm1137, %v3836, 0.0
    %4088 = vadd.xlane.f32.xlu0 %v4087
    %v4089 = vpop.xlane.xlu0 %4088
    %v4090 = vsel %vm1137, %v3840, 0.0
    %4091 = vadd.xlane.f32.xlu0 %v4090
    %v4092 = vpop.xlane.xlu0 %4091
    %v4093 = vmul.f32 %v4089, %v1144
    %v4094 = vmul.f32 %v4092, %v1144
    %v4095 = vsub.f32 %v3836, %v4093
    %v4096 = vsub.f32 %v3840, %v4094
    %v4097 = vmul.f32 %v4095, %v4095
    %v4098 = vmul.f32 %v4096, %v4096
    %v4099 = vsel %vm1137, %v4097, 0.0
    %4100 = vadd.xlane.f32.xlu0 %v4099
    %v4101 = vpop.xlane.xlu0 %4100
    %v4102 = vsel %vm1137, %v4098, 0.0
    %4103 = vadd.xlane.f32.xlu0 %v4102
    %v4104 = vpop.xlane.xlu0 %4103
    %v4105 = vmul.f32 %v4101, %v1144
    %v4106 = vmul.f32 %v4104, %v1144
    %v4107 = vadd.f32 %v4105, 1e-06
    %v4108 = vadd.f32 %v4106, 1e-06
    %v4109 = vrsqrt.pop %v4107
    %v4110 = vrsqrt.pop %v4108
    %v4111 = vmul.f32 %v3836, %v169
    %v4112 = vmul.f32 %v3840, %v170
    %v4113 = vmul.f32 %v4035, %v172
    %v4114 = vmul.f32 %v4039, %v173
    %v4115 = vadd.f32 %v4111, %v4113
    %v4116 = vadd.f32 %v4112, %v4114
    %v4117 = vmul.f32 %v4093, %v175
    %v4118 = vmul.f32 %v4094, %v176
    %v4119 = vsub.f32 %v4115, %v4117
    %v4120 = vsub.f32 %v4116, %v4118
    %v4121 = vmul.f32 %v4109, %v4119
    %v4122 = vmul.f32 %v4110, %v4120
    %v4123 = vpack.c.bf16 %v4086, %v4085
    %v4124 = vpack.c.bf16 %v4122, %v4121
    %v4126 = vsel %vm1137, %v4123, 0
    %v4129 = vsel %vm1137, %v4124, 0
    %4131 = vmatprep.subr.bf16.mxu0 0
    %4132 = vmatpush1.bf16.xpose.msra.mxu0 0
    %4133 = vmatprep.subr.bf16.mxu0 0
    %4134 = vmatpush1.bf16.xpose.msra.mxu0 0
    %4135 = vmatprep.subr.bf16.mxu0 0
    %4136 = vmatpush1.bf16.xpose.msra.mxu0 0
    %4137 = vmatprep.subr.bf16.mxu0 0
    %4138 = vmatpush1.bf16.xpose.msra.mxu0 0
    %4139 = vmatprep.subr.bf16.mxu0 0
    %4140 = vmatpush1.bf16.xpose.msra.mxu0 0
    %4141 = vmatprep.subr.bf16.mxu0 0
    %4142 = vmatpush1.bf16.xpose.msra.mxu0 0
    %4143 = vmatprep.subr.bf16.mxu0 0
    %4144 = vmatpush1.bf16.xpose.msra.mxu0 0
    %4145 = vmatprep.subr.bf16.mxu0 0
    %4146 = vmatpush1.bf16.xpose.msra.mxu0 %v4129
    %4147 = vmatprep.subr.bf16.mxu0 0
    %4148 = vmatpush2.bf16.xpose.msra.mxu0 0
    %4149 = vmatprep.subr.bf16.mxu0 0
    %4150 = vmatpush2.bf16.xpose.msra.mxu0 0
    %4151 = vmatprep.subr.bf16.mxu0 0
    %4152 = vmatpush2.bf16.xpose.msra.mxu0 0
    %4153 = vmatprep.subr.bf16.mxu0 0
    %4154 = vmatpush2.bf16.xpose.msra.mxu0 0
    %4155 = vmatprep.subr.bf16.mxu0 0
    %4156 = vmatpush2.bf16.xpose.msra.mxu0 0
    %4157 = vmatprep.subr.bf16.mxu0 0
    %4158 = vmatpush2.bf16.xpose.msra.mxu0 0
    %4159 = vmatprep.subr.bf16.mxu0 0
    %4160 = vmatpush2.bf16.xpose.msra.mxu0 0
    %4161 = vmatprep.subr.bf16.mxu0 0
    %4162 = vmatpush2.bf16.xpose.msra.mxu0 0
    %4163 = vmatprep.mubr.bf16.mxu0 0
    %4164 = vmatmul.mubr.bf16.gmra.mxu0 %v4126
    %v4165 = vpop.f32.mrf.mxu0
    %v4166 = vadd.f32 0.0, %v4165
    %v4167 = vpop.f32.mrf.mxu0
    %v4168 = vpop.f32.mrf.mxu0
    %v4169 = vadd.f32 0.0, %v4168
    %v4170 = vpop.f32.mrf.mxu0
    %4171 = vdwg.mxu0
    %v4172 = vmul.f32 %v4166, 0.125
    %v4173 = vmul.f32 %v4169, 0.125
    %v4174 = vsel %vm1262, %v4172, -inf
    %4175 = vmax.xlane.f32.xlu0 %v4174
    %v4176 = vpop.xlane.xlu0 %4175
    %v4177 = vsel %vm1262, %v4173, -inf
    %4178 = vmax.xlane.f32.xlu0 %v4177
    %v4179 = vpop.xlane.xlu0 %4178
    %v4180 = vsub.f32 %v4172, %v4176
    %v4181 = vsub.f32 %v4173, %v4179
    %v4182 = vmul.f32 %v4180, 1.442695
    %v4183 = vpow.pop %v4182
    %v4184 = vmul.f32 %v4181, 1.442695
    %v4185 = vpow.pop %v4184
    %v4186 = vsel %vm1262, %v4183, 0.0
    %4187 = vadd.xlane.f32.xlu0 %v4186
    %v4188 = vpop.xlane.xlu0 %4187
    %v4189 = vsel %vm1262, %v4185, 0.0
    %4190 = vadd.xlane.f32.xlu0 %v4189
    %v4191 = vpop.xlane.xlu0 %4190
    %v4192 = vrcp.pop %v4188
    %v4193 = vrcp.pop %v4191
    %v4194 = vmul.f32 %v4183, %v4192
    %v4195 = vmul.f32 %v4185, %v4193
    %v4196 = vpack.c.bf16 %v3890, %v3887
    %v4197 = vpack.c.bf16 %v4195, %v4194
    %v4199 = vsel %vm1262, %v4197, 0
    %4201 = vmatprep.subr.bf16.mxu0 0
    %4202 = vmatpush1.bf16.msra.mxu0 0
    %4203 = vmatprep.subr.bf16.mxu0 0
    %4204 = vmatpush1.bf16.msra.mxu0 0
    %4205 = vmatprep.subr.bf16.mxu0 0
    %4206 = vmatpush1.bf16.msra.mxu0 0
    %4207 = vmatprep.subr.bf16.mxu0 0
    %4208 = vmatpush1.bf16.msra.mxu0 0
    %4209 = vmatprep.subr.bf16.mxu0 0
    %4210 = vmatpush1.bf16.msra.mxu0 0
    %4211 = vmatprep.subr.bf16.mxu0 0
    %4212 = vmatpush1.bf16.msra.mxu0 0
    %4213 = vmatprep.subr.bf16.mxu0 0
    %4214 = vmatpush1.bf16.msra.mxu0 0
    %4215 = vmatprep.subr.bf16.mxu0 0
    %4216 = vmatpush1.bf16.msra.mxu0 %v4196
    %4217 = vmatprep.subr.bf16.mxu0 0
    %4218 = vmatpush2.bf16.msra.mxu0 0
    %4219 = vmatprep.subr.bf16.mxu0 0
    %4220 = vmatpush2.bf16.msra.mxu0 0
    %4221 = vmatprep.subr.bf16.mxu0 0
    %4222 = vmatpush2.bf16.msra.mxu0 0
    %4223 = vmatprep.subr.bf16.mxu0 0
    %4224 = vmatpush2.bf16.msra.mxu0 0
    %4225 = vmatprep.subr.bf16.mxu0 0
    %4226 = vmatpush2.bf16.msra.mxu0 0
    %4227 = vmatprep.subr.bf16.mxu0 0
    %4228 = vmatpush2.bf16.msra.mxu0 0
    %4229 = vmatprep.subr.bf16.mxu0 0
    %4230 = vmatpush2.bf16.msra.mxu0 0
    %4231 = vmatprep.subr.bf16.mxu0 0
    %4232 = vmatpush2.bf16.msra.mxu0 0
    %4233 = vmatprep.mubr.bf16.mxu0 0
    %4234 = vmatmul.mubr.bf16.gmra.mxu0 %v4199
    %v4235 = vpop.f32.mrf.mxu0
    %v4236 = vadd.f32 0.0, %v4235
    %v4237 = vpop.f32.mrf.mxu0
    %v4238 = vpop.f32.mrf.mxu0
    %v4239 = vadd.f32 0.0, %v4238
    %v4240 = vpop.f32.mrf.mxu0
    %4241 = vdwg.mxu0
    %4244 = vrot.lane.b32.xlu0 %v3834, 64
    %v4245 = vpop.permute.xlu0 %4244
    %4246 = vrot.lane.b32.xlu0 %v3838, 64
    %v4247 = vpop.permute.xlu0 %4246
    %v4250 = vsel %vm1137, %v4245, 0.0
    %4251 = vadd.xlane.f32.xlu0 %v4250
    %v4252 = vpop.xlane.xlu0 %4251
    %v4253 = vsel %vm1137, %v4247, 0.0
    %4254 = vadd.xlane.f32.xlu0 %v4253
    %v4255 = vpop.xlane.xlu0 %4254
    %v4256 = vmul.f32 %v4252, %v1144
    %v4257 = vmul.f32 %v4255, %v1144
    %v4258 = vsub.f32 %v3834, %v4256
    %v4259 = vsub.f32 %v3838, %v4257
    %v4260 = vmul.f32 %v4258, %v4258
    %v4261 = vmul.f32 %v4259, %v4259
    %4264 = vrot.lane.b32.xlu0 %v4260, 64
    %v4265 = vpop.permute.xlu0 %4264
    %4266 = vrot.lane.b32.xlu0 %v4261, 64
    %v4267 = vpop.permute.xlu0 %4266
    %v4270 = vsel %vm1137, %v4265, 0.0
    %4271 = vadd.xlane.f32.xlu0 %v4270
    %v4272 = vpop.xlane.xlu0 %4271
    %v4273 = vsel %vm1137, %v4267, 0.0
    %4274 = vadd.xlane.f32.xlu0 %v4273
    %v4275 = vpop.xlane.xlu0 %4274
    %v4276 = vmul.f32 %v4272, %v1144
    %v4277 = vmul.f32 %v4275, %v1144
    %v4278 = vadd.f32 %v4276, 1e-06
    %v4279 = vadd.f32 %v4277, 1e-06
    %v4280 = vrsqrt.pop %v4278
    %v4281 = vrsqrt.pop %v4279
    %v4282 = vmul.f32 %v3834, %v1374
    %v4283 = vmul.f32 %v3838, %v1376
    %v4284 = vmul.f32 %v4033, %v1384
    %v4285 = vmul.f32 %v4037, %v1386
    %v4286 = vadd.f32 %v4282, %v4284
    %v4287 = vadd.f32 %v4283, %v4285
    %v4288 = vmul.f32 %v4256, %v175
    %v4289 = vmul.f32 %v4257, %v176
    %4292 = vrot.lane.b32.xlu0 %v4288, 64
    %v4293 = vpop.permute.xlu0 %4292
    %4294 = vrot.lane.b32.xlu0 %v4289, 64
    %v4295 = vpop.permute.xlu0 %4294
    %v4298 = vsub.f32 %v4286, %v4293
    %v4299 = vsub.f32 %v4287, %v4295
    %v4300 = vmul.f32 %v4280, %v4298
    %v4301 = vmul.f32 %v4281, %v4299
    %4304 = vrot.lane.b32.xlu0 %v3836, 64
    %v4305 = vpop.permute.xlu0 %4304
    %4306 = vrot.lane.b32.xlu0 %v3840, 64
    %v4307 = vpop.permute.xlu0 %4306
    %v4310 = vsel %vm1137, %v4305, 0.0
    %4311 = vadd.xlane.f32.xlu0 %v4310
    %v4312 = vpop.xlane.xlu0 %4311
    %v4313 = vsel %vm1137, %v4307, 0.0
    %4314 = vadd.xlane.f32.xlu0 %v4313
    %v4315 = vpop.xlane.xlu0 %4314
    %v4316 = vmul.f32 %v4312, %v1144
    %v4317 = vmul.f32 %v4315, %v1144
    %v4318 = vsub.f32 %v3836, %v4316
    %v4319 = vsub.f32 %v3840, %v4317
    %v4320 = vmul.f32 %v4318, %v4318
    %v4321 = vmul.f32 %v4319, %v4319
    %4324 = vrot.lane.b32.xlu0 %v4320, 64
    %v4325 = vpop.permute.xlu0 %4324
    %4326 = vrot.lane.b32.xlu0 %v4321, 64
    %v4327 = vpop.permute.xlu0 %4326
    %v4330 = vsel %vm1137, %v4325, 0.0
    %4331 = vadd.xlane.f32.xlu0 %v4330
    %v4332 = vpop.xlane.xlu0 %4331
    %v4333 = vsel %vm1137, %v4327, 0.0
    %4334 = vadd.xlane.f32.xlu0 %v4333
    %v4335 = vpop.xlane.xlu0 %4334
    %v4336 = vmul.f32 %v4332, %v1144
    %v4337 = vmul.f32 %v4335, %v1144
    %v4338 = vadd.f32 %v4336, 1e-06
    %v4339 = vadd.f32 %v4337, 1e-06
    %v4340 = vrsqrt.pop %v4338
    %v4341 = vrsqrt.pop %v4339
    %v4342 = vmul.f32 %v3836, %v1374
    %v4343 = vmul.f32 %v3840, %v1376
    %v4344 = vmul.f32 %v4035, %v1384
    %v4345 = vmul.f32 %v4039, %v1386
    %v4346 = vadd.f32 %v4342, %v4344
    %v4347 = vadd.f32 %v4343, %v4345
    %v4348 = vmul.f32 %v4316, %v175
    %v4349 = vmul.f32 %v4317, %v176
    %4352 = vrot.lane.b32.xlu0 %v4348, 64
    %v4353 = vpop.permute.xlu0 %4352
    %4354 = vrot.lane.b32.xlu0 %v4349, 64
    %v4355 = vpop.permute.xlu0 %4354
    %v4358 = vsub.f32 %v4346, %v4353
    %v4359 = vsub.f32 %v4347, %v4355
    %v4360 = vmul.f32 %v4340, %v4358
    %v4361 = vmul.f32 %v4341, %v4359
    %v4362 = vpack.c.bf16 %v4301, %v4300
    %v4363 = vpack.c.bf16 %v4361, %v4360
    %4365 = vrot.lane.b32.xlu0 %v4362, 64
    %v4366 = vpop.permute.xlu0 %4365
    %4368 = vrot.lane.b32.xlu0 %v4363, 64
    %v4369 = vpop.permute.xlu0 %4368
    %v4371 = vsel %vm1137, %v4366, 0
    %v4374 = vsel %vm1137, %v4369, 0
    %4376 = vmatprep.subr.bf16.mxu0 0
    %4377 = vmatpush1.bf16.xpose.msra.mxu0 0
    %4378 = vmatprep.subr.bf16.mxu0 0
    %4379 = vmatpush1.bf16.xpose.msra.mxu0 0
    %4380 = vmatprep.subr.bf16.mxu0 0
    %4381 = vmatpush1.bf16.xpose.msra.mxu0 0
    %4382 = vmatprep.subr.bf16.mxu0 0
    %4383 = vmatpush1.bf16.xpose.msra.mxu0 0
    %4384 = vmatprep.subr.bf16.mxu0 0
    %4385 = vmatpush1.bf16.xpose.msra.mxu0 0
    %4386 = vmatprep.subr.bf16.mxu0 0
    %4387 = vmatpush1.bf16.xpose.msra.mxu0 0
    %4388 = vmatprep.subr.bf16.mxu0 0
    %4389 = vmatpush1.bf16.xpose.msra.mxu0 0
    %4390 = vmatprep.subr.bf16.mxu0 0
    %4391 = vmatpush1.bf16.xpose.msra.mxu0 %v4374
    %4392 = vmatprep.subr.bf16.mxu0 0
    %4393 = vmatpush2.bf16.xpose.msra.mxu0 0
    %4394 = vmatprep.subr.bf16.mxu0 0
    %4395 = vmatpush2.bf16.xpose.msra.mxu0 0
    %4396 = vmatprep.subr.bf16.mxu0 0
    %4397 = vmatpush2.bf16.xpose.msra.mxu0 0
    %4398 = vmatprep.subr.bf16.mxu0 0
    %4399 = vmatpush2.bf16.xpose.msra.mxu0 0
    %4400 = vmatprep.subr.bf16.mxu0 0
    %4401 = vmatpush2.bf16.xpose.msra.mxu0 0
    %4402 = vmatprep.subr.bf16.mxu0 0
    %4403 = vmatpush2.bf16.xpose.msra.mxu0 0
    %4404 = vmatprep.subr.bf16.mxu0 0
    %4405 = vmatpush2.bf16.xpose.msra.mxu0 0
    %4406 = vmatprep.subr.bf16.mxu0 0
    %4407 = vmatpush2.bf16.xpose.msra.mxu0 0
    %4408 = vmatprep.mubr.bf16.mxu0 0
    %4409 = vmatmul.mubr.bf16.gmra.mxu0 %v4371
    %v4410 = vpop.f32.mrf.mxu0
    %v4411 = vadd.f32 0.0, %v4410
    %v4412 = vpop.f32.mrf.mxu0
    %v4413 = vpop.f32.mrf.mxu0
    %v4414 = vadd.f32 0.0, %v4413
    %v4415 = vpop.f32.mrf.mxu0
    %4416 = vdwg.mxu0
    %v4417 = vmul.f32 %v4411, 0.125
    %v4418 = vmul.f32 %v4414, 0.125
    %v4419 = vsel %vm1262, %v4417, -inf
    %4420 = vmax.xlane.f32.xlu0 %v4419
    %v4421 = vpop.xlane.xlu0 %4420
    %v4422 = vsel %vm1262, %v4418, -inf
    %4423 = vmax.xlane.f32.xlu0 %v4422
    %v4424 = vpop.xlane.xlu0 %4423
    %v4425 = vsub.f32 %v4417, %v4421
    %v4426 = vsub.f32 %v4418, %v4424
    %v4427 = vmul.f32 %v4425, 1.442695
    %v4428 = vpow.pop %v4427
    %v4429 = vmul.f32 %v4426, 1.442695
    %v4430 = vpow.pop %v4429
    %v4431 = vsel %vm1262, %v4428, 0.0
    %4432 = vadd.xlane.f32.xlu0 %v4431
    %v4433 = vpop.xlane.xlu0 %4432
    %v4434 = vsel %vm1262, %v4430, 0.0
    %4435 = vadd.xlane.f32.xlu0 %v4434
    %v4436 = vpop.xlane.xlu0 %4435
    %v4437 = vrcp.pop %v4433
    %v4438 = vrcp.pop %v4436
    %v4439 = vmul.f32 %v4428, %v4437
    %v4440 = vmul.f32 %v4430, %v4438
    %v4441 = vpack.c.bf16 %v4440, %v4439
    %4443 = vrot.lane.b32.xlu0 %v4196, 64
    %v4444 = vpop.permute.xlu0 %4443
    %v4447 = vsel %vm1262, %v4441, 0
    %4449 = vmatprep.subr.bf16.mxu0 0
    %4450 = vmatpush1.bf16.msra.mxu0 0
    %4451 = vmatprep.subr.bf16.mxu0 0
    %4452 = vmatpush1.bf16.msra.mxu0 0
    %4453 = vmatprep.subr.bf16.mxu0 0
    %4454 = vmatpush1.bf16.msra.mxu0 0
    %4455 = vmatprep.subr.bf16.mxu0 0
    %4456 = vmatpush1.bf16.msra.mxu0 0
    %4457 = vmatprep.subr.bf16.mxu0 0
    %4458 = vmatpush1.bf16.msra.mxu0 0
    %4459 = vmatprep.subr.bf16.mxu0 0
    %4460 = vmatpush1.bf16.msra.mxu0 0
    %4461 = vmatprep.subr.bf16.mxu0 0
    %4462 = vmatpush1.bf16.msra.mxu0 0
    %4463 = vmatprep.subr.bf16.mxu0 0
    %4464 = vmatpush1.bf16.msra.mxu0 %v4444
    %4465 = vmatprep.subr.bf16.mxu0 0
    %4466 = vmatpush2.bf16.msra.mxu0 0
    %4467 = vmatprep.subr.bf16.mxu0 0
    %4468 = vmatpush2.bf16.msra.mxu0 0
    %4469 = vmatprep.subr.bf16.mxu0 0
    %4470 = vmatpush2.bf16.msra.mxu0 0
    %4471 = vmatprep.subr.bf16.mxu0 0
    %4472 = vmatpush2.bf16.msra.mxu0 0
    %4473 = vmatprep.subr.bf16.mxu0 0
    %4474 = vmatpush2.bf16.msra.mxu0 0
    %4475 = vmatprep.subr.bf16.mxu0 0
    %4476 = vmatpush2.bf16.msra.mxu0 0
    %4477 = vmatprep.subr.bf16.mxu0 0
    %4478 = vmatpush2.bf16.msra.mxu0 0
    %4479 = vmatprep.subr.bf16.mxu0 0
    %4480 = vmatpush2.bf16.msra.mxu0 0
    %4481 = vmatprep.mubr.bf16.mxu0 0
    %4482 = vmatmul.mubr.bf16.gmra.mxu0 %v4447
    %v4483 = vpop.f32.mrf.mxu0
    %v4484 = vadd.f32 0.0, %v4483
    %v4485 = vpop.f32.mrf.mxu0
    %v4486 = vpop.f32.mrf.mxu0
    %v4487 = vadd.f32 0.0, %v4486
    %v4488 = vpop.f32.mrf.mxu0
    %4489 = vdwg.mxu0
    %4492 = vrot.lane.b32.xlu0 %v4484, 64
    %v4493 = vpop.permute.xlu0 %4492
    %4494 = vrot.lane.b32.xlu0 %v4487, 64
    %v4495 = vpop.permute.xlu0 %4494
    %v4498 = vsel %vm1137, %v4236, %v4493
    %v4499 = vsel %vm1137, %v4239, %v4495
    %v4500 = vsel %vm1137, %v3844, 0.0
    %4501 = vadd.xlane.f32.xlu0 %v4500
    %v4502 = vpop.xlane.xlu0 %4501
    %v4503 = vsel %vm1137, %v3848, 0.0
    %4504 = vadd.xlane.f32.xlu0 %v4503
    %v4505 = vpop.xlane.xlu0 %4504
    %v4506 = vmul.f32 %v4502, %v1144
    %v4507 = vmul.f32 %v4505, %v1144
    %v4508 = vsub.f32 %v3844, %v4506
    %v4509 = vsub.f32 %v3848, %v4507
    %v4510 = vmul.f32 %v4508, %v4508
    %v4511 = vmul.f32 %v4509, %v4509
    %v4512 = vsel %vm1137, %v4510, 0.0
    %4513 = vadd.xlane.f32.xlu0 %v4512
    %v4514 = vpop.xlane.xlu0 %4513
    %v4515 = vsel %vm1137, %v4511, 0.0
    %4516 = vadd.xlane.f32.xlu0 %v4515
    %v4517 = vpop.xlane.xlu0 %4516
    %v4518 = vmul.f32 %v4514, %v1144
    %v4519 = vmul.f32 %v4517, %v1144
    %v4520 = vadd.f32 %v4518, 1e-06
    %v4521 = vadd.f32 %v4519, 1e-06
    %v4522 = vrsqrt.pop %v4520
    %v4523 = vrsqrt.pop %v4521
    %v4524 = vmul.f32 %v3844, %v169
    %v4525 = vmul.f32 %v3848, %v170
    %v4526 = vmul.f32 %v4043, %v172
    %v4527 = vmul.f32 %v4047, %v173
    %v4528 = vadd.f32 %v4524, %v4526
    %v4529 = vadd.f32 %v4525, %v4527
    %v4530 = vmul.f32 %v4506, %v175
    %v4531 = vmul.f32 %v4507, %v176
    %v4532 = vsub.f32 %v4528, %v4530
    %v4533 = vsub.f32 %v4529, %v4531
    %v4534 = vmul.f32 %v4522, %v4532
    %v4535 = vmul.f32 %v4523, %v4533
    %v4536 = vsel %vm1137, %v3846, 0.0
    %4537 = vadd.xlane.f32.xlu0 %v4536
    %v4538 = vpop.xlane.xlu0 %4537
    %v4539 = vsel %vm1137, %v3850, 0.0
    %4540 = vadd.xlane.f32.xlu0 %v4539
    %v4541 = vpop.xlane.xlu0 %4540
    %v4542 = vmul.f32 %v4538, %v1144
    %v4543 = vmul.f32 %v4541, %v1144
    %v4544 = vsub.f32 %v3846, %v4542
    %v4545 = vsub.f32 %v3850, %v4543
    %v4546 = vmul.f32 %v4544, %v4544
    %v4547 = vmul.f32 %v4545, %v4545
    %v4548 = vsel %vm1137, %v4546, 0.0
    %4549 = vadd.xlane.f32.xlu0 %v4548
    %v4550 = vpop.xlane.xlu0 %4549
    %v4551 = vsel %vm1137, %v4547, 0.0
    %4552 = vadd.xlane.f32.xlu0 %v4551
    %v4553 = vpop.xlane.xlu0 %4552
    %v4554 = vmul.f32 %v4550, %v1144
    %v4555 = vmul.f32 %v4553, %v1144
    %v4556 = vadd.f32 %v4554, 1e-06
    %v4557 = vadd.f32 %v4555, 1e-06
    %v4558 = vrsqrt.pop %v4556
    %v4559 = vrsqrt.pop %v4557
    %v4560 = vmul.f32 %v3846, %v169
    %v4561 = vmul.f32 %v3850, %v170
    %v4562 = vmul.f32 %v4045, %v172
    %v4563 = vmul.f32 %v4049, %v173
    %v4564 = vadd.f32 %v4560, %v4562
    %v4565 = vadd.f32 %v4561, %v4563
    %v4566 = vmul.f32 %v4542, %v175
    %v4567 = vmul.f32 %v4543, %v176
    %v4568 = vsub.f32 %v4564, %v4566
    %v4569 = vsub.f32 %v4565, %v4567
    %v4570 = vmul.f32 %v4558, %v4568
    %v4571 = vmul.f32 %v4559, %v4569
    %v4572 = vpack.c.bf16 %v4535, %v4534
    %v4573 = vpack.c.bf16 %v4571, %v4570
    %v4575 = vsel %vm1137, %v4572, 0
    %v4578 = vsel %vm1137, %v4573, 0
    %4580 = vmatprep.subr.bf16.mxu0 0
    %4581 = vmatpush1.bf16.xpose.msra.mxu0 0
    %4582 = vmatprep.subr.bf16.mxu0 0
    %4583 = vmatpush1.bf16.xpose.msra.mxu0 0
    %4584 = vmatprep.subr.bf16.mxu0 0
    %4585 = vmatpush1.bf16.xpose.msra.mxu0 0
    %4586 = vmatprep.subr.bf16.mxu0 0
    %4587 = vmatpush1.bf16.xpose.msra.mxu0 0
    %4588 = vmatprep.subr.bf16.mxu0 0
    %4589 = vmatpush1.bf16.xpose.msra.mxu0 0
    %4590 = vmatprep.subr.bf16.mxu0 0
    %4591 = vmatpush1.bf16.xpose.msra.mxu0 0
    %4592 = vmatprep.subr.bf16.mxu0 0
    %4593 = vmatpush1.bf16.xpose.msra.mxu0 0
    %4594 = vmatprep.subr.bf16.mxu0 0
    %4595 = vmatpush1.bf16.xpose.msra.mxu0 %v4578
    %4596 = vmatprep.subr.bf16.mxu0 0
    %4597 = vmatpush2.bf16.xpose.msra.mxu0 0
    %4598 = vmatprep.subr.bf16.mxu0 0
    %4599 = vmatpush2.bf16.xpose.msra.mxu0 0
    %4600 = vmatprep.subr.bf16.mxu0 0
    %4601 = vmatpush2.bf16.xpose.msra.mxu0 0
    %4602 = vmatprep.subr.bf16.mxu0 0
    %4603 = vmatpush2.bf16.xpose.msra.mxu0 0
    %4604 = vmatprep.subr.bf16.mxu0 0
    %4605 = vmatpush2.bf16.xpose.msra.mxu0 0
    %4606 = vmatprep.subr.bf16.mxu0 0
    %4607 = vmatpush2.bf16.xpose.msra.mxu0 0
    %4608 = vmatprep.subr.bf16.mxu0 0
    %4609 = vmatpush2.bf16.xpose.msra.mxu0 0
    %4610 = vmatprep.subr.bf16.mxu0 0
    %4611 = vmatpush2.bf16.xpose.msra.mxu0 0
    %4612 = vmatprep.mubr.bf16.mxu0 0
    %4613 = vmatmul.mubr.bf16.gmra.mxu0 %v4575
    %v4614 = vpop.f32.mrf.mxu0
    %v4615 = vadd.f32 0.0, %v4614
    %v4616 = vpop.f32.mrf.mxu0
    %v4617 = vpop.f32.mrf.mxu0
    %v4618 = vadd.f32 0.0, %v4617
    %v4619 = vpop.f32.mrf.mxu0
    %4620 = vdwg.mxu0
    %v4621 = vmul.f32 %v4615, 0.125
    %v4622 = vmul.f32 %v4618, 0.125
    %v4623 = vsel %vm1262, %v4621, -inf
    %4624 = vmax.xlane.f32.xlu0 %v4623
    %v4625 = vpop.xlane.xlu0 %4624
    %v4626 = vsel %vm1262, %v4622, -inf
    %4627 = vmax.xlane.f32.xlu0 %v4626
    %v4628 = vpop.xlane.xlu0 %4627
    %v4629 = vsub.f32 %v4621, %v4625
    %v4630 = vsub.f32 %v4622, %v4628
    %v4631 = vmul.f32 %v4629, 1.442695
    %v4632 = vpow.pop %v4631
    %v4633 = vmul.f32 %v4630, 1.442695
    %v4634 = vpow.pop %v4633
    %v4635 = vsel %vm1262, %v4632, 0.0
    %4636 = vadd.xlane.f32.xlu0 %v4635
    %v4637 = vpop.xlane.xlu0 %4636
    %v4638 = vsel %vm1262, %v4634, 0.0
    %4639 = vadd.xlane.f32.xlu0 %v4638
    %v4640 = vpop.xlane.xlu0 %4639
    %v4641 = vrcp.pop %v4637
    %v4642 = vrcp.pop %v4640
    %v4643 = vmul.f32 %v4632, %v4641
    %v4644 = vmul.f32 %v4634, %v4642
    %v4645 = vpack.c.bf16 %v3898, %v3895
    %v4646 = vpack.c.bf16 %v4644, %v4643
    %v4648 = vsel %vm1262, %v4646, 0
    %4650 = vmatprep.subr.bf16.mxu0 0
    %4651 = vmatpush1.bf16.msra.mxu0 0
    %4652 = vmatprep.subr.bf16.mxu0 0
    %4653 = vmatpush1.bf16.msra.mxu0 0
    %4654 = vmatprep.subr.bf16.mxu0 0
    %4655 = vmatpush1.bf16.msra.mxu0 0
    %4656 = vmatprep.subr.bf16.mxu0 0
    %4657 = vmatpush1.bf16.msra.mxu0 0
    %4658 = vmatprep.subr.bf16.mxu0 0
    %4659 = vmatpush1.bf16.msra.mxu0 0
    %4660 = vmatprep.subr.bf16.mxu0 0
    %4661 = vmatpush1.bf16.msra.mxu0 0
    %4662 = vmatprep.subr.bf16.mxu0 0
    %4663 = vmatpush1.bf16.msra.mxu0 0
    %4664 = vmatprep.subr.bf16.mxu0 0
    %4665 = vmatpush1.bf16.msra.mxu0 %v4645
    %4666 = vmatprep.subr.bf16.mxu0 0
    %4667 = vmatpush2.bf16.msra.mxu0 0
    %4668 = vmatprep.subr.bf16.mxu0 0
    %4669 = vmatpush2.bf16.msra.mxu0 0
    %4670 = vmatprep.subr.bf16.mxu0 0
    %4671 = vmatpush2.bf16.msra.mxu0 0
    %4672 = vmatprep.subr.bf16.mxu0 0
    %4673 = vmatpush2.bf16.msra.mxu0 0
    %4674 = vmatprep.subr.bf16.mxu0 0
    %4675 = vmatpush2.bf16.msra.mxu0 0
    %4676 = vmatprep.subr.bf16.mxu0 0
    %4677 = vmatpush2.bf16.msra.mxu0 0
    %4678 = vmatprep.subr.bf16.mxu0 0
    %4679 = vmatpush2.bf16.msra.mxu0 0
    %4680 = vmatprep.subr.bf16.mxu0 0
    %4681 = vmatpush2.bf16.msra.mxu0 0
    %4682 = vmatprep.mubr.bf16.mxu0 0
    %4683 = vmatmul.mubr.bf16.gmra.mxu0 %v4648
    %v4684 = vpop.f32.mrf.mxu0
    %v4685 = vadd.f32 0.0, %v4684
    %v4686 = vpop.f32.mrf.mxu0
    %v4687 = vpop.f32.mrf.mxu0
    %v4688 = vadd.f32 0.0, %v4687
    %v4689 = vpop.f32.mrf.mxu0
    %4690 = vdwg.mxu0
    %4693 = vrot.lane.b32.xlu0 %v3844, 64
    %v4694 = vpop.permute.xlu0 %4693
    %4695 = vrot.lane.b32.xlu0 %v3848, 64
    %v4696 = vpop.permute.xlu0 %4695
    %v4699 = vsel %vm1137, %v4694, 0.0
    %4700 = vadd.xlane.f32.xlu0 %v4699
    %v4701 = vpop.xlane.xlu0 %4700
    %v4702 = vsel %vm1137, %v4696, 0.0
    %4703 = vadd.xlane.f32.xlu0 %v4702
    %v4704 = vpop.xlane.xlu0 %4703
    %v4705 = vmul.f32 %v4701, %v1144
    %v4706 = vmul.f32 %v4704, %v1144
    %v4707 = vsub.f32 %v3844, %v4705
    %v4708 = vsub.f32 %v3848, %v4706
    %v4709 = vmul.f32 %v4707, %v4707
    %v4710 = vmul.f32 %v4708, %v4708
    %4713 = vrot.lane.b32.xlu0 %v4709, 64
    %v4714 = vpop.permute.xlu0 %4713
    %4715 = vrot.lane.b32.xlu0 %v4710, 64
    %v4716 = vpop.permute.xlu0 %4715
    %v4719 = vsel %vm1137, %v4714, 0.0
    %4720 = vadd.xlane.f32.xlu0 %v4719
    %v4721 = vpop.xlane.xlu0 %4720
    %v4722 = vsel %vm1137, %v4716, 0.0
    %4723 = vadd.xlane.f32.xlu0 %v4722
    %v4724 = vpop.xlane.xlu0 %4723
    %v4725 = vmul.f32 %v4721, %v1144
    %v4726 = vmul.f32 %v4724, %v1144
    %v4727 = vadd.f32 %v4725, 1e-06
    %v4728 = vadd.f32 %v4726, 1e-06
    %v4729 = vrsqrt.pop %v4727
    %v4730 = vrsqrt.pop %v4728
    %v4731 = vmul.f32 %v3844, %v1374
    %v4732 = vmul.f32 %v3848, %v1376
    %v4733 = vmul.f32 %v4043, %v1384
    %v4734 = vmul.f32 %v4047, %v1386
    %v4735 = vadd.f32 %v4731, %v4733
    %v4736 = vadd.f32 %v4732, %v4734
    %v4737 = vmul.f32 %v4705, %v175
    %v4738 = vmul.f32 %v4706, %v176
    %4741 = vrot.lane.b32.xlu0 %v4737, 64
    %v4742 = vpop.permute.xlu0 %4741
    %4743 = vrot.lane.b32.xlu0 %v4738, 64
    %v4744 = vpop.permute.xlu0 %4743
    %v4747 = vsub.f32 %v4735, %v4742
    %v4748 = vsub.f32 %v4736, %v4744
    %v4749 = vmul.f32 %v4729, %v4747
    %v4750 = vmul.f32 %v4730, %v4748
    %4753 = vrot.lane.b32.xlu0 %v3846, 64
    %v4754 = vpop.permute.xlu0 %4753
    %4755 = vrot.lane.b32.xlu0 %v3850, 64
    %v4756 = vpop.permute.xlu0 %4755
    %v4759 = vsel %vm1137, %v4754, 0.0
    %4760 = vadd.xlane.f32.xlu0 %v4759
    %v4761 = vpop.xlane.xlu0 %4760
    %v4762 = vsel %vm1137, %v4756, 0.0
    %4763 = vadd.xlane.f32.xlu0 %v4762
    %v4764 = vpop.xlane.xlu0 %4763
    %v4765 = vmul.f32 %v4761, %v1144
    %v4766 = vmul.f32 %v4764, %v1144
    %v4767 = vsub.f32 %v3846, %v4765
    %v4768 = vsub.f32 %v3850, %v4766
    %v4769 = vmul.f32 %v4767, %v4767
    %v4770 = vmul.f32 %v4768, %v4768
    %4773 = vrot.lane.b32.xlu0 %v4769, 64
    %v4774 = vpop.permute.xlu0 %4773
    %4775 = vrot.lane.b32.xlu0 %v4770, 64
    %v4776 = vpop.permute.xlu0 %4775
    %v4779 = vsel %vm1137, %v4774, 0.0
    %4780 = vadd.xlane.f32.xlu0 %v4779
    %v4781 = vpop.xlane.xlu0 %4780
    %v4782 = vsel %vm1137, %v4776, 0.0
    %4783 = vadd.xlane.f32.xlu0 %v4782
    %v4784 = vpop.xlane.xlu0 %4783
    %v4785 = vmul.f32 %v4781, %v1144
    %v4786 = vmul.f32 %v4784, %v1144
    %v4787 = vadd.f32 %v4785, 1e-06
    %v4788 = vadd.f32 %v4786, 1e-06
    %v4789 = vrsqrt.pop %v4787
    %v4790 = vrsqrt.pop %v4788
    %v4791 = vmul.f32 %v3846, %v1374
    %v4792 = vmul.f32 %v3850, %v1376
    %v4793 = vmul.f32 %v4045, %v1384
    %v4794 = vmul.f32 %v4049, %v1386
    %v4795 = vadd.f32 %v4791, %v4793
    %v4796 = vadd.f32 %v4792, %v4794
    %v4797 = vmul.f32 %v4765, %v175
    %v4798 = vmul.f32 %v4766, %v176
    %4801 = vrot.lane.b32.xlu0 %v4797, 64
    %v4802 = vpop.permute.xlu0 %4801
    %4803 = vrot.lane.b32.xlu0 %v4798, 64
    %v4804 = vpop.permute.xlu0 %4803
    %v4807 = vsub.f32 %v4795, %v4802
    %v4808 = vsub.f32 %v4796, %v4804
    %v4809 = vmul.f32 %v4789, %v4807
    %v4810 = vmul.f32 %v4790, %v4808
    %v4811 = vpack.c.bf16 %v4750, %v4749
    %v4812 = vpack.c.bf16 %v4810, %v4809
    %4814 = vrot.lane.b32.xlu0 %v4811, 64
    %v4815 = vpop.permute.xlu0 %4814
    %4817 = vrot.lane.b32.xlu0 %v4812, 64
    %v4818 = vpop.permute.xlu0 %4817
    %v4820 = vsel %vm1137, %v4815, 0
    %v4823 = vsel %vm1137, %v4818, 0
    %4825 = vmatprep.subr.bf16.mxu0 0
    %4826 = vmatpush1.bf16.xpose.msra.mxu0 0
    %4827 = vmatprep.subr.bf16.mxu0 0
    %4828 = vmatpush1.bf16.xpose.msra.mxu0 0
    %4829 = vmatprep.subr.bf16.mxu0 0
    %4830 = vmatpush1.bf16.xpose.msra.mxu0 0
    %4831 = vmatprep.subr.bf16.mxu0 0
    %4832 = vmatpush1.bf16.xpose.msra.mxu0 0
    %4833 = vmatprep.subr.bf16.mxu0 0
    %4834 = vmatpush1.bf16.xpose.msra.mxu0 0
    %4835 = vmatprep.subr.bf16.mxu0 0
    %4836 = vmatpush1.bf16.xpose.msra.mxu0 0
    %4837 = vmatprep.subr.bf16.mxu0 0
    %4838 = vmatpush1.bf16.xpose.msra.mxu0 0
    %4839 = vmatprep.subr.bf16.mxu0 0
    %4840 = vmatpush1.bf16.xpose.msra.mxu0 %v4823
    %4841 = vmatprep.subr.bf16.mxu0 0
    %4842 = vmatpush2.bf16.xpose.msra.mxu0 0
    %4843 = vmatprep.subr.bf16.mxu0 0
    %4844 = vmatpush2.bf16.xpose.msra.mxu0 0
    %4845 = vmatprep.subr.bf16.mxu0 0
    %4846 = vmatpush2.bf16.xpose.msra.mxu0 0
    %4847 = vmatprep.subr.bf16.mxu0 0
    %4848 = vmatpush2.bf16.xpose.msra.mxu0 0
    %4849 = vmatprep.subr.bf16.mxu0 0
    %4850 = vmatpush2.bf16.xpose.msra.mxu0 0
    %4851 = vmatprep.subr.bf16.mxu0 0
    %4852 = vmatpush2.bf16.xpose.msra.mxu0 0
    %4853 = vmatprep.subr.bf16.mxu0 0
    %4854 = vmatpush2.bf16.xpose.msra.mxu0 0
    %4855 = vmatprep.subr.bf16.mxu0 0
    %4856 = vmatpush2.bf16.xpose.msra.mxu0 0
    %4857 = vmatprep.mubr.bf16.mxu0 0
    %4858 = vmatmul.mubr.bf16.gmra.mxu0 %v4820
    %v4859 = vpop.f32.mrf.mxu0
    %v4860 = vadd.f32 0.0, %v4859
    %v4861 = vpop.f32.mrf.mxu0
    %v4862 = vpop.f32.mrf.mxu0
    %v4863 = vadd.f32 0.0, %v4862
    %v4864 = vpop.f32.mrf.mxu0
    %4865 = vdwg.mxu0
    %v4866 = vmul.f32 %v4860, 0.125
    %v4867 = vmul.f32 %v4863, 0.125
    %v4868 = vsel %vm1262, %v4866, -inf
    %4869 = vmax.xlane.f32.xlu0 %v4868
    %v4870 = vpop.xlane.xlu0 %4869
    %v4871 = vsel %vm1262, %v4867, -inf
    %4872 = vmax.xlane.f32.xlu0 %v4871
    %v4873 = vpop.xlane.xlu0 %4872
    %v4874 = vsub.f32 %v4866, %v4870
    %v4875 = vsub.f32 %v4867, %v4873
    %v4876 = vmul.f32 %v4874, 1.442695
    %v4877 = vpow.pop %v4876
    %v4878 = vmul.f32 %v4875, 1.442695
    %v4879 = vpow.pop %v4878
    %v4880 = vsel %vm1262, %v4877, 0.0
    %4881 = vadd.xlane.f32.xlu0 %v4880
    %v4882 = vpop.xlane.xlu0 %4881
    %v4883 = vsel %vm1262, %v4879, 0.0
    %4884 = vadd.xlane.f32.xlu0 %v4883
    %v4885 = vpop.xlane.xlu0 %4884
    %v4886 = vrcp.pop %v4882
    %v4887 = vrcp.pop %v4885
    %v4888 = vmul.f32 %v4877, %v4886
    %v4889 = vmul.f32 %v4879, %v4887
    %v4890 = vpack.c.bf16 %v4889, %v4888
    %4892 = vrot.lane.b32.xlu0 %v4645, 64
    %v4893 = vpop.permute.xlu0 %4892
    %v4896 = vsel %vm1262, %v4890, 0
    %4898 = vmatprep.subr.bf16.mxu0 0
    %4899 = vmatpush1.bf16.msra.mxu0 0
    %4900 = vmatprep.subr.bf16.mxu0 0
    %4901 = vmatpush1.bf16.msra.mxu0 0
    %4902 = vmatprep.subr.bf16.mxu0 0
    %4903 = vmatpush1.bf16.msra.mxu0 0
    %4904 = vmatprep.subr.bf16.mxu0 0
    %4905 = vmatpush1.bf16.msra.mxu0 0
    %4906 = vmatprep.subr.bf16.mxu0 0
    %4907 = vmatpush1.bf16.msra.mxu0 0
    %4908 = vmatprep.subr.bf16.mxu0 0
    %4909 = vmatpush1.bf16.msra.mxu0 0
    %4910 = vmatprep.subr.bf16.mxu0 0
    %4911 = vmatpush1.bf16.msra.mxu0 0
    %4912 = vmatprep.subr.bf16.mxu0 0
    %4913 = vmatpush1.bf16.msra.mxu0 %v4893
    %4914 = vmatprep.subr.bf16.mxu0 0
    %4915 = vmatpush2.bf16.msra.mxu0 0
    %4916 = vmatprep.subr.bf16.mxu0 0
    %4917 = vmatpush2.bf16.msra.mxu0 0
    %4918 = vmatprep.subr.bf16.mxu0 0
    %4919 = vmatpush2.bf16.msra.mxu0 0
    %4920 = vmatprep.subr.bf16.mxu0 0
    %4921 = vmatpush2.bf16.msra.mxu0 0
    %4922 = vmatprep.subr.bf16.mxu0 0
    %4923 = vmatpush2.bf16.msra.mxu0 0
    %4924 = vmatprep.subr.bf16.mxu0 0
    %4925 = vmatpush2.bf16.msra.mxu0 0
    %4926 = vmatprep.subr.bf16.mxu0 0
    %4927 = vmatpush2.bf16.msra.mxu0 0
    %4928 = vmatprep.subr.bf16.mxu0 0
    %4929 = vmatpush2.bf16.msra.mxu0 0
    %4930 = vmatprep.mubr.bf16.mxu0 0
    %4931 = vmatmul.mubr.bf16.gmra.mxu0 %v4896
    %v4932 = vpop.f32.mrf.mxu0
    %v4933 = vadd.f32 0.0, %v4932
    %v4934 = vpop.f32.mrf.mxu0
    %v4935 = vpop.f32.mrf.mxu0
    %v4936 = vadd.f32 0.0, %v4935
    %v4937 = vpop.f32.mrf.mxu0
    %4938 = vdwg.mxu0
    %4941 = vrot.lane.b32.xlu0 %v4933, 64
    %v4942 = vpop.permute.xlu0 %4941
    %4943 = vrot.lane.b32.xlu0 %v4936, 64
    %v4944 = vpop.permute.xlu0 %4943
    %v4947 = vsel %vm1137, %v4685, %v4942
    %v4948 = vsel %vm1137, %v4688, %v4944
    %s4949 = scalar_lea.vmem [#allocation7], 64
    %v4950 = vld [vmem:[%s4949] sm:$0xf]
    %v4951 = vld [vmem:[%s4949 + $0x4] sm:$0xf]
    %v4952 = vld [vmem:[%s4949 + $0x8] sm:$0xf]
    %v4953 = vld [vmem:[%s4949 + $0xc] sm:$0xf]
    %v4954 = vld [vmem:[%s4949 + $0x10] sm:$0xf]
    %v4955 = vld [vmem:[%s4949 + $0x14] sm:$0xf]
    %v4956 = vld [vmem:[%s4949 + $0x18] sm:$0xf]
    %v4957 = vld [vmem:[%s4949 + $0x1c] sm:$0xf]
    %v4958 = vld [vmem:[%s4949 + $0x20] sm:$0xf]
    %v4959 = vld [vmem:[%s4949 + $0x24] sm:$0xf]
    %v4960 = vld [vmem:[%s4949 + $0x28] sm:$0xf]
    %v4961 = vld [vmem:[%s4949 + $0x2c] sm:$0xf]
    %v4962 = vld [vmem:[%s4949 + $0x30] sm:$0xf]
    %v4963 = vld [vmem:[%s4949 + $0x34] sm:$0xf]
    %v4964 = vld [vmem:[%s4949 + $0x38] sm:$0xf]
    %v4965 = vld [vmem:[%s4949 + $0x3c] sm:$0xf]
    %v4966 = vpack.c.bf16 %v4499, %v4498
    %v4967 = vpack.c.bf16 %v4948, %v4947
    %v4984 = vunpack.c.l.b16 %v4950
    %v4985 = vunpack.c.l.b16 %v4951
    %v4986 = vunpack.c.l.b16 %v4952
    %v4987 = vunpack.c.l.b16 %v4953
    %v4988 = vunpack.c.l.b16 %v4954
    %v4989 = vunpack.c.l.b16 %v4955
    %v4990 = vunpack.c.l.b16 %v4956
    %v4991 = vunpack.c.l.b16 %v4957
    %v4992 = vunpack.c.l.b16 %v4958
    %v4993 = vunpack.c.l.b16 %v4959
    %v4994 = vunpack.c.l.b16 %v4960
    %v4995 = vunpack.c.l.b16 %v4961
    %v4996 = vunpack.c.l.b16 %v4962
    %v4997 = vunpack.c.l.b16 %v4963
    %v4998 = vunpack.c.l.b16 %v4964
    %v4999 = vunpack.c.l.b16 %v4965
    %v5000 = vpack.c.b16 %v4985, %v4984
    %v5001 = vpack.c.b16 %v4987, %v4986
    %v5002 = vpack.c.b16 %v4989, %v4988
    %v5003 = vpack.c.b16 %v4991, %v4990
    %v5004 = vpack.c.b16 %v4993, %v4992
    %v5005 = vpack.c.b16 %v4995, %v4994
    %v5006 = vpack.c.b16 %v4997, %v4996
    %v5007 = vpack.c.b16 %v4999, %v4998
    %5016 = vmatprep.subr.bf16.mxu0 0
    %5017 = vmatpush1.bf16.msra.mxu0 %v5007
    %5018 = vmatprep.subr.bf16.mxu0 0
    %5019 = vmatpush1.bf16.msra.mxu0 %v5006
    %5020 = vmatprep.subr.bf16.mxu0 0
    %5021 = vmatpush1.bf16.msra.mxu0 %v5005
    %5022 = vmatprep.subr.bf16.mxu0 0
    %5023 = vmatpush1.bf16.msra.mxu0 %v5004
    %5024 = vmatprep.subr.bf16.mxu0 0
    %5025 = vmatpush1.bf16.msra.mxu0 %v5003
    %5026 = vmatprep.subr.bf16.mxu0 0
    %5027 = vmatpush1.bf16.msra.mxu0 %v5002
    %5028 = vmatprep.subr.bf16.mxu0 0
    %5029 = vmatpush1.bf16.msra.mxu0 %v5001
    %5030 = vmatprep.subr.bf16.mxu0 0
    %5031 = vmatpush1.bf16.msra.mxu0 %v5000
    %5032 = vmatprep.subr.bf16.mxu0 0
    %5033 = vmatpush2.bf16.msra.mxu0 0
    %5034 = vmatprep.subr.bf16.mxu0 0
    %5035 = vmatpush2.bf16.msra.mxu0 0
    %5036 = vmatprep.subr.bf16.mxu0 0
    %5037 = vmatpush2.bf16.msra.mxu0 0
    %5038 = vmatprep.subr.bf16.mxu0 0
    %5039 = vmatpush2.bf16.msra.mxu0 0
    %5040 = vmatprep.subr.bf16.mxu0 0
    %5041 = vmatpush2.bf16.msra.mxu0 0
    %5042 = vmatprep.subr.bf16.mxu0 0
    %5043 = vmatpush2.bf16.msra.mxu0 0
    %5044 = vmatprep.subr.bf16.mxu0 0
    %5045 = vmatpush2.bf16.msra.mxu0 0
    %5046 = vmatprep.subr.bf16.mxu0 0
    %5047 = vmatpush2.bf16.msra.mxu0 0
    %5048 = vmatprep.mubr.bf16.mxu0 0
    %5049 = vmatmul.mubr.bf16.gmra.mxu0 %v4966
    %v5050 = vpop.f32.mrf.mxu0
    %v5051 = vadd.f32 0.0, %v5050
    %v5052 = vpop.f32.mrf.mxu0
    %v5053 = vpop.f32.mrf.mxu0
    %v5054 = vadd.f32 0.0, %v5053
    %v5055 = vpop.f32.mrf.mxu0
    %5056 = vmatprep.mubr.bf16.mxu0 0
    %5057 = vmatmul.mubr.bf16.gmra.mxu0 %v4967
    %v5058 = vpop.f32.mrf.mxu0
    %v5059 = vadd.f32 0.0, %v5058
    %v5060 = vpop.f32.mrf.mxu0
    %v5061 = vpop.f32.mrf.mxu0
    %v5062 = vadd.f32 0.0, %v5061
    %v5063 = vpop.f32.mrf.mxu0
    %5064 = vdwg.mxu0
    %v5065 = vmul.f32 %v3497, %v5051
    %v5066 = vmul.f32 %v3501, %v5054
    %v5067 = vmul.f32 %v3507, %v5059
    %v5068 = vmul.f32 %v3511, %v5062
    %v5069 = vadd.f32 %v3083, %v5065
    %v5070 = vadd.f32 %v3084, %v5066
    %v5071 = vadd.f32 %v3085, %v5067
    %v5072 = vadd.f32 %v3086, %v5068
    %5073 = vadd.xlane.f32.xlu0 %v5069
    %v5074 = vpop.xlane.xlu0 %5073
    %5075 = vadd.xlane.f32.xlu0 %v5070
    %v5076 = vpop.xlane.xlu0 %5075
    %5077 = vadd.xlane.f32.xlu0 %v5071
    %v5078 = vpop.xlane.xlu0 %5077
    %5079 = vadd.xlane.f32.xlu0 %v5072
    %v5080 = vpop.xlane.xlu0 %5079
    %v5081 = vmul.f32 %v5074, %v664
    %v5082 = vmul.f32 %v5076, %v664
    %v5083 = vmul.f32 %v5078, %v664
    %v5084 = vmul.f32 %v5080, %v664
    %v5085 = vsub.f32 %v5069, %v5081
    %v5086 = vsub.f32 %v5070, %v5082
    %v5087 = vsub.f32 %v5071, %v5083
    %v5088 = vsub.f32 %v5072, %v5084
    %v5089 = vmul.f32 %v5085, %v5085
    %v5090 = vmul.f32 %v5086, %v5086
    %v5091 = vmul.f32 %v5087, %v5087
    %v5092 = vmul.f32 %v5088, %v5088
    %5093 = vadd.xlane.f32.xlu0 %v5089
    %v5094 = vpop.xlane.xlu0 %5093
    %5095 = vadd.xlane.f32.xlu0 %v5090
    %v5096 = vpop.xlane.xlu0 %5095
    %5097 = vadd.xlane.f32.xlu0 %v5091
    %v5098 = vpop.xlane.xlu0 %5097
    %5099 = vadd.xlane.f32.xlu0 %v5092
    %v5100 = vpop.xlane.xlu0 %5099
    %v5101 = vmul.f32 %v5094, %v664
    %v5102 = vmul.f32 %v5096, %v664
    %v5103 = vmul.f32 %v5098, %v664
    %v5104 = vmul.f32 %v5100, %v664
    %v5105 = vadd.f32 %v5101, 1e-05
    %v5106 = vadd.f32 %v5102, 1e-05
    %v5107 = vadd.f32 %v5103, 1e-05
    %v5108 = vadd.f32 %v5104, 1e-05
    %v5109 = vrsqrt.pop %v5105
    %v5110 = vrsqrt.pop %v5106
    %v5111 = vrsqrt.pop %v5107
    %v5112 = vrsqrt.pop %v5108
    %v5113 = vmul.f32 %v5085, %v5109
    %v5114 = vmul.f32 %v5086, %v5110
    %v5115 = vmul.f32 %v5087, %v5111
    %v5116 = vmul.f32 %v5088, %v5112
    %s5117 = scalar_lea.vmem %s9, 1
    %v5118 = vld [vmem:[%s5117] sm:$0x1]
    %v5120 = vlaneseq
    %v5121 = vshrl.u32 %v5120, 7
    %v5122 = vsub.s32 0, %v5121
    %v5123 = vrot.slane %v5118, %v5122
    %v5125 = vmul.f32 %v5113, %v5123
    %v5126 = vmul.f32 %v5114, %v5123
    %v5127 = vmul.f32 %v5115, %v5123
    %v5128 = vmul.f32 %v5116, %v5123
    %v5129 = vadd.f32 %v3550, 1.0
    %v5130 = vadd.f32 %v3554, 1.0
    %v5131 = vadd.f32 %v3560, 1.0
    %v5132 = vadd.f32 %v3564, 1.0
    %v5133 = vmul.f32 %v5125, %v5129
    %v5134 = vmul.f32 %v5126, %v5130
    %v5135 = vmul.f32 %v5127, %v5131
    %v5136 = vmul.f32 %v5128, %v5132
    %v5137 = vadd.f32 %v5133, %v3499
    %v5138 = vadd.f32 %v5134, %v3503
    %v5139 = vadd.f32 %v5135, %v3509
    %v5140 = vadd.f32 %v5136, %v3513
    %s5141 = scalar_lea.vmem [#allocation8], 256
    %v5142 = vld [vmem:[%s5141] sm:$0xff]
    %v5143 = vld [vmem:[%s5141 + $0x8] sm:$0xff]
    %v5144 = vld [vmem:[%s5141 + $0x10] sm:$0xff]
    %v5145 = vld [vmem:[%s5141 + $0x18] sm:$0xff]
    %v5146 = vld [vmem:[%s5141 + $0x20] sm:$0xff]
    %v5147 = vld [vmem:[%s5141 + $0x28] sm:$0xff]
    %v5148 = vld [vmem:[%s5141 + $0x30] sm:$0xff]
    %v5149 = vld [vmem:[%s5141 + $0x38] sm:$0xff]
    %v5150 = vld [vmem:[%s5141 + $0x40] sm:$0xff]
    %v5151 = vld [vmem:[%s5141 + $0x48] sm:$0xff]
    %v5152 = vld [vmem:[%s5141 + $0x50] sm:$0xff]
    %v5153 = vld [vmem:[%s5141 + $0x58] sm:$0xff]
    %v5154 = vld [vmem:[%s5141 + $0x60] sm:$0xff]
    %v5155 = vld [vmem:[%s5141 + $0x68] sm:$0xff]
    %v5156 = vld [vmem:[%s5141 + $0x70] sm:$0xff]
    %v5157 = vld [vmem:[%s5141 + $0x78] sm:$0xff]
    %v5158 = vld [vmem:[%s5141 + $0x80] sm:$0xff]
    %v5159 = vld [vmem:[%s5141 + $0x88] sm:$0xff]
    %v5160 = vld [vmem:[%s5141 + $0x90] sm:$0xff]
    %v5161 = vld [vmem:[%s5141 + $0x98] sm:$0xff]
    %v5162 = vld [vmem:[%s5141 + $0xa0] sm:$0xff]
    %v5163 = vld [vmem:[%s5141 + $0xa8] sm:$0xff]
    %v5164 = vld [vmem:[%s5141 + $0xb0] sm:$0xff]
    %v5165 = vld [vmem:[%s5141 + $0xb8] sm:$0xff]
    %v5166 = vld [vmem:[%s5141 + $0xc0] sm:$0xff]
    %v5167 = vld [vmem:[%s5141 + $0xc8] sm:$0xff]
    %v5168 = vld [vmem:[%s5141 + $0xd0] sm:$0xff]
    %v5169 = vld [vmem:[%s5141 + $0xd8] sm:$0xff]
    %v5170 = vld [vmem:[%s5141 + $0xe0] sm:$0xff]
    %v5171 = vld [vmem:[%s5141 + $0xe8] sm:$0xff]
    %v5172 = vld [vmem:[%s5141 + $0xf0] sm:$0xff]
    %v5173 = vld [vmem:[%s5141 + $0xf8] sm:$0xff]
    %s5174 = scalar_lea.vmem %s11, 4
    %v5175 = vld [vmem:[%s5174] sm:$0xf]
    %v5176 = vpack.c.bf16 %v5138, %v5137
    %v5177 = vpack.c.bf16 %v5140, %v5139
    %v5179 = vlaneseq
    %v5180 = vshrl.u32 %v5179, 7
    %v5181 = vsub.s32 0, %v5180
    %v5182 = vrot.slane %v5175, %v5181
    %v5183 = vlaneseq
    %v5184 = vshrl.u32 %v5183, 7
    %v5185 = vsub.s32 1, %v5184
    %v5186 = vrot.slane %v5175, %v5185
    %v5187 = vlaneseq
    %v5188 = vshrl.u32 %v5187, 7
    %v5189 = vsub.s32 2, %v5188
    %v5190 = vrot.slane %v5175, %v5189
    %v5191 = vlaneseq
    %v5192 = vshrl.u32 %v5191, 7
    %v5193 = vsub.s32 3, %v5192
    %v5194 = vrot.slane %v5175, %v5193
    %v5231 = vunpack.c.l.b16 %v5142
    %v5232 = vunpack.c.h.b16 %v5142
    %v5233 = vunpack.c.l.b16 %v5143
    %v5234 = vunpack.c.h.b16 %v5143
    %v5235 = vunpack.c.l.b16 %v5144
    %v5236 = vunpack.c.h.b16 %v5144
    %v5237 = vunpack.c.l.b16 %v5145
    %v5238 = vunpack.c.h.b16 %v5145
    %v5239 = vunpack.c.l.b16 %v5146
    %v5240 = vunpack.c.h.b16 %v5146
    %v5241 = vunpack.c.l.b16 %v5147
    %v5242 = vunpack.c.h.b16 %v5147
    %v5243 = vunpack.c.l.b16 %v5148
    %v5244 = vunpack.c.h.b16 %v5148
    %v5245 = vunpack.c.l.b16 %v5149
    %v5246 = vunpack.c.h.b16 %v5149
    %v5247 = vunpack.c.l.b16 %v5150
    %v5248 = vunpack.c.h.b16 %v5150
    %v5249 = vunpack.c.l.b16 %v5151
    %v5250 = vunpack.c.h.b16 %v5151
    %v5251 = vunpack.c.l.b16 %v5152
    %v5252 = vunpack.c.h.b16 %v5152
    %v5253 = vunpack.c.l.b16 %v5153
    %v5254 = vunpack.c.h.b16 %v5153
    %v5255 = vunpack.c.l.b16 %v5154
    %v5256 = vunpack.c.h.b16 %v5154
    %v5257 = vunpack.c.l.b16 %v5155
    %v5258 = vunpack.c.h.b16 %v5155
    %v5259 = vunpack.c.l.b16 %v5156
    %v5260 = vunpack.c.h.b16 %v5156
    %v5261 = vunpack.c.l.b16 %v5157
    %v5262 = vunpack.c.h.b16 %v5157
    %v5263 = vunpack.c.l.b16 %v5158
    %v5264 = vunpack.c.h.b16 %v5158
    %v5265 = vunpack.c.l.b16 %v5159
    %v5266 = vunpack.c.h.b16 %v5159
    %v5267 = vunpack.c.l.b16 %v5160
    %v5268 = vunpack.c.h.b16 %v5160
    %v5269 = vunpack.c.l.b16 %v5161
    %v5270 = vunpack.c.h.b16 %v5161
    %v5271 = vunpack.c.l.b16 %v5162
    %v5272 = vunpack.c.h.b16 %v5162
    %v5273 = vunpack.c.l.b16 %v5163
    %v5274 = vunpack.c.h.b16 %v5163
    %v5275 = vunpack.c.l.b16 %v5164
    %v5276 = vunpack.c.h.b16 %v5164
    %v5277 = vunpack.c.l.b16 %v5165
    %v5278 = vunpack.c.h.b16 %v5165
    %v5279 = vunpack.c.l.b16 %v5166
    %v5280 = vunpack.c.h.b16 %v5166
    %v5281 = vunpack.c.l.b16 %v5167
    %v5282 = vunpack.c.h.b16 %v5167
    %v5283 = vunpack.c.l.b16 %v5168
    %v5284 = vunpack.c.h.b16 %v5168
    %v5285 = vunpack.c.l.b16 %v5169
    %v5286 = vunpack.c.h.b16 %v5169
    %v5287 = vunpack.c.l.b16 %v5170
    %v5288 = vunpack.c.h.b16 %v5170
    %v5289 = vunpack.c.l.b16 %v5171
    %v5290 = vunpack.c.h.b16 %v5171
    %v5291 = vunpack.c.l.b16 %v5172
    %v5292 = vunpack.c.h.b16 %v5172
    %v5293 = vunpack.c.l.b16 %v5173
    %v5294 = vunpack.c.h.b16 %v5173
    %v5295 = vpack.c.b16 %v5235, %v5231
    %v5296 = vpack.c.b16 %v5236, %v5232
    %v5297 = vpack.c.b16 %v5237, %v5233
    %v5298 = vpack.c.b16 %v5238, %v5234
    %v5299 = vpack.c.b16 %v5243, %v5239
    %v5300 = vpack.c.b16 %v5244, %v5240
    %v5301 = vpack.c.b16 %v5245, %v5241
    %v5302 = vpack.c.b16 %v5246, %v5242
    %v5303 = vpack.c.b16 %v5251, %v5247
    %v5304 = vpack.c.b16 %v5252, %v5248
    %v5305 = vpack.c.b16 %v5253, %v5249
    %v5306 = vpack.c.b16 %v5254, %v5250
    %v5307 = vpack.c.b16 %v5259, %v5255
    %v5308 = vpack.c.b16 %v5260, %v5256
    %v5309 = vpack.c.b16 %v5261, %v5257
    %v5310 = vpack.c.b16 %v5262, %v5258
    %v5311 = vpack.c.b16 %v5267, %v5263
    %v5312 = vpack.c.b16 %v5268, %v5264
    %v5313 = vpack.c.b16 %v5269, %v5265
    %v5314 = vpack.c.b16 %v5270, %v5266
    %v5315 = vpack.c.b16 %v5275, %v5271
    %v5316 = vpack.c.b16 %v5276, %v5272
    %v5317 = vpack.c.b16 %v5277, %v5273
    %v5318 = vpack.c.b16 %v5278, %v5274
    %v5319 = vpack.c.b16 %v5283, %v5279
    %v5320 = vpack.c.b16 %v5284, %v5280
    %v5321 = vpack.c.b16 %v5285, %v5281
    %v5322 = vpack.c.b16 %v5286, %v5282
    %v5323 = vpack.c.b16 %v5291, %v5287
    %v5324 = vpack.c.b16 %v5292, %v5288
    %v5325 = vpack.c.b16 %v5293, %v5289
    %v5326 = vpack.c.b16 %v5294, %v5290
    %5359 = vmatprep.subr.bf16.mxu0 %v5324
    %5360 = vmatpush1.bf16.msra.mxu0 %v5323
    %5361 = vmatprep.subr.bf16.mxu0 %v5320
    %5362 = vmatpush1.bf16.msra.mxu0 %v5319
    %5363 = vmatprep.subr.bf16.mxu0 %v5316
    %5364 = vmatpush1.bf16.msra.mxu0 %v5315
    %5365 = vmatprep.subr.bf16.mxu0 %v5312
    %5366 = vmatpush1.bf16.msra.mxu0 %v5311
    %5367 = vmatprep.subr.bf16.mxu0 %v5308
    %5368 = vmatpush1.bf16.msra.mxu0 %v5307
    %5369 = vmatprep.subr.bf16.mxu0 %v5304
    %5370 = vmatpush1.bf16.msra.mxu0 %v5303
    %5371 = vmatprep.subr.bf16.mxu0 %v5300
    %5372 = vmatpush1.bf16.msra.mxu0 %v5299
    %5373 = vmatprep.subr.bf16.mxu0 %v5296
    %5374 = vmatpush1.bf16.msra.mxu0 %v5295
    %5375 = vmatprep.subr.bf16.mxu0 0
    %5376 = vmatpush2.bf16.msra.mxu0 0
    %5377 = vmatprep.subr.bf16.mxu0 0
    %5378 = vmatpush2.bf16.msra.mxu0 0
    %5379 = vmatprep.subr.bf16.mxu0 0
    %5380 = vmatpush2.bf16.msra.mxu0 0
    %5381 = vmatprep.subr.bf16.mxu0 0
    %5382 = vmatpush2.bf16.msra.mxu0 0
    %5383 = vmatprep.subr.bf16.mxu0 0
    %5384 = vmatpush2.bf16.msra.mxu0 0
    %5385 = vmatprep.subr.bf16.mxu0 0
    %5386 = vmatpush2.bf16.msra.mxu0 0
    %5387 = vmatprep.subr.bf16.mxu0 0
    %5388 = vmatpush2.bf16.msra.mxu0 0
    %5389 = vmatprep.subr.bf16.mxu0 0
    %5390 = vmatpush2.bf16.msra.mxu0 0
    %5391 = vmatprep.mubr.bf16.mxu0 0
    %5392 = vmatmul.mubr.bf16.gmra.mxu0 %v5176
    %v5393 = vpop.f32.mrf.mxu0
    %v5394 = vadd.f32 %v5182, %v5393
    %v5395 = vpop.f32.mrf.mxu0
    %v5396 = vadd.f32 %v5186, %v5395
    %v5397 = vpop.f32.mrf.mxu0
    %v5398 = vadd.f32 %v5182, %v5397
    %v5399 = vpop.f32.mrf.mxu0
    %v5400 = vadd.f32 %v5186, %v5399
    %5401 = vmatprep.mubr.bf16.mxu0 0
    %5402 = vmatmul.mubr.bf16.gmra.mxu0 %v5177
    %v5403 = vpop.f32.mrf.mxu0
    %v5404 = vadd.f32 %v5182, %v5403
    %v5405 = vpop.f32.mrf.mxu0
    %v5406 = vadd.f32 %v5186, %v5405
    %v5407 = vpop.f32.mrf.mxu0
    %v5408 = vadd.f32 %v5182, %v5407
    %v5409 = vpop.f32.mrf.mxu0
    %v5410 = vadd.f32 %v5186, %v5409
    %5411 = vdwg.mxu0
    %5412 = vmatprep.subr.bf16.mxu0 %v5326
    %5413 = vmatpush1.bf16.msra.mxu0 %v5325
    %5414 = vmatprep.subr.bf16.mxu0 %v5322
    %5415 = vmatpush1.bf16.msra.mxu0 %v5321
    %5416 = vmatprep.subr.bf16.mxu0 %v5318
    %5417 = vmatpush1.bf16.msra.mxu0 %v5317
    %5418 = vmatprep.subr.bf16.mxu0 %v5314
    %5419 = vmatpush1.bf16.msra.mxu0 %v5313
    %5420 = vmatprep.subr.bf16.mxu0 %v5310
    %5421 = vmatpush1.bf16.msra.mxu0 %v5309
    %5422 = vmatprep.subr.bf16.mxu0 %v5306
    %5423 = vmatpush1.bf16.msra.mxu0 %v5305
    %5424 = vmatprep.subr.bf16.mxu0 %v5302
    %5425 = vmatpush1.bf16.msra.mxu0 %v5301
    %5426 = vmatprep.subr.bf16.mxu0 %v5298
    %5427 = vmatpush1.bf16.msra.mxu0 %v5297
    %5428 = vmatprep.subr.bf16.mxu0 0
    %5429 = vmatpush2.bf16.msra.mxu0 0
    %5430 = vmatprep.subr.bf16.mxu0 0
    %5431 = vmatpush2.bf16.msra.mxu0 0
    %5432 = vmatprep.subr.bf16.mxu0 0
    %5433 = vmatpush2.bf16.msra.mxu0 0
    %5434 = vmatprep.subr.bf16.mxu0 0
    %5435 = vmatpush2.bf16.msra.mxu0 0
    %5436 = vmatprep.subr.bf16.mxu0 0
    %5437 = vmatpush2.bf16.msra.mxu0 0
    %5438 = vmatprep.subr.bf16.mxu0 0
    %5439 = vmatpush2.bf16.msra.mxu0 0
    %5440 = vmatprep.subr.bf16.mxu0 0
    %5441 = vmatpush2.bf16.msra.mxu0 0
    %5442 = vmatprep.subr.bf16.mxu0 0
    %5443 = vmatpush2.bf16.msra.mxu0 0
    %5444 = vmatprep.mubr.bf16.mxu0 0
    %5445 = vmatmul.mubr.bf16.gmra.mxu0 %v5176
    %v5446 = vpop.f32.mrf.mxu0
    %v5447 = vadd.f32 %v5190, %v5446
    %v5448 = vpop.f32.mrf.mxu0
    %v5449 = vadd.f32 %v5194, %v5448
    %v5450 = vpop.f32.mrf.mxu0
    %v5451 = vadd.f32 %v5190, %v5450
    %v5452 = vpop.f32.mrf.mxu0
    %v5453 = vadd.f32 %v5194, %v5452
    %5454 = vmatprep.mubr.bf16.mxu0 0
    %5455 = vmatmul.mubr.bf16.gmra.mxu0 %v5177
    %v5456 = vpop.f32.mrf.mxu0
    %v5457 = vadd.f32 %v5190, %v5456
    %v5458 = vpop.f32.mrf.mxu0
    %v5459 = vadd.f32 %v5194, %v5458
    %v5460 = vpop.f32.mrf.mxu0
    %v5461 = vadd.f32 %v5190, %v5460
    %v5462 = vpop.f32.mrf.mxu0
    %v5463 = vadd.f32 %v5194, %v5462
    %5464 = vdwg.mxu0
    %v5465 = vmul.f32 %v5394, 0.5
    %v5466 = vmul.f32 %v5396, 0.5
    %v5467 = vmul.f32 %v5447, 0.5
    %v5468 = vmul.f32 %v5449, 0.5
    %v5469 = vmul.f32 %v5398, 0.5
    %v5470 = vmul.f32 %v5400, 0.5
    %v5471 = vmul.f32 %v5451, 0.5
    %v5472 = vmul.f32 %v5453, 0.5
    %v5473 = vmul.f32 %v5404, 0.5
    %v5474 = vmul.f32 %v5406, 0.5
    %v5475 = vmul.f32 %v5457, 0.5
    %v5476 = vmul.f32 %v5459, 0.5
    %v5477 = vmul.f32 %v5408, 0.5
    %v5478 = vmul.f32 %v5410, 0.5
    %v5479 = vmul.f32 %v5461, 0.5
    %v5480 = vmul.f32 %v5463, 0.5
    %v5481 = vmul.f32 %v5394, 0.044715
    %v5482 = vmul.f32 %v5396, 0.044715
    %v5483 = vmul.f32 %v5447, 0.044715
    %v5484 = vmul.f32 %v5449, 0.044715
    %v5485 = vmul.f32 %v5398, 0.044715
    %v5486 = vmul.f32 %v5400, 0.044715
    %v5487 = vmul.f32 %v5451, 0.044715
    %v5488 = vmul.f32 %v5453, 0.044715
    %v5489 = vmul.f32 %v5404, 0.044715
    %v5490 = vmul.f32 %v5406, 0.044715
    %v5491 = vmul.f32 %v5457, 0.044715
    %v5492 = vmul.f32 %v5459, 0.044715
    %v5493 = vmul.f32 %v5408, 0.044715
    %v5494 = vmul.f32 %v5410, 0.044715
    %v5495 = vmul.f32 %v5461, 0.044715
    %v5496 = vmul.f32 %v5463, 0.044715
    %v5497 = vmul.f32 %v5481, %v5394
    %v5498 = vmul.f32 %v5482, %v5396
    %v5499 = vmul.f32 %v5483, %v5447
    %v5500 = vmul.f32 %v5484, %v5449
    %v5501 = vmul.f32 %v5485, %v5398
    %v5502 = vmul.f32 %v5486, %v5400
    %v5503 = vmul.f32 %v5487, %v5451
    %v5504 = vmul.f32 %v5488, %v5453
    %v5505 = vmul.f32 %v5489, %v5404
    %v5506 = vmul.f32 %v5490, %v5406
    %v5507 = vmul.f32 %v5491, %v5457
    %v5508 = vmul.f32 %v5492, %v5459
    %v5509 = vmul.f32 %v5493, %v5408
    %v5510 = vmul.f32 %v5494, %v5410
    %v5511 = vmul.f32 %v5495, %v5461
    %v5512 = vmul.f32 %v5496, %v5463
    %v5513 = vmul.f32 %v5497, %v5394
    %v5514 = vmul.f32 %v5498, %v5396
    %v5515 = vmul.f32 %v5499, %v5447
    %v5516 = vmul.f32 %v5500, %v5449
    %v5517 = vmul.f32 %v5501, %v5398
    %v5518 = vmul.f32 %v5502, %v5400
    %v5519 = vmul.f32 %v5503, %v5451
    %v5520 = vmul.f32 %v5504, %v5453
    %v5521 = vmul.f32 %v5505, %v5404
    %v5522 = vmul.f32 %v5506, %v5406
    %v5523 = vmul.f32 %v5507, %v5457
    %v5524 = vmul.f32 %v5508, %v5459
    %v5525 = vmul.f32 %v5509, %v5408
    %v5526 = vmul.f32 %v5510, %v5410
    %v5527 = vmul.f32 %v5511, %v5461
    %v5528 = vmul.f32 %v5512, %v5463
    %v5529 = vadd.f32 %v5394, %v5513
    %v5530 = vadd.f32 %v5396, %v5514
    %v5531 = vadd.f32 %v5447, %v5515
    %v5532 = vadd.f32 %v5449, %v5516
    %v5533 = vadd.f32 %v5398, %v5517
    %v5534 = vadd.f32 %v5400, %v5518
    %v5535 = vadd.f32 %v5451, %v5519
    %v5536 = vadd.f32 %v5453, %v5520
    %v5537 = vadd.f32 %v5404, %v5521
    %v5538 = vadd.f32 %v5406, %v5522
    %v5539 = vadd.f32 %v5457, %v5523
    %v5540 = vadd.f32 %v5459, %v5524
    %v5541 = vadd.f32 %v5408, %v5525
    %v5542 = vadd.f32 %v5410, %v5526
    %v5543 = vadd.f32 %v5461, %v5527
    %v5544 = vadd.f32 %v5463, %v5528
    %v5545 = vmul.f32 %v5529, 0.7978846
    %v5546 = vmul.f32 %v5530, 0.7978846
    %v5547 = vmul.f32 %v5531, 0.7978846
    %v5548 = vmul.f32 %v5532, 0.7978846
    %v5549 = vmul.f32 %v5533, 0.7978846
    %v5550 = vmul.f32 %v5534, 0.7978846
    %v5551 = vmul.f32 %v5535, 0.7978846
    %v5552 = vmul.f32 %v5536, 0.7978846
    %v5553 = vmul.f32 %v5537, 0.7978846
    %v5554 = vmul.f32 %v5538, 0.7978846
    %v5555 = vmul.f32 %v5539, 0.7978846
    %v5556 = vmul.f32 %v5540, 0.7978846
    %v5557 = vmul.f32 %v5541, 0.7978846
    %v5558 = vmul.f32 %v5542, 0.7978846
    %v5559 = vmul.f32 %v5543, 0.7978846
    %v5560 = vmul.f32 %v5544, 0.7978846
    %v5561 = vtanh.pop %v5545
    %v5562 = vtanh.pop %v5546
    %v5563 = vtanh.pop %v5547
    %v5564 = vtanh.pop %v5548
    %v5565 = vtanh.pop %v5549
    %v5566 = vtanh.pop %v5550
    %v5567 = vtanh.pop %v5551
    %v5568 = vtanh.pop %v5552
    %v5569 = vtanh.pop %v5553
    %v5570 = vtanh.pop %v5554
    %v5571 = vtanh.pop %v5555
    %v5572 = vtanh.pop %v5556
    %v5573 = vtanh.pop %v5557
    %v5574 = vtanh.pop %v5558
    %v5575 = vtanh.pop %v5559
    %v5576 = vtanh.pop %v5560
    %v5577 = vadd.f32 %v5561, 1.0
    %v5578 = vadd.f32 %v5562, 1.0
    %v5579 = vadd.f32 %v5563, 1.0
    %v5580 = vadd.f32 %v5564, 1.0
    %v5581 = vadd.f32 %v5565, 1.0
    %v5582 = vadd.f32 %v5566, 1.0
    %v5583 = vadd.f32 %v5567, 1.0
    %v5584 = vadd.f32 %v5568, 1.0
    %v5585 = vadd.f32 %v5569, 1.0
    %v5586 = vadd.f32 %v5570, 1.0
    %v5587 = vadd.f32 %v5571, 1.0
    %v5588 = vadd.f32 %v5572, 1.0
    %v5589 = vadd.f32 %v5573, 1.0
    %v5590 = vadd.f32 %v5574, 1.0
    %v5591 = vadd.f32 %v5575, 1.0
    %v5592 = vadd.f32 %v5576, 1.0
    %v5593 = vmul.f32 %v5465, %v5577
    %v5594 = vmul.f32 %v5466, %v5578
    %v5595 = vmul.f32 %v5467, %v5579
    %v5596 = vmul.f32 %v5468, %v5580
    %v5597 = vmul.f32 %v5469, %v5581
    %v5598 = vmul.f32 %v5470, %v5582
    %v5599 = vmul.f32 %v5471, %v5583
    %v5600 = vmul.f32 %v5472, %v5584
    %v5601 = vmul.f32 %v5473, %v5585
    %v5602 = vmul.f32 %v5474, %v5586
    %v5603 = vmul.f32 %v5475, %v5587
    %v5604 = vmul.f32 %v5476, %v5588
    %v5605 = vmul.f32 %v5477, %v5589
    %v5606 = vmul.f32 %v5478, %v5590
    %v5607 = vmul.f32 %v5479, %v5591
    %v5608 = vmul.f32 %v5480, %v5592
    %s5609 = scalar_lea.vmem [#allocation10], 256
    %v5610 = vld [vmem:[%s5609] sm:$0xf]
    %v5611 = vld [vmem:[%s5609 + $0x4] sm:$0xf]
    %v5612 = vld [vmem:[%s5609 + $0x8] sm:$0xf]
    %v5613 = vld [vmem:[%s5609 + $0xc] sm:$0xf]
    %v5614 = vld [vmem:[%s5609 + $0x10] sm:$0xf]
    %v5615 = vld [vmem:[%s5609 + $0x14] sm:$0xf]
    %v5616 = vld [vmem:[%s5609 + $0x18] sm:$0xf]
    %v5617 = vld [vmem:[%s5609 + $0x1c] sm:$0xf]
    %v5618 = vld [vmem:[%s5609 + $0x20] sm:$0xf]
    %v5619 = vld [vmem:[%s5609 + $0x24] sm:$0xf]
    %v5620 = vld [vmem:[%s5609 + $0x28] sm:$0xf]
    %v5621 = vld [vmem:[%s5609 + $0x2c] sm:$0xf]
    %v5622 = vld [vmem:[%s5609 + $0x30] sm:$0xf]
    %v5623 = vld [vmem:[%s5609 + $0x34] sm:$0xf]
    %v5624 = vld [vmem:[%s5609 + $0x38] sm:$0xf]
    %v5625 = vld [vmem:[%s5609 + $0x3c] sm:$0xf]
    %v5626 = vld [vmem:[%s5609 + $0x40] sm:$0xf]
    %v5627 = vld [vmem:[%s5609 + $0x44] sm:$0xf]
    %v5628 = vld [vmem:[%s5609 + $0x48] sm:$0xf]
    %v5629 = vld [vmem:[%s5609 + $0x4c] sm:$0xf]
    %v5630 = vld [vmem:[%s5609 + $0x50] sm:$0xf]
    %v5631 = vld [vmem:[%s5609 + $0x54] sm:$0xf]
    %v5632 = vld [vmem:[%s5609 + $0x58] sm:$0xf]
    %v5633 = vld [vmem:[%s5609 + $0x5c] sm:$0xf]
    %v5634 = vld [vmem:[%s5609 + $0x60] sm:$0xf]
    %v5635 = vld [vmem:[%s5609 + $0x64] sm:$0xf]
    %v5636 = vld [vmem:[%s5609 + $0x68] sm:$0xf]
    %v5637 = vld [vmem:[%s5609 + $0x6c] sm:$0xf]
    %v5638 = vld [vmem:[%s5609 + $0x70] sm:$0xf]
    %v5639 = vld [vmem:[%s5609 + $0x74] sm:$0xf]
    %v5640 = vld [vmem:[%s5609 + $0x78] sm:$0xf]
    %v5641 = vld [vmem:[%s5609 + $0x7c] sm:$0xf]
    %v5642 = vld [vmem:[%s5609 + $0x80] sm:$0xf]
    %v5643 = vld [vmem:[%s5609 + $0x84] sm:$0xf]
    %v5644 = vld [vmem:[%s5609 + $0x88] sm:$0xf]
    %v5645 = vld [vmem:[%s5609 + $0x8c] sm:$0xf]
    %v5646 = vld [vmem:[%s5609 + $0x90] sm:$0xf]
    %v5647 = vld [vmem:[%s5609 + $0x94] sm:$0xf]
    %v5648 = vld [vmem:[%s5609 + $0x98] sm:$0xf]
    %v5649 = vld [vmem:[%s5609 + $0x9c] sm:$0xf]
    %v5650 = vld [vmem:[%s5609 + $0xa0] sm:$0xf]
    %v5651 = vld [vmem:[%s5609 + $0xa4] sm:$0xf]
    %v5652 = vld [vmem:[%s5609 + $0xa8] sm:$0xf]
    %v5653 = vld [vmem:[%s5609 + $0xac] sm:$0xf]
    %v5654 = vld [vmem:[%s5609 + $0xb0] sm:$0xf]
    %v5655 = vld [vmem:[%s5609 + $0xb4] sm:$0xf]
    %v5656 = vld [vmem:[%s5609 + $0xb8] sm:$0xf]
    %v5657 = vld [vmem:[%s5609 + $0xbc] sm:$0xf]
    %v5658 = vld [vmem:[%s5609 + $0xc0] sm:$0xf]
    %v5659 = vld [vmem:[%s5609 + $0xc4] sm:$0xf]
    %v5660 = vld [vmem:[%s5609 + $0xc8] sm:$0xf]
    %v5661 = vld [vmem:[%s5609 + $0xcc] sm:$0xf]
    %v5662 = vld [vmem:[%s5609 + $0xd0] sm:$0xf]
    %v5663 = vld [vmem:[%s5609 + $0xd4] sm:$0xf]
    %v5664 = vld [vmem:[%s5609 + $0xd8] sm:$0xf]
    %v5665 = vld [vmem:[%s5609 + $0xdc] sm:$0xf]
    %v5666 = vld [vmem:[%s5609 + $0xe0] sm:$0xf]
    %v5667 = vld [vmem:[%s5609 + $0xe4] sm:$0xf]
    %v5668 = vld [vmem:[%s5609 + $0xe8] sm:$0xf]
    %v5669 = vld [vmem:[%s5609 + $0xec] sm:$0xf]
    %v5670 = vld [vmem:[%s5609 + $0xf0] sm:$0xf]
    %v5671 = vld [vmem:[%s5609 + $0xf4] sm:$0xf]
    %v5672 = vld [vmem:[%s5609 + $0xf8] sm:$0xf]
    %v5673 = vld [vmem:[%s5609 + $0xfc] sm:$0xf]
    %s5674 = scalar_lea.vmem %s13, 1
    %v5675 = vld [vmem:[%s5674] sm:$0x1]
    %v5676 = vpack.c.bf16 %v5597, %v5593
    %v5677 = vpack.c.bf16 %v5598, %v5594
    %v5678 = vpack.c.bf16 %v5599, %v5595
    %v5679 = vpack.c.bf16 %v5600, %v5596
    %v5680 = vpack.c.bf16 %v5605, %v5601
    %v5681 = vpack.c.bf16 %v5606, %v5602
    %v5682 = vpack.c.bf16 %v5607, %v5603
    %v5683 = vpack.c.bf16 %v5608, %v5604
    %v5685 = vlaneseq
    %v5686 = vshrl.u32 %v5685, 7
    %v5687 = vsub.s32 0, %v5686
    %v5688 = vrot.slane %v5675, %v5687
    %v5754 = vunpack.c.l.b16 %v5610
    %v5755 = vunpack.c.l.b16 %v5611
    %v5756 = vunpack.c.l.b16 %v5612
    %v5757 = vunpack.c.l.b16 %v5613
    %v5758 = vunpack.c.l.b16 %v5614
    %v5759 = vunpack.c.l.b16 %v5615
    %v5760 = vunpack.c.l.b16 %v5616
    %v5761 = vunpack.c.l.b16 %v5617
    %v5762 = vunpack.c.l.b16 %v5618
    %v5763 = vunpack.c.l.b16 %v5619
    %v5764 = vunpack.c.l.b16 %v5620
    %v5765 = vunpack.c.l.b16 %v5621
    %v5766 = vunpack.c.l.b16 %v5622
    %v5767 = vunpack.c.l.b16 %v5623
    %v5768 = vunpack.c.l.b16 %v5624
    %v5769 = vunpack.c.l.b16 %v5625
    %v5770 = vunpack.c.l.b16 %v5626
    %v5771 = vunpack.c.l.b16 %v5627
    %v5772 = vunpack.c.l.b16 %v5628
    %v5773 = vunpack.c.l.b16 %v5629
    %v5774 = vunpack.c.l.b16 %v5630
    %v5775 = vunpack.c.l.b16 %v5631
    %v5776 = vunpack.c.l.b16 %v5632
    %v5777 = vunpack.c.l.b16 %v5633
    %v5778 = vunpack.c.l.b16 %v5634
    %v5779 = vunpack.c.l.b16 %v5635
    %v5780 = vunpack.c.l.b16 %v5636
    %v5781 = vunpack.c.l.b16 %v5637
    %v5782 = vunpack.c.l.b16 %v5638
    %v5783 = vunpack.c.l.b16 %v5639
    %v5784 = vunpack.c.l.b16 %v5640
    %v5785 = vunpack.c.l.b16 %v5641
    %v5786 = vunpack.c.l.b16 %v5642
    %v5787 = vunpack.c.l.b16 %v5643
    %v5788 = vunpack.c.l.b16 %v5644
    %v5789 = vunpack.c.l.b16 %v5645
    %v5790 = vunpack.c.l.b16 %v5646
    %v5791 = vunpack.c.l.b16 %v5647
    %v5792 = vunpack.c.l.b16 %v5648
    %v5793 = vunpack.c.l.b16 %v5649
    %v5794 = vunpack.c.l.b16 %v5650
    %v5795 = vunpack.c.l.b16 %v5651
    %v5796 = vunpack.c.l.b16 %v5652
    %v5797 = vunpack.c.l.b16 %v5653
    %v5798 = vunpack.c.l.b16 %v5654
    %v5799 = vunpack.c.l.b16 %v5655
    %v5800 = vunpack.c.l.b16 %v5656
    %v5801 = vunpack.c.l.b16 %v5657
    %v5802 = vunpack.c.l.b16 %v5658
    %v5803 = vunpack.c.l.b16 %v5659
    %v5804 = vunpack.c.l.b16 %v5660
    %v5805 = vunpack.c.l.b16 %v5661
    %v5806 = vunpack.c.l.b16 %v5662
    %v5807 = vunpack.c.l.b16 %v5663
    %v5808 = vunpack.c.l.b16 %v5664
    %v5809 = vunpack.c.l.b16 %v5665
    %v5810 = vunpack.c.l.b16 %v5666
    %v5811 = vunpack.c.l.b16 %v5667
    %v5812 = vunpack.c.l.b16 %v5668
    %v5813 = vunpack.c.l.b16 %v5669
    %v5814 = vunpack.c.l.b16 %v5670
    %v5815 = vunpack.c.l.b16 %v5671
    %v5816 = vunpack.c.l.b16 %v5672
    %v5817 = vunpack.c.l.b16 %v5673
    %v5818 = vpack.c.b16 %v5755, %v5754
    %v5819 = vpack.c.b16 %v5757, %v5756
    %v5820 = vpack.c.b16 %v5759, %v5758
    %v5821 = vpack.c.b16 %v5761, %v5760
    %v5822 = vpack.c.b16 %v5763, %v5762
    %v5823 = vpack.c.b16 %v5765, %v5764
    %v5824 = vpack.c.b16 %v5767, %v5766
    %v5825 = vpack.c.b16 %v5769, %v5768
    %v5826 = vpack.c.b16 %v5771, %v5770
    %v5827 = vpack.c.b16 %v5773, %v5772
    %v5828 = vpack.c.b16 %v5775, %v5774
    %v5829 = vpack.c.b16 %v5777, %v5776
    %v5830 = vpack.c.b16 %v5779, %v5778
    %v5831 = vpack.c.b16 %v5781, %v5780
    %v5832 = vpack.c.b16 %v5783, %v5782
    %v5833 = vpack.c.b16 %v5785, %v5784
    %v5834 = vpack.c.b16 %v5787, %v5786
    %v5835 = vpack.c.b16 %v5789, %v5788
    %v5836 = vpack.c.b16 %v5791, %v5790
    %v5837 = vpack.c.b16 %v5793, %v5792
    %v5838 = vpack.c.b16 %v5795, %v5794
    %v5839 = vpack.c.b16 %v5797, %v5796
    %v5840 = vpack.c.b16 %v5799, %v5798
    %v5841 = vpack.c.b16 %v5801, %v5800
    %v5842 = vpack.c.b16 %v5803, %v5802
    %v5843 = vpack.c.b16 %v5805, %v5804
    %v5844 = vpack.c.b16 %v5807, %v5806
    %v5845 = vpack.c.b16 %v5809, %v5808
    %v5846 = vpack.c.b16 %v5811, %v5810
    %v5847 = vpack.c.b16 %v5813, %v5812
    %v5848 = vpack.c.b16 %v5815, %v5814
    %v5849 = vpack.c.b16 %v5817, %v5816
    %5882 = vmatprep.subr.bf16.mxu0 0
    %5883 = vmatpush1.bf16.msra.mxu0 %v5825
    %5884 = vmatprep.subr.bf16.mxu0 0
    %5885 = vmatpush1.bf16.msra.mxu0 %v5824
    %5886 = vmatprep.subr.bf16.mxu0 0
    %5887 = vmatpush1.bf16.msra.mxu0 %v5823
    %5888 = vmatprep.subr.bf16.mxu0 0
    %5889 = vmatpush1.bf16.msra.mxu0 %v5822
    %5890 = vmatprep.subr.bf16.mxu0 0
    %5891 = vmatpush1.bf16.msra.mxu0 %v5821
    %5892 = vmatprep.subr.bf16.mxu0 0
    %5893 = vmatpush1.bf16.msra.mxu0 %v5820
    %5894 = vmatprep.subr.bf16.mxu0 0
    %5895 = vmatpush1.bf16.msra.mxu0 %v5819
    %5896 = vmatprep.subr.bf16.mxu0 0
    %5897 = vmatpush1.bf16.msra.mxu0 %v5818
    %5898 = vmatprep.subr.bf16.mxu0 0
    %5899 = vmatpush2.bf16.msra.mxu0 %v5833
    %5900 = vmatprep.subr.bf16.mxu0 0
    %5901 = vmatpush2.bf16.msra.mxu0 %v5832
    %5902 = vmatprep.subr.bf16.mxu0 0
    %5903 = vmatpush2.bf16.msra.mxu0 %v5831
    %5904 = vmatprep.subr.bf16.mxu0 0
    %5905 = vmatpush2.bf16.msra.mxu0 %v5830
    %5906 = vmatprep.subr.bf16.mxu0 0
    %5907 = vmatpush2.bf16.msra.mxu0 %v5829
    %5908 = vmatprep.subr.bf16.mxu0 0
    %5909 = vmatpush2.bf16.msra.mxu0 %v5828
    %5910 = vmatprep.subr.bf16.mxu0 0
    %5911 = vmatpush2.bf16.msra.mxu0 %v5827
    %5912 = vmatprep.subr.bf16.mxu0 0
    %5913 = vmatpush2.bf16.msra.mxu0 %v5826
    %5914 = vmatprep.mubr.bf16.mxu0 %v5677
    %5915 = vmatmul.mubr.bf16.gmra.mxu0 %v5676
    %v5916 = vpop.f32.mrf.mxu0
    %v5917 = vadd.f32 %v5688, %v5916
    %v5918 = vpop.f32.mrf.mxu0
    %v5919 = vpop.f32.mrf.mxu0
    %v5920 = vadd.f32 %v5688, %v5919
    %v5921 = vpop.f32.mrf.mxu0
    %5922 = vmatprep.mubr.bf16.mxu0 %v5681
    %5923 = vmatmul.mubr.bf16.gmra.mxu0 %v5680
    %v5924 = vpop.f32.mrf.mxu0
    %v5925 = vadd.f32 %v5688, %v5924
    %v5926 = vpop.f32.mrf.mxu0
    %v5927 = vpop.f32.mrf.mxu0
    %v5928 = vadd.f32 %v5688, %v5927
    %v5929 = vpop.f32.mrf.mxu0
    %5930 = vdwg.mxu0
    %5931 = vmatprep.subr.bf16.mxu0 0
    %5932 = vmatpush1.bf16.msra.mxu0 %v5841
    %5933 = vmatprep.subr.bf16.mxu0 0
    %5934 = vmatpush1.bf16.msra.mxu0 %v5840
    %5935 = vmatprep.subr.bf16.mxu0 0
    %5936 = vmatpush1.bf16.msra.mxu0 %v5839
    %5937 = vmatprep.subr.bf16.mxu0 0
    %5938 = vmatpush1.bf16.msra.mxu0 %v5838
    %5939 = vmatprep.subr.bf16.mxu0 0
    %5940 = vmatpush1.bf16.msra.mxu0 %v5837
    %5941 = vmatprep.subr.bf16.mxu0 0
    %5942 = vmatpush1.bf16.msra.mxu0 %v5836
    %5943 = vmatprep.subr.bf16.mxu0 0
    %5944 = vmatpush1.bf16.msra.mxu0 %v5835
    %5945 = vmatprep.subr.bf16.mxu0 0
    %5946 = vmatpush1.bf16.msra.mxu0 %v5834
    %5947 = vmatprep.subr.bf16.mxu0 0
    %5948 = vmatpush2.bf16.msra.mxu0 %v5849
    %5949 = vmatprep.subr.bf16.mxu0 0
    %5950 = vmatpush2.bf16.msra.mxu0 %v5848
    %5951 = vmatprep.subr.bf16.mxu0 0
    %5952 = vmatpush2.bf16.msra.mxu0 %v5847
    %5953 = vmatprep.subr.bf16.mxu0 0
    %5954 = vmatpush2.bf16.msra.mxu0 %v5846
    %5955 = vmatprep.subr.bf16.mxu0 0
    %5956 = vmatpush2.bf16.msra.mxu0 %v5845
    %5957 = vmatprep.subr.bf16.mxu0 0
    %5958 = vmatpush2.bf16.msra.mxu0 %v5844
    %5959 = vmatprep.subr.bf16.mxu0 0
    %5960 = vmatpush2.bf16.msra.mxu0 %v5843
    %5961 = vmatprep.subr.bf16.mxu0 0
    %5962 = vmatpush2.bf16.msra.mxu0 %v5842
    %5963 = vmatprep.mubr.bf16.mxu0 %v5679
    %5964 = vmatmul.mubr.bf16.gmra.mxu0 %v5678
    %v5965 = vpop.f32.mrf.mxu0
    %v5966 = vadd.f32 %v5917, %v5965
    %v5967 = vpop.f32.mrf.mxu0
    %v5968 = vpop.f32.mrf.mxu0
    %v5969 = vadd.f32 %v5920, %v5968
    %v5970 = vpop.f32.mrf.mxu0
    %5971 = vmatprep.mubr.bf16.mxu0 %v5683
    %5972 = vmatmul.mubr.bf16.gmra.mxu0 %v5682
    %v5973 = vpop.f32.mrf.mxu0
    %v5974 = vadd.f32 %v5925, %v5973
    %v5975 = vpop.f32.mrf.mxu0
    %v5976 = vpop.f32.mrf.mxu0
    %v5977 = vadd.f32 %v5928, %v5976
    %v5978 = vpop.f32.mrf.mxu0
    %5979 = vdwg.mxu0
    %v5980 = vmul.f32 %v3552, %v5966
    %v5981 = vmul.f32 %v3556, %v5969
    %v5982 = vmul.f32 %v3562, %v5974
    %v5983 = vmul.f32 %v3566, %v5977
    %v5984 = vadd.f32 %v5069, %v5980
    %v5985 = vadd.f32 %v5070, %v5981
    %v5986 = vadd.f32 %v5071, %v5982
    %v5987 = vadd.f32 %v5072, %v5983
    %v5988 = vld [vmem:[#allocation11] sm:$0xff]
    %v5989 = vld [vmem:[#allocation11 + $0x8] sm:$0xff]
    %v5990 = vld [vmem:[#allocation11 + $0x10] sm:$0xff]
    %v5991 = vld [vmem:[#allocation11 + $0x18] sm:$0xff]
    %v5992 = vld [vmem:[#allocation11 + $0x20] sm:$0xff]
    %v5993 = vld [vmem:[#allocation11 + $0x28] sm:$0xff]
    %v5994 = vld [vmem:[#allocation11 + $0x30] sm:$0xff]
    %v5995 = vld [vmem:[#allocation11 + $0x38] sm:$0xff]
    %v5996 = vld [vmem:[#allocation11 + $0x40] sm:$0xff]
    %v5997 = vld [vmem:[#allocation11 + $0x48] sm:$0xff]
    %v5998 = vld [vmem:[#allocation11 + $0x50] sm:$0xff]
    %v5999 = vld [vmem:[#allocation11 + $0x58] sm:$0xff]
    %v6000 = vld [vmem:[#allocation11 + $0x60] sm:$0xff]
    %v6001 = vld [vmem:[#allocation11 + $0x68] sm:$0xff]
    %v6002 = vld [vmem:[#allocation11 + $0x70] sm:$0xff]
    %v6003 = vld [vmem:[#allocation11 + $0x78] sm:$0xff]
    %v6004 = vld [vmem:[%s15] sm:$0x3]
    %v6006 = vlaneseq
    %v6007 = vshrl.u32 %v6006, 7
    %v6008 = vsub.s32 0, %v6007
    %v6009 = vrot.slane %v6004, %v6008
    %v6010 = vlaneseq
    %v6011 = vshrl.u32 %v6010, 7
    %v6012 = vsub.s32 1, %v6011
    %v6013 = vrot.slane %v6004, %v6012
    %v6032 = vunpack.c.l.b16 %v5988
    %v6033 = vunpack.c.h.b16 %v5988
    %v6034 = vunpack.c.l.b16 %v5989
    %v6035 = vunpack.c.h.b16 %v5989
    %v6036 = vunpack.c.l.b16 %v5990
    %v6037 = vunpack.c.h.b16 %v5990
    %v6038 = vunpack.c.l.b16 %v5991
    %v6039 = vunpack.c.h.b16 %v5991
    %v6040 = vunpack.c.l.b16 %v5992
    %v6041 = vunpack.c.h.b16 %v5992
    %v6042 = vunpack.c.l.b16 %v5993
    %v6043 = vunpack.c.h.b16 %v5993
    %v6044 = vunpack.c.l.b16 %v5994
    %v6045 = vunpack.c.h.b16 %v5994
    %v6046 = vunpack.c.l.b16 %v5995
    %v6047 = vunpack.c.h.b16 %v5995
    %v6048 = vunpack.c.l.b16 %v5996
    %v6049 = vunpack.c.h.b16 %v5996
    %v6050 = vunpack.c.l.b16 %v5997
    %v6051 = vunpack.c.h.b16 %v5997
    %v6052 = vunpack.c.l.b16 %v5998
    %v6053 = vunpack.c.h.b16 %v5998
    %v6054 = vunpack.c.l.b16 %v5999
    %v6055 = vunpack.c.h.b16 %v5999
    %v6056 = vunpack.c.l.b16 %v6000
    %v6057 = vunpack.c.h.b16 %v6000
    %v6058 = vunpack.c.l.b16 %v6001
    %v6059 = vunpack.c.h.b16 %v6001
    %v6060 = vunpack.c.l.b16 %v6002
    %v6061 = vunpack.c.h.b16 %v6002
    %v6062 = vunpack.c.l.b16 %v6003
    %v6063 = vunpack.c.h.b16 %v6003
    %v6064 = vpack.c.b16 %v6034, %v6032
    %v6065 = vpack.c.b16 %v6035, %v6033
    %v6066 = vpack.c.b16 %v6038, %v6036
    %v6067 = vpack.c.b16 %v6039, %v6037
    %v6068 = vpack.c.b16 %v6042, %v6040
    %v6069 = vpack.c.b16 %v6043, %v6041
    %v6070 = vpack.c.b16 %v6046, %v6044
    %v6071 = vpack.c.b16 %v6047, %v6045
    %v6072 = vpack.c.b16 %v6050, %v6048
    %v6073 = vpack.c.b16 %v6051, %v6049
    %v6074 = vpack.c.b16 %v6054, %v6052
    %v6075 = vpack.c.b16 %v6055, %v6053
    %v6076 = vpack.c.b16 %v6058, %v6056
    %v6077 = vpack.c.b16 %v6059, %v6057
    %v6078 = vpack.c.b16 %v6062, %v6060
    %v6079 = vpack.c.b16 %v6063, %v6061
    %6096 = vmatprep.subr.bf16.mxu0 %v6079
    %6097 = vmatpush1.bf16.msra.mxu0 %v6078
    %6098 = vmatprep.subr.bf16.mxu0 %v6077
    %6099 = vmatpush1.bf16.msra.mxu0 %v6076
    %6100 = vmatprep.subr.bf16.mxu0 %v6075
    %6101 = vmatpush1.bf16.msra.mxu0 %v6074
    %6102 = vmatprep.subr.bf16.mxu0 %v6073
    %6103 = vmatpush1.bf16.msra.mxu0 %v6072
    %6104 = vmatprep.subr.bf16.mxu0 %v6071
    %6105 = vmatpush1.bf16.msra.mxu0 %v6070
    %6106 = vmatprep.subr.bf16.mxu0 %v6069
    %6107 = vmatpush1.bf16.msra.mxu0 %v6068
    %6108 = vmatprep.subr.bf16.mxu0 %v6067
    %6109 = vmatpush1.bf16.msra.mxu0 %v6066
    %6110 = vmatprep.subr.bf16.mxu0 %v6065
    %6111 = vmatpush1.bf16.msra.mxu0 %v6064
    %6112 = vmatprep.subr.bf16.mxu0 0
    %6113 = vmatpush2.bf16.msra.mxu0 0
    %6114 = vmatprep.subr.bf16.mxu0 0
    %6115 = vmatpush2.bf16.msra.mxu0 0
    %6116 = vmatprep.subr.bf16.mxu0 0
    %6117 = vmatpush2.bf16.msra.mxu0 0
    %6118 = vmatprep.subr.bf16.mxu0 0
    %6119 = vmatpush2.bf16.msra.mxu0 0
    %6120 = vmatprep.subr.bf16.mxu0 0
    %6121 = vmatpush2.bf16.msra.mxu0 0
    %6122 = vmatprep.subr.bf16.mxu0 0
    %6123 = vmatpush2.bf16.msra.mxu0 0
    %6124 = vmatprep.subr.bf16.mxu0 0
    %6125 = vmatpush2.bf16.msra.mxu0 0
    %6126 = vmatprep.subr.bf16.mxu0 0
    %6127 = vmatpush2.bf16.msra.mxu0 0
    %6128 = vmatprep.mubr.bf16.mxu0 0
    %6129 = vmatmul.mubr.bf16.gmra.mxu0 %v167
    %v6130 = vpop.f32.mrf.mxu0
    %v6131 = vadd.f32 %v6009, %v6130
    %v6132 = vpop.f32.mrf.mxu0
    %v6133 = vadd.f32 %v6013, %v6132
    %v6134 = vpop.f32.mrf.mxu0
    %v6135 = vadd.f32 %v6009, %v6134
    %v6136 = vpop.f32.mrf.mxu0
    %v6137 = vadd.f32 %v6013, %v6136
    %6138 = vmatprep.mubr.bf16.mxu0 0
    %6139 = vmatmul.mubr.bf16.gmra.mxu0 %v168
    %v6140 = vpop.f32.mrf.mxu0
    %v6141 = vadd.f32 %v6009, %v6140
    %v6142 = vpop.f32.mrf.mxu0
    %v6143 = vadd.f32 %v6013, %v6142
    %v6144 = vpop.f32.mrf.mxu0
    %v6145 = vadd.f32 %v6009, %v6144
    %v6146 = vpop.f32.mrf.mxu0
    %v6147 = vadd.f32 %v6013, %v6146
    %6148 = vdwg.mxu0
    %6149 = vadd.xlane.f32.xlu0 %v5984
    %v6150 = vpop.xlane.xlu0 %6149
    %6151 = vadd.xlane.f32.xlu0 %v5985
    %v6152 = vpop.xlane.xlu0 %6151
    %6153 = vadd.xlane.f32.xlu0 %v5986
    %v6154 = vpop.xlane.xlu0 %6153
    %6155 = vadd.xlane.f32.xlu0 %v5987
    %v6156 = vpop.xlane.xlu0 %6155
    %v6157 = vmul.f32 %v6150, %v664
    %v6158 = vmul.f32 %v6152, %v664
    %v6159 = vmul.f32 %v6154, %v664
    %v6160 = vmul.f32 %v6156, %v664
    %v6161 = vsub.f32 %v5984, %v6157
    %v6162 = vsub.f32 %v5985, %v6158
    %v6163 = vsub.f32 %v5986, %v6159
    %v6164 = vsub.f32 %v5987, %v6160
    %v6165 = vmul.f32 %v6161, %v6161
    %v6166 = vmul.f32 %v6162, %v6162
    %v6167 = vmul.f32 %v6163, %v6163
    %v6168 = vmul.f32 %v6164, %v6164
    %6169 = vadd.xlane.f32.xlu0 %v6165
    %v6170 = vpop.xlane.xlu0 %6169
    %6171 = vadd.xlane.f32.xlu0 %v6166
    %v6172 = vpop.xlane.xlu0 %6171
    %6173 = vadd.xlane.f32.xlu0 %v6167
    %v6174 = vpop.xlane.xlu0 %6173
    %6175 = vadd.xlane.f32.xlu0 %v6168
    %v6176 = vpop.xlane.xlu0 %6175
    %v6177 = vmul.f32 %v6170, %v664
    %v6178 = vmul.f32 %v6172, %v664
    %v6179 = vmul.f32 %v6174, %v664
    %v6180 = vmul.f32 %v6176, %v664
    %v6181 = vadd.f32 %v6177, 1e-05
    %v6182 = vadd.f32 %v6178, 1e-05
    %v6183 = vadd.f32 %v6179, 1e-05
    %v6184 = vadd.f32 %v6180, 1e-05
    %v6185 = vrsqrt.pop %v6181
    %v6186 = vrsqrt.pop %v6182
    %v6187 = vrsqrt.pop %v6183
    %v6188 = vrsqrt.pop %v6184
    %v6189 = vmul.f32 %v6161, %v6185
    %v6190 = vmul.f32 %v6162, %v6186
    %v6191 = vmul.f32 %v6163, %v6187
    %v6192 = vmul.f32 %v6164, %v6188
    %v6193 = vld [vmem:[%s16] sm:$0x1]
    %v6195 = vlaneseq
    %v6196 = vshrl.u32 %v6195, 7
    %v6197 = vsub.s32 0, %v6196
    %v6198 = vrot.slane %v6193, %v6197
    %v6200 = vmul.f32 %v6189, %v6198
    %v6201 = vmul.f32 %v6190, %v6198
    %v6202 = vmul.f32 %v6191, %v6198
    %v6203 = vmul.f32 %v6192, %v6198
    %v6204 = vadd.f32 %v6133, 1.0
    %v6205 = vadd.f32 %v6137, 1.0
    %v6206 = vadd.f32 %v6143, 1.0
    %v6207 = vadd.f32 %v6147, 1.0
    %v6208 = vmul.f32 %v6200, %v6204
    %v6209 = vmul.f32 %v6201, %v6205
    %v6210 = vmul.f32 %v6202, %v6206
    %v6211 = vmul.f32 %v6203, %v6207
    %v6212 = vadd.f32 %v6208, %v6131
    %v6213 = vadd.f32 %v6209, %v6135
    %v6214 = vadd.f32 %v6210, %v6141
    %v6215 = vadd.f32 %v6211, %v6145
    %v6216 = vld [vmem:[#allocation13] sm:$0xf]
    %v6217 = vld [vmem:[#allocation13 + $0x4] sm:$0xf]
    %v6218 = vld [vmem:[#allocation13 + $0x8] sm:$0xf]
    %v6219 = vld [vmem:[#allocation13 + $0xc] sm:$0xf]
    %v6220 = vld [vmem:[#allocation13 + $0x10] sm:$0xf]
    %v6221 = vld [vmem:[#allocation13 + $0x14] sm:$0xf]
    %v6222 = vld [vmem:[#allocation13 + $0x18] sm:$0xf]
    %v6223 = vld [vmem:[#allocation13 + $0x1c] sm:$0xf]
    %v6224 = vld [vmem:[#allocation13 + $0x20] sm:$0xf]
    %v6225 = vld [vmem:[#allocation13 + $0x24] sm:$0xf]
    %v6226 = vld [vmem:[#allocation13 + $0x28] sm:$0xf]
    %v6227 = vld [vmem:[#allocation13 + $0x2c] sm:$0xf]
    %v6228 = vld [vmem:[#allocation13 + $0x30] sm:$0xf]
    %v6229 = vld [vmem:[#allocation13 + $0x34] sm:$0xf]
    %v6230 = vld [vmem:[#allocation13 + $0x38] sm:$0xf]
    %v6231 = vld [vmem:[#allocation13 + $0x3c] sm:$0xf]
    %v6232 = vld [vmem:[%s18] sm:$0x1]
    %v6233 = vpack.c.bf16 %v6213, %v6212
    %v6234 = vpack.c.bf16 %v6215, %v6214
    %v6236 = vlaneseq
    %v6237 = vshrl.u32 %v6236, 7
    %v6238 = vsub.s32 0, %v6237
    %v6239 = vrot.slane %v6232, %v6238
    %v6257 = vunpack.c.l.b16 %v6216
    %v6258 = vunpack.c.l.b16 %v6217
    %v6259 = vunpack.c.l.b16 %v6218
    %v6260 = vunpack.c.l.b16 %v6219
    %v6261 = vunpack.c.l.b16 %v6220
    %v6262 = vunpack.c.l.b16 %v6221
    %v6263 = vunpack.c.l.b16 %v6222
    %v6264 = vunpack.c.l.b16 %v6223
    %v6265 = vunpack.c.l.b16 %v6224
    %v6266 = vunpack.c.l.b16 %v6225
    %v6267 = vunpack.c.l.b16 %v6226
    %v6268 = vunpack.c.l.b16 %v6227
    %v6269 = vunpack.c.l.b16 %v6228
    %v6270 = vunpack.c.l.b16 %v6229
    %v6271 = vunpack.c.l.b16 %v6230
    %v6272 = vunpack.c.l.b16 %v6231
    %v6273 = vpack.c.b16 %v6258, %v6257
    %v6274 = vpack.c.b16 %v6260, %v6259
    %v6275 = vpack.c.b16 %v6262, %v6261
    %v6276 = vpack.c.b16 %v6264, %v6263
    %v6277 = vpack.c.b16 %v6266, %v6265
    %v6278 = vpack.c.b16 %v6268, %v6267
    %v6279 = vpack.c.b16 %v6270, %v6269
    %v6280 = vpack.c.b16 %v6272, %v6271
    %6289 = vmatprep.subr.bf16.mxu0 0
    %6290 = vmatpush1.bf16.msra.mxu0 %v6280
    %6291 = vmatprep.subr.bf16.mxu0 0
    %6292 = vmatpush1.bf16.msra.mxu0 %v6279
    %6293 = vmatprep.subr.bf16.mxu0 0
    %6294 = vmatpush1.bf16.msra.mxu0 %v6278
    %6295 = vmatprep.subr.bf16.mxu0 0
    %6296 = vmatpush1.bf16.msra.mxu0 %v6277
    %6297 = vmatprep.subr.bf16.mxu0 0
    %6298 = vmatpush1.bf16.msra.mxu0 %v6276
    %6299 = vmatprep.subr.bf16.mxu0 0
    %6300 = vmatpush1.bf16.msra.mxu0 %v6275
    %6301 = vmatprep.subr.bf16.mxu0 0
    %6302 = vmatpush1.bf16.msra.mxu0 %v6274
    %6303 = vmatprep.subr.bf16.mxu0 0
    %6304 = vmatpush1.bf16.msra.mxu0 %v6273
    %6305 = vmatprep.subr.bf16.mxu0 0
    %6306 = vmatpush2.bf16.msra.mxu0 0
    %6307 = vmatprep.subr.bf16.mxu0 0
    %6308 = vmatpush2.bf16.msra.mxu0 0
    %6309 = vmatprep.subr.bf16.mxu0 0
    %6310 = vmatpush2.bf16.msra.mxu0 0
    %6311 = vmatprep.subr.bf16.mxu0 0
    %6312 = vmatpush2.bf16.msra.mxu0 0
    %6313 = vmatprep.subr.bf16.mxu0 0
    %6314 = vmatpush2.bf16.msra.mxu0 0
    %6315 = vmatprep.subr.bf16.mxu0 0
    %6316 = vmatpush2.bf16.msra.mxu0 0
    %6317 = vmatprep.subr.bf16.mxu0 0
    %6318 = vmatpush2.bf16.msra.mxu0 0
    %6319 = vmatprep.subr.bf16.mxu0 0
    %6320 = vmatpush2.bf16.msra.mxu0 0
    %6321 = vmatprep.mubr.bf16.mxu0 0
    %6322 = vmatmul.mubr.bf16.gmra.mxu0 %v6233
    %v6323 = vpop.f32.mrf.mxu0
    %v6324 = vadd.f32 %v6239, %v6323
    %v6325 = vpop.f32.mrf.mxu0
    %v6326 = vpop.f32.mrf.mxu0
    %v6327 = vadd.f32 %v6239, %v6326
    %v6328 = vpop.f32.mrf.mxu0
    %6329 = vmatprep.mubr.bf16.mxu0 0
    %6330 = vmatmul.mubr.bf16.gmra.mxu0 %v6234
    %v6331 = vpop.f32.mrf.mxu0
    %v6332 = vadd.f32 %v6239, %v6331
    %v6333 = vpop.f32.mrf.mxu0
    %v6334 = vpop.f32.mrf.mxu0
    %v6335 = vadd.f32 %v6239, %v6334
    %v6336 = vpop.f32.mrf.mxu0
    %6337 = vdwg.mxu0
    %v6338 = vmul.f32 %v6324, 0.033333335
    %v6339 = vmul.f32 %v6327, 0.033333335
    %v6340 = vmul.f32 %v6332, 0.033333335
    %v6341 = vmul.f32 %v6335, 0.033333335
    %v6342 = vtanh.pop %v6338
    %v6343 = vtanh.pop %v6339
    %v6344 = vtanh.pop %v6340
    %v6345 = vtanh.pop %v6341
    %v6346 = vmul.f32 %v6342, 30.0
    %v6347 = vmul.f32 %v6343, 30.0
    %v6348 = vmul.f32 %v6344, 30.0
    %v6349 = vmul.f32 %v6345, 30.0
    %6350 = vst [vmem:[#allocation14] sm:$0xff] %v6346
    %6351 = vst [vmem:[#allocation14 + $0x8] sm:$0xff] %v6347
    %6352 = vst [vmem:[#allocation14 + $0x10] sm:$0xff] %v6348
    %6353 = vst [vmem:[#allocation14 + $0x18] sm:$0xff] %v6349
    // Predicated region
    $region106: #{dit_forward.1} parent=1 // pred_check
      _
    $region107: #{dit_forward.1} parent=1 // pred_check_branch
      %6355 = sbr.rel (0) target = $region109
    $region108: #{dit_forward.1} parent=1 // pred_region
      %s6357 = ssub.s32 512, 512
      %6358 = vsyncadd [#allocation4], %s6357
      %s6359 = sshll.u32 [#allocation14], 4
      %s6360 = int_to_ptr.vmem [resolvable:$true] %s6359
      %6365 = dma.vmem_to_hbm [thread:$0]  %s6360, 512, %s19, [#allocation4], 128, 128, 8
    $region109: #{dit_forward.1} parent=1 // pred_fallthru
      _
    // Predicated region
    $region110: #{dit_forward.1} parent=1 // pred_check
      _
    $region111: #{dit_forward.1} parent=1 // pred_check_branch
      %6367 = sbr.rel (0) target = $region113
    $region112: #{dit_forward.1} parent=1 // pred_region
      %6368 = dma.done [#allocation4], 512
    $region113: #{dit_forward.1} parent=1 // pred_fallthru
      _
    %6369 = vsyncpa [#allocation3], 1
    %6370 = vsyncpa [#allocation6], 1
    %6371 = vsyncpa [#allocation9], 1
    %6372 = vsyncpa [#allocation12], 1
    %6373 = vsyncpa [#allocation4], 1

</llo_original>
